<compile_context>
chip_gen: v7x
topology: tpu7x:2x2x1
jax: 0.10.0
libtpu: 0.0.40
codegen_flags: <defaults>
</compile_context>

<pallas_src>
import math

import jax
import jax.numpy as jnp
from jax.experimental import pallas as pl
from jax.experimental.pallas import tpu as pltpu

# ---- hyperparameters (mirror the PyTorch module; small test-time seq/batch) ----
D = 512          # input_size / d_model
H = 4            # num_heads
HD = D // H      # head_dim = 128
L = 2            # num_layers
C = 2            # num_classes
FF = 2048        # nn.TransformerEncoderLayer default dim_feedforward
S = 8            # sequence length (small)
B = 2            # batch size (small)
EPS = 1e-5       # LayerNorm eps (PyTorch default)

# ---- packed per-layer vector bundle: static, 128-lane-aligned offsets ----
_OFF_INB = 0                       # in_proj bias      (3D)
_OFF_OUTB = _OFF_INB + 3 * D       # out_proj bias     (D)
_OFF_LN1W = _OFF_OUTB + D          # norm1 weight      (D)
_OFF_LN1B = _OFF_LN1W + D          # norm1 bias        (D)
_OFF_LN2W = _OFF_LN1B + D          # norm2 weight      (D)
_OFF_LN2B = _OFF_LN2W + D          # norm2 bias        (D)
_OFF_FF1B = _OFF_LN2B + D          # linear1 bias      (FF)
_OFF_FF2B = _OFF_FF1B + FF         # linear2 bias      (D)
P_VEC = _OFF_FF2B + D              # = 6656 (multiple of 128)


def _layer_norm(x, w, b):
    mu = jnp.mean(x, axis=-1, keepdims=True)
    var = jnp.mean((x - mu) ** 2, axis=-1, keepdims=True)
    return (x - mu) * jax.lax.rsqrt(var + EPS) * w + b


def encoder_layer_kernel(x_ref, inW_ref, outW_ref, ff1W_ref, ff2W_ref, vec_ref,
                         out_ref):
    l = pl.program_id(0)

    # out_ref (constant block index) is the VMEM-resident carried activation across
    # layers; it is initialized here at step 0 and written back to HBM only once.
    @pl.when(l == 0)
    def _():
        out_ref[...] = x_ref[...]

    # Static lane-aligned slices of the packed per-layer (1, P_VEC) f32 bundle.
    inB = vec_ref[:, _OFF_INB:_OFF_INB + 3 * D]
    outB = vec_ref[:, _OFF_OUTB:_OFF_OUTB + D]
    ln1w = vec_ref[:, _OFF_LN1W:_OFF_LN1W + D]
    ln1b = vec_ref[:, _OFF_LN1B:_OFF_LN1B + D]
    ln2w = vec_ref[:, _OFF_LN2W:_OFF_LN2W + D]
    ln2b = vec_ref[:, _OFF_LN2B:_OFF_LN2B + D]
    ff1B = vec_ref[:, _OFF_FF1B:_OFF_FF1B + FF]
    ff2B = vec_ref[:, _OFF_FF2B:_OFF_FF2B + D]

    x = out_ref[...]                       # (B, S, D) f32
    x2 = x.reshape(B * S, D)               # (B*S, D)  f32

    # ---------------- multi-head self-attention (bf16 MXU path, f32 accumulate) ----
    qkv = jnp.dot(x2.astype(jnp.bfloat16), inW_ref[...],
                  preferred_element_type=jnp.float32) + inB          # (B*S, 3D) f32
    q = qkv[:, 0 * D:1 * D].reshape(B, S, D).astype(jnp.bfloat16)
    k = qkv[:, 1 * D:2 * D].reshape(B, S, D).astype(jnp.bfloat16)
    v = qkv[:, 2 * D:3 * D].reshape(B, S, D).astype(jnp.bfloat16)

    scale = 1.0 / math.sqrt(HD)
    heads = []
    for h in range(H):                     # static unroll; known-good single-batch einsums
        qh = q[:, :, h * HD:(h + 1) * HD]  # (B, S, HD) bf16
        kh = k[:, :, h * HD:(h + 1) * HD]
        vh = v[:, :, h * HD:(h + 1) * HD]
        s = jnp.einsum('bqd,bkd->bqk', qh, kh,
                       preferred_element_type=jnp.float32) * scale   # (B, S, S) f32
        s_max = jnp.max(s, axis=-1, keepdims=True)
        p = jnp.exp(s - s_max)
        # divide -> EUP reciprocal; VPU slots carry the LayerNorm/residual work
        p = p * pl.reciprocal(jnp.sum(p, axis=-1, keepdims=True), approx=True)
        heads.append(jnp.einsum('bqk,bkd->bqd', p.astype(jnp.bfloat16), vh,
                                preferred_element_type=jnp.float32))  # (B, S, HD) f32
    attn = jnp.concatenate(heads, axis=-1).reshape(B * S, D)
    attn = jnp.dot(attn.astype(jnp.bfloat16), outW_ref[...],
                   preferred_element_type=jnp.float32) + outB        # (B*S, D) f32

    # residual + post-LayerNorm (norm_first=False default), all f32
    h1 = _layer_norm(x2 + attn, ln1w, ln1b)

    # ---------------- feed-forward (relu) ----------------
    ff = jnp.dot(h1.astype(jnp.bfloat16), ff1W_ref[...],
                 preferred_element_type=jnp.float32) + ff1B          # (B*S, FF) f32
    ff = jnp.maximum(ff, 0.0)
    ff = jnp.dot(ff.astype(jnp.bfloat16), ff2W_ref[...],
                 preferred_element_type=jnp.float32) + ff2B          # (B*S, D)  f32
    h2 = _layer_norm(h1 + ff, ln2w, ln2b)

    out_ref[...] = h2.reshape(B, S, D)


def transformer_classifier(x_sbd, params):
    """x_sbd: (S, B, D) seq-first (PyTorch convention). Returns (B, C) logits."""
    (pe, inW, outW, ff1W, ff2W, vec, fcW, fcB) = params

    # PE add, mean-pool and the 512->2 head are trivial XLA ops; keeping them outside
    # the kernel means the kernel only streams 4 big bf16 matrices + 1 packed f32
    # vector per grid step and writes one lane-dense (B, S, 512) output.
    x_bsd = jnp.transpose(x_sbd, (1, 0, 2)) + pe[None, :, :]         # (B, S, D) f32

    def stacked(shape):   # per-layer weight: leading layer dim squeezed out
        return pl.BlockSpec((None,) + shape, lambda l: (l,) + (0,) * len(shape))

    grid_spec = pltpu.PrefetchScalarGridSpec(
        num_scalar_prefetch=0,
        grid=(L,),
        in_specs=[
            pl.BlockSpec((B, S, D), lambda l: (0, 0, 0)),   # activations, fetched once
            stacked((D, 3 * D)),      # in_proj weight  (in, out), bf16
            stacked((D, D)),          # out_proj weight, bf16
            stacked((D, FF)),         # linear1 weight, bf16
            stacked((FF, D)),         # linear2 weight, bf16
            stacked((1, P_VEC)),      # packed biases + LayerNorm params, f32
        ],
        out_specs=pl.BlockSpec((B, S, D), lambda l: (0, 0, 0)),
    )

    h = pl.pallas_call(
        encoder_layer_kernel,
        out_shape=jax.ShapeDtypeStruct((B, S, D), jnp.float32),
        grid_spec=grid_spec,
        compiler_params=pltpu.CompilerParams(
            # Grid carries state across layers in the resident output block -> sequential.
            dimension_semantics=("arbitrary",),
            # bf16 weights ~6 MiB/layer, double-buffered working set ~13 MiB; 32 MiB
            # leaves headroom and fits inside v7x's 64 MiB physical VMEM.
            vmem_limit_bytes=32 * 1024 * 1024,
        ),
    )(x_bsd, inW, outW, ff1W, ff2W, vec)

    pooled = jnp.mean(h, axis=1)                                      # (B, D)
    return jnp.dot(pooled, fcW) + fcB                                 # (B, C)


def init_params(key):
    keys = jax.random.split(key, 10)

    def nrm_bf16(k, shape, scale=0.02):
        # large streamed weights -> bf16 (halves HBM traffic; MXU-native on all gens)
        return (scale * jax.random.normal(k, shape)).astype(jnp.bfloat16)

    def nrm_f32(k, shape, scale=0.02):
        return (scale * jax.random.normal(k, shape)).astype(jnp.float32)

    # sinusoidal positional-encoding buffer (only the first S rows are needed)
    position = jnp.arange(S, dtype=jnp.float32)[:, None]
    div_term = jnp.exp(jnp.arange(0, D, 2, dtype=jnp.float32)
                       * (-math.log(10000.0) / D))
    pe = jnp.zeros((S, D), jnp.float32)
    pe = pe.at[:, 0::2].set(jnp.sin(position * div_term))
    pe = pe.at[:, 1::2].set(jnp.cos(position * div_term))

    # big streamed matrices, stored (in_features, out_features) i.e. PyTorch weight.T
    inW = nrm_bf16(keys[0], (L, D, 3 * D))
    outW = nrm_bf16(keys[1], (L, D, D))
    ff1W = nrm_bf16(keys[2], (L, D, FF))
    ff2W = nrm_bf16(keys[3], (L, FF, D))

    # small per-layer vectors, packed into one (L, 1, P_VEC) f32 array
    inB = nrm_f32(keys[4], (L, 1, 3 * D))
    outB = nrm_f32(keys[5], (L, 1, D))
    ln1w = jnp.ones((L, 1, D), jnp.float32)
    ln1b = jnp.zeros((L, 1, D), jnp.float32)
    ln2w = jnp.ones((L, 1, D), jnp.float32)
    ln2b = jnp.zeros((L, 1, D), jnp.float32)
    ff1B = nrm_f32(keys[6], (L, 1, FF))
    ff2B = nrm_f32(keys[7], (L, 1, D))
    vec = jnp.concatenate([inB, outB, ln1w, ln1b, ln2w, ln2b, ff1B, ff2B], axis=-1)
    assert vec.shape == (L, 1, P_VEC)

    # classifier head (lives in the XLA wrapper)
    fcW = nrm_f32(keys[8], (D, C))
    fcB = nrm_f32(keys[9], (C,))
    return (pe, inW, outW, ff1W, ff2W, vec, fcW, fcB)


if __name__ == "__main__":
    key = jax.random.PRNGKey(0)
    k_x, k_p = jax.random.split(key)
    # Module input convention: (seq_len, batch, d_model)
    x = jax.random.normal(k_x, (S, B, D), dtype=jnp.float32)
    params = init_params(k_p)

    fwd = jax.jit(transformer_classifier)
    out = fwd(x, params)
    out = jax.block_until_ready(out)
    assert out.shape == (B, C) and bool(jnp.all(jnp.isfinite(out)))
    print("KERNEL_OK")
</pallas_src>

<mosaic_0001>
module attributes {stable_mosaic.version = 11 : i64} {
  func.func @encoder_layer_kernel(%arg0: i32, %arg1: memref<2x8x512xf32, #tpu.memory_space<vmem>>, %arg2: memref<1x512x1536xbf16, #tpu.memory_space<vmem>>, %arg3: memref<1x512x512xbf16, #tpu.memory_space<vmem>>, %arg4: memref<1x512x2048xbf16, #tpu.memory_space<vmem>>, %arg5: memref<1x2048x512xbf16, #tpu.memory_space<vmem>>, %arg6: memref<1x1x6656xf32, #tpu.memory_space<vmem>>, %arg7: memref<2x8x512xf32, #tpu.memory_space<vmem>>) attributes {dimension_semantics = [#tpu.dimension_semantics<arbitrary>], iteration_bounds = array<i64: 2>, scalar_prefetch = 0 : i64, scratch_operands = 0 : i64, tpu.core_type = #tpu.core_type<tc>, window_params = [{pipeline_mode = #tpu.pipeline_mode<synchronous>, transform_indices = @transform_0, window_bounds = array<i64: 2, 8, 512>}, {transform_indices = @transform_1, window_bounds = array<i64: 1, 512, 1536>}, {transform_indices = @transform_2, window_bounds = array<i64: 1, 512, 512>}, {transform_indices = @transform_3, window_bounds = array<i64: 1, 512, 2048>}, {transform_indices = @transform_4, window_bounds = array<i64: 1, 2048, 512>}, {transform_indices = @transform_5, window_bounds = array<i64: 1, 1, 6656>}, {pipeline_mode = #tpu.pipeline_mode<synchronous>, transform_indices = @transform_6, window_bounds = array<i64: 2, 8, 512>}]} {
    %c0_i32 = arith.constant 0 : i32
    %0 = arith.cmpi eq, %arg0, %c0_i32 : i32
    %1 = arith.extui %0 : i1 to i32
    %c0_i32_0 = arith.constant 0 : i32
    %2 = arith.cmpi ne, %1, %c0_i32_0 : i32
    scf.if %2 {
      %c0_69 = arith.constant 0 : index
      %c0_70 = arith.constant 0 : index
      %c0_71 = arith.constant 0 : index
      %178 = vector.load %arg1[%c0_69, %c0_70, %c0_71] : memref<2x8x512xf32, #tpu.memory_space<vmem>>, vector<2x8x512xf32>
      %c0_72 = arith.constant 0 : index
      %c0_73 = arith.constant 0 : index
      %c0_74 = arith.constant 0 : index
      %179 = vector.load %arg7[%c0_72, %c0_73, %c0_74] : memref<2x8x512xf32, #tpu.memory_space<vmem>>, vector<2x8x512xf32>
      tpu.vector_store %arg7[%c0_72, %c0_73, %c0_74], %178 {strides = array<i32>} : memref<2x8x512xf32, #tpu.memory_space<vmem>>, vector<2x8x512xf32>,
    } else {
    }
    %c0 = arith.constant 0 : index
    %c0_1 = arith.constant 0 : index
    %c0_2 = arith.constant 0 : index
    %3 = vector.load %arg6[%c0, %c0_1, %c0_2] : memref<1x1x6656xf32, #tpu.memory_space<vmem>>, vector<1x1x1536xf32>
    %4 = vector.shape_cast %3 : vector<1x1x1536xf32> to vector<1x1536xf32>
    %c0_3 = arith.constant 0 : index
    %c0_4 = arith.constant 0 : index
    %c1536 = arith.constant 1536 : index
    %5 = vector.load %arg6[%c0_3, %c0_4, %c1536] : memref<1x1x6656xf32, #tpu.memory_space<vmem>>, vector<1x1x512xf32>
    %6 = vector.shape_cast %5 : vector<1x1x512xf32> to vector<1x512xf32>
    %c0_5 = arith.constant 0 : index
    %c0_6 = arith.constant 0 : index
    %c2048 = arith.constant 2048 : index
    %7 = vector.load %arg6[%c0_5, %c0_6, %c2048] : memref<1x1x6656xf32, #tpu.memory_space<vmem>>, vector<1x1x512xf32>
    %8 = vector.shape_cast %7 : vector<1x1x512xf32> to vector<1x512xf32>
    %c0_7 = arith.constant 0 : index
    %c0_8 = arith.constant 0 : index
    %c2560 = arith.constant 2560 : index
    %9 = vector.load %arg6[%c0_7, %c0_8, %c2560] : memref<1x1x6656xf32, #tpu.memory_space<vmem>>, vector<1x1x512xf32>
    %10 = vector.shape_cast %9 : vector<1x1x512xf32> to vector<1x512xf32>
    %c0_9 = arith.constant 0 : index
    %c0_10 = arith.constant 0 : index
    %c3072 = arith.constant 3072 : index
    %11 = vector.load %arg6[%c0_9, %c0_10, %c3072] : memref<1x1x6656xf32, #tpu.memory_space<vmem>>, vector<1x1x512xf32>
    %12 = vector.shape_cast %11 : vector<1x1x512xf32> to vector<1x512xf32>
    %c0_11 = arith.constant 0 : index
    %c0_12 = arith.constant 0 : index
    %c3584 = arith.constant 3584 : index
    %13 = vector.load %arg6[%c0_11, %c0_12, %c3584] : memref<1x1x6656xf32, #tpu.memory_space<vmem>>, vector<1x1x512xf32>
    %14 = vector.shape_cast %13 : vector<1x1x512xf32> to vector<1x512xf32>
    %c0_13 = arith.constant 0 : index
    %c0_14 = arith.constant 0 : index
    %c4096 = arith.constant 4096 : index
    %15 = vector.load %arg6[%c0_13, %c0_14, %c4096] : memref<1x1x6656xf32, #tpu.memory_space<vmem>>, vector<1x1x2048xf32>
    %16 = vector.shape_cast %15 : vector<1x1x2048xf32> to vector<1x2048xf32>
    %c0_15 = arith.constant 0 : index
    %c0_16 = arith.constant 0 : index
    %c6144 = arith.constant 6144 : index
    %17 = vector.load %arg6[%c0_15, %c0_16, %c6144] : memref<1x1x6656xf32, #tpu.memory_space<vmem>>, vector<1x1x512xf32>
    %18 = vector.shape_cast %17 : vector<1x1x512xf32> to vector<1x512xf32>
    %c0_17 = arith.constant 0 : index
    %c0_18 = arith.constant 0 : index
    %c0_19 = arith.constant 0 : index
    %19 = vector.load %arg7[%c0_17, %c0_18, %c0_19] : memref<2x8x512xf32, #tpu.memory_space<vmem>>, vector<2x8x512xf32>
    %20 = vector.shape_cast %19 : vector<2x8x512xf32> to vector<16x512xf32>
    %21 = arith.truncf %20 : vector<16x512xf32> to vector<16x512xbf16>
    %c0_20 = arith.constant 0 : index
    %c0_21 = arith.constant 0 : index
    %c0_22 = arith.constant 0 : index
    %22 = vector.load %arg2[%c0_20, %c0_21, %c0_22] : memref<1x512x1536xbf16, #tpu.memory_space<vmem>>, vector<1x512x1536xbf16>
    %23 = vector.shape_cast %22 : vector<1x512x1536xbf16> to vector<512x1536xbf16>
    %cst = arith.constant dense<0.000000e+00> : vector<16x1536xf32>
    %24 = tpu.matmul %21, %23, %cst {dimension_numbers = #tpu.dot_dimension_numbers<[1], [0], [0], [1], [0, 0, 1, 1], [], []>} : vector<16x512xbf16>, vector<512x1536xbf16>, vector<16x1536xf32> -> vector<16x1536xf32>
    %25 = vector.broadcast %4 : vector<1x1536xf32> to vector<16x1536xf32>
    %26 = arith.addf %24, %25 : vector<16x1536xf32>
    %27 = vector.extract_strided_slice %26 {offsets = [0, 0], sizes = [16, 512], strides = [1, 1]} : vector<16x1536xf32> to vector<16x512xf32>
    %28 = vector.shape_cast %27 : vector<16x512xf32> to vector<2x8x512xf32>
    %29 = arith.truncf %28 : vector<2x8x512xf32> to vector<2x8x512xbf16>
    %30 = vector.extract_strided_slice %26 {offsets = [0, 512], sizes = [16, 512], strides = [1, 1]} : vector<16x1536xf32> to vector<16x512xf32>
    %31 = vector.shape_cast %30 : vector<16x512xf32> to vector<2x8x512xf32>
    %32 = arith.truncf %31 : vector<2x8x512xf32> to vector<2x8x512xbf16>
    %33 = vector.extract_strided_slice %26 {offsets = [0, 1024], sizes = [16, 512], strides = [1, 1]} : vector<16x1536xf32> to vector<16x512xf32>
    %34 = vector.shape_cast %33 : vector<16x512xf32> to vector<2x8x512xf32>
    %35 = arith.truncf %34 : vector<2x8x512xf32> to vector<2x8x512xbf16>
    %36 = vector.extract_strided_slice %29 {offsets = [0, 0, 0], sizes = [2, 8, 128], strides = [1, 1, 1]} : vector<2x8x512xbf16> to vector<2x8x128xbf16>
    %37 = vector.extract_strided_slice %32 {offsets = [0, 0, 0], sizes = [2, 8, 128], strides = [1, 1, 1]} : vector<2x8x512xbf16> to vector<2x8x128xbf16>
    %38 = vector.extract_strided_slice %35 {offsets = [0, 0, 0], sizes = [2, 8, 128], strides = [1, 1, 1]} : vector<2x8x512xbf16> to vector<2x8x128xbf16>
    "tpu.trace_start"() <{level = 10 : i32, message = "bqd,bkd->bqk"}> : () -> ()
    %cst_23 = arith.constant dense<0.000000e+00> : vector<2x8x8xf32>
    %39 = tpu.matmul %36, %37, %cst_23 {dimension_numbers = #tpu.dot_dimension_numbers<[2], [2], [1], [1], [0, 0, 0, 1, 1, 1], [0], [0]>} : vector<2x8x128xbf16>, vector<2x8x128xbf16>, vector<2x8x8xf32> -> vector<2x8x8xf32>
    "tpu.trace_stop"() : () -> ()
    %cst_24 = arith.constant 0.0883883461 : f32
    %40 = vector.broadcast %cst_24 : f32 to vector<2x8x8xf32>
    %41 = arith.mulf %39, %40 : vector<2x8x8xf32>
    %cst_25 = arith.constant dense<0xFF800000> : vector<2x8xf32>
    %42 = vector.multi_reduction <maximumf>, %41, %cst_25 [2] : vector<2x8x8xf32> to vector<2x8xf32>
    %43 = vector.shape_cast %42 : vector<2x8xf32> to vector<2x8x1xf32>
    %44 = vector.broadcast %43 : vector<2x8x1xf32> to vector<2x8x8xf32>
    %45 = arith.subf %41, %44 : vector<2x8x8xf32>
    %46 = math.exp %45 : vector<2x8x8xf32>
    %cst_26 = arith.constant dense<0.000000e+00> : vector<2x8xf32>
    %47 = vector.multi_reduction <add>, %46, %cst_26 [2] : vector<2x8x8xf32> to vector<2x8xf32>
    %48 = vector.shape_cast %47 : vector<2x8xf32> to vector<2x8x1xf32>
    %49 = tpu.reciprocal %48 {approx = true} : vector<2x8x1xf32> -> vector<2x8x1xf32>
    %50 = vector.broadcast %49 : vector<2x8x1xf32> to vector<2x8x8xf32>
    %51 = arith.mulf %46, %50 : vector<2x8x8xf32>
    %52 = arith.truncf %51 : vector<2x8x8xf32> to vector<2x8x8xbf16>
    "tpu.trace_start"() <{level = 10 : i32, message = "bqk,bkd->bqd"}> : () -> ()
    %cst_27 = arith.constant dense<0.000000e+00> : vector<2x8x128xf32>
    %53 = tpu.matmul %52, %38, %cst_27 {dimension_numbers = #tpu.dot_dimension_numbers<[2], [1], [1], [2], [0, 0, 0, 1, 1, 2], [0], [0]>} : vector<2x8x8xbf16>, vector<2x8x128xbf16>, vector<2x8x128xf32> -> vector<2x8x128xf32>
    "tpu.trace_stop"() : () -> ()
    %54 = vector.extract_strided_slice %29 {offsets = [0, 0, 128], sizes = [2, 8, 128], strides = [1, 1, 1]} : vector<2x8x512xbf16> to vector<2x8x128xbf16>
    %55 = vector.extract_strided_slice %32 {offsets = [0, 0, 128], sizes = [2, 8, 128], strides = [1, 1, 1]} : vector<2x8x512xbf16> to vector<2x8x128xbf16>
    %56 = vector.extract_strided_slice %35 {offsets = [0, 0, 128], sizes = [2, 8, 128], strides = [1, 1, 1]} : vector<2x8x512xbf16> to vector<2x8x128xbf16>
    "tpu.trace_start"() <{level = 10 : i32, message = "bqd,bkd->bqk"}> : () -> ()
    %cst_28 = arith.constant dense<0.000000e+00> : vector<2x8x8xf32>
    %57 = tpu.matmul %54, %55, %cst_28 {dimension_numbers = #tpu.dot_dimension_numbers<[2], [2], [1], [1], [0, 0, 0, 1, 1, 1], [0], [0]>} : vector<2x8x128xbf16>, vector<2x8x128xbf16>, vector<2x8x8xf32> -> vector<2x8x8xf32>
    "tpu.trace_stop"() : () -> ()
    %cst_29 = arith.constant 0.0883883461 : f32
    %58 = vector.broadcast %cst_29 : f32 to vector<2x8x8xf32>
    %59 = arith.mulf %57, %58 : vector<2x8x8xf32>
    %cst_30 = arith.constant dense<0xFF800000> : vector<2x8xf32>
    %60 = vector.multi_reduction <maximumf>, %59, %cst_30 [2] : vector<2x8x8xf32> to vector<2x8xf32>
    %61 = vector.shape_cast %60 : vector<2x8xf32> to vector<2x8x1xf32>
    %62 = vector.broadcast %61 : vector<2x8x1xf32> to vector<2x8x8xf32>
    %63 = arith.subf %59, %62 : vector<2x8x8xf32>
    %64 = math.exp %63 : vector<2x8x8xf32>
    %cst_31 = arith.constant dense<0.000000e+00> : vector<2x8xf32>
    %65 = vector.multi_reduction <add>, %64, %cst_31 [2] : vector<2x8x8xf32> to vector<2x8xf32>
    %66 = vector.shape_cast %65 : vector<2x8xf32> to vector<2x8x1xf32>
    %67 = tpu.reciprocal %66 {approx = true} : vector<2x8x1xf32> -> vector<2x8x1xf32>
    %68 = vector.broadcast %67 : vector<2x8x1xf32> to vector<2x8x8xf32>
    %69 = arith.mulf %64, %68 : vector<2x8x8xf32>
    %70 = arith.truncf %69 : vector<2x8x8xf32> to vector<2x8x8xbf16>
    "tpu.trace_start"() <{level = 10 : i32, message = "bqk,bkd->bqd"}> : () -> ()
    %cst_32 = arith.constant dense<0.000000e+00> : vector<2x8x128xf32>
    %71 = tpu.matmul %70, %56, %cst_32 {dimension_numbers = #tpu.dot_dimension_numbers<[2], [1], [1], [2], [0, 0, 0, 1, 1, 2], [0], [0]>} : vector<2x8x8xbf16>, vector<2x8x128xbf16>, vector<2x8x128xf32> -> vector<2x8x128xf32>
    "tpu.trace_stop"() : () -> ()
    %72 = vector.extract_strided_slice %29 {offsets = [0, 0, 256], sizes = [2, 8, 128], strides = [1, 1, 1]} : vector<2x8x512xbf16> to vector<2x8x128xbf16>
    %73 = vector.extract_strided_slice %32 {offsets = [0, 0, 256], sizes = [2, 8, 128], strides = [1, 1, 1]} : vector<2x8x512xbf16> to vector<2x8x128xbf16>
    %74 = vector.extract_strided_slice %35 {offsets = [0, 0, 256], sizes = [2, 8, 128], strides = [1, 1, 1]} : vector<2x8x512xbf16> to vector<2x8x128xbf16>
    "tpu.trace_start"() <{level = 10 : i32, message = "bqd,bkd->bqk"}> : () -> ()
    %cst_33 = arith.constant dense<0.000000e+00> : vector<2x8x8xf32>
    %75 = tpu.matmul %72, %73, %cst_33 {dimension_numbers = #tpu.dot_dimension_numbers<[2], [2], [1], [1], [0, 0, 0, 1, 1, 1], [0], [0]>} : vector<2x8x128xbf16>, vector<2x8x128xbf16>, vector<2x8x8xf32> -> vector<2x8x8xf32>
    "tpu.trace_stop"() : () -> ()
    %cst_34 = arith.constant 0.0883883461 : f32
    %76 = vector.broadcast %cst_34 : f32 to vector<2x8x8xf32>
    %77 = arith.mulf %75, %76 : vector<2x8x8xf32>
    %cst_35 = arith.constant dense<0xFF800000> : vector<2x8xf32>
    %78 = vector.multi_reduction <maximumf>, %77, %cst_35 [2] : vector<2x8x8xf32> to vector<2x8xf32>
    %79 = vector.shape_cast %78 : vector<2x8xf32> to vector<2x8x1xf32>
    %80 = vector.broadcast %79 : vector<2x8x1xf32> to vector<2x8x8xf32>
    %81 = arith.subf %77, %80 : vector<2x8x8xf32>
    %82 = math.exp %81 : vector<2x8x8xf32>
    %cst_36 = arith.constant dense<0.000000e+00> : vector<2x8xf32>
    %83 = vector.multi_reduction <add>, %82, %cst_36 [2] : vector<2x8x8xf32> to vector<2x8xf32>
    %84 = vector.shape_cast %83 : vector<2x8xf32> to vector<2x8x1xf32>
    %85 = tpu.reciprocal %84 {approx = true} : vector<2x8x1xf32> -> vector<2x8x1xf32>
    %86 = vector.broadcast %85 : vector<2x8x1xf32> to vector<2x8x8xf32>
    %87 = arith.mulf %82, %86 : vector<2x8x8xf32>
    %88 = arith.truncf %87 : vector<2x8x8xf32> to vector<2x8x8xbf16>
    "tpu.trace_start"() <{level = 10 : i32, message = "bqk,bkd->bqd"}> : () -> ()
    %cst_37 = arith.constant dense<0.000000e+00> : vector<2x8x128xf32>
    %89 = tpu.matmul %88, %74, %cst_37 {dimension_numbers = #tpu.dot_dimension_numbers<[2], [1], [1], [2], [0, 0, 0, 1, 1, 2], [0], [0]>} : vector<2x8x8xbf16>, vector<2x8x128xbf16>, vector<2x8x128xf32> -> vector<2x8x128xf32>
    "tpu.trace_stop"() : () -> ()
    %90 = vector.extract_strided_slice %29 {offsets = [0, 0, 384], sizes = [2, 8, 128], strides = [1, 1, 1]} : vector<2x8x512xbf16> to vector<2x8x128xbf16>
    %91 = vector.extract_strided_slice %32 {offsets = [0, 0, 384], sizes = [2, 8, 128], strides = [1, 1, 1]} : vector<2x8x512xbf16> to vector<2x8x128xbf16>
    %92 = vector.extract_strided_slice %35 {offsets = [0, 0, 384], sizes = [2, 8, 128], strides = [1, 1, 1]} : vector<2x8x512xbf16> to vector<2x8x128xbf16>
    "tpu.trace_start"() <{level = 10 : i32, message = "bqd,bkd->bqk"}> : () -> ()
    %cst_38 = arith.constant dense<0.000000e+00> : vector<2x8x8xf32>
    %93 = tpu.matmul %90, %91, %cst_38 {dimension_numbers = #tpu.dot_dimension_numbers<[2], [2], [1], [1], [0, 0, 0, 1, 1, 1], [0], [0]>} : vector<2x8x128xbf16>, vector<2x8x128xbf16>, vector<2x8x8xf32> -> vector<2x8x8xf32>
    "tpu.trace_stop"() : () -> ()
    %cst_39 = arith.constant 0.0883883461 : f32
    %94 = vector.broadcast %cst_39 : f32 to vector<2x8x8xf32>
    %95 = arith.mulf %93, %94 : vector<2x8x8xf32>
    %cst_40 = arith.constant dense<0xFF800000> : vector<2x8xf32>
    %96 = vector.multi_reduction <maximumf>, %95, %cst_40 [2] : vector<2x8x8xf32> to vector<2x8xf32>
    %97 = vector.shape_cast %96 : vector<2x8xf32> to vector<2x8x1xf32>
    %98 = vector.broadcast %97 : vector<2x8x1xf32> to vector<2x8x8xf32>
    %99 = arith.subf %95, %98 : vector<2x8x8xf32>
    %100 = math.exp %99 : vector<2x8x8xf32>
    %cst_41 = arith.constant dense<0.000000e+00> : vector<2x8xf32>
    %101 = vector.multi_reduction <add>, %100, %cst_41 [2] : vector<2x8x8xf32> to vector<2x8xf32>
    %102 = vector.shape_cast %101 : vector<2x8xf32> to vector<2x8x1xf32>
    %103 = tpu.reciprocal %102 {approx = true} : vector<2x8x1xf32> -> vector<2x8x1xf32>
    %104 = vector.broadcast %103 : vector<2x8x1xf32> to vector<2x8x8xf32>
    %105 = arith.mulf %100, %104 : vector<2x8x8xf32>
    %106 = arith.truncf %105 : vector<2x8x8xf32> to vector<2x8x8xbf16>
    "tpu.trace_start"() <{level = 10 : i32, message = "bqk,bkd->bqd"}> : () -> ()
    %cst_42 = arith.constant dense<0.000000e+00> : vector<2x8x128xf32>
    %107 = tpu.matmul %106, %92, %cst_42 {dimension_numbers = #tpu.dot_dimension_numbers<[2], [1], [1], [2], [0, 0, 0, 1, 1, 2], [0], [0]>} : vector<2x8x8xbf16>, vector<2x8x128xbf16>, vector<2x8x128xf32> -> vector<2x8x128xf32>
    "tpu.trace_stop"() : () -> ()
    %108 = tpu.concatenate %53, %71, %89, %107 in 2 : vector<2x8x128xf32>, vector<2x8x128xf32>, vector<2x8x128xf32>, vector<2x8x128xf32> -> vector<2x8x512xf32>
    %109 = vector.shape_cast %108 : vector<2x8x512xf32> to vector<16x512xf32>
    %110 = arith.truncf %109 : vector<16x512xf32> to vector<16x512xbf16>
    %c0_43 = arith.constant 0 : index
    %c0_44 = arith.constant 0 : index
    %c0_45 = arith.constant 0 : index
    %111 = vector.load %arg3[%c0_43, %c0_44, %c0_45] : memref<1x512x512xbf16, #tpu.memory_space<vmem>>, vector<1x512x512xbf16>
    %112 = vector.shape_cast %111 : vector<1x512x512xbf16> to vector<512x512xbf16>
    %cst_46 = arith.constant dense<0.000000e+00> : vector<16x512xf32>
    %113 = tpu.matmul %110, %112, %cst_46 {dimension_numbers = #tpu.dot_dimension_numbers<[1], [0], [0], [1], [0, 0, 1, 1], [], []>} : vector<16x512xbf16>, vector<512x512xbf16>, vector<16x512xf32> -> vector<16x512xf32>
    %114 = vector.broadcast %6 : vector<1x512xf32> to vector<16x512xf32>
    %115 = arith.addf %113, %114 : vector<16x512xf32>
    %116 = arith.addf %20, %115 : vector<16x512xf32>
    %cst_47 = arith.constant dense<0.000000e+00> : vector<16xf32>
    %117 = vector.multi_reduction <add>, %116, %cst_47 [1] : vector<16x512xf32> to vector<16xf32>
    %118 = vector.shape_cast %117 : vector<16xf32> to vector<16x1xf32>
    %cst_48 = arith.constant 5.120000e+02 : f32
    %119 = vector.broadcast %cst_48 : f32 to vector<16x1xf32>
    %120 = arith.divf %118, %119 : vector<16x1xf32>
    %121 = vector.broadcast %120 : vector<16x1xf32> to vector<16x512xf32>
    %122 = arith.subf %116, %121 : vector<16x512xf32>
    %123 = arith.mulf %122, %122 : vector<16x512xf32>
    %cst_49 = arith.constant dense<0.000000e+00> : vector<16xf32>
    %124 = vector.multi_reduction <add>, %123, %cst_49 [1] : vector<16x512xf32> to vector<16xf32>
    %125 = vector.shape_cast %124 : vector<16xf32> to vector<16x1xf32>
    %cst_50 = arith.constant 5.120000e+02 : f32
    %126 = vector.broadcast %cst_50 : f32 to vector<16x1xf32>
    %127 = arith.divf %125, %126 : vector<16x1xf32>
    %128 = vector.broadcast %120 : vector<16x1xf32> to vector<16x512xf32>
    %129 = arith.subf %116, %128 : vector<16x512xf32>
    %cst_51 = arith.constant 9.99999974E-6 : f32
    %130 = vector.broadcast %cst_51 : f32 to vector<16x1xf32>
    %131 = arith.addf %127, %130 : vector<16x1xf32>
    %132 = math.rsqrt %131 : vector<16x1xf32>
    %133 = vector.broadcast %132 : vector<16x1xf32> to vector<16x512xf32>
    %134 = arith.mulf %129, %133 : vector<16x512xf32>
    %135 = vector.broadcast %8 : vector<1x512xf32> to vector<16x512xf32>
    %136 = arith.mulf %134, %135 : vector<16x512xf32>
    %137 = vector.broadcast %10 : vector<1x512xf32> to vector<16x512xf32>
    %138 = arith.addf %136, %137 : vector<16x512xf32>
    %139 = arith.truncf %138 : vector<16x512xf32> to vector<16x512xbf16>
    %c0_52 = arith.constant 0 : index
    %c0_53 = arith.constant 0 : index
    %c0_54 = arith.constant 0 : index
    %140 = vector.load %arg4[%c0_52, %c0_53, %c0_54] : memref<1x512x2048xbf16, #tpu.memory_space<vmem>>, vector<1x512x2048xbf16>
    %141 = vector.shape_cast %140 : vector<1x512x2048xbf16> to vector<512x2048xbf16>
    %cst_55 = arith.constant dense<0.000000e+00> : vector<16x2048xf32>
    %142 = tpu.matmul %139, %141, %cst_55 {dimension_numbers = #tpu.dot_dimension_numbers<[1], [0], [0], [1], [0, 0, 1, 1], [], []>} : vector<16x512xbf16>, vector<512x2048xbf16>, vector<16x2048xf32> -> vector<16x2048xf32>
    %143 = vector.broadcast %16 : vector<1x2048xf32> to vector<16x2048xf32>
    %144 = arith.addf %142, %143 : vector<16x2048xf32>
    %cst_56 = arith.constant 0.000000e+00 : f32
    %145 = vector.broadcast %cst_56 : f32 to vector<16x2048xf32>
    %146 = arith.maximumf %144, %145 : vector<16x2048xf32>
    %147 = arith.truncf %146 : vector<16x2048xf32> to vector<16x2048xbf16>
    %c0_57 = arith.constant 0 : index
    %c0_58 = arith.constant 0 : index
    %c0_59 = arith.constant 0 : index
    %148 = vector.load %arg5[%c0_57, %c0_58, %c0_59] : memref<1x2048x512xbf16, #tpu.memory_space<vmem>>, vector<1x2048x512xbf16>
    %149 = vector.shape_cast %148 : vector<1x2048x512xbf16> to vector<2048x512xbf16>
    %cst_60 = arith.constant dense<0.000000e+00> : vector<16x512xf32>
    %150 = tpu.matmul %147, %149, %cst_60 {dimension_numbers = #tpu.dot_dimension_numbers<[1], [0], [0], [1], [0, 0, 1, 1], [], []>} : vector<16x2048xbf16>, vector<2048x512xbf16>, vector<16x512xf32> -> vector<16x512xf32>
    %151 = vector.broadcast %18 : vector<1x512xf32> to vector<16x512xf32>
    %152 = arith.addf %150, %151 : vector<16x512xf32>
    %153 = arith.addf %138, %152 : vector<16x512xf32>
    %cst_61 = arith.constant dense<0.000000e+00> : vector<16xf32>
    %154 = vector.multi_reduction <add>, %153, %cst_61 [1] : vector<16x512xf32> to vector<16xf32>
    %155 = vector.shape_cast %154 : vector<16xf32> to vector<16x1xf32>
    %cst_62 = arith.constant 5.120000e+02 : f32
    %156 = vector.broadcast %cst_62 : f32 to vector<16x1xf32>
    %157 = arith.divf %155, %156 : vector<16x1xf32>
    %158 = vector.broadcast %157 : vector<16x1xf32> to vector<16x512xf32>
    %159 = arith.subf %153, %158 : vector<16x512xf32>
    %160 = arith.mulf %159, %159 : vector<16x512xf32>
    %cst_63 = arith.constant dense<0.000000e+00> : vector<16xf32>
    %161 = vector.multi_reduction <add>, %160, %cst_63 [1] : vector<16x512xf32> to vector<16xf32>
    %162 = vector.shape_cast %161 : vector<16xf32> to vector<16x1xf32>
    %cst_64 = arith.constant 5.120000e+02 : f32
    %163 = vector.broadcast %cst_64 : f32 to vector<16x1xf32>
    %164 = arith.divf %162, %163 : vector<16x1xf32>
    %165 = vector.broadcast %157 : vector<16x1xf32> to vector<16x512xf32>
    %166 = arith.subf %153, %165 : vector<16x512xf32>
    %cst_65 = arith.constant 9.99999974E-6 : f32
    %167 = vector.broadcast %cst_65 : f32 to vector<16x1xf32>
    %168 = arith.addf %164, %167 : vector<16x1xf32>
    %169 = math.rsqrt %168 : vector<16x1xf32>
    %170 = vector.broadcast %169 : vector<16x1xf32> to vector<16x512xf32>
    %171 = arith.mulf %166, %170 : vector<16x512xf32>
    %172 = vector.broadcast %12 : vector<1x512xf32> to vector<16x512xf32>
    %173 = arith.mulf %171, %172 : vector<16x512xf32>
    %174 = vector.broadcast %14 : vector<1x512xf32> to vector<16x512xf32>
    %175 = arith.addf %173, %174 : vector<16x512xf32>
    %176 = vector.shape_cast %175 : vector<16x512xf32> to vector<2x8x512xf32>
    %c0_66 = arith.constant 0 : index
    %c0_67 = arith.constant 0 : index
    %c0_68 = arith.constant 0 : index
    %177 = vector.load %arg7[%c0_66, %c0_67, %c0_68] : memref<2x8x512xf32, #tpu.memory_space<vmem>>, vector<2x8x512xf32>
    tpu.vector_store %arg7[%c0_66, %c0_67, %c0_68], %176 {strides = array<i32>} : memref<2x8x512xf32, #tpu.memory_space<vmem>>, vector<2x8x512xf32>,
    return
  }
  func.func @transform_0(%arg0: i32) -> (i32, i32, i32) {
    %c0_i32 = arith.constant 0 : i32
    %c0_i32_0 = arith.constant 0 : i32
    %c0_i32_1 = arith.constant 0 : i32
    %c0_i32_2 = arith.constant 0 : i32
    return %c0_i32, %c0_i32_0, %c0_i32_1 : i32, i32, i32
  }
  func.func @transform_1(%arg0: i32) -> (i32, i32, i32) {
    %c0_i32 = arith.constant 0 : i32
    %c0_i32_0 = arith.constant 0 : i32
    %c0_i32_1 = arith.constant 0 : i32
    return %arg0, %c0_i32, %c0_i32_0 : i32, i32, i32
  }
  func.func @transform_2(%arg0: i32) -> (i32, i32, i32) {
    %c0_i32 = arith.constant 0 : i32
    %c0_i32_0 = arith.constant 0 : i32
    %c0_i32_1 = arith.constant 0 : i32
    return %arg0, %c0_i32, %c0_i32_0 : i32, i32, i32
  }
  func.func @transform_3(%arg0: i32) -> (i32, i32, i32) {
    %c0_i32 = arith.constant 0 : i32
    %c0_i32_0 = arith.constant 0 : i32
    %c0_i32_1 = arith.constant 0 : i32
    return %arg0, %c0_i32, %c0_i32_0 : i32, i32, i32
  }
  func.func @transform_4(%arg0: i32) -> (i32, i32, i32) {
    %c0_i32 = arith.constant 0 : i32
    %c0_i32_0 = arith.constant 0 : i32
    %c0_i32_1 = arith.constant 0 : i32
    return %arg0, %c0_i32, %c0_i32_0 : i32, i32, i32
  }
  func.func @transform_5(%arg0: i32) -> (i32, i32, i32) {
    %c0_i32 = arith.constant 0 : i32
    %c0_i32_0 = arith.constant 0 : i32
    %c0_i32_1 = arith.constant 0 : i32
    return %arg0, %c0_i32, %c0_i32_0 : i32, i32, i32
  }
  func.func @transform_6(%arg0: i32) -> (i32, i32, i32) {
    %c0_i32 = arith.constant 0 : i32
    %c0_i32_0 = arith.constant 0 : i32
    %c0_i32_1 = arith.constant 0 : i32
    %c0_i32_2 = arith.constant 0 : i32
    return %c0_i32, %c0_i32_0, %c0_i32_1 : i32, i32, i32
  }
}

</mosaic_0001>

<llo_original>
// kernel: transformer_classifier.1
$region0: #{transformer_classifier.1}
  #allocation0 [shape = 'u32[]', space=smem, size = 0x4, offset = 0x4, fixed_abs, tag = 'smem constant byte address 0x4 - core index']
  #allocation1 [shape = 'u32[144,128]{1,0:T(1,128)}', space=vmem, size = 0x12000, scoped, tag = 'internal scratch']
  %s0 = inlined_call_operand.vmem [shape: f32[2,8,512], index: 0, kind: input, shape index: {}]
  %s1 = inlined_call_operand.hbm [shape: bf16[2,512,1536], index: 1, kind: input, shape index: {}]
  %s2 = inlined_call_operand.hbm [shape: bf16[2,512,512], index: 2, kind: input, shape index: {}]
  %s3 = inlined_call_operand.hbm [shape: bf16[2,512,2048], index: 3, kind: input, shape index: {}]
  %s4 = inlined_call_operand.hbm [shape: bf16[2,2048,512], index: 4, kind: input, shape index: {}]
  %s5 = inlined_call_operand.hbm [shape: f32[2,1,6656], index: 5, kind: input, shape index: {}]
  %s6 = inlined_call_operand.vmem [shape: f32[2,8,512], index: 6, kind: output, shape index: {}]
  %s7 = sld [smem:[#allocation0]]
  $region81: #{transformer_classifier.1} parent=0
    _
  %s9 = ssub.s32 1, %s7
  %s10 = scalar_select 0, %s9, %s7
  $region1: #{transformer_classifier.1} parent=0
    #allocation2 [shape = 'u8[3145728]{0}', space=vmem, size = 0x300000, scoped, tag = 'input window, operand 1']
    #allocation3 [shape = 's32[2]{0}', space=sflag, size = 0x8, scoped, tag = 'scoped memory for transformer_classifier.1']
    #allocation4 [shape = 'u8[1048576]{0}', space=vmem, size = 0x100000, scoped, tag = 'input window, operand 2']
    #allocation5 [shape = 's32[2]{0}', space=sflag, size = 0x8, scoped, tag = 'scoped memory for transformer_classifier.1']
    #allocation6 [shape = 'u8[4194304]{0}', space=vmem, size = 0x400000, scoped, tag = 'input window, operand 3']
    #allocation7 [shape = 'u8[4194304]{0}', space=vmem, size = 0x400000, scoped, tag = 'input window, operand 4']
    #allocation8 [shape = 's32[2]{0}', space=sflag, size = 0x8, scoped, tag = 'scoped memory for transformer_classifier.1']
    #allocation9 [shape = 'u8[53248]{0}', space=vmem, size = 0xd000, scoped, tag = 'input window, operand 5']
    %11 = vsyncpa [#allocation3], 0
    %s12 = scalar_lea.sflag [#allocation3], 1
    %13 = vsyncpa %s12, 0
    %14 = vsyncpa [#allocation5], 0
    %s15 = scalar_lea.sflag [#allocation5], 1
    %16 = vsyncpa %s15, 0
    %17 = vsyncpa [#allocation8], 0
    %s18 = scalar_lea.sflag [#allocation8], 1
    %19 = vsyncpa %s18, 0
    loop: start=0, step=1, limit=4
    $region2: #{transformer_classifier.1} parent=1 // loop_pre_header
      _
    $region3: #{transformer_classifier.1} parent=1 // loop_header
      %s21 = sphi 0, %s25
      %p22 = scmp.ge.s32.totalorder %s21, 4
      %s29 = sphi 0, %s29
      %s31 = sphi 0, %s29
      %s32 = sphi 0, %s31
      %s46 = sphi 0, %s32
      %s52 = sphi 0, %s54
      %s55 = sphi 0, %s52
      %s56 = sphi 0, %s55
      %s72 = sphi 0, %s56
      %s78 = sphi 0, %s80
      %s81 = sphi 0, %s78
      %s82 = sphi 0, %s81
      %s98 = sphi 0, %s82
      %s104 = sphi 0, %s106
      %s107 = sphi 0, %s104
      %s108 = sphi 0, %s107
      %s124 = sphi 0, %s108
      %s130 = sphi 0, %s132
      %s133 = sphi 0, %s130
      %s134 = sphi 0, %s133
      %s150 = sphi 0, %s134
      %s156 = sphi 0, %s158
      %s159 = sphi 0, %s156
      %s160 = sphi 0, %s159
      %s176 = sphi 0, %s160
      %s180 = sphi 0, %s180
      %s182 = sphi 0, %s180
      %s183 = sphi 0, %s182
      %s197 = sphi 0, %s183
    $region4: #{transformer_classifier.1} parent=1 // loop_header_branch
      %24 = sbr.rel (%p22) target = $region8
    $region5: #{transformer_classifier.1} parent=1 // loop_body
      %s26 = ssub.s32 %s21, 1
      %s27 = ssub.s32 %s21, 2
      %s28 = sadd.s32 %s21, 1
      %s30 = sadd.s32 %s29, 1
      %p33 = scmp.eq.s32.totalorder %s21, 1
      %p34 = scmp.ne.s32.totalorder %s29, %s31
      %p35 = scmp.eq.s32.totalorder %s21, 0
      %p36 = por %p34, %p35
      %p37 = scmp.ne.s32.totalorder %s29, %s31
      %p38 = scmp.eq.s32.totalorder %s26, 1
      %p39 = por %p37, %p38
      %p40 = scmp.ne.s32.totalorder %s31, %s32
      %p41 = scmp.eq.s32.totalorder %s26, 0
      %p42 = por %p40, %p41
      %p43 = scmp.ne.s32.totalorder %s31, %s32
      %p44 = scmp.eq.s32.totalorder %s27, 1
      %p45 = por %p43, %p44
      %p47 = scmp.ne.s32.totalorder %s32, %s46
      %p48 = scmp.eq.s32.totalorder %s27, 0
      %p49 = por %p47, %p48
      %s50 = ssub.s32 %s21, %s28
      %p51 = scmp.eq.s32.totalorder %s50, 0
      %s53 = sadd.s32 %s52, 1
      %s54 = scalar_select %p51, %s52, %s53
      %p57 = pneg %p51
      %p58 = scmp.eq.s32.totalorder %s21, 1
      %p59 = por %p57, %p58
      %p60 = scmp.ne.s32.totalorder %s52, %s55
      %p61 = scmp.eq.s32.totalorder %s21, 0
      %p62 = por %p60, %p61
      %p63 = scmp.ne.s32.totalorder %s52, %s55
      %p64 = scmp.eq.s32.totalorder %s26, 1
      %p65 = por %p63, %p64
      %p66 = scmp.ne.s32.totalorder %s55, %s56
      %p67 = scmp.eq.s32.totalorder %s26, 0
      %p68 = por %p66, %p67
      %p69 = scmp.ne.s32.totalorder %s55, %s56
      %p70 = scmp.eq.s32.totalorder %s27, 1
      %p71 = por %p69, %p70
      %p73 = scmp.ne.s32.totalorder %s56, %s72
      %p74 = scmp.eq.s32.totalorder %s27, 0
      %p75 = por %p73, %p74
      %s76 = ssub.s32 %s21, %s28
      %p77 = scmp.eq.s32.totalorder %s76, 0
      %s79 = sadd.s32 %s78, 1
      %s80 = scalar_select %p77, %s78, %s79
      %p83 = pneg %p77
      %p84 = scmp.eq.s32.totalorder %s21, 1
      %p85 = por %p83, %p84
      %p86 = scmp.ne.s32.totalorder %s78, %s81
      %p87 = scmp.eq.s32.totalorder %s21, 0
      %p88 = por %p86, %p87
      %p89 = scmp.ne.s32.totalorder %s78, %s81
      %p90 = scmp.eq.s32.totalorder %s26, 1
      %p91 = por %p89, %p90
      %p92 = scmp.ne.s32.totalorder %s81, %s82
      %p93 = scmp.eq.s32.totalorder %s26, 0
      %p94 = por %p92, %p93
      %p95 = scmp.ne.s32.totalorder %s81, %s82
      %p96 = scmp.eq.s32.totalorder %s27, 1
      %p97 = por %p95, %p96
      %p99 = scmp.ne.s32.totalorder %s82, %s98
      %p100 = scmp.eq.s32.totalorder %s27, 0
      %p101 = por %p99, %p100
      %s102 = ssub.s32 %s21, %s28
      %p103 = scmp.eq.s32.totalorder %s102, 0
      %s105 = sadd.s32 %s104, 1
      %s106 = scalar_select %p103, %s104, %s105
      %p109 = pneg %p103
      %p110 = scmp.eq.s32.totalorder %s21, 1
      %p111 = por %p109, %p110
      %p112 = scmp.ne.s32.totalorder %s104, %s107
      %p113 = scmp.eq.s32.totalorder %s21, 0
      %p114 = por %p112, %p113
      %p115 = scmp.ne.s32.totalorder %s104, %s107
      %p116 = scmp.eq.s32.totalorder %s26, 1
      %p117 = por %p115, %p116
      %p118 = scmp.ne.s32.totalorder %s107, %s108
      %p119 = scmp.eq.s32.totalorder %s26, 0
      %p120 = por %p118, %p119
      %p121 = scmp.ne.s32.totalorder %s107, %s108
      %p122 = scmp.eq.s32.totalorder %s27, 1
      %p123 = por %p121, %p122
      %p125 = scmp.ne.s32.totalorder %s108, %s124
      %p126 = scmp.eq.s32.totalorder %s27, 0
      %p127 = por %p125, %p126
      %s128 = ssub.s32 %s21, %s28
      %p129 = scmp.eq.s32.totalorder %s128, 0
      %s131 = sadd.s32 %s130, 1
      %s132 = scalar_select %p129, %s130, %s131
      %p135 = pneg %p129
      %p136 = scmp.eq.s32.totalorder %s21, 1
      %p137 = por %p135, %p136
      %p138 = scmp.ne.s32.totalorder %s130, %s133
      %p139 = scmp.eq.s32.totalorder %s21, 0
      %p140 = por %p138, %p139
      %p141 = scmp.ne.s32.totalorder %s130, %s133
      %p142 = scmp.eq.s32.totalorder %s26, 1
      %p143 = por %p141, %p142
      %p144 = scmp.ne.s32.totalorder %s133, %s134
      %p145 = scmp.eq.s32.totalorder %s26, 0
      %p146 = por %p144, %p145
      %p147 = scmp.ne.s32.totalorder %s133, %s134
      %p148 = scmp.eq.s32.totalorder %s27, 1
      %p149 = por %p147, %p148
      %p151 = scmp.ne.s32.totalorder %s134, %s150
      %p152 = scmp.eq.s32.totalorder %s27, 0
      %p153 = por %p151, %p152
      %s154 = ssub.s32 %s21, %s28
      %p155 = scmp.eq.s32.totalorder %s154, 0
      %s157 = sadd.s32 %s156, 1
      %s158 = scalar_select %p155, %s156, %s157
      %p161 = pneg %p155
      %p162 = scmp.eq.s32.totalorder %s21, 1
      %p163 = por %p161, %p162
      %p164 = scmp.ne.s32.totalorder %s156, %s159
      %p165 = scmp.eq.s32.totalorder %s21, 0
      %p166 = por %p164, %p165
      %p167 = scmp.ne.s32.totalorder %s156, %s159
      %p168 = scmp.eq.s32.totalorder %s26, 1
      %p169 = por %p167, %p168
      %p170 = scmp.ne.s32.totalorder %s159, %s160
      %p171 = scmp.eq.s32.totalorder %s26, 0
      %p172 = por %p170, %p171
      %p173 = scmp.ne.s32.totalorder %s159, %s160
      %p174 = scmp.eq.s32.totalorder %s27, 1
      %p175 = por %p173, %p174
      %p177 = scmp.ne.s32.totalorder %s160, %s176
      %p178 = scmp.eq.s32.totalorder %s27, 0
      %p179 = por %p177, %p178
      %s181 = sadd.s32 %s180, 1
      %p184 = scmp.eq.s32.totalorder %s21, 1
      %p185 = scmp.ne.s32.totalorder %s180, %s182
      %p186 = scmp.eq.s32.totalorder %s21, 0
      %p187 = por %p185, %p186
      %p188 = scmp.ne.s32.totalorder %s180, %s182
      %p189 = scmp.eq.s32.totalorder %s26, 1
      %p190 = por %p188, %p189
      %p191 = scmp.ne.s32.totalorder %s182, %s183
      %p192 = scmp.eq.s32.totalorder %s26, 0
      %p193 = por %p191, %p192
      %p194 = scmp.ne.s32.totalorder %s182, %s183
      %p195 = scmp.eq.s32.totalorder %s27, 1
      %p196 = por %p194, %p195
      %p198 = scmp.ne.s32.totalorder %s183, %s197
      %p199 = scmp.eq.s32.totalorder %s27, 0
      %p200 = por %p198, %p199
      %p201 = scmp.le.s32.totalorder 1, %s21
      %p202 = scmp.lt.s32.totalorder %s21, 3
      %p203 = pnand %p201, %p202
      %p204 = pneg %p203
      // Predicated region
      $region9: #{transformer_classifier.1} parent=5 // pred_check
        _
      $region10: #{transformer_classifier.1} parent=5 // pred_check_branch
        %206 = sbr.rel (%p203) target = $region12
      $region11: #{transformer_classifier.1} parent=5 // pred_region
        %s207 = ssub.s32 %s21, 1
        // Predicated region
        $region13: #{transformer_classifier.1} parent=11 // pred_check
          %p208 = pneg %p42
        $region14: #{transformer_classifier.1} parent=11 // pred_check_branch
          %210 = sbr.rel (%p208) target = $region16
        $region15: #{transformer_classifier.1} parent=11 // pred_region
          _
        $region16: #{transformer_classifier.1} parent=11 // pred_fallthru
          _
      $region12: #{transformer_classifier.1} parent=5 // pred_fallthru
        _
      %p211 = scmp.lt.s32.totalorder %s21, 2
      // Predicated region
      $region17: #{transformer_classifier.1} parent=5 // pred_check
        %p212 = pneg %p211
      $region18: #{transformer_classifier.1} parent=5 // pred_check_branch
        %214 = sbr.rel (%p212) target = $region20
      $region19: #{transformer_classifier.1} parent=5 // pred_region
        // Predicated region
        $region21: #{transformer_classifier.1} parent=19 // pred_check
          %p215 = pneg %p62
        $region22: #{transformer_classifier.1} parent=19 // pred_check_branch
          %217 = sbr.rel (%p215) target = $region24
        $region23: #{transformer_classifier.1} parent=19 // pred_region
          %s218 = sand.u32 %s52, 1
          %s219 = scalar_lea.sflag [#allocation3], %s218
          %s220 = sand.u32 %s52, 1
          %s221 = smul.addr %s220, 3072
          %s222 = scalar_lea.vmem [#allocation2], %s221
          %s224 = ssub.s32 49152, 49152
          %225 = vsyncadd %s219, %s224
          %s226 = smul.addr %s21, 768
          %s227 = smul.addr %s226, 64
          %s228 = scalar_lea.hbm %s1, %s227
          %s229 = sshll.u32 %s222, 4
          %s230 = int_to_ptr.vmem [resolvable:$true] %s229
          %235 = dma.hbm_to_vmem [thread:$0]  %s228, 49152, %s230, %s219, 768, 768, 48
        $region24: #{transformer_classifier.1} parent=19 // pred_fallthru
          _
        // Predicated region
        $region25: #{transformer_classifier.1} parent=19 // pred_check
          %p236 = pneg %p88
        $region26: #{transformer_classifier.1} parent=19 // pred_check_branch
          %238 = sbr.rel (%p236) target = $region28
        $region27: #{transformer_classifier.1} parent=19 // pred_region
          %s239 = sand.u32 %s21, 1
          %s240 = scalar_lea.sflag [#allocation5], %s239
          %s241 = sand.u32 %s78, 1
          %s242 = smul.addr %s241, 1024
          %s243 = scalar_lea.vmem [#allocation4], %s242
          %s245 = ssub.s32 16384, 16384
          %246 = vsyncadd %s240, %s245
          %s247 = smul.addr %s21, 256
          %s248 = smul.addr %s247, 64
          %s249 = scalar_lea.hbm %s2, %s248
          %s250 = sshll.u32 %s243, 4
          %s251 = int_to_ptr.vmem [resolvable:$true] %s250
          %256 = dma.hbm_to_vmem [thread:$0]  %s249, 16384, %s251, %s240, 256, 256, 16
        $region28: #{transformer_classifier.1} parent=19 // pred_fallthru
          _
        // Predicated region
        $region29: #{transformer_classifier.1} parent=19 // pred_check
          %p257 = pneg %p114
        $region30: #{transformer_classifier.1} parent=19 // pred_check_branch
          %259 = sbr.rel (%p257) target = $region32
        $region31: #{transformer_classifier.1} parent=19 // pred_region
          %s260 = sand.u32 %s21, 1
          %s261 = scalar_lea.sflag [#allocation5], %s260
          %s262 = sand.u32 %s104, 1
          %s263 = smul.addr %s262, 4096
          %s264 = scalar_lea.vmem [#allocation6], %s263
          %s266 = ssub.s32 65536, 65536
          %267 = vsyncadd %s261, %s266
          %s268 = smul.addr %s21, 1024
          %s269 = smul.addr %s268, 64
          %s270 = scalar_lea.hbm %s3, %s269
          %s271 = sshll.u32 %s264, 4
          %s272 = int_to_ptr.vmem [resolvable:$true] %s271
          %277 = dma.hbm_to_vmem [thread:$0]  %s270, 65536, %s272, %s261, 1024, 1024, 64
        $region32: #{transformer_classifier.1} parent=19 // pred_fallthru
          _
        // Predicated region
        $region33: #{transformer_classifier.1} parent=19 // pred_check
          %p278 = pneg %p140
        $region34: #{transformer_classifier.1} parent=19 // pred_check_branch
          %280 = sbr.rel (%p278) target = $region36
        $region35: #{transformer_classifier.1} parent=19 // pred_region
          %s281 = sand.u32 %s21, 1
          %s282 = scalar_lea.sflag [#allocation8], %s281
          %s283 = sand.u32 %s130, 1
          %s284 = smul.addr %s283, 4096
          %s285 = scalar_lea.vmem [#allocation7], %s284
          %s287 = ssub.s32 65536, 65536
          %288 = vsyncadd %s282, %s287
          %s289 = smul.addr %s21, 1024
          %s290 = smul.addr %s289, 64
          %s291 = scalar_lea.hbm %s4, %s290
          %s292 = sshll.u32 %s285, 4
          %s293 = int_to_ptr.vmem [resolvable:$true] %s292
          %298 = dma.hbm_to_vmem [thread:$0]  %s291, 65536, %s293, %s282, 256, 256, 16
        $region36: #{transformer_classifier.1} parent=19 // pred_fallthru
          _
        // Predicated region
        $region37: #{transformer_classifier.1} parent=19 // pred_check
          %p299 = pneg %p166
        $region38: #{transformer_classifier.1} parent=19 // pred_check_branch
          %301 = sbr.rel (%p299) target = $region40
        $region39: #{transformer_classifier.1} parent=19 // pred_region
          %s302 = sand.u32 %s21, 1
          %s303 = scalar_lea.sflag [#allocation8], %s302
          %s304 = sand.u32 %s156, 1
          %s305 = smul.addr %s304, 52
          %s306 = scalar_lea.vmem [#allocation9], %s305
          %s308 = ssub.s32 832, 832
          %309 = vsyncadd %s303, %s308
          %s310 = smul.addr %s21, 52
          %s311 = smul.addr %s310, 16
          %s312 = scalar_lea.hbm %s5, %s311
          %s314 = sshll.u32 %s306, 4
          %s315 = int_to_ptr.vmem [resolvable:$true] %s314
          %317 = dma.hbm_to_vmem [thread:$0]  %s312, 832, %s315, %s303
        $region40: #{transformer_classifier.1} parent=19 // pred_fallthru
          _
      $region20: #{transformer_classifier.1} parent=5 // pred_fallthru
        _
      %p318 = scmp.le.s32.totalorder 1, %s21
      %p319 = scmp.lt.s32.totalorder %s21, 3
      %p320 = pnand %p318, %p319
      %p321 = pneg %p320
      // Predicated region
      $region41: #{transformer_classifier.1} parent=5 // pred_check
        _
      $region42: #{transformer_classifier.1} parent=5 // pred_check_branch
        %323 = sbr.rel (%p320) target = $region44
      $region43: #{transformer_classifier.1} parent=5 // pred_region
        %s324 = ssub.s32 %s21, 1
        %s325 = sand.u32 %s55, 1
        %s326 = scalar_lea.sflag [#allocation3], %s325
        %s327 = sand.u32 %s55, 1
        %s328 = smul.addr %s327, 3072
        %s329 = scalar_lea.vmem [#allocation2], %s328
        // Predicated region
        $region45: #{transformer_classifier.1} parent=43 // pred_check
          %p330 = pneg %p68
        $region46: #{transformer_classifier.1} parent=43 // pred_check_branch
          %332 = sbr.rel (%p330) target = $region48
        $region47: #{transformer_classifier.1} parent=43 // pred_region
          %333 = dma.done %s326, 49152
        $region48: #{transformer_classifier.1} parent=43 // pred_fallthru
          _
        %s334 = sand.u32 %s26, 1
        %s335 = scalar_lea.sflag [#allocation5], %s334
        %s336 = sand.u32 %s81, 1
        %s337 = smul.addr %s336, 1024
        %s338 = scalar_lea.vmem [#allocation4], %s337
        // Predicated region
        $region49: #{transformer_classifier.1} parent=43 // pred_check
          %p339 = pneg %p94
        $region50: #{transformer_classifier.1} parent=43 // pred_check_branch
          %341 = sbr.rel (%p339) target = $region52
        $region51: #{transformer_classifier.1} parent=43 // pred_region
          %342 = dma.done %s335, 16384
        $region52: #{transformer_classifier.1} parent=43 // pred_fallthru
          _
        %s343 = sand.u32 %s26, 1
        %s344 = scalar_lea.sflag [#allocation5], %s343
        %s345 = sand.u32 %s107, 1
        %s346 = smul.addr %s345, 4096
        %s347 = scalar_lea.vmem [#allocation6], %s346
        // Predicated region
        $region53: #{transformer_classifier.1} parent=43 // pred_check
          %p348 = pneg %p120
        $region54: #{transformer_classifier.1} parent=43 // pred_check_branch
          %350 = sbr.rel (%p348) target = $region56
        $region55: #{transformer_classifier.1} parent=43 // pred_region
          %351 = dma.done %s344, 65536
        $region56: #{transformer_classifier.1} parent=43 // pred_fallthru
          _
        %s352 = sand.u32 %s26, 1
        %s353 = scalar_lea.sflag [#allocation8], %s352
        %s354 = sand.u32 %s133, 1
        %s355 = smul.addr %s354, 4096
        %s356 = scalar_lea.vmem [#allocation7], %s355
        // Predicated region
        $region57: #{transformer_classifier.1} parent=43 // pred_check
          %p357 = pneg %p146
        $region58: #{transformer_classifier.1} parent=43 // pred_check_branch
          %359 = sbr.rel (%p357) target = $region60
        $region59: #{transformer_classifier.1} parent=43 // pred_region
          %360 = dma.done %s353, 65536
        $region60: #{transformer_classifier.1} parent=43 // pred_fallthru
          _
        %s361 = sand.u32 %s26, 1
        %s362 = scalar_lea.sflag [#allocation8], %s361
        %s363 = sand.u32 %s159, 1
        %s364 = smul.addr %s363, 52
        %s365 = scalar_lea.vmem [#allocation9], %s364
        // Predicated region
        $region61: #{transformer_classifier.1} parent=43 // pred_check
          %p366 = pneg %p172
        $region62: #{transformer_classifier.1} parent=43 // pred_check_branch
          %368 = sbr.rel (%p366) target = $region64
        $region63: #{transformer_classifier.1} parent=43 // pred_region
          %369 = dma.done %s362, 832
        $region64: #{transformer_classifier.1} parent=43 // pred_fallthru
          _
        %p370 = pneg %p42
        %p371 = pneg %p39
        %s372 = sand.u32 %s55, 1
        %s373 = scalar_lea.sflag [#allocation3], %s372
        %s374 = sand.u32 %s55, 1
        %s375 = smul.addr %s374, 3072
        %s376 = scalar_lea.vmem [#allocation2], %s375
        %p377 = pneg %p68
        %p378 = pneg %p65
        %s379 = sand.u32 %s26, 1
        %s380 = scalar_lea.sflag [#allocation5], %s379
        %s381 = sand.u32 %s81, 1
        %s382 = smul.addr %s381, 1024
        %s383 = scalar_lea.vmem [#allocation4], %s382
        %p384 = pneg %p94
        %p385 = pneg %p91
        %s386 = sand.u32 %s26, 1
        %s387 = scalar_lea.sflag [#allocation5], %s386
        %s388 = sand.u32 %s107, 1
        %s389 = smul.addr %s388, 4096
        %s390 = scalar_lea.vmem [#allocation6], %s389
        %p391 = pneg %p120
        %p392 = pneg %p117
        %s393 = sand.u32 %s26, 1
        %s394 = scalar_lea.sflag [#allocation8], %s393
        %s395 = sand.u32 %s133, 1
        %s396 = smul.addr %s395, 4096
        %s397 = scalar_lea.vmem [#allocation7], %s396
        %p398 = pneg %p146
        %p399 = pneg %p143
        %s400 = sand.u32 %s26, 1
        %s401 = scalar_lea.sflag [#allocation8], %s400
        %s402 = sand.u32 %s159, 1
        %s403 = smul.addr %s402, 52
        %s404 = scalar_lea.vmem [#allocation9], %s403
        %p405 = pneg %p172
        %p406 = pneg %p169
        %p407 = pneg %p193
        %p408 = pneg %p190
        %p410 = scmp.eq.s32.totalorder %s26, 0
        // Predicated region
        $region65: #{transformer_classifier.1} parent=43 // pred_check
          %p411 = pneg %p410
        $region66: #{transformer_classifier.1} parent=43 // pred_check_branch
          %413 = sbr.rel (%p411) target = $region68
        $region67: #{transformer_classifier.1} parent=43 // pred_region
          %v414 = vld [vmem:[%s0] sm:$0xff]
          %v415 = vld [vmem:[%s0 + $0x8] sm:$0xff]
          %v416 = vld [vmem:[%s0 + $0x10] sm:$0xff]
          %v417 = vld [vmem:[%s0 + $0x18] sm:$0xff]
          %v418 = vld [vmem:[%s0 + $0x20] sm:$0xff]
          %v419 = vld [vmem:[%s0 + $0x28] sm:$0xff]
          %v420 = vld [vmem:[%s0 + $0x30] sm:$0xff]
          %v421 = vld [vmem:[%s0 + $0x38] sm:$0xff]
          %422 = vst [vmem:[%s6] sm:$0xff] %v414
          %423 = vst [vmem:[%s6 + $0x8] sm:$0xff] %v415
          %424 = vst [vmem:[%s6 + $0x10] sm:$0xff] %v416
          %425 = vst [vmem:[%s6 + $0x18] sm:$0xff] %v417
          %426 = vst [vmem:[%s6 + $0x20] sm:$0xff] %v418
          %427 = vst [vmem:[%s6 + $0x28] sm:$0xff] %v419
          %428 = vst [vmem:[%s6 + $0x30] sm:$0xff] %v420
          %429 = vst [vmem:[%s6 + $0x38] sm:$0xff] %v421
        $region68: #{transformer_classifier.1} parent=43 // pred_fallthru
          _
        %v430 = vld [vmem:[%s365] sm:$0xff]
        %v431 = vld [vmem:[%s365 + $0x8] sm:$0xf]
        %v432 = vld [vmem:[%s365 + $0xc] sm:$0xf]
        %v433 = vld [vmem:[%s365 + $0x10] sm:$0xf]
        %v434 = vld [vmem:[%s365 + $0x14] sm:$0xf]
        %v435 = vld [vmem:[%s365 + $0x18] sm:$0xf]
        %v436 = vld [vmem:[%s365 + $0x1c] sm:$0xf]
        %v437 = vld [vmem:[%s365 + $0x20] sm:$0xff]
        %v438 = vld [vmem:[%s365 + $0x28] sm:$0xff]
        %v439 = vld [vmem:[%s365 + $0x30] sm:$0xf]
        %v440 = vld [vmem:[%s6] sm:$0xff]
        %v441 = vld [vmem:[%s6 + $0x8] sm:$0xff]
        %v442 = vld [vmem:[%s6 + $0x10] sm:$0xff]
        %v443 = vld [vmem:[%s6 + $0x18] sm:$0xff]
        %v444 = vld [vmem:[%s6 + $0x20] sm:$0xff]
        %v445 = vld [vmem:[%s6 + $0x28] sm:$0xff]
        %v446 = vld [vmem:[%s6 + $0x30] sm:$0xff]
        %v447 = vld [vmem:[%s6 + $0x38] sm:$0xff]
        %v448 = vpack.c.bf16 %v444, %v440
        %v449 = vpack.c.bf16 %v445, %v441
        %v450 = vpack.c.bf16 %v446, %v442
        %v451 = vpack.c.bf16 %v447, %v443
        %v452 = vld [vmem:[%s329] sm:$0xff]
        %v453 = vld [vmem:[%s329 + $0x8] sm:$0xff]
        %v454 = vld [vmem:[%s329 + $0x10] sm:$0xff]
        %v455 = vld [vmem:[%s329 + $0x18] sm:$0xff]
        %v456 = vld [vmem:[%s329 + $0x20] sm:$0xff]
        %v457 = vld [vmem:[%s329 + $0x28] sm:$0xff]
        %v458 = vld [vmem:[%s329 + $0x30] sm:$0xff]
        %v459 = vld [vmem:[%s329 + $0x38] sm:$0xff]
        %v460 = vld [vmem:[%s329 + $0x40] sm:$0xff]
        %v461 = vld [vmem:[%s329 + $0x48] sm:$0xff]
        %v462 = vld [vmem:[%s329 + $0x50] sm:$0xff]
        %v463 = vld [vmem:[%s329 + $0x58] sm:$0xff]
        %v464 = vld [vmem:[%s329 + $0x60] sm:$0xff]
        %v465 = vld [vmem:[%s329 + $0x68] sm:$0xff]
        %v466 = vld [vmem:[%s329 + $0x70] sm:$0xff]
        %v467 = vld [vmem:[%s329 + $0x78] sm:$0xff]
        %v468 = vld [vmem:[%s329 + $0x80] sm:$0xff]
        %v469 = vld [vmem:[%s329 + $0x88] sm:$0xff]
        %v470 = vld [vmem:[%s329 + $0x90] sm:$0xff]
        %v471 = vld [vmem:[%s329 + $0x98] sm:$0xff]
        %v472 = vld [vmem:[%s329 + $0xa0] sm:$0xff]
        %v473 = vld [vmem:[%s329 + $0xa8] sm:$0xff]
        %v474 = vld [vmem:[%s329 + $0xb0] sm:$0xff]
        %v475 = vld [vmem:[%s329 + $0xb8] sm:$0xff]
        %v476 = vld [vmem:[%s329 + $0xc0] sm:$0xff]
        %v477 = vld [vmem:[%s329 + $0xc8] sm:$0xff]
        %v478 = vld [vmem:[%s329 + $0xd0] sm:$0xff]
        %v479 = vld [vmem:[%s329 + $0xd8] sm:$0xff]
        %v480 = vld [vmem:[%s329 + $0xe0] sm:$0xff]
        %v481 = vld [vmem:[%s329 + $0xe8] sm:$0xff]
        %v482 = vld [vmem:[%s329 + $0xf0] sm:$0xff]
        %v483 = vld [vmem:[%s329 + $0xf8] sm:$0xff]
        %v484 = vld [vmem:[%s329 + $0x100] sm:$0xff]
        %v485 = vld [vmem:[%s329 + $0x108] sm:$0xff]
        %v486 = vld [vmem:[%s329 + $0x110] sm:$0xff]
        %v487 = vld [vmem:[%s329 + $0x118] sm:$0xff]
        %v488 = vld [vmem:[%s329 + $0x120] sm:$0xff]
        %v489 = vld [vmem:[%s329 + $0x128] sm:$0xff]
        %v490 = vld [vmem:[%s329 + $0x130] sm:$0xff]
        %v491 = vld [vmem:[%s329 + $0x138] sm:$0xff]
        %v492 = vld [vmem:[%s329 + $0x140] sm:$0xff]
        %v493 = vld [vmem:[%s329 + $0x148] sm:$0xff]
        %v494 = vld [vmem:[%s329 + $0x150] sm:$0xff]
        %v495 = vld [vmem:[%s329 + $0x158] sm:$0xff]
        %v496 = vld [vmem:[%s329 + $0x160] sm:$0xff]
        %v497 = vld [vmem:[%s329 + $0x168] sm:$0xff]
        %v498 = vld [vmem:[%s329 + $0x170] sm:$0xff]
        %v499 = vld [vmem:[%s329 + $0x178] sm:$0xff]
        %v500 = vld [vmem:[%s329 + $0x180] sm:$0xff]
        %v501 = vld [vmem:[%s329 + $0x188] sm:$0xff]
        %v502 = vld [vmem:[%s329 + $0x190] sm:$0xff]
        %v503 = vld [vmem:[%s329 + $0x198] sm:$0xff]
        %v504 = vld [vmem:[%s329 + $0x1a0] sm:$0xff]
        %v505 = vld [vmem:[%s329 + $0x1a8] sm:$0xff]
        %v506 = vld [vmem:[%s329 + $0x1b0] sm:$0xff]
        %v507 = vld [vmem:[%s329 + $0x1b8] sm:$0xff]
        %v508 = vld [vmem:[%s329 + $0x1c0] sm:$0xff]
        %v509 = vld [vmem:[%s329 + $0x1c8] sm:$0xff]
        %v510 = vld [vmem:[%s329 + $0x1d0] sm:$0xff]
        %v511 = vld [vmem:[%s329 + $0x1d8] sm:$0xff]
        %v512 = vld [vmem:[%s329 + $0x1e0] sm:$0xff]
        %v513 = vld [vmem:[%s329 + $0x1e8] sm:$0xff]
        %v514 = vld [vmem:[%s329 + $0x1f0] sm:$0xff]
        %v515 = vld [vmem:[%s329 + $0x1f8] sm:$0xff]
        %v516 = vld [vmem:[%s329 + $0x200] sm:$0xff]
        %v517 = vld [vmem:[%s329 + $0x208] sm:$0xff]
        %v518 = vld [vmem:[%s329 + $0x210] sm:$0xff]
        %v519 = vld [vmem:[%s329 + $0x218] sm:$0xff]
        %v520 = vld [vmem:[%s329 + $0x220] sm:$0xff]
        %v521 = vld [vmem:[%s329 + $0x228] sm:$0xff]
        %v522 = vld [vmem:[%s329 + $0x230] sm:$0xff]
        %v523 = vld [vmem:[%s329 + $0x238] sm:$0xff]
        %v524 = vld [vmem:[%s329 + $0x240] sm:$0xff]
        %v525 = vld [vmem:[%s329 + $0x248] sm:$0xff]
        %v526 = vld [vmem:[%s329 + $0x250] sm:$0xff]
        %v527 = vld [vmem:[%s329 + $0x258] sm:$0xff]
        %v528 = vld [vmem:[%s329 + $0x260] sm:$0xff]
        %v529 = vld [vmem:[%s329 + $0x268] sm:$0xff]
        %v530 = vld [vmem:[%s329 + $0x270] sm:$0xff]
        %v531 = vld [vmem:[%s329 + $0x278] sm:$0xff]
        %v532 = vld [vmem:[%s329 + $0x280] sm:$0xff]
        %v533 = vld [vmem:[%s329 + $0x288] sm:$0xff]
        %v534 = vld [vmem:[%s329 + $0x290] sm:$0xff]
        %v535 = vld [vmem:[%s329 + $0x298] sm:$0xff]
        %v536 = vld [vmem:[%s329 + $0x2a0] sm:$0xff]
        %v537 = vld [vmem:[%s329 + $0x2a8] sm:$0xff]
        %v538 = vld [vmem:[%s329 + $0x2b0] sm:$0xff]
        %v539 = vld [vmem:[%s329 + $0x2b8] sm:$0xff]
        %v540 = vld [vmem:[%s329 + $0x2c0] sm:$0xff]
        %v541 = vld [vmem:[%s329 + $0x2c8] sm:$0xff]
        %v542 = vld [vmem:[%s329 + $0x2d0] sm:$0xff]
        %v543 = vld [vmem:[%s329 + $0x2d8] sm:$0xff]
        %v544 = vld [vmem:[%s329 + $0x2e0] sm:$0xff]
        %v545 = vld [vmem:[%s329 + $0x2e8] sm:$0xff]
        %v546 = vld [vmem:[%s329 + $0x2f0] sm:$0xff]
        %v547 = vld [vmem:[%s329 + $0x2f8] sm:$0xff]
        %v548 = vld [vmem:[%s329 + $0x300] sm:$0xff]
        %v549 = vld [vmem:[%s329 + $0x308] sm:$0xff]
        %v550 = vld [vmem:[%s329 + $0x310] sm:$0xff]
        %v551 = vld [vmem:[%s329 + $0x318] sm:$0xff]
        %v552 = vld [vmem:[%s329 + $0x320] sm:$0xff]
        %v553 = vld [vmem:[%s329 + $0x328] sm:$0xff]
        %v554 = vld [vmem:[%s329 + $0x330] sm:$0xff]
        %v555 = vld [vmem:[%s329 + $0x338] sm:$0xff]
        %v556 = vld [vmem:[%s329 + $0x340] sm:$0xff]
        %v557 = vld [vmem:[%s329 + $0x348] sm:$0xff]
        %v558 = vld [vmem:[%s329 + $0x350] sm:$0xff]
        %v559 = vld [vmem:[%s329 + $0x358] sm:$0xff]
        %v560 = vld [vmem:[%s329 + $0x360] sm:$0xff]
        %v561 = vld [vmem:[%s329 + $0x368] sm:$0xff]
        %v562 = vld [vmem:[%s329 + $0x370] sm:$0xff]
        %v563 = vld [vmem:[%s329 + $0x378] sm:$0xff]
        %v564 = vld [vmem:[%s329 + $0x380] sm:$0xff]
        %v565 = vld [vmem:[%s329 + $0x388] sm:$0xff]
        %v566 = vld [vmem:[%s329 + $0x390] sm:$0xff]
        %v567 = vld [vmem:[%s329 + $0x398] sm:$0xff]
        %v568 = vld [vmem:[%s329 + $0x3a0] sm:$0xff]
        %v569 = vld [vmem:[%s329 + $0x3a8] sm:$0xff]
        %v570 = vld [vmem:[%s329 + $0x3b0] sm:$0xff]
        %v571 = vld [vmem:[%s329 + $0x3b8] sm:$0xff]
        %v572 = vld [vmem:[%s329 + $0x3c0] sm:$0xff]
        %v573 = vld [vmem:[%s329 + $0x3c8] sm:$0xff]
        %v574 = vld [vmem:[%s329 + $0x3d0] sm:$0xff]
        %v575 = vld [vmem:[%s329 + $0x3d8] sm:$0xff]
        %v576 = vld [vmem:[%s329 + $0x3e0] sm:$0xff]
        %v577 = vld [vmem:[%s329 + $0x3e8] sm:$0xff]
        %v578 = vld [vmem:[%s329 + $0x3f0] sm:$0xff]
        %v579 = vld [vmem:[%s329 + $0x3f8] sm:$0xff]
        %v580 = vld [vmem:[%s329 + $0x400] sm:$0xff]
        %v581 = vld [vmem:[%s329 + $0x408] sm:$0xff]
        %v582 = vld [vmem:[%s329 + $0x410] sm:$0xff]
        %v583 = vld [vmem:[%s329 + $0x418] sm:$0xff]
        %v584 = vld [vmem:[%s329 + $0x420] sm:$0xff]
        %v585 = vld [vmem:[%s329 + $0x428] sm:$0xff]
        %v586 = vld [vmem:[%s329 + $0x430] sm:$0xff]
        %v587 = vld [vmem:[%s329 + $0x438] sm:$0xff]
        %v588 = vld [vmem:[%s329 + $0x440] sm:$0xff]
        %v589 = vld [vmem:[%s329 + $0x448] sm:$0xff]
        %v590 = vld [vmem:[%s329 + $0x450] sm:$0xff]
        %v591 = vld [vmem:[%s329 + $0x458] sm:$0xff]
        %v592 = vld [vmem:[%s329 + $0x460] sm:$0xff]
        %v593 = vld [vmem:[%s329 + $0x468] sm:$0xff]
        %v594 = vld [vmem:[%s329 + $0x470] sm:$0xff]
        %v595 = vld [vmem:[%s329 + $0x478] sm:$0xff]
        %v596 = vld [vmem:[%s329 + $0x480] sm:$0xff]
        %v597 = vld [vmem:[%s329 + $0x488] sm:$0xff]
        %v598 = vld [vmem:[%s329 + $0x490] sm:$0xff]
        %v599 = vld [vmem:[%s329 + $0x498] sm:$0xff]
        %v600 = vld [vmem:[%s329 + $0x4a0] sm:$0xff]
        %v601 = vld [vmem:[%s329 + $0x4a8] sm:$0xff]
        %v602 = vld [vmem:[%s329 + $0x4b0] sm:$0xff]
        %v603 = vld [vmem:[%s329 + $0x4b8] sm:$0xff]
        %v604 = vld [vmem:[%s329 + $0x4c0] sm:$0xff]
        %v605 = vld [vmem:[%s329 + $0x4c8] sm:$0xff]
        %v606 = vld [vmem:[%s329 + $0x4d0] sm:$0xff]
        %v607 = vld [vmem:[%s329 + $0x4d8] sm:$0xff]
        %v608 = vld [vmem:[%s329 + $0x4e0] sm:$0xff]
        %v609 = vld [vmem:[%s329 + $0x4e8] sm:$0xff]
        %v610 = vld [vmem:[%s329 + $0x4f0] sm:$0xff]
        %v611 = vld [vmem:[%s329 + $0x4f8] sm:$0xff]
        %v612 = vld [vmem:[%s329 + $0x500] sm:$0xff]
        %v613 = vld [vmem:[%s329 + $0x508] sm:$0xff]
        %v614 = vld [vmem:[%s329 + $0x510] sm:$0xff]
        %v615 = vld [vmem:[%s329 + $0x518] sm:$0xff]
        %v616 = vld [vmem:[%s329 + $0x520] sm:$0xff]
        %v617 = vld [vmem:[%s329 + $0x528] sm:$0xff]
        %v618 = vld [vmem:[%s329 + $0x530] sm:$0xff]
        %v619 = vld [vmem:[%s329 + $0x538] sm:$0xff]
        %v620 = vld [vmem:[%s329 + $0x540] sm:$0xff]
        %v621 = vld [vmem:[%s329 + $0x548] sm:$0xff]
        %v622 = vld [vmem:[%s329 + $0x550] sm:$0xff]
        %v623 = vld [vmem:[%s329 + $0x558] sm:$0xff]
        %v624 = vld [vmem:[%s329 + $0x560] sm:$0xff]
        %v625 = vld [vmem:[%s329 + $0x568] sm:$0xff]
        %v626 = vld [vmem:[%s329 + $0x570] sm:$0xff]
        %v627 = vld [vmem:[%s329 + $0x578] sm:$0xff]
        %v628 = vld [vmem:[%s329 + $0x580] sm:$0xff]
        %v629 = vld [vmem:[%s329 + $0x588] sm:$0xff]
        %v630 = vld [vmem:[%s329 + $0x590] sm:$0xff]
        %v631 = vld [vmem:[%s329 + $0x598] sm:$0xff]
        %v632 = vld [vmem:[%s329 + $0x5a0] sm:$0xff]
        %v633 = vld [vmem:[%s329 + $0x5a8] sm:$0xff]
        %v634 = vld [vmem:[%s329 + $0x5b0] sm:$0xff]
        %v635 = vld [vmem:[%s329 + $0x5b8] sm:$0xff]
        %v636 = vld [vmem:[%s329 + $0x5c0] sm:$0xff]
        %v637 = vld [vmem:[%s329 + $0x5c8] sm:$0xff]
        %v638 = vld [vmem:[%s329 + $0x5d0] sm:$0xff]
        %v639 = vld [vmem:[%s329 + $0x5d8] sm:$0xff]
        %v640 = vld [vmem:[%s329 + $0x5e0] sm:$0xff]
        %v641 = vld [vmem:[%s329 + $0x5e8] sm:$0xff]
        %v642 = vld [vmem:[%s329 + $0x5f0] sm:$0xff]
        %v643 = vld [vmem:[%s329 + $0x5f8] sm:$0xff]
        %v644 = vld [vmem:[%s329 + $0x600] sm:$0xff]
        %v645 = vld [vmem:[%s329 + $0x608] sm:$0xff]
        %v646 = vld [vmem:[%s329 + $0x610] sm:$0xff]
        %v647 = vld [vmem:[%s329 + $0x618] sm:$0xff]
        %v648 = vld [vmem:[%s329 + $0x620] sm:$0xff]
        %v649 = vld [vmem:[%s329 + $0x628] sm:$0xff]
        %v650 = vld [vmem:[%s329 + $0x630] sm:$0xff]
        %v651 = vld [vmem:[%s329 + $0x638] sm:$0xff]
        %v652 = vld [vmem:[%s329 + $0x640] sm:$0xff]
        %v653 = vld [vmem:[%s329 + $0x648] sm:$0xff]
        %v654 = vld [vmem:[%s329 + $0x650] sm:$0xff]
        %v655 = vld [vmem:[%s329 + $0x658] sm:$0xff]
        %v656 = vld [vmem:[%s329 + $0x660] sm:$0xff]
        %v657 = vld [vmem:[%s329 + $0x668] sm:$0xff]
        %v658 = vld [vmem:[%s329 + $0x670] sm:$0xff]
        %v659 = vld [vmem:[%s329 + $0x678] sm:$0xff]
        %v660 = vld [vmem:[%s329 + $0x680] sm:$0xff]
        %v661 = vld [vmem:[%s329 + $0x688] sm:$0xff]
        %v662 = vld [vmem:[%s329 + $0x690] sm:$0xff]
        %v663 = vld [vmem:[%s329 + $0x698] sm:$0xff]
        %v664 = vld [vmem:[%s329 + $0x6a0] sm:$0xff]
        %v665 = vld [vmem:[%s329 + $0x6a8] sm:$0xff]
        %v666 = vld [vmem:[%s329 + $0x6b0] sm:$0xff]
        %v667 = vld [vmem:[%s329 + $0x6b8] sm:$0xff]
        %v668 = vld [vmem:[%s329 + $0x6c0] sm:$0xff]
        %v669 = vld [vmem:[%s329 + $0x6c8] sm:$0xff]
        %v670 = vld [vmem:[%s329 + $0x6d0] sm:$0xff]
        %v671 = vld [vmem:[%s329 + $0x6d8] sm:$0xff]
        %v672 = vld [vmem:[%s329 + $0x6e0] sm:$0xff]
        %v673 = vld [vmem:[%s329 + $0x6e8] sm:$0xff]
        %v674 = vld [vmem:[%s329 + $0x6f0] sm:$0xff]
        %v675 = vld [vmem:[%s329 + $0x6f8] sm:$0xff]
        %v676 = vld [vmem:[%s329 + $0x700] sm:$0xff]
        %v677 = vld [vmem:[%s329 + $0x708] sm:$0xff]
        %v678 = vld [vmem:[%s329 + $0x710] sm:$0xff]
        %v679 = vld [vmem:[%s329 + $0x718] sm:$0xff]
        %v680 = vld [vmem:[%s329 + $0x720] sm:$0xff]
        %v681 = vld [vmem:[%s329 + $0x728] sm:$0xff]
        %v682 = vld [vmem:[%s329 + $0x730] sm:$0xff]
        %v683 = vld [vmem:[%s329 + $0x738] sm:$0xff]
        %v684 = vld [vmem:[%s329 + $0x740] sm:$0xff]
        %v685 = vld [vmem:[%s329 + $0x748] sm:$0xff]
        %v686 = vld [vmem:[%s329 + $0x750] sm:$0xff]
        %v687 = vld [vmem:[%s329 + $0x758] sm:$0xff]
        %v688 = vld [vmem:[%s329 + $0x760] sm:$0xff]
        %v689 = vld [vmem:[%s329 + $0x768] sm:$0xff]
        %v690 = vld [vmem:[%s329 + $0x770] sm:$0xff]
        %v691 = vld [vmem:[%s329 + $0x778] sm:$0xff]
        %v692 = vld [vmem:[%s329 + $0x780] sm:$0xff]
        %v693 = vld [vmem:[%s329 + $0x788] sm:$0xff]
        %v694 = vld [vmem:[%s329 + $0x790] sm:$0xff]
        %v695 = vld [vmem:[%s329 + $0x798] sm:$0xff]
        %v696 = vld [vmem:[%s329 + $0x7a0] sm:$0xff]
        %v697 = vld [vmem:[%s329 + $0x7a8] sm:$0xff]
        %v698 = vld [vmem:[%s329 + $0x7b0] sm:$0xff]
        %v699 = vld [vmem:[%s329 + $0x7b8] sm:$0xff]
        %v700 = vld [vmem:[%s329 + $0x7c0] sm:$0xff]
        %v701 = vld [vmem:[%s329 + $0x7c8] sm:$0xff]
        %v702 = vld [vmem:[%s329 + $0x7d0] sm:$0xff]
        %v703 = vld [vmem:[%s329 + $0x7d8] sm:$0xff]
        %v704 = vld [vmem:[%s329 + $0x7e0] sm:$0xff]
        %v705 = vld [vmem:[%s329 + $0x7e8] sm:$0xff]
        %v706 = vld [vmem:[%s329 + $0x7f0] sm:$0xff]
        %v707 = vld [vmem:[%s329 + $0x7f8] sm:$0xff]
        %v708 = vld [vmem:[%s329 + $0x800] sm:$0xff]
        %v709 = vld [vmem:[%s329 + $0x808] sm:$0xff]
        %v710 = vld [vmem:[%s329 + $0x810] sm:$0xff]
        %v711 = vld [vmem:[%s329 + $0x818] sm:$0xff]
        %v712 = vld [vmem:[%s329 + $0x820] sm:$0xff]
        %v713 = vld [vmem:[%s329 + $0x828] sm:$0xff]
        %v714 = vld [vmem:[%s329 + $0x830] sm:$0xff]
        %v715 = vld [vmem:[%s329 + $0x838] sm:$0xff]
        %v716 = vld [vmem:[%s329 + $0x840] sm:$0xff]
        %v717 = vld [vmem:[%s329 + $0x848] sm:$0xff]
        %v718 = vld [vmem:[%s329 + $0x850] sm:$0xff]
        %v719 = vld [vmem:[%s329 + $0x858] sm:$0xff]
        %v720 = vld [vmem:[%s329 + $0x860] sm:$0xff]
        %v721 = vld [vmem:[%s329 + $0x868] sm:$0xff]
        %v722 = vld [vmem:[%s329 + $0x870] sm:$0xff]
        %v723 = vld [vmem:[%s329 + $0x878] sm:$0xff]
        %v724 = vld [vmem:[%s329 + $0x880] sm:$0xff]
        %v725 = vld [vmem:[%s329 + $0x888] sm:$0xff]
        %v726 = vld [vmem:[%s329 + $0x890] sm:$0xff]
        %v727 = vld [vmem:[%s329 + $0x898] sm:$0xff]
        %v728 = vld [vmem:[%s329 + $0x8a0] sm:$0xff]
        %v729 = vld [vmem:[%s329 + $0x8a8] sm:$0xff]
        %v730 = vld [vmem:[%s329 + $0x8b0] sm:$0xff]
        %v731 = vld [vmem:[%s329 + $0x8b8] sm:$0xff]
        %v732 = vld [vmem:[%s329 + $0x8c0] sm:$0xff]
        %v733 = vld [vmem:[%s329 + $0x8c8] sm:$0xff]
        %v734 = vld [vmem:[%s329 + $0x8d0] sm:$0xff]
        %v735 = vld [vmem:[%s329 + $0x8d8] sm:$0xff]
        %v736 = vld [vmem:[%s329 + $0x8e0] sm:$0xff]
        %v737 = vld [vmem:[%s329 + $0x8e8] sm:$0xff]
        %v738 = vld [vmem:[%s329 + $0x8f0] sm:$0xff]
        %v739 = vld [vmem:[%s329 + $0x8f8] sm:$0xff]
        %v740 = vld [vmem:[%s329 + $0x900] sm:$0xff]
        %v741 = vld [vmem:[%s329 + $0x908] sm:$0xff]
        %v742 = vld [vmem:[%s329 + $0x910] sm:$0xff]
        %v743 = vld [vmem:[%s329 + $0x918] sm:$0xff]
        %v744 = vld [vmem:[%s329 + $0x920] sm:$0xff]
        %v745 = vld [vmem:[%s329 + $0x928] sm:$0xff]
        %v746 = vld [vmem:[%s329 + $0x930] sm:$0xff]
        %v747 = vld [vmem:[%s329 + $0x938] sm:$0xff]
        %v748 = vld [vmem:[%s329 + $0x940] sm:$0xff]
        %v749 = vld [vmem:[%s329 + $0x948] sm:$0xff]
        %v750 = vld [vmem:[%s329 + $0x950] sm:$0xff]
        %v751 = vld [vmem:[%s329 + $0x958] sm:$0xff]
        %v752 = vld [vmem:[%s329 + $0x960] sm:$0xff]
        %v753 = vld [vmem:[%s329 + $0x968] sm:$0xff]
        %v754 = vld [vmem:[%s329 + $0x970] sm:$0xff]
        %v755 = vld [vmem:[%s329 + $0x978] sm:$0xff]
        %v756 = vld [vmem:[%s329 + $0x980] sm:$0xff]
        %v757 = vld [vmem:[%s329 + $0x988] sm:$0xff]
        %v758 = vld [vmem:[%s329 + $0x990] sm:$0xff]
        %v759 = vld [vmem:[%s329 + $0x998] sm:$0xff]
        %v760 = vld [vmem:[%s329 + $0x9a0] sm:$0xff]
        %v761 = vld [vmem:[%s329 + $0x9a8] sm:$0xff]
        %v762 = vld [vmem:[%s329 + $0x9b0] sm:$0xff]
        %v763 = vld [vmem:[%s329 + $0x9b8] sm:$0xff]
        %v764 = vld [vmem:[%s329 + $0x9c0] sm:$0xff]
        %v765 = vld [vmem:[%s329 + $0x9c8] sm:$0xff]
        %v766 = vld [vmem:[%s329 + $0x9d0] sm:$0xff]
        %v767 = vld [vmem:[%s329 + $0x9d8] sm:$0xff]
        %v768 = vld [vmem:[%s329 + $0x9e0] sm:$0xff]
        %v769 = vld [vmem:[%s329 + $0x9e8] sm:$0xff]
        %v770 = vld [vmem:[%s329 + $0x9f0] sm:$0xff]
        %v771 = vld [vmem:[%s329 + $0x9f8] sm:$0xff]
        %v772 = vld [vmem:[%s329 + $0xa00] sm:$0xff]
        %v773 = vld [vmem:[%s329 + $0xa08] sm:$0xff]
        %v774 = vld [vmem:[%s329 + $0xa10] sm:$0xff]
        %v775 = vld [vmem:[%s329 + $0xa18] sm:$0xff]
        %v776 = vld [vmem:[%s329 + $0xa20] sm:$0xff]
        %v777 = vld [vmem:[%s329 + $0xa28] sm:$0xff]
        %v778 = vld [vmem:[%s329 + $0xa30] sm:$0xff]
        %v779 = vld [vmem:[%s329 + $0xa38] sm:$0xff]
        %v780 = vld [vmem:[%s329 + $0xa40] sm:$0xff]
        %v781 = vld [vmem:[%s329 + $0xa48] sm:$0xff]
        %v782 = vld [vmem:[%s329 + $0xa50] sm:$0xff]
        %v783 = vld [vmem:[%s329 + $0xa58] sm:$0xff]
        %v784 = vld [vmem:[%s329 + $0xa60] sm:$0xff]
        %v785 = vld [vmem:[%s329 + $0xa68] sm:$0xff]
        %v786 = vld [vmem:[%s329 + $0xa70] sm:$0xff]
        %v787 = vld [vmem:[%s329 + $0xa78] sm:$0xff]
        %v788 = vld [vmem:[%s329 + $0xa80] sm:$0xff]
        %v789 = vld [vmem:[%s329 + $0xa88] sm:$0xff]
        %v790 = vld [vmem:[%s329 + $0xa90] sm:$0xff]
        %v791 = vld [vmem:[%s329 + $0xa98] sm:$0xff]
        %v792 = vld [vmem:[%s329 + $0xaa0] sm:$0xff]
        %v793 = vld [vmem:[%s329 + $0xaa8] sm:$0xff]
        %v794 = vld [vmem:[%s329 + $0xab0] sm:$0xff]
        %v795 = vld [vmem:[%s329 + $0xab8] sm:$0xff]
        %v796 = vld [vmem:[%s329 + $0xac0] sm:$0xff]
        %v797 = vld [vmem:[%s329 + $0xac8] sm:$0xff]
        %v798 = vld [vmem:[%s329 + $0xad0] sm:$0xff]
        %v799 = vld [vmem:[%s329 + $0xad8] sm:$0xff]
        %v800 = vld [vmem:[%s329 + $0xae0] sm:$0xff]
        %v801 = vld [vmem:[%s329 + $0xae8] sm:$0xff]
        %v802 = vld [vmem:[%s329 + $0xaf0] sm:$0xff]
        %v803 = vld [vmem:[%s329 + $0xaf8] sm:$0xff]
        %v804 = vld [vmem:[%s329 + $0xb00] sm:$0xff]
        %v805 = vld [vmem:[%s329 + $0xb08] sm:$0xff]
        %v806 = vld [vmem:[%s329 + $0xb10] sm:$0xff]
        %v807 = vld [vmem:[%s329 + $0xb18] sm:$0xff]
        %v808 = vld [vmem:[%s329 + $0xb20] sm:$0xff]
        %v809 = vld [vmem:[%s329 + $0xb28] sm:$0xff]
        %v810 = vld [vmem:[%s329 + $0xb30] sm:$0xff]
        %v811 = vld [vmem:[%s329 + $0xb38] sm:$0xff]
        %v812 = vld [vmem:[%s329 + $0xb40] sm:$0xff]
        %v813 = vld [vmem:[%s329 + $0xb48] sm:$0xff]
        %v814 = vld [vmem:[%s329 + $0xb50] sm:$0xff]
        %v815 = vld [vmem:[%s329 + $0xb58] sm:$0xff]
        %v816 = vld [vmem:[%s329 + $0xb60] sm:$0xff]
        %v817 = vld [vmem:[%s329 + $0xb68] sm:$0xff]
        %v818 = vld [vmem:[%s329 + $0xb70] sm:$0xff]
        %v819 = vld [vmem:[%s329 + $0xb78] sm:$0xff]
        %v820 = vld [vmem:[%s329 + $0xb80] sm:$0xff]
        %v821 = vld [vmem:[%s329 + $0xb88] sm:$0xff]
        %v822 = vld [vmem:[%s329 + $0xb90] sm:$0xff]
        %v823 = vld [vmem:[%s329 + $0xb98] sm:$0xff]
        %v824 = vld [vmem:[%s329 + $0xba0] sm:$0xff]
        %v825 = vld [vmem:[%s329 + $0xba8] sm:$0xff]
        %v826 = vld [vmem:[%s329 + $0xbb0] sm:$0xff]
        %v827 = vld [vmem:[%s329 + $0xbb8] sm:$0xff]
        %v828 = vld [vmem:[%s329 + $0xbc0] sm:$0xff]
        %v829 = vld [vmem:[%s329 + $0xbc8] sm:$0xff]
        %v830 = vld [vmem:[%s329 + $0xbd0] sm:$0xff]
        %v831 = vld [vmem:[%s329 + $0xbd8] sm:$0xff]
        %v832 = vld [vmem:[%s329 + $0xbe0] sm:$0xff]
        %v833 = vld [vmem:[%s329 + $0xbe8] sm:$0xff]
        %v834 = vld [vmem:[%s329 + $0xbf0] sm:$0xff]
        %v835 = vld [vmem:[%s329 + $0xbf8] sm:$0xff]
        %v838 = vlaneseq
        %v839 = vshrl.u32 %v838, 7
        %v840 = vsub.s32 0, %v839
        %v841 = vrot.slane %v430, %v840
        %v842 = vlaneseq
        %v843 = vshrl.u32 %v842, 7
        %v844 = vsub.s32 1, %v843
        %v845 = vrot.slane %v430, %v844
        %v846 = vlaneseq
        %v847 = vshrl.u32 %v846, 7
        %v848 = vsub.s32 2, %v847
        %v849 = vrot.slane %v430, %v848
        %v850 = vlaneseq
        %v851 = vshrl.u32 %v850, 7
        %v852 = vsub.s32 3, %v851
        %v853 = vrot.slane %v430, %v852
        %v854 = vlaneseq
        %v855 = vshrl.u32 %v854, 7
        %v856 = vsub.s32 4, %v855
        %v857 = vrot.slane %v430, %v856
        %v858 = vlaneseq
        %v859 = vshrl.u32 %v858, 7
        %v860 = vsub.s32 5, %v859
        %v861 = vrot.slane %v430, %v860
        %v862 = vlaneseq
        %v863 = vshrl.u32 %v862, 7
        %v864 = vsub.s32 6, %v863
        %v865 = vrot.slane %v430, %v864
        %v866 = vlaneseq
        %v867 = vshrl.u32 %v866, 7
        %v868 = vsub.s32 7, %v867
        %v869 = vrot.slane %v430, %v868
        %v870 = vlaneseq
        %v871 = vshrl.u32 %v870, 7
        %v872 = vsub.s32 0, %v871
        %v873 = vrot.slane %v431, %v872
        %v874 = vlaneseq
        %v875 = vshrl.u32 %v874, 7
        %v876 = vsub.s32 1, %v875
        %v877 = vrot.slane %v431, %v876
        %v878 = vlaneseq
        %v879 = vshrl.u32 %v878, 7
        %v880 = vsub.s32 2, %v879
        %v881 = vrot.slane %v431, %v880
        %v882 = vlaneseq
        %v883 = vshrl.u32 %v882, 7
        %v884 = vsub.s32 3, %v883
        %v885 = vrot.slane %v431, %v884
        %v1282 = vunpack.c.l.b16 %v452
        %v1283 = vunpack.c.h.b16 %v452
        %v1284 = vunpack.c.l.b16 %v453
        %v1285 = vunpack.c.h.b16 %v453
        %v1286 = vunpack.c.l.b16 %v454
        %v1287 = vunpack.c.h.b16 %v454
        %v1288 = vunpack.c.l.b16 %v455
        %v1289 = vunpack.c.h.b16 %v455
        %v1290 = vunpack.c.l.b16 %v456
        %v1291 = vunpack.c.h.b16 %v456
        %v1292 = vunpack.c.l.b16 %v457
        %v1293 = vunpack.c.h.b16 %v457
        %v1294 = vunpack.c.l.b16 %v458
        %v1295 = vunpack.c.h.b16 %v458
        %v1296 = vunpack.c.l.b16 %v459
        %v1297 = vunpack.c.h.b16 %v459
        %v1298 = vunpack.c.l.b16 %v460
        %v1299 = vunpack.c.h.b16 %v460
        %v1300 = vunpack.c.l.b16 %v461
        %v1301 = vunpack.c.h.b16 %v461
        %v1302 = vunpack.c.l.b16 %v462
        %v1303 = vunpack.c.h.b16 %v462
        %v1304 = vunpack.c.l.b16 %v463
        %v1305 = vunpack.c.h.b16 %v463
        %v1306 = vunpack.c.l.b16 %v464
        %v1307 = vunpack.c.h.b16 %v464
        %v1308 = vunpack.c.l.b16 %v465
        %v1309 = vunpack.c.h.b16 %v465
        %v1310 = vunpack.c.l.b16 %v466
        %v1311 = vunpack.c.h.b16 %v466
        %v1312 = vunpack.c.l.b16 %v467
        %v1313 = vunpack.c.h.b16 %v467
        %v1314 = vunpack.c.l.b16 %v468
        %v1315 = vunpack.c.h.b16 %v468
        %v1316 = vunpack.c.l.b16 %v469
        %v1317 = vunpack.c.h.b16 %v469
        %v1318 = vunpack.c.l.b16 %v470
        %v1319 = vunpack.c.h.b16 %v470
        %v1320 = vunpack.c.l.b16 %v471
        %v1321 = vunpack.c.h.b16 %v471
        %v1322 = vunpack.c.l.b16 %v472
        %v1323 = vunpack.c.h.b16 %v472
        %v1324 = vunpack.c.l.b16 %v473
        %v1325 = vunpack.c.h.b16 %v473
        %v1326 = vunpack.c.l.b16 %v474
        %v1327 = vunpack.c.h.b16 %v474
        %v1328 = vunpack.c.l.b16 %v475
        %v1329 = vunpack.c.h.b16 %v475
        %v1330 = vunpack.c.l.b16 %v476
        %v1331 = vunpack.c.h.b16 %v476
        %v1332 = vunpack.c.l.b16 %v477
        %v1333 = vunpack.c.h.b16 %v477
        %v1334 = vunpack.c.l.b16 %v478
        %v1335 = vunpack.c.h.b16 %v478
        %v1336 = vunpack.c.l.b16 %v479
        %v1337 = vunpack.c.h.b16 %v479
        %v1338 = vunpack.c.l.b16 %v480
        %v1339 = vunpack.c.h.b16 %v480
        %v1340 = vunpack.c.l.b16 %v481
        %v1341 = vunpack.c.h.b16 %v481
        %v1342 = vunpack.c.l.b16 %v482
        %v1343 = vunpack.c.h.b16 %v482
        %v1344 = vunpack.c.l.b16 %v483
        %v1345 = vunpack.c.h.b16 %v483
        %v1346 = vunpack.c.l.b16 %v484
        %v1347 = vunpack.c.h.b16 %v484
        %v1348 = vunpack.c.l.b16 %v485
        %v1349 = vunpack.c.h.b16 %v485
        %v1350 = vunpack.c.l.b16 %v486
        %v1351 = vunpack.c.h.b16 %v486
        %v1352 = vunpack.c.l.b16 %v487
        %v1353 = vunpack.c.h.b16 %v487
        %v1354 = vunpack.c.l.b16 %v488
        %v1355 = vunpack.c.h.b16 %v488
        %v1356 = vunpack.c.l.b16 %v489
        %v1357 = vunpack.c.h.b16 %v489
        %v1358 = vunpack.c.l.b16 %v490
        %v1359 = vunpack.c.h.b16 %v490
        %v1360 = vunpack.c.l.b16 %v491
        %v1361 = vunpack.c.h.b16 %v491
        %v1362 = vunpack.c.l.b16 %v492
        %v1363 = vunpack.c.h.b16 %v492
        %v1364 = vunpack.c.l.b16 %v493
        %v1365 = vunpack.c.h.b16 %v493
        %v1366 = vunpack.c.l.b16 %v494
        %v1367 = vunpack.c.h.b16 %v494
        %v1368 = vunpack.c.l.b16 %v495
        %v1369 = vunpack.c.h.b16 %v495
        %v1370 = vunpack.c.l.b16 %v496
        %v1371 = vunpack.c.h.b16 %v496
        %v1372 = vunpack.c.l.b16 %v497
        %v1373 = vunpack.c.h.b16 %v497
        %v1374 = vunpack.c.l.b16 %v498
        %v1375 = vunpack.c.h.b16 %v498
        %v1376 = vunpack.c.l.b16 %v499
        %v1377 = vunpack.c.h.b16 %v499
        %v1378 = vunpack.c.l.b16 %v500
        %v1379 = vunpack.c.h.b16 %v500
        %v1380 = vunpack.c.l.b16 %v501
        %v1381 = vunpack.c.h.b16 %v501
        %v1382 = vunpack.c.l.b16 %v502
        %v1383 = vunpack.c.h.b16 %v502
        %v1384 = vunpack.c.l.b16 %v503
        %v1385 = vunpack.c.h.b16 %v503
        %v1386 = vunpack.c.l.b16 %v504
        %v1387 = vunpack.c.h.b16 %v504
        %v1388 = vunpack.c.l.b16 %v505
        %v1389 = vunpack.c.h.b16 %v505
        %v1390 = vunpack.c.l.b16 %v506
        %v1391 = vunpack.c.h.b16 %v506
        %v1392 = vunpack.c.l.b16 %v507
        %v1393 = vunpack.c.h.b16 %v507
        %v1394 = vunpack.c.l.b16 %v508
        %v1395 = vunpack.c.h.b16 %v508
        %v1396 = vunpack.c.l.b16 %v509
        %v1397 = vunpack.c.h.b16 %v509
        %v1398 = vunpack.c.l.b16 %v510
        %v1399 = vunpack.c.h.b16 %v510
        %v1400 = vunpack.c.l.b16 %v511
        %v1401 = vunpack.c.h.b16 %v511
        %v1402 = vunpack.c.l.b16 %v512
        %v1403 = vunpack.c.h.b16 %v512
        %v1404 = vunpack.c.l.b16 %v513
        %v1405 = vunpack.c.h.b16 %v513
        %v1406 = vunpack.c.l.b16 %v514
        %v1407 = vunpack.c.h.b16 %v514
        %v1408 = vunpack.c.l.b16 %v515
        %v1409 = vunpack.c.h.b16 %v515
        %v1410 = vunpack.c.l.b16 %v516
        %v1411 = vunpack.c.h.b16 %v516
        %v1412 = vunpack.c.l.b16 %v517
        %v1413 = vunpack.c.h.b16 %v517
        %v1414 = vunpack.c.l.b16 %v518
        %v1415 = vunpack.c.h.b16 %v518
        %v1416 = vunpack.c.l.b16 %v519
        %v1417 = vunpack.c.h.b16 %v519
        %v1418 = vunpack.c.l.b16 %v520
        %v1419 = vunpack.c.h.b16 %v520
        %v1420 = vunpack.c.l.b16 %v521
        %v1421 = vunpack.c.h.b16 %v521
        %v1422 = vunpack.c.l.b16 %v522
        %v1423 = vunpack.c.h.b16 %v522
        %v1424 = vunpack.c.l.b16 %v523
        %v1425 = vunpack.c.h.b16 %v523
        %v1426 = vunpack.c.l.b16 %v524
        %v1427 = vunpack.c.h.b16 %v524
        %v1428 = vunpack.c.l.b16 %v525
        %v1429 = vunpack.c.h.b16 %v525
        %v1430 = vunpack.c.l.b16 %v526
        %v1431 = vunpack.c.h.b16 %v526
        %v1432 = vunpack.c.l.b16 %v527
        %v1433 = vunpack.c.h.b16 %v527
        %v1434 = vunpack.c.l.b16 %v528
        %v1435 = vunpack.c.h.b16 %v528
        %v1436 = vunpack.c.l.b16 %v529
        %v1437 = vunpack.c.h.b16 %v529
        %v1438 = vunpack.c.l.b16 %v530
        %v1439 = vunpack.c.h.b16 %v530
        %v1440 = vunpack.c.l.b16 %v531
        %v1441 = vunpack.c.h.b16 %v531
        %v1442 = vunpack.c.l.b16 %v532
        %v1443 = vunpack.c.h.b16 %v532
        %v1444 = vunpack.c.l.b16 %v533
        %v1445 = vunpack.c.h.b16 %v533
        %v1446 = vunpack.c.l.b16 %v534
        %v1447 = vunpack.c.h.b16 %v534
        %v1448 = vunpack.c.l.b16 %v535
        %v1449 = vunpack.c.h.b16 %v535
        %v1450 = vunpack.c.l.b16 %v536
        %v1451 = vunpack.c.h.b16 %v536
        %v1452 = vunpack.c.l.b16 %v537
        %v1453 = vunpack.c.h.b16 %v537
        %v1454 = vunpack.c.l.b16 %v538
        %v1455 = vunpack.c.h.b16 %v538
        %v1456 = vunpack.c.l.b16 %v539
        %v1457 = vunpack.c.h.b16 %v539
        %v1458 = vunpack.c.l.b16 %v540
        %v1459 = vunpack.c.h.b16 %v540
        %v1460 = vunpack.c.l.b16 %v541
        %v1461 = vunpack.c.h.b16 %v541
        %v1462 = vunpack.c.l.b16 %v542
        %v1463 = vunpack.c.h.b16 %v542
        %v1464 = vunpack.c.l.b16 %v543
        %v1465 = vunpack.c.h.b16 %v543
        %v1466 = vunpack.c.l.b16 %v544
        %v1467 = vunpack.c.h.b16 %v544
        %v1468 = vunpack.c.l.b16 %v545
        %v1469 = vunpack.c.h.b16 %v545
        %v1470 = vunpack.c.l.b16 %v546
        %v1471 = vunpack.c.h.b16 %v546
        %v1472 = vunpack.c.l.b16 %v547
        %v1473 = vunpack.c.h.b16 %v547
        %v1474 = vunpack.c.l.b16 %v548
        %v1475 = vunpack.c.h.b16 %v548
        %v1476 = vunpack.c.l.b16 %v549
        %v1477 = vunpack.c.h.b16 %v549
        %v1478 = vunpack.c.l.b16 %v550
        %v1479 = vunpack.c.h.b16 %v550
        %v1480 = vunpack.c.l.b16 %v551
        %v1481 = vunpack.c.h.b16 %v551
        %v1482 = vunpack.c.l.b16 %v552
        %v1483 = vunpack.c.h.b16 %v552
        %v1484 = vunpack.c.l.b16 %v553
        %v1485 = vunpack.c.h.b16 %v553
        %v1486 = vunpack.c.l.b16 %v554
        %v1487 = vunpack.c.h.b16 %v554
        %v1488 = vunpack.c.l.b16 %v555
        %v1489 = vunpack.c.h.b16 %v555
        %v1490 = vunpack.c.l.b16 %v556
        %v1491 = vunpack.c.h.b16 %v556
        %v1492 = vunpack.c.l.b16 %v557
        %v1493 = vunpack.c.h.b16 %v557
        %v1494 = vunpack.c.l.b16 %v558
        %v1495 = vunpack.c.h.b16 %v558
        %v1496 = vunpack.c.l.b16 %v559
        %v1497 = vunpack.c.h.b16 %v559
        %v1498 = vunpack.c.l.b16 %v560
        %v1499 = vunpack.c.h.b16 %v560
        %v1500 = vunpack.c.l.b16 %v561
        %v1501 = vunpack.c.h.b16 %v561
        %v1502 = vunpack.c.l.b16 %v562
        %v1503 = vunpack.c.h.b16 %v562
        %v1504 = vunpack.c.l.b16 %v563
        %v1505 = vunpack.c.h.b16 %v563
        %v1506 = vunpack.c.l.b16 %v564
        %v1507 = vunpack.c.h.b16 %v564
        %v1508 = vunpack.c.l.b16 %v565
        %v1509 = vunpack.c.h.b16 %v565
        %v1510 = vunpack.c.l.b16 %v566
        %v1511 = vunpack.c.h.b16 %v566
        %v1512 = vunpack.c.l.b16 %v567
        %v1513 = vunpack.c.h.b16 %v567
        %v1514 = vunpack.c.l.b16 %v568
        %v1515 = vunpack.c.h.b16 %v568
        %v1516 = vunpack.c.l.b16 %v569
        %v1517 = vunpack.c.h.b16 %v569
        %v1518 = vunpack.c.l.b16 %v570
        %v1519 = vunpack.c.h.b16 %v570
        %v1520 = vunpack.c.l.b16 %v571
        %v1521 = vunpack.c.h.b16 %v571
        %v1522 = vunpack.c.l.b16 %v572
        %v1523 = vunpack.c.h.b16 %v572
        %v1524 = vunpack.c.l.b16 %v573
        %v1525 = vunpack.c.h.b16 %v573
        %v1526 = vunpack.c.l.b16 %v574
        %v1527 = vunpack.c.h.b16 %v574
        %v1528 = vunpack.c.l.b16 %v575
        %v1529 = vunpack.c.h.b16 %v575
        %v1530 = vunpack.c.l.b16 %v576
        %v1531 = vunpack.c.h.b16 %v576
        %v1532 = vunpack.c.l.b16 %v577
        %v1533 = vunpack.c.h.b16 %v577
        %v1534 = vunpack.c.l.b16 %v578
        %v1535 = vunpack.c.h.b16 %v578
        %v1536 = vunpack.c.l.b16 %v579
        %v1537 = vunpack.c.h.b16 %v579
        %v1538 = vunpack.c.l.b16 %v580
        %v1539 = vunpack.c.h.b16 %v580
        %v1540 = vunpack.c.l.b16 %v581
        %v1541 = vunpack.c.h.b16 %v581
        %v1542 = vunpack.c.l.b16 %v582
        %v1543 = vunpack.c.h.b16 %v582
        %v1544 = vunpack.c.l.b16 %v583
        %v1545 = vunpack.c.h.b16 %v583
        %v1546 = vunpack.c.l.b16 %v584
        %v1547 = vunpack.c.h.b16 %v584
        %v1548 = vunpack.c.l.b16 %v585
        %v1549 = vunpack.c.h.b16 %v585
        %v1550 = vunpack.c.l.b16 %v586
        %v1551 = vunpack.c.h.b16 %v586
        %v1552 = vunpack.c.l.b16 %v587
        %v1553 = vunpack.c.h.b16 %v587
        %v1554 = vunpack.c.l.b16 %v588
        %v1555 = vunpack.c.h.b16 %v588
        %v1556 = vunpack.c.l.b16 %v589
        %v1557 = vunpack.c.h.b16 %v589
        %v1558 = vunpack.c.l.b16 %v590
        %v1559 = vunpack.c.h.b16 %v590
        %v1560 = vunpack.c.l.b16 %v591
        %v1561 = vunpack.c.h.b16 %v591
        %v1562 = vunpack.c.l.b16 %v592
        %v1563 = vunpack.c.h.b16 %v592
        %v1564 = vunpack.c.l.b16 %v593
        %v1565 = vunpack.c.h.b16 %v593
        %v1566 = vunpack.c.l.b16 %v594
        %v1567 = vunpack.c.h.b16 %v594
        %v1568 = vunpack.c.l.b16 %v595
        %v1569 = vunpack.c.h.b16 %v595
        %v1570 = vunpack.c.l.b16 %v596
        %v1571 = vunpack.c.h.b16 %v596
        %v1572 = vunpack.c.l.b16 %v597
        %v1573 = vunpack.c.h.b16 %v597
        %v1574 = vunpack.c.l.b16 %v598
        %v1575 = vunpack.c.h.b16 %v598
        %v1576 = vunpack.c.l.b16 %v599
        %v1577 = vunpack.c.h.b16 %v599
        %v1578 = vunpack.c.l.b16 %v600
        %v1579 = vunpack.c.h.b16 %v600
        %v1580 = vunpack.c.l.b16 %v601
        %v1581 = vunpack.c.h.b16 %v601
        %v1582 = vunpack.c.l.b16 %v602
        %v1583 = vunpack.c.h.b16 %v602
        %v1584 = vunpack.c.l.b16 %v603
        %v1585 = vunpack.c.h.b16 %v603
        %v1586 = vunpack.c.l.b16 %v604
        %v1587 = vunpack.c.h.b16 %v604
        %v1588 = vunpack.c.l.b16 %v605
        %v1589 = vunpack.c.h.b16 %v605
        %v1590 = vunpack.c.l.b16 %v606
        %v1591 = vunpack.c.h.b16 %v606
        %v1592 = vunpack.c.l.b16 %v607
        %v1593 = vunpack.c.h.b16 %v607
        %v1594 = vunpack.c.l.b16 %v608
        %v1595 = vunpack.c.h.b16 %v608
        %v1596 = vunpack.c.l.b16 %v609
        %v1597 = vunpack.c.h.b16 %v609
        %v1598 = vunpack.c.l.b16 %v610
        %v1599 = vunpack.c.h.b16 %v610
        %v1600 = vunpack.c.l.b16 %v611
        %v1601 = vunpack.c.h.b16 %v611
        %v1602 = vunpack.c.l.b16 %v612
        %v1603 = vunpack.c.h.b16 %v612
        %v1604 = vunpack.c.l.b16 %v613
        %v1605 = vunpack.c.h.b16 %v613
        %v1606 = vunpack.c.l.b16 %v614
        %v1607 = vunpack.c.h.b16 %v614
        %v1608 = vunpack.c.l.b16 %v615
        %v1609 = vunpack.c.h.b16 %v615
        %v1610 = vunpack.c.l.b16 %v616
        %v1611 = vunpack.c.h.b16 %v616
        %v1612 = vunpack.c.l.b16 %v617
        %v1613 = vunpack.c.h.b16 %v617
        %v1614 = vunpack.c.l.b16 %v618
        %v1615 = vunpack.c.h.b16 %v618
        %v1616 = vunpack.c.l.b16 %v619
        %v1617 = vunpack.c.h.b16 %v619
        %v1618 = vunpack.c.l.b16 %v620
        %v1619 = vunpack.c.h.b16 %v620
        %v1620 = vunpack.c.l.b16 %v621
        %v1621 = vunpack.c.h.b16 %v621
        %v1622 = vunpack.c.l.b16 %v622
        %v1623 = vunpack.c.h.b16 %v622
        %v1624 = vunpack.c.l.b16 %v623
        %v1625 = vunpack.c.h.b16 %v623
        %v1626 = vunpack.c.l.b16 %v624
        %v1627 = vunpack.c.h.b16 %v624
        %v1628 = vunpack.c.l.b16 %v625
        %v1629 = vunpack.c.h.b16 %v625
        %v1630 = vunpack.c.l.b16 %v626
        %v1631 = vunpack.c.h.b16 %v626
        %v1632 = vunpack.c.l.b16 %v627
        %v1633 = vunpack.c.h.b16 %v627
        %v1634 = vunpack.c.l.b16 %v628
        %v1635 = vunpack.c.h.b16 %v628
        %v1636 = vunpack.c.l.b16 %v629
        %v1637 = vunpack.c.h.b16 %v629
        %v1638 = vunpack.c.l.b16 %v630
        %v1639 = vunpack.c.h.b16 %v630
        %v1640 = vunpack.c.l.b16 %v631
        %v1641 = vunpack.c.h.b16 %v631
        %v1642 = vunpack.c.l.b16 %v632
        %v1643 = vunpack.c.h.b16 %v632
        %v1644 = vunpack.c.l.b16 %v633
        %v1645 = vunpack.c.h.b16 %v633
        %v1646 = vunpack.c.l.b16 %v634
        %v1647 = vunpack.c.h.b16 %v634
        %v1648 = vunpack.c.l.b16 %v635
        %v1649 = vunpack.c.h.b16 %v635
        %v1650 = vunpack.c.l.b16 %v636
        %v1651 = vunpack.c.h.b16 %v636
        %v1652 = vunpack.c.l.b16 %v637
        %v1653 = vunpack.c.h.b16 %v637
        %v1654 = vunpack.c.l.b16 %v638
        %v1655 = vunpack.c.h.b16 %v638
        %v1656 = vunpack.c.l.b16 %v639
        %v1657 = vunpack.c.h.b16 %v639
        %v1658 = vunpack.c.l.b16 %v640
        %v1659 = vunpack.c.h.b16 %v640
        %v1660 = vunpack.c.l.b16 %v641
        %v1661 = vunpack.c.h.b16 %v641
        %v1662 = vunpack.c.l.b16 %v642
        %v1663 = vunpack.c.h.b16 %v642
        %v1664 = vunpack.c.l.b16 %v643
        %v1665 = vunpack.c.h.b16 %v643
        %v1666 = vunpack.c.l.b16 %v644
        %v1667 = vunpack.c.h.b16 %v644
        %v1668 = vunpack.c.l.b16 %v645
        %v1669 = vunpack.c.h.b16 %v645
        %v1670 = vunpack.c.l.b16 %v646
        %v1671 = vunpack.c.h.b16 %v646
        %v1672 = vunpack.c.l.b16 %v647
        %v1673 = vunpack.c.h.b16 %v647
        %v1674 = vunpack.c.l.b16 %v648
        %v1675 = vunpack.c.h.b16 %v648
        %v1676 = vunpack.c.l.b16 %v649
        %v1677 = vunpack.c.h.b16 %v649
        %v1678 = vunpack.c.l.b16 %v650
        %v1679 = vunpack.c.h.b16 %v650
        %v1680 = vunpack.c.l.b16 %v651
        %v1681 = vunpack.c.h.b16 %v651
        %v1682 = vunpack.c.l.b16 %v652
        %v1683 = vunpack.c.h.b16 %v652
        %v1684 = vunpack.c.l.b16 %v653
        %v1685 = vunpack.c.h.b16 %v653
        %v1686 = vunpack.c.l.b16 %v654
        %v1687 = vunpack.c.h.b16 %v654
        %v1688 = vunpack.c.l.b16 %v655
        %v1689 = vunpack.c.h.b16 %v655
        %v1690 = vunpack.c.l.b16 %v656
        %v1691 = vunpack.c.h.b16 %v656
        %v1692 = vunpack.c.l.b16 %v657
        %v1693 = vunpack.c.h.b16 %v657
        %v1694 = vunpack.c.l.b16 %v658
        %v1695 = vunpack.c.h.b16 %v658
        %v1696 = vunpack.c.l.b16 %v659
        %v1697 = vunpack.c.h.b16 %v659
        %v1698 = vunpack.c.l.b16 %v660
        %v1699 = vunpack.c.h.b16 %v660
        %v1700 = vunpack.c.l.b16 %v661
        %v1701 = vunpack.c.h.b16 %v661
        %v1702 = vunpack.c.l.b16 %v662
        %v1703 = vunpack.c.h.b16 %v662
        %v1704 = vunpack.c.l.b16 %v663
        %v1705 = vunpack.c.h.b16 %v663
        %v1706 = vunpack.c.l.b16 %v664
        %v1707 = vunpack.c.h.b16 %v664
        %v1708 = vunpack.c.l.b16 %v665
        %v1709 = vunpack.c.h.b16 %v665
        %v1710 = vunpack.c.l.b16 %v666
        %v1711 = vunpack.c.h.b16 %v666
        %v1712 = vunpack.c.l.b16 %v667
        %v1713 = vunpack.c.h.b16 %v667
        %v1714 = vunpack.c.l.b16 %v668
        %v1715 = vunpack.c.h.b16 %v668
        %v1716 = vunpack.c.l.b16 %v669
        %v1717 = vunpack.c.h.b16 %v669
        %v1718 = vunpack.c.l.b16 %v670
        %v1719 = vunpack.c.h.b16 %v670
        %v1720 = vunpack.c.l.b16 %v671
        %v1721 = vunpack.c.h.b16 %v671
        %v1722 = vunpack.c.l.b16 %v672
        %v1723 = vunpack.c.h.b16 %v672
        %v1724 = vunpack.c.l.b16 %v673
        %v1725 = vunpack.c.h.b16 %v673
        %v1726 = vunpack.c.l.b16 %v674
        %v1727 = vunpack.c.h.b16 %v674
        %v1728 = vunpack.c.l.b16 %v675
        %v1729 = vunpack.c.h.b16 %v675
        %v1730 = vunpack.c.l.b16 %v676
        %v1731 = vunpack.c.h.b16 %v676
        %v1732 = vunpack.c.l.b16 %v677
        %v1733 = vunpack.c.h.b16 %v677
        %v1734 = vunpack.c.l.b16 %v678
        %v1735 = vunpack.c.h.b16 %v678
        %v1736 = vunpack.c.l.b16 %v679
        %v1737 = vunpack.c.h.b16 %v679
        %v1738 = vunpack.c.l.b16 %v680
        %v1739 = vunpack.c.h.b16 %v680
        %v1740 = vunpack.c.l.b16 %v681
        %v1741 = vunpack.c.h.b16 %v681
        %v1742 = vunpack.c.l.b16 %v682
        %v1743 = vunpack.c.h.b16 %v682
        %v1744 = vunpack.c.l.b16 %v683
        %v1745 = vunpack.c.h.b16 %v683
        %v1746 = vunpack.c.l.b16 %v684
        %v1747 = vunpack.c.h.b16 %v684
        %v1748 = vunpack.c.l.b16 %v685
        %v1749 = vunpack.c.h.b16 %v685
        %v1750 = vunpack.c.l.b16 %v686
        %v1751 = vunpack.c.h.b16 %v686
        %v1752 = vunpack.c.l.b16 %v687
        %v1753 = vunpack.c.h.b16 %v687
        %v1754 = vunpack.c.l.b16 %v688
        %v1755 = vunpack.c.h.b16 %v688
        %v1756 = vunpack.c.l.b16 %v689
        %v1757 = vunpack.c.h.b16 %v689
        %v1758 = vunpack.c.l.b16 %v690
        %v1759 = vunpack.c.h.b16 %v690
        %v1760 = vunpack.c.l.b16 %v691
        %v1761 = vunpack.c.h.b16 %v691
        %v1762 = vunpack.c.l.b16 %v692
        %v1763 = vunpack.c.h.b16 %v692
        %v1764 = vunpack.c.l.b16 %v693
        %v1765 = vunpack.c.h.b16 %v693
        %v1766 = vunpack.c.l.b16 %v694
        %v1767 = vunpack.c.h.b16 %v694
        %v1768 = vunpack.c.l.b16 %v695
        %v1769 = vunpack.c.h.b16 %v695
        %v1770 = vunpack.c.l.b16 %v696
        %v1771 = vunpack.c.h.b16 %v696
        %v1772 = vunpack.c.l.b16 %v697
        %v1773 = vunpack.c.h.b16 %v697
        %v1774 = vunpack.c.l.b16 %v698
        %v1775 = vunpack.c.h.b16 %v698
        %v1776 = vunpack.c.l.b16 %v699
        %v1777 = vunpack.c.h.b16 %v699
        %v1778 = vunpack.c.l.b16 %v700
        %v1779 = vunpack.c.h.b16 %v700
        %v1780 = vunpack.c.l.b16 %v701
        %v1781 = vunpack.c.h.b16 %v701
        %v1782 = vunpack.c.l.b16 %v702
        %v1783 = vunpack.c.h.b16 %v702
        %v1784 = vunpack.c.l.b16 %v703
        %v1785 = vunpack.c.h.b16 %v703
        %v1786 = vunpack.c.l.b16 %v704
        %v1787 = vunpack.c.h.b16 %v704
        %v1788 = vunpack.c.l.b16 %v705
        %v1789 = vunpack.c.h.b16 %v705
        %v1790 = vunpack.c.l.b16 %v706
        %v1791 = vunpack.c.h.b16 %v706
        %v1792 = vunpack.c.l.b16 %v707
        %v1793 = vunpack.c.h.b16 %v707
        %v1794 = vunpack.c.l.b16 %v708
        %v1795 = vunpack.c.h.b16 %v708
        %v1796 = vunpack.c.l.b16 %v709
        %v1797 = vunpack.c.h.b16 %v709
        %v1798 = vunpack.c.l.b16 %v710
        %v1799 = vunpack.c.h.b16 %v710
        %v1800 = vunpack.c.l.b16 %v711
        %v1801 = vunpack.c.h.b16 %v711
        %v1802 = vunpack.c.l.b16 %v712
        %v1803 = vunpack.c.h.b16 %v712
        %v1804 = vunpack.c.l.b16 %v713
        %v1805 = vunpack.c.h.b16 %v713
        %v1806 = vunpack.c.l.b16 %v714
        %v1807 = vunpack.c.h.b16 %v714
        %v1808 = vunpack.c.l.b16 %v715
        %v1809 = vunpack.c.h.b16 %v715
        %v1810 = vunpack.c.l.b16 %v716
        %v1811 = vunpack.c.h.b16 %v716
        %v1812 = vunpack.c.l.b16 %v717
        %v1813 = vunpack.c.h.b16 %v717
        %v1814 = vunpack.c.l.b16 %v718
        %v1815 = vunpack.c.h.b16 %v718
        %v1816 = vunpack.c.l.b16 %v719
        %v1817 = vunpack.c.h.b16 %v719
        %v1818 = vunpack.c.l.b16 %v720
        %v1819 = vunpack.c.h.b16 %v720
        %v1820 = vunpack.c.l.b16 %v721
        %v1821 = vunpack.c.h.b16 %v721
        %v1822 = vunpack.c.l.b16 %v722
        %v1823 = vunpack.c.h.b16 %v722
        %v1824 = vunpack.c.l.b16 %v723
        %v1825 = vunpack.c.h.b16 %v723
        %v1826 = vunpack.c.l.b16 %v724
        %v1827 = vunpack.c.h.b16 %v724
        %v1828 = vunpack.c.l.b16 %v725
        %v1829 = vunpack.c.h.b16 %v725
        %v1830 = vunpack.c.l.b16 %v726
        %v1831 = vunpack.c.h.b16 %v726
        %v1832 = vunpack.c.l.b16 %v727
        %v1833 = vunpack.c.h.b16 %v727
        %v1834 = vunpack.c.l.b16 %v728
        %v1835 = vunpack.c.h.b16 %v728
        %v1836 = vunpack.c.l.b16 %v729
        %v1837 = vunpack.c.h.b16 %v729
        %v1838 = vunpack.c.l.b16 %v730
        %v1839 = vunpack.c.h.b16 %v730
        %v1840 = vunpack.c.l.b16 %v731
        %v1841 = vunpack.c.h.b16 %v731
        %v1842 = vunpack.c.l.b16 %v732
        %v1843 = vunpack.c.h.b16 %v732
        %v1844 = vunpack.c.l.b16 %v733
        %v1845 = vunpack.c.h.b16 %v733
        %v1846 = vunpack.c.l.b16 %v734
        %v1847 = vunpack.c.h.b16 %v734
        %v1848 = vunpack.c.l.b16 %v735
        %v1849 = vunpack.c.h.b16 %v735
        %v1850 = vunpack.c.l.b16 %v736
        %v1851 = vunpack.c.h.b16 %v736
        %v1852 = vunpack.c.l.b16 %v737
        %v1853 = vunpack.c.h.b16 %v737
        %v1854 = vunpack.c.l.b16 %v738
        %v1855 = vunpack.c.h.b16 %v738
        %v1856 = vunpack.c.l.b16 %v739
        %v1857 = vunpack.c.h.b16 %v739
        %v1858 = vunpack.c.l.b16 %v740
        %v1859 = vunpack.c.h.b16 %v740
        %v1860 = vunpack.c.l.b16 %v741
        %v1861 = vunpack.c.h.b16 %v741
        %v1862 = vunpack.c.l.b16 %v742
        %v1863 = vunpack.c.h.b16 %v742
        %v1864 = vunpack.c.l.b16 %v743
        %v1865 = vunpack.c.h.b16 %v743
        %v1866 = vunpack.c.l.b16 %v744
        %v1867 = vunpack.c.h.b16 %v744
        %v1868 = vunpack.c.l.b16 %v745
        %v1869 = vunpack.c.h.b16 %v745
        %v1870 = vunpack.c.l.b16 %v746
        %v1871 = vunpack.c.h.b16 %v746
        %v1872 = vunpack.c.l.b16 %v747
        %v1873 = vunpack.c.h.b16 %v747
        %v1874 = vunpack.c.l.b16 %v748
        %v1875 = vunpack.c.h.b16 %v748
        %v1876 = vunpack.c.l.b16 %v749
        %v1877 = vunpack.c.h.b16 %v749
        %v1878 = vunpack.c.l.b16 %v750
        %v1879 = vunpack.c.h.b16 %v750
        %v1880 = vunpack.c.l.b16 %v751
        %v1881 = vunpack.c.h.b16 %v751
        %v1882 = vunpack.c.l.b16 %v752
        %v1883 = vunpack.c.h.b16 %v752
        %v1884 = vunpack.c.l.b16 %v753
        %v1885 = vunpack.c.h.b16 %v753
        %v1886 = vunpack.c.l.b16 %v754
        %v1887 = vunpack.c.h.b16 %v754
        %v1888 = vunpack.c.l.b16 %v755
        %v1889 = vunpack.c.h.b16 %v755
        %v1890 = vunpack.c.l.b16 %v756
        %v1891 = vunpack.c.h.b16 %v756
        %v1892 = vunpack.c.l.b16 %v757
        %v1893 = vunpack.c.h.b16 %v757
        %v1894 = vunpack.c.l.b16 %v758
        %v1895 = vunpack.c.h.b16 %v758
        %v1896 = vunpack.c.l.b16 %v759
        %v1897 = vunpack.c.h.b16 %v759
        %v1898 = vunpack.c.l.b16 %v760
        %v1899 = vunpack.c.h.b16 %v760
        %v1900 = vunpack.c.l.b16 %v761
        %v1901 = vunpack.c.h.b16 %v761
        %v1902 = vunpack.c.l.b16 %v762
        %v1903 = vunpack.c.h.b16 %v762
        %v1904 = vunpack.c.l.b16 %v763
        %v1905 = vunpack.c.h.b16 %v763
        %v1906 = vunpack.c.l.b16 %v764
        %v1907 = vunpack.c.h.b16 %v764
        %v1908 = vunpack.c.l.b16 %v765
        %v1909 = vunpack.c.h.b16 %v765
        %v1910 = vunpack.c.l.b16 %v766
        %v1911 = vunpack.c.h.b16 %v766
        %v1912 = vunpack.c.l.b16 %v767
        %v1913 = vunpack.c.h.b16 %v767
        %v1914 = vunpack.c.l.b16 %v768
        %v1915 = vunpack.c.h.b16 %v768
        %v1916 = vunpack.c.l.b16 %v769
        %v1917 = vunpack.c.h.b16 %v769
        %v1918 = vunpack.c.l.b16 %v770
        %v1919 = vunpack.c.h.b16 %v770
        %v1920 = vunpack.c.l.b16 %v771
        %v1921 = vunpack.c.h.b16 %v771
        %v1922 = vunpack.c.l.b16 %v772
        %v1923 = vunpack.c.h.b16 %v772
        %v1924 = vunpack.c.l.b16 %v773
        %v1925 = vunpack.c.h.b16 %v773
        %v1926 = vunpack.c.l.b16 %v774
        %v1927 = vunpack.c.h.b16 %v774
        %v1928 = vunpack.c.l.b16 %v775
        %v1929 = vunpack.c.h.b16 %v775
        %v1930 = vunpack.c.l.b16 %v776
        %v1931 = vunpack.c.h.b16 %v776
        %v1932 = vunpack.c.l.b16 %v777
        %v1933 = vunpack.c.h.b16 %v777
        %v1934 = vunpack.c.l.b16 %v778
        %v1935 = vunpack.c.h.b16 %v778
        %v1936 = vunpack.c.l.b16 %v779
        %v1937 = vunpack.c.h.b16 %v779
        %v1938 = vunpack.c.l.b16 %v780
        %v1939 = vunpack.c.h.b16 %v780
        %v1940 = vunpack.c.l.b16 %v781
        %v1941 = vunpack.c.h.b16 %v781
        %v1942 = vunpack.c.l.b16 %v782
        %v1943 = vunpack.c.h.b16 %v782
        %v1944 = vunpack.c.l.b16 %v783
        %v1945 = vunpack.c.h.b16 %v783
        %v1946 = vunpack.c.l.b16 %v784
        %v1947 = vunpack.c.h.b16 %v784
        %v1948 = vunpack.c.l.b16 %v785
        %v1949 = vunpack.c.h.b16 %v785
        %v1950 = vunpack.c.l.b16 %v786
        %v1951 = vunpack.c.h.b16 %v786
        %v1952 = vunpack.c.l.b16 %v787
        %v1953 = vunpack.c.h.b16 %v787
        %v1954 = vunpack.c.l.b16 %v788
        %v1955 = vunpack.c.h.b16 %v788
        %v1956 = vunpack.c.l.b16 %v789
        %v1957 = vunpack.c.h.b16 %v789
        %v1958 = vunpack.c.l.b16 %v790
        %v1959 = vunpack.c.h.b16 %v790
        %v1960 = vunpack.c.l.b16 %v791
        %v1961 = vunpack.c.h.b16 %v791
        %v1962 = vunpack.c.l.b16 %v792
        %v1963 = vunpack.c.h.b16 %v792
        %v1964 = vunpack.c.l.b16 %v793
        %v1965 = vunpack.c.h.b16 %v793
        %v1966 = vunpack.c.l.b16 %v794
        %v1967 = vunpack.c.h.b16 %v794
        %v1968 = vunpack.c.l.b16 %v795
        %v1969 = vunpack.c.h.b16 %v795
        %v1970 = vunpack.c.l.b16 %v796
        %v1971 = vunpack.c.h.b16 %v796
        %v1972 = vunpack.c.l.b16 %v797
        %v1973 = vunpack.c.h.b16 %v797
        %v1974 = vunpack.c.l.b16 %v798
        %v1975 = vunpack.c.h.b16 %v798
        %v1976 = vunpack.c.l.b16 %v799
        %v1977 = vunpack.c.h.b16 %v799
        %v1978 = vunpack.c.l.b16 %v800
        %v1979 = vunpack.c.h.b16 %v800
        %v1980 = vunpack.c.l.b16 %v801
        %v1981 = vunpack.c.h.b16 %v801
        %v1982 = vunpack.c.l.b16 %v802
        %v1983 = vunpack.c.h.b16 %v802
        %v1984 = vunpack.c.l.b16 %v803
        %v1985 = vunpack.c.h.b16 %v803
        %v1986 = vunpack.c.l.b16 %v804
        %v1987 = vunpack.c.h.b16 %v804
        %v1988 = vunpack.c.l.b16 %v805
        %v1989 = vunpack.c.h.b16 %v805
        %v1990 = vunpack.c.l.b16 %v806
        %v1991 = vunpack.c.h.b16 %v806
        %v1992 = vunpack.c.l.b16 %v807
        %v1993 = vunpack.c.h.b16 %v807
        %v1994 = vunpack.c.l.b16 %v808
        %v1995 = vunpack.c.h.b16 %v808
        %v1996 = vunpack.c.l.b16 %v809
        %v1997 = vunpack.c.h.b16 %v809
        %v1998 = vunpack.c.l.b16 %v810
        %v1999 = vunpack.c.h.b16 %v810
        %v2000 = vunpack.c.l.b16 %v811
        %v2001 = vunpack.c.h.b16 %v811
        %v2002 = vunpack.c.l.b16 %v812
        %v2003 = vunpack.c.h.b16 %v812
        %v2004 = vunpack.c.l.b16 %v813
        %v2005 = vunpack.c.h.b16 %v813
        %v2006 = vunpack.c.l.b16 %v814
        %v2007 = vunpack.c.h.b16 %v814
        %v2008 = vunpack.c.l.b16 %v815
        %v2009 = vunpack.c.h.b16 %v815
        %v2010 = vunpack.c.l.b16 %v816
        %v2011 = vunpack.c.h.b16 %v816
        %v2012 = vunpack.c.l.b16 %v817
        %v2013 = vunpack.c.h.b16 %v817
        %v2014 = vunpack.c.l.b16 %v818
        %v2015 = vunpack.c.h.b16 %v818
        %v2016 = vunpack.c.l.b16 %v819
        %v2017 = vunpack.c.h.b16 %v819
        %v2018 = vunpack.c.l.b16 %v820
        %v2019 = vunpack.c.h.b16 %v820
        %v2020 = vunpack.c.l.b16 %v821
        %v2021 = vunpack.c.h.b16 %v821
        %v2022 = vunpack.c.l.b16 %v822
        %v2023 = vunpack.c.h.b16 %v822
        %v2024 = vunpack.c.l.b16 %v823
        %v2025 = vunpack.c.h.b16 %v823
        %v2026 = vunpack.c.l.b16 %v824
        %v2027 = vunpack.c.h.b16 %v824
        %v2028 = vunpack.c.l.b16 %v825
        %v2029 = vunpack.c.h.b16 %v825
        %v2030 = vunpack.c.l.b16 %v826
        %v2031 = vunpack.c.h.b16 %v826
        %v2032 = vunpack.c.l.b16 %v827
        %v2033 = vunpack.c.h.b16 %v827
        %v2034 = vunpack.c.l.b16 %v828
        %v2035 = vunpack.c.h.b16 %v828
        %v2036 = vunpack.c.l.b16 %v829
        %v2037 = vunpack.c.h.b16 %v829
        %v2038 = vunpack.c.l.b16 %v830
        %v2039 = vunpack.c.h.b16 %v830
        %v2040 = vunpack.c.l.b16 %v831
        %v2041 = vunpack.c.h.b16 %v831
        %v2042 = vunpack.c.l.b16 %v832
        %v2043 = vunpack.c.h.b16 %v832
        %v2044 = vunpack.c.l.b16 %v833
        %v2045 = vunpack.c.h.b16 %v833
        %v2046 = vunpack.c.l.b16 %v834
        %v2047 = vunpack.c.h.b16 %v834
        %v2048 = vunpack.c.l.b16 %v835
        %v2049 = vunpack.c.h.b16 %v835
        %v2050 = vpack.c.b16 %v1294, %v1282
        %v2051 = vpack.c.b16 %v1295, %v1283
        %v2052 = vpack.c.b16 %v1296, %v1284
        %v2053 = vpack.c.b16 %v1297, %v1285
        %v2054 = vpack.c.b16 %v1298, %v1286
        %v2055 = vpack.c.b16 %v1299, %v1287
        %v2056 = vpack.c.b16 %v1300, %v1288
        %v2057 = vpack.c.b16 %v1301, %v1289
        %v2058 = vpack.c.b16 %v1302, %v1290
        %v2059 = vpack.c.b16 %v1303, %v1291
        %v2060 = vpack.c.b16 %v1304, %v1292
        %v2061 = vpack.c.b16 %v1305, %v1293
        %v2062 = vpack.c.b16 %v1318, %v1306
        %v2063 = vpack.c.b16 %v1319, %v1307
        %v2064 = vpack.c.b16 %v1320, %v1308
        %v2065 = vpack.c.b16 %v1321, %v1309
        %v2066 = vpack.c.b16 %v1322, %v1310
        %v2067 = vpack.c.b16 %v1323, %v1311
        %v2068 = vpack.c.b16 %v1324, %v1312
        %v2069 = vpack.c.b16 %v1325, %v1313
        %v2070 = vpack.c.b16 %v1326, %v1314
        %v2071 = vpack.c.b16 %v1327, %v1315
        %v2072 = vpack.c.b16 %v1328, %v1316
        %v2073 = vpack.c.b16 %v1329, %v1317
        %v2074 = vpack.c.b16 %v1342, %v1330
        %v2075 = vpack.c.b16 %v1343, %v1331
        %v2076 = vpack.c.b16 %v1344, %v1332
        %v2077 = vpack.c.b16 %v1345, %v1333
        %v2078 = vpack.c.b16 %v1346, %v1334
        %v2079 = vpack.c.b16 %v1347, %v1335
        %v2080 = vpack.c.b16 %v1348, %v1336
        %v2081 = vpack.c.b16 %v1349, %v1337
        %v2082 = vpack.c.b16 %v1350, %v1338
        %v2083 = vpack.c.b16 %v1351, %v1339
        %v2084 = vpack.c.b16 %v1352, %v1340
        %v2085 = vpack.c.b16 %v1353, %v1341
        %v2086 = vpack.c.b16 %v1366, %v1354
        %v2087 = vpack.c.b16 %v1367, %v1355
        %v2088 = vpack.c.b16 %v1368, %v1356
        %v2089 = vpack.c.b16 %v1369, %v1357
        %v2090 = vpack.c.b16 %v1370, %v1358
        %v2091 = vpack.c.b16 %v1371, %v1359
        %v2092 = vpack.c.b16 %v1372, %v1360
        %v2093 = vpack.c.b16 %v1373, %v1361
        %v2094 = vpack.c.b16 %v1374, %v1362
        %v2095 = vpack.c.b16 %v1375, %v1363
        %v2096 = vpack.c.b16 %v1376, %v1364
        %v2097 = vpack.c.b16 %v1377, %v1365
        %v2098 = vpack.c.b16 %v1390, %v1378
        %v2099 = vpack.c.b16 %v1391, %v1379
        %v2100 = vpack.c.b16 %v1392, %v1380
        %v2101 = vpack.c.b16 %v1393, %v1381
        %v2102 = vpack.c.b16 %v1394, %v1382
        %v2103 = vpack.c.b16 %v1395, %v1383
        %v2104 = vpack.c.b16 %v1396, %v1384
        %v2105 = vpack.c.b16 %v1397, %v1385
        %v2106 = vpack.c.b16 %v1398, %v1386
        %v2107 = vpack.c.b16 %v1399, %v1387
        %v2108 = vpack.c.b16 %v1400, %v1388
        %v2109 = vpack.c.b16 %v1401, %v1389
        %v2110 = vpack.c.b16 %v1414, %v1402
        %v2111 = vpack.c.b16 %v1415, %v1403
        %v2112 = vpack.c.b16 %v1416, %v1404
        %v2113 = vpack.c.b16 %v1417, %v1405
        %v2114 = vpack.c.b16 %v1418, %v1406
        %v2115 = vpack.c.b16 %v1419, %v1407
        %v2116 = vpack.c.b16 %v1420, %v1408
        %v2117 = vpack.c.b16 %v1421, %v1409
        %v2118 = vpack.c.b16 %v1422, %v1410
        %v2119 = vpack.c.b16 %v1423, %v1411
        %v2120 = vpack.c.b16 %v1424, %v1412
        %v2121 = vpack.c.b16 %v1425, %v1413
        %v2122 = vpack.c.b16 %v1438, %v1426
        %v2123 = vpack.c.b16 %v1439, %v1427
        %v2124 = vpack.c.b16 %v1440, %v1428
        %v2125 = vpack.c.b16 %v1441, %v1429
        %v2126 = vpack.c.b16 %v1442, %v1430
        %v2127 = vpack.c.b16 %v1443, %v1431
        %v2128 = vpack.c.b16 %v1444, %v1432
        %v2129 = vpack.c.b16 %v1445, %v1433
        %v2130 = vpack.c.b16 %v1446, %v1434
        %v2131 = vpack.c.b16 %v1447, %v1435
        %v2132 = vpack.c.b16 %v1448, %v1436
        %v2133 = vpack.c.b16 %v1449, %v1437
        %v2134 = vpack.c.b16 %v1462, %v1450
        %v2135 = vpack.c.b16 %v1463, %v1451
        %v2136 = vpack.c.b16 %v1464, %v1452
        %v2137 = vpack.c.b16 %v1465, %v1453
        %v2138 = vpack.c.b16 %v1466, %v1454
        %v2139 = vpack.c.b16 %v1467, %v1455
        %v2140 = vpack.c.b16 %v1468, %v1456
        %v2141 = vpack.c.b16 %v1469, %v1457
        %v2142 = vpack.c.b16 %v1470, %v1458
        %v2143 = vpack.c.b16 %v1471, %v1459
        %v2144 = vpack.c.b16 %v1472, %v1460
        %v2145 = vpack.c.b16 %v1473, %v1461
        %v2146 = vpack.c.b16 %v1486, %v1474
        %v2147 = vpack.c.b16 %v1487, %v1475
        %v2148 = vpack.c.b16 %v1488, %v1476
        %v2149 = vpack.c.b16 %v1489, %v1477
        %v2150 = vpack.c.b16 %v1490, %v1478
        %v2151 = vpack.c.b16 %v1491, %v1479
        %v2152 = vpack.c.b16 %v1492, %v1480
        %v2153 = vpack.c.b16 %v1493, %v1481
        %v2154 = vpack.c.b16 %v1494, %v1482
        %v2155 = vpack.c.b16 %v1495, %v1483
        %v2156 = vpack.c.b16 %v1496, %v1484
        %v2157 = vpack.c.b16 %v1497, %v1485
        %v2158 = vpack.c.b16 %v1510, %v1498
        %v2159 = vpack.c.b16 %v1511, %v1499
        %v2160 = vpack.c.b16 %v1512, %v1500
        %v2161 = vpack.c.b16 %v1513, %v1501
        %v2162 = vpack.c.b16 %v1514, %v1502
        %v2163 = vpack.c.b16 %v1515, %v1503
        %v2164 = vpack.c.b16 %v1516, %v1504
        %v2165 = vpack.c.b16 %v1517, %v1505
        %v2166 = vpack.c.b16 %v1518, %v1506
        %v2167 = vpack.c.b16 %v1519, %v1507
        %v2168 = vpack.c.b16 %v1520, %v1508
        %v2169 = vpack.c.b16 %v1521, %v1509
        %v2170 = vpack.c.b16 %v1534, %v1522
        %v2171 = vpack.c.b16 %v1535, %v1523
        %v2172 = vpack.c.b16 %v1536, %v1524
        %v2173 = vpack.c.b16 %v1537, %v1525
        %v2174 = vpack.c.b16 %v1538, %v1526
        %v2175 = vpack.c.b16 %v1539, %v1527
        %v2176 = vpack.c.b16 %v1540, %v1528
        %v2177 = vpack.c.b16 %v1541, %v1529
        %v2178 = vpack.c.b16 %v1542, %v1530
        %v2179 = vpack.c.b16 %v1543, %v1531
        %v2180 = vpack.c.b16 %v1544, %v1532
        %v2181 = vpack.c.b16 %v1545, %v1533
        %v2182 = vpack.c.b16 %v1558, %v1546
        %v2183 = vpack.c.b16 %v1559, %v1547
        %v2184 = vpack.c.b16 %v1560, %v1548
        %v2185 = vpack.c.b16 %v1561, %v1549
        %v2186 = vpack.c.b16 %v1562, %v1550
        %v2187 = vpack.c.b16 %v1563, %v1551
        %v2188 = vpack.c.b16 %v1564, %v1552
        %v2189 = vpack.c.b16 %v1565, %v1553
        %v2190 = vpack.c.b16 %v1566, %v1554
        %v2191 = vpack.c.b16 %v1567, %v1555
        %v2192 = vpack.c.b16 %v1568, %v1556
        %v2193 = vpack.c.b16 %v1569, %v1557
        %v2194 = vpack.c.b16 %v1582, %v1570
        %v2195 = vpack.c.b16 %v1583, %v1571
        %v2196 = vpack.c.b16 %v1584, %v1572
        %v2197 = vpack.c.b16 %v1585, %v1573
        %v2198 = vpack.c.b16 %v1586, %v1574
        %v2199 = vpack.c.b16 %v1587, %v1575
        %v2200 = vpack.c.b16 %v1588, %v1576
        %v2201 = vpack.c.b16 %v1589, %v1577
        %v2202 = vpack.c.b16 %v1590, %v1578
        %v2203 = vpack.c.b16 %v1591, %v1579
        %v2204 = vpack.c.b16 %v1592, %v1580
        %v2205 = vpack.c.b16 %v1593, %v1581
        %v2206 = vpack.c.b16 %v1606, %v1594
        %v2207 = vpack.c.b16 %v1607, %v1595
        %v2208 = vpack.c.b16 %v1608, %v1596
        %v2209 = vpack.c.b16 %v1609, %v1597
        %v2210 = vpack.c.b16 %v1610, %v1598
        %v2211 = vpack.c.b16 %v1611, %v1599
        %v2212 = vpack.c.b16 %v1612, %v1600
        %v2213 = vpack.c.b16 %v1613, %v1601
        %v2214 = vpack.c.b16 %v1614, %v1602
        %v2215 = vpack.c.b16 %v1615, %v1603
        %v2216 = vpack.c.b16 %v1616, %v1604
        %v2217 = vpack.c.b16 %v1617, %v1605
        %v2218 = vpack.c.b16 %v1630, %v1618
        %v2219 = vpack.c.b16 %v1631, %v1619
        %v2220 = vpack.c.b16 %v1632, %v1620
        %v2221 = vpack.c.b16 %v1633, %v1621
        %v2222 = vpack.c.b16 %v1634, %v1622
        %v2223 = vpack.c.b16 %v1635, %v1623
        %v2224 = vpack.c.b16 %v1636, %v1624
        %v2225 = vpack.c.b16 %v1637, %v1625
        %v2226 = vpack.c.b16 %v1638, %v1626
        %v2227 = vpack.c.b16 %v1639, %v1627
        %v2228 = vpack.c.b16 %v1640, %v1628
        %v2229 = vpack.c.b16 %v1641, %v1629
        %v2230 = vpack.c.b16 %v1654, %v1642
        %v2231 = vpack.c.b16 %v1655, %v1643
        %v2232 = vpack.c.b16 %v1656, %v1644
        %v2233 = vpack.c.b16 %v1657, %v1645
        %v2234 = vpack.c.b16 %v1658, %v1646
        %v2235 = vpack.c.b16 %v1659, %v1647
        %v2236 = vpack.c.b16 %v1660, %v1648
        %v2237 = vpack.c.b16 %v1661, %v1649
        %v2238 = vpack.c.b16 %v1662, %v1650
        %v2239 = vpack.c.b16 %v1663, %v1651
        %v2240 = vpack.c.b16 %v1664, %v1652
        %v2241 = vpack.c.b16 %v1665, %v1653
        %v2242 = vpack.c.b16 %v1678, %v1666
        %v2243 = vpack.c.b16 %v1679, %v1667
        %v2244 = vpack.c.b16 %v1680, %v1668
        %v2245 = vpack.c.b16 %v1681, %v1669
        %v2246 = vpack.c.b16 %v1682, %v1670
        %v2247 = vpack.c.b16 %v1683, %v1671
        %v2248 = vpack.c.b16 %v1684, %v1672
        %v2249 = vpack.c.b16 %v1685, %v1673
        %v2250 = vpack.c.b16 %v1686, %v1674
        %v2251 = vpack.c.b16 %v1687, %v1675
        %v2252 = vpack.c.b16 %v1688, %v1676
        %v2253 = vpack.c.b16 %v1689, %v1677
        %v2254 = vpack.c.b16 %v1702, %v1690
        %v2255 = vpack.c.b16 %v1703, %v1691
        %v2256 = vpack.c.b16 %v1704, %v1692
        %v2257 = vpack.c.b16 %v1705, %v1693
        %v2258 = vpack.c.b16 %v1706, %v1694
        %v2259 = vpack.c.b16 %v1707, %v1695
        %v2260 = vpack.c.b16 %v1708, %v1696
        %v2261 = vpack.c.b16 %v1709, %v1697
        %v2262 = vpack.c.b16 %v1710, %v1698
        %v2263 = vpack.c.b16 %v1711, %v1699
        %v2264 = vpack.c.b16 %v1712, %v1700
        %v2265 = vpack.c.b16 %v1713, %v1701
        %v2266 = vpack.c.b16 %v1726, %v1714
        %v2267 = vpack.c.b16 %v1727, %v1715
        %v2268 = vpack.c.b16 %v1728, %v1716
        %v2269 = vpack.c.b16 %v1729, %v1717
        %v2270 = vpack.c.b16 %v1730, %v1718
        %v2271 = vpack.c.b16 %v1731, %v1719
        %v2272 = vpack.c.b16 %v1732, %v1720
        %v2273 = vpack.c.b16 %v1733, %v1721
        %v2274 = vpack.c.b16 %v1734, %v1722
        %v2275 = vpack.c.b16 %v1735, %v1723
        %v2276 = vpack.c.b16 %v1736, %v1724
        %v2277 = vpack.c.b16 %v1737, %v1725
        %v2278 = vpack.c.b16 %v1750, %v1738
        %v2279 = vpack.c.b16 %v1751, %v1739
        %v2280 = vpack.c.b16 %v1752, %v1740
        %v2281 = vpack.c.b16 %v1753, %v1741
        %v2282 = vpack.c.b16 %v1754, %v1742
        %v2283 = vpack.c.b16 %v1755, %v1743
        %v2284 = vpack.c.b16 %v1756, %v1744
        %v2285 = vpack.c.b16 %v1757, %v1745
        %v2286 = vpack.c.b16 %v1758, %v1746
        %v2287 = vpack.c.b16 %v1759, %v1747
        %v2288 = vpack.c.b16 %v1760, %v1748
        %v2289 = vpack.c.b16 %v1761, %v1749
        %v2290 = vpack.c.b16 %v1774, %v1762
        %v2291 = vpack.c.b16 %v1775, %v1763
        %v2292 = vpack.c.b16 %v1776, %v1764
        %v2293 = vpack.c.b16 %v1777, %v1765
        %v2294 = vpack.c.b16 %v1778, %v1766
        %v2295 = vpack.c.b16 %v1779, %v1767
        %v2296 = vpack.c.b16 %v1780, %v1768
        %v2297 = vpack.c.b16 %v1781, %v1769
        %v2298 = vpack.c.b16 %v1782, %v1770
        %v2299 = vpack.c.b16 %v1783, %v1771
        %v2300 = vpack.c.b16 %v1784, %v1772
        %v2301 = vpack.c.b16 %v1785, %v1773
        %v2302 = vpack.c.b16 %v1798, %v1786
        %v2303 = vpack.c.b16 %v1799, %v1787
        %v2304 = vpack.c.b16 %v1800, %v1788
        %v2305 = vpack.c.b16 %v1801, %v1789
        %v2306 = vpack.c.b16 %v1802, %v1790
        %v2307 = vpack.c.b16 %v1803, %v1791
        %v2308 = vpack.c.b16 %v1804, %v1792
        %v2309 = vpack.c.b16 %v1805, %v1793
        %v2310 = vpack.c.b16 %v1806, %v1794
        %v2311 = vpack.c.b16 %v1807, %v1795
        %v2312 = vpack.c.b16 %v1808, %v1796
        %v2313 = vpack.c.b16 %v1809, %v1797
        %v2314 = vpack.c.b16 %v1822, %v1810
        %v2315 = vpack.c.b16 %v1823, %v1811
        %v2316 = vpack.c.b16 %v1824, %v1812
        %v2317 = vpack.c.b16 %v1825, %v1813
        %v2318 = vpack.c.b16 %v1826, %v1814
        %v2319 = vpack.c.b16 %v1827, %v1815
        %v2320 = vpack.c.b16 %v1828, %v1816
        %v2321 = vpack.c.b16 %v1829, %v1817
        %v2322 = vpack.c.b16 %v1830, %v1818
        %v2323 = vpack.c.b16 %v1831, %v1819
        %v2324 = vpack.c.b16 %v1832, %v1820
        %v2325 = vpack.c.b16 %v1833, %v1821
        %v2326 = vpack.c.b16 %v1846, %v1834
        %v2327 = vpack.c.b16 %v1847, %v1835
        %v2328 = vpack.c.b16 %v1848, %v1836
        %v2329 = vpack.c.b16 %v1849, %v1837
        %v2330 = vpack.c.b16 %v1850, %v1838
        %v2331 = vpack.c.b16 %v1851, %v1839
        %v2332 = vpack.c.b16 %v1852, %v1840
        %v2333 = vpack.c.b16 %v1853, %v1841
        %v2334 = vpack.c.b16 %v1854, %v1842
        %v2335 = vpack.c.b16 %v1855, %v1843
        %v2336 = vpack.c.b16 %v1856, %v1844
        %v2337 = vpack.c.b16 %v1857, %v1845
        %v2338 = vpack.c.b16 %v1870, %v1858
        %v2339 = vpack.c.b16 %v1871, %v1859
        %v2340 = vpack.c.b16 %v1872, %v1860
        %v2341 = vpack.c.b16 %v1873, %v1861
        %v2342 = vpack.c.b16 %v1874, %v1862
        %v2343 = vpack.c.b16 %v1875, %v1863
        %v2344 = vpack.c.b16 %v1876, %v1864
        %v2345 = vpack.c.b16 %v1877, %v1865
        %v2346 = vpack.c.b16 %v1878, %v1866
        %v2347 = vpack.c.b16 %v1879, %v1867
        %v2348 = vpack.c.b16 %v1880, %v1868
        %v2349 = vpack.c.b16 %v1881, %v1869
        %v2350 = vpack.c.b16 %v1894, %v1882
        %v2351 = vpack.c.b16 %v1895, %v1883
        %v2352 = vpack.c.b16 %v1896, %v1884
        %v2353 = vpack.c.b16 %v1897, %v1885
        %v2354 = vpack.c.b16 %v1898, %v1886
        %v2355 = vpack.c.b16 %v1899, %v1887
        %v2356 = vpack.c.b16 %v1900, %v1888
        %v2357 = vpack.c.b16 %v1901, %v1889
        %v2358 = vpack.c.b16 %v1902, %v1890
        %v2359 = vpack.c.b16 %v1903, %v1891
        %v2360 = vpack.c.b16 %v1904, %v1892
        %v2361 = vpack.c.b16 %v1905, %v1893
        %v2362 = vpack.c.b16 %v1918, %v1906
        %v2363 = vpack.c.b16 %v1919, %v1907
        %v2364 = vpack.c.b16 %v1920, %v1908
        %v2365 = vpack.c.b16 %v1921, %v1909
        %v2366 = vpack.c.b16 %v1922, %v1910
        %v2367 = vpack.c.b16 %v1923, %v1911
        %v2368 = vpack.c.b16 %v1924, %v1912
        %v2369 = vpack.c.b16 %v1925, %v1913
        %v2370 = vpack.c.b16 %v1926, %v1914
        %v2371 = vpack.c.b16 %v1927, %v1915
        %v2372 = vpack.c.b16 %v1928, %v1916
        %v2373 = vpack.c.b16 %v1929, %v1917
        %v2374 = vpack.c.b16 %v1942, %v1930
        %v2375 = vpack.c.b16 %v1943, %v1931
        %v2376 = vpack.c.b16 %v1944, %v1932
        %v2377 = vpack.c.b16 %v1945, %v1933
        %v2378 = vpack.c.b16 %v1946, %v1934
        %v2379 = vpack.c.b16 %v1947, %v1935
        %v2380 = vpack.c.b16 %v1948, %v1936
        %v2381 = vpack.c.b16 %v1949, %v1937
        %v2382 = vpack.c.b16 %v1950, %v1938
        %v2383 = vpack.c.b16 %v1951, %v1939
        %v2384 = vpack.c.b16 %v1952, %v1940
        %v2385 = vpack.c.b16 %v1953, %v1941
        %v2386 = vpack.c.b16 %v1966, %v1954
        %v2387 = vpack.c.b16 %v1967, %v1955
        %v2388 = vpack.c.b16 %v1968, %v1956
        %v2389 = vpack.c.b16 %v1969, %v1957
        %v2390 = vpack.c.b16 %v1970, %v1958
        %v2391 = vpack.c.b16 %v1971, %v1959
        %v2392 = vpack.c.b16 %v1972, %v1960
        %v2393 = vpack.c.b16 %v1973, %v1961
        %v2394 = vpack.c.b16 %v1974, %v1962
        %v2395 = vpack.c.b16 %v1975, %v1963
        %v2396 = vpack.c.b16 %v1976, %v1964
        %v2397 = vpack.c.b16 %v1977, %v1965
        %v2398 = vpack.c.b16 %v1990, %v1978
        %v2399 = vpack.c.b16 %v1991, %v1979
        %v2400 = vpack.c.b16 %v1992, %v1980
        %v2401 = vpack.c.b16 %v1993, %v1981
        %v2402 = vpack.c.b16 %v1994, %v1982
        %v2403 = vpack.c.b16 %v1995, %v1983
        %v2404 = vpack.c.b16 %v1996, %v1984
        %v2405 = vpack.c.b16 %v1997, %v1985
        %v2406 = vpack.c.b16 %v1998, %v1986
        %v2407 = vpack.c.b16 %v1999, %v1987
        %v2408 = vpack.c.b16 %v2000, %v1988
        %v2409 = vpack.c.b16 %v2001, %v1989
        %v2410 = vpack.c.b16 %v2014, %v2002
        %v2411 = vpack.c.b16 %v2015, %v2003
        %v2412 = vpack.c.b16 %v2016, %v2004
        %v2413 = vpack.c.b16 %v2017, %v2005
        %v2414 = vpack.c.b16 %v2018, %v2006
        %v2415 = vpack.c.b16 %v2019, %v2007
        %v2416 = vpack.c.b16 %v2020, %v2008
        %v2417 = vpack.c.b16 %v2021, %v2009
        %v2418 = vpack.c.b16 %v2022, %v2010
        %v2419 = vpack.c.b16 %v2023, %v2011
        %v2420 = vpack.c.b16 %v2024, %v2012
        %v2421 = vpack.c.b16 %v2025, %v2013
        %v2422 = vpack.c.b16 %v2038, %v2026
        %v2423 = vpack.c.b16 %v2039, %v2027
        %v2424 = vpack.c.b16 %v2040, %v2028
        %v2425 = vpack.c.b16 %v2041, %v2029
        %v2426 = vpack.c.b16 %v2042, %v2030
        %v2427 = vpack.c.b16 %v2043, %v2031
        %v2428 = vpack.c.b16 %v2044, %v2032
        %v2429 = vpack.c.b16 %v2045, %v2033
        %v2430 = vpack.c.b16 %v2046, %v2034
        %v2431 = vpack.c.b16 %v2047, %v2035
        %v2432 = vpack.c.b16 %v2048, %v2036
        %v2433 = vpack.c.b16 %v2049, %v2037
        %2818 = vmatprep.subr.bf16.mxu0 %v2051
        %2819 = vmatpush1.bf16.msra.mxu0 %v2050
        %2820 = vmatprep.subr.bf16.mxu0 %v2063
        %2821 = vmatpush1.bf16.msra.mxu0 %v2062
        %2822 = vmatprep.subr.bf16.mxu0 %v2075
        %2823 = vmatpush1.bf16.msra.mxu0 %v2074
        %2824 = vmatprep.subr.bf16.mxu0 %v2087
        %2825 = vmatpush1.bf16.msra.mxu0 %v2086
        %2826 = vmatprep.subr.bf16.mxu0 %v2099
        %2827 = vmatpush1.bf16.msra.mxu0 %v2098
        %2828 = vmatprep.subr.bf16.mxu0 %v2111
        %2829 = vmatpush1.bf16.msra.mxu0 %v2110
        %2830 = vmatprep.subr.bf16.mxu0 %v2123
        %2831 = vmatpush1.bf16.msra.mxu0 %v2122
        %2832 = vmatprep.subr.bf16.mxu0 %v2135
        %2833 = vmatpush1.bf16.msra.mxu0 %v2134
        %2834 = vmatprep.subr.bf16.mxu0 %v2147
        %2835 = vmatpush1.bf16.msra.mxu0 %v2146
        %2836 = vmatprep.subr.bf16.mxu0 %v2159
        %2837 = vmatpush1.bf16.msra.mxu0 %v2158
        %2838 = vmatprep.subr.bf16.mxu0 %v2171
        %2839 = vmatpush1.bf16.msra.mxu0 %v2170
        %2840 = vmatprep.subr.bf16.mxu0 %v2183
        %2841 = vmatpush1.bf16.msra.mxu0 %v2182
        %2842 = vmatprep.subr.bf16.mxu0 %v2195
        %2843 = vmatpush1.bf16.msra.mxu0 %v2194
        %2844 = vmatprep.subr.bf16.mxu0 %v2207
        %2845 = vmatpush1.bf16.msra.mxu0 %v2206
        %2846 = vmatprep.subr.bf16.mxu0 %v2219
        %2847 = vmatpush1.bf16.msra.mxu0 %v2218
        %2848 = vmatprep.subr.bf16.mxu0 %v2231
        %2849 = vmatpush1.bf16.msra.mxu0 %v2230
        %2850 = vmatprep.mubr.bf16.mxu0 %v449
        %2851 = vmatmul.mubr.bf16.gmra.mrb[0].mxu0 %v448
        %v2852 = vpop.f32.mrb[0].mxu0
        %v2853 = vadd.f32 %v841, %v2852
        %v2854 = vpop.f32.mrb[0].mxu0
        %v2855 = vadd.f32 %v845, %v2854
        %v2856 = vpop.f32.mrb[0].mxu0
        %v2857 = vadd.f32 %v841, %v2856
        %v2858 = vpop.f32.mrb[0].mxu0
        %v2859 = vadd.f32 %v845, %v2858
        %2860 = vdwg.mxu0
        %2861 = vmatprep.subr.bf16.mxu0 %v2243
        %2862 = vmatpush1.bf16.msra.mxu0 %v2242
        %2863 = vmatprep.subr.bf16.mxu0 %v2255
        %2864 = vmatpush1.bf16.msra.mxu0 %v2254
        %2865 = vmatprep.subr.bf16.mxu0 %v2267
        %2866 = vmatpush1.bf16.msra.mxu0 %v2266
        %2867 = vmatprep.subr.bf16.mxu0 %v2279
        %2868 = vmatpush1.bf16.msra.mxu0 %v2278
        %2869 = vmatprep.subr.bf16.mxu0 %v2291
        %2870 = vmatpush1.bf16.msra.mxu0 %v2290
        %2871 = vmatprep.subr.bf16.mxu0 %v2303
        %2872 = vmatpush1.bf16.msra.mxu0 %v2302
        %2873 = vmatprep.subr.bf16.mxu0 %v2315
        %2874 = vmatpush1.bf16.msra.mxu0 %v2314
        %2875 = vmatprep.subr.bf16.mxu0 %v2327
        %2876 = vmatpush1.bf16.msra.mxu0 %v2326
        %2877 = vmatprep.subr.bf16.mxu0 %v2339
        %2878 = vmatpush1.bf16.msra.mxu0 %v2338
        %2879 = vmatprep.subr.bf16.mxu0 %v2351
        %2880 = vmatpush1.bf16.msra.mxu0 %v2350
        %2881 = vmatprep.subr.bf16.mxu0 %v2363
        %2882 = vmatpush1.bf16.msra.mxu0 %v2362
        %2883 = vmatprep.subr.bf16.mxu0 %v2375
        %2884 = vmatpush1.bf16.msra.mxu0 %v2374
        %2885 = vmatprep.subr.bf16.mxu0 %v2387
        %2886 = vmatpush1.bf16.msra.mxu0 %v2386
        %2887 = vmatprep.subr.bf16.mxu0 %v2399
        %2888 = vmatpush1.bf16.msra.mxu0 %v2398
        %2889 = vmatprep.subr.bf16.mxu0 %v2411
        %2890 = vmatpush1.bf16.msra.mxu0 %v2410
        %2891 = vmatprep.subr.bf16.mxu0 %v2423
        %2892 = vmatpush1.bf16.msra.mxu0 %v2422
        %2893 = vmatprep.mubr.bf16.mxu0 %v451
        %2894 = vmatmul.mubr.bf16.gmra.mrb[0].mxu0 %v450
        %v2895 = vpop.f32.mrb[0].mxu0
        %v2896 = vadd.f32 %v2853, %v2895
        %v2897 = vpop.f32.mrb[0].mxu0
        %v2898 = vadd.f32 %v2855, %v2897
        %v2899 = vpop.f32.mrb[0].mxu0
        %v2900 = vadd.f32 %v2857, %v2899
        %v2901 = vpop.f32.mrb[0].mxu0
        %v2902 = vadd.f32 %v2859, %v2901
        %2903 = vdwg.mxu0
        %2904 = vmatprep.subr.bf16.mxu0 %v2053
        %2905 = vmatpush1.bf16.msra.mxu0 %v2052
        %2906 = vmatprep.subr.bf16.mxu0 %v2065
        %2907 = vmatpush1.bf16.msra.mxu0 %v2064
        %2908 = vmatprep.subr.bf16.mxu0 %v2077
        %2909 = vmatpush1.bf16.msra.mxu0 %v2076
        %2910 = vmatprep.subr.bf16.mxu0 %v2089
        %2911 = vmatpush1.bf16.msra.mxu0 %v2088
        %2912 = vmatprep.subr.bf16.mxu0 %v2101
        %2913 = vmatpush1.bf16.msra.mxu0 %v2100
        %2914 = vmatprep.subr.bf16.mxu0 %v2113
        %2915 = vmatpush1.bf16.msra.mxu0 %v2112
        %2916 = vmatprep.subr.bf16.mxu0 %v2125
        %2917 = vmatpush1.bf16.msra.mxu0 %v2124
        %2918 = vmatprep.subr.bf16.mxu0 %v2137
        %2919 = vmatpush1.bf16.msra.mxu0 %v2136
        %2920 = vmatprep.subr.bf16.mxu0 %v2149
        %2921 = vmatpush1.bf16.msra.mxu0 %v2148
        %2922 = vmatprep.subr.bf16.mxu0 %v2161
        %2923 = vmatpush1.bf16.msra.mxu0 %v2160
        %2924 = vmatprep.subr.bf16.mxu0 %v2173
        %2925 = vmatpush1.bf16.msra.mxu0 %v2172
        %2926 = vmatprep.subr.bf16.mxu0 %v2185
        %2927 = vmatpush1.bf16.msra.mxu0 %v2184
        %2928 = vmatprep.subr.bf16.mxu0 %v2197
        %2929 = vmatpush1.bf16.msra.mxu0 %v2196
        %2930 = vmatprep.subr.bf16.mxu0 %v2209
        %2931 = vmatpush1.bf16.msra.mxu0 %v2208
        %2932 = vmatprep.subr.bf16.mxu0 %v2221
        %2933 = vmatpush1.bf16.msra.mxu0 %v2220
        %2934 = vmatprep.subr.bf16.mxu0 %v2233
        %2935 = vmatpush1.bf16.msra.mxu0 %v2232
        %2936 = vmatprep.mubr.bf16.mxu0 %v449
        %2937 = vmatmul.mubr.bf16.gmra.mrb[0].mxu0 %v448
        %v2938 = vpop.f32.mrb[0].mxu0
        %v2939 = vadd.f32 %v849, %v2938
        %v2940 = vpop.f32.mrb[0].mxu0
        %v2941 = vadd.f32 %v853, %v2940
        %v2942 = vpop.f32.mrb[0].mxu0
        %v2943 = vadd.f32 %v849, %v2942
        %v2944 = vpop.f32.mrb[0].mxu0
        %v2945 = vadd.f32 %v853, %v2944
        %2946 = vdwg.mxu0
        %2947 = vmatprep.subr.bf16.mxu0 %v2245
        %2948 = vmatpush1.bf16.msra.mxu0 %v2244
        %2949 = vmatprep.subr.bf16.mxu0 %v2257
        %2950 = vmatpush1.bf16.msra.mxu0 %v2256
        %2951 = vmatprep.subr.bf16.mxu0 %v2269
        %2952 = vmatpush1.bf16.msra.mxu0 %v2268
        %2953 = vmatprep.subr.bf16.mxu0 %v2281
        %2954 = vmatpush1.bf16.msra.mxu0 %v2280
        %2955 = vmatprep.subr.bf16.mxu0 %v2293
        %2956 = vmatpush1.bf16.msra.mxu0 %v2292
        %2957 = vmatprep.subr.bf16.mxu0 %v2305
        %2958 = vmatpush1.bf16.msra.mxu0 %v2304
        %2959 = vmatprep.subr.bf16.mxu0 %v2317
        %2960 = vmatpush1.bf16.msra.mxu0 %v2316
        %2961 = vmatprep.subr.bf16.mxu0 %v2329
        %2962 = vmatpush1.bf16.msra.mxu0 %v2328
        %2963 = vmatprep.subr.bf16.mxu0 %v2341
        %2964 = vmatpush1.bf16.msra.mxu0 %v2340
        %2965 = vmatprep.subr.bf16.mxu0 %v2353
        %2966 = vmatpush1.bf16.msra.mxu0 %v2352
        %2967 = vmatprep.subr.bf16.mxu0 %v2365
        %2968 = vmatpush1.bf16.msra.mxu0 %v2364
        %2969 = vmatprep.subr.bf16.mxu0 %v2377
        %2970 = vmatpush1.bf16.msra.mxu0 %v2376
        %2971 = vmatprep.subr.bf16.mxu0 %v2389
        %2972 = vmatpush1.bf16.msra.mxu0 %v2388
        %2973 = vmatprep.subr.bf16.mxu0 %v2401
        %2974 = vmatpush1.bf16.msra.mxu0 %v2400
        %2975 = vmatprep.subr.bf16.mxu0 %v2413
        %2976 = vmatpush1.bf16.msra.mxu0 %v2412
        %2977 = vmatprep.subr.bf16.mxu0 %v2425
        %2978 = vmatpush1.bf16.msra.mxu0 %v2424
        %2979 = vmatprep.mubr.bf16.mxu0 %v451
        %2980 = vmatmul.mubr.bf16.gmra.mrb[0].mxu0 %v450
        %v2981 = vpop.f32.mrb[0].mxu0
        %v2982 = vadd.f32 %v2939, %v2981
        %v2983 = vpop.f32.mrb[0].mxu0
        %v2984 = vadd.f32 %v2941, %v2983
        %v2985 = vpop.f32.mrb[0].mxu0
        %v2986 = vadd.f32 %v2943, %v2985
        %v2987 = vpop.f32.mrb[0].mxu0
        %v2988 = vadd.f32 %v2945, %v2987
        %2989 = vdwg.mxu0
        %2990 = vmatprep.subr.bf16.mxu0 %v2055
        %2991 = vmatpush1.bf16.msra.mxu0 %v2054
        %2992 = vmatprep.subr.bf16.mxu0 %v2067
        %2993 = vmatpush1.bf16.msra.mxu0 %v2066
        %2994 = vmatprep.subr.bf16.mxu0 %v2079
        %2995 = vmatpush1.bf16.msra.mxu0 %v2078
        %2996 = vmatprep.subr.bf16.mxu0 %v2091
        %2997 = vmatpush1.bf16.msra.mxu0 %v2090
        %2998 = vmatprep.subr.bf16.mxu0 %v2103
        %2999 = vmatpush1.bf16.msra.mxu0 %v2102
        %3000 = vmatprep.subr.bf16.mxu0 %v2115
        %3001 = vmatpush1.bf16.msra.mxu0 %v2114
        %3002 = vmatprep.subr.bf16.mxu0 %v2127
        %3003 = vmatpush1.bf16.msra.mxu0 %v2126
        %3004 = vmatprep.subr.bf16.mxu0 %v2139
        %3005 = vmatpush1.bf16.msra.mxu0 %v2138
        %3006 = vmatprep.subr.bf16.mxu0 %v2151
        %3007 = vmatpush1.bf16.msra.mxu0 %v2150
        %3008 = vmatprep.subr.bf16.mxu0 %v2163
        %3009 = vmatpush1.bf16.msra.mxu0 %v2162
        %3010 = vmatprep.subr.bf16.mxu0 %v2175
        %3011 = vmatpush1.bf16.msra.mxu0 %v2174
        %3012 = vmatprep.subr.bf16.mxu0 %v2187
        %3013 = vmatpush1.bf16.msra.mxu0 %v2186
        %3014 = vmatprep.subr.bf16.mxu0 %v2199
        %3015 = vmatpush1.bf16.msra.mxu0 %v2198
        %3016 = vmatprep.subr.bf16.mxu0 %v2211
        %3017 = vmatpush1.bf16.msra.mxu0 %v2210
        %3018 = vmatprep.subr.bf16.mxu0 %v2223
        %3019 = vmatpush1.bf16.msra.mxu0 %v2222
        %3020 = vmatprep.subr.bf16.mxu0 %v2235
        %3021 = vmatpush1.bf16.msra.mxu0 %v2234
        %3022 = vmatprep.mubr.bf16.mxu0 %v449
        %3023 = vmatmul.mubr.bf16.gmra.mrb[0].mxu0 %v448
        %v3024 = vpop.f32.mrb[0].mxu0
        %v3025 = vadd.f32 %v857, %v3024
        %v3026 = vpop.f32.mrb[0].mxu0
        %v3027 = vadd.f32 %v861, %v3026
        %v3028 = vpop.f32.mrb[0].mxu0
        %v3029 = vadd.f32 %v857, %v3028
        %v3030 = vpop.f32.mrb[0].mxu0
        %v3031 = vadd.f32 %v861, %v3030
        %3032 = vdwg.mxu0
        %3033 = vmatprep.subr.bf16.mxu0 %v2247
        %3034 = vmatpush1.bf16.msra.mxu0 %v2246
        %3035 = vmatprep.subr.bf16.mxu0 %v2259
        %3036 = vmatpush1.bf16.msra.mxu0 %v2258
        %3037 = vmatprep.subr.bf16.mxu0 %v2271
        %3038 = vmatpush1.bf16.msra.mxu0 %v2270
        %3039 = vmatprep.subr.bf16.mxu0 %v2283
        %3040 = vmatpush1.bf16.msra.mxu0 %v2282
        %3041 = vmatprep.subr.bf16.mxu0 %v2295
        %3042 = vmatpush1.bf16.msra.mxu0 %v2294
        %3043 = vmatprep.subr.bf16.mxu0 %v2307
        %3044 = vmatpush1.bf16.msra.mxu0 %v2306
        %3045 = vmatprep.subr.bf16.mxu0 %v2319
        %3046 = vmatpush1.bf16.msra.mxu0 %v2318
        %3047 = vmatprep.subr.bf16.mxu0 %v2331
        %3048 = vmatpush1.bf16.msra.mxu0 %v2330
        %3049 = vmatprep.subr.bf16.mxu0 %v2343
        %3050 = vmatpush1.bf16.msra.mxu0 %v2342
        %3051 = vmatprep.subr.bf16.mxu0 %v2355
        %3052 = vmatpush1.bf16.msra.mxu0 %v2354
        %3053 = vmatprep.subr.bf16.mxu0 %v2367
        %3054 = vmatpush1.bf16.msra.mxu0 %v2366
        %3055 = vmatprep.subr.bf16.mxu0 %v2379
        %3056 = vmatpush1.bf16.msra.mxu0 %v2378
        %3057 = vmatprep.subr.bf16.mxu0 %v2391
        %3058 = vmatpush1.bf16.msra.mxu0 %v2390
        %3059 = vmatprep.subr.bf16.mxu0 %v2403
        %3060 = vmatpush1.bf16.msra.mxu0 %v2402
        %3061 = vmatprep.subr.bf16.mxu0 %v2415
        %3062 = vmatpush1.bf16.msra.mxu0 %v2414
        %3063 = vmatprep.subr.bf16.mxu0 %v2427
        %3064 = vmatpush1.bf16.msra.mxu0 %v2426
        %3065 = vmatprep.mubr.bf16.mxu0 %v451
        %3066 = vmatmul.mubr.bf16.gmra.mrb[0].mxu0 %v450
        %v3067 = vpop.f32.mrb[0].mxu0
        %v3068 = vadd.f32 %v3025, %v3067
        %v3069 = vpop.f32.mrb[0].mxu0
        %v3070 = vadd.f32 %v3027, %v3069
        %v3071 = vpop.f32.mrb[0].mxu0
        %v3072 = vadd.f32 %v3029, %v3071
        %v3073 = vpop.f32.mrb[0].mxu0
        %v3074 = vadd.f32 %v3031, %v3073
        %3075 = vdwg.mxu0
        %3076 = vmatprep.subr.bf16.mxu0 %v2057
        %3077 = vmatpush1.bf16.msra.mxu0 %v2056
        %3078 = vmatprep.subr.bf16.mxu0 %v2069
        %3079 = vmatpush1.bf16.msra.mxu0 %v2068
        %3080 = vmatprep.subr.bf16.mxu0 %v2081
        %3081 = vmatpush1.bf16.msra.mxu0 %v2080
        %3082 = vmatprep.subr.bf16.mxu0 %v2093
        %3083 = vmatpush1.bf16.msra.mxu0 %v2092
        %3084 = vmatprep.subr.bf16.mxu0 %v2105
        %3085 = vmatpush1.bf16.msra.mxu0 %v2104
        %3086 = vmatprep.subr.bf16.mxu0 %v2117
        %3087 = vmatpush1.bf16.msra.mxu0 %v2116
        %3088 = vmatprep.subr.bf16.mxu0 %v2129
        %3089 = vmatpush1.bf16.msra.mxu0 %v2128
        %3090 = vmatprep.subr.bf16.mxu0 %v2141
        %3091 = vmatpush1.bf16.msra.mxu0 %v2140
        %3092 = vmatprep.subr.bf16.mxu0 %v2153
        %3093 = vmatpush1.bf16.msra.mxu0 %v2152
        %3094 = vmatprep.subr.bf16.mxu0 %v2165
        %3095 = vmatpush1.bf16.msra.mxu0 %v2164
        %3096 = vmatprep.subr.bf16.mxu0 %v2177
        %3097 = vmatpush1.bf16.msra.mxu0 %v2176
        %3098 = vmatprep.subr.bf16.mxu0 %v2189
        %3099 = vmatpush1.bf16.msra.mxu0 %v2188
        %3100 = vmatprep.subr.bf16.mxu0 %v2201
        %3101 = vmatpush1.bf16.msra.mxu0 %v2200
        %3102 = vmatprep.subr.bf16.mxu0 %v2213
        %3103 = vmatpush1.bf16.msra.mxu0 %v2212
        %3104 = vmatprep.subr.bf16.mxu0 %v2225
        %3105 = vmatpush1.bf16.msra.mxu0 %v2224
        %3106 = vmatprep.subr.bf16.mxu0 %v2237
        %3107 = vmatpush1.bf16.msra.mxu0 %v2236
        %3108 = vmatprep.mubr.bf16.mxu0 %v449
        %3109 = vmatmul.mubr.bf16.gmra.mrb[0].mxu0 %v448
        %v3110 = vpop.f32.mrb[0].mxu0
        %v3111 = vadd.f32 %v865, %v3110
        %v3112 = vpop.f32.mrb[0].mxu0
        %v3113 = vadd.f32 %v869, %v3112
        %v3114 = vpop.f32.mrb[0].mxu0
        %v3115 = vadd.f32 %v865, %v3114
        %v3116 = vpop.f32.mrb[0].mxu0
        %v3117 = vadd.f32 %v869, %v3116
        %3118 = vdwg.mxu0
        %3119 = vmatprep.subr.bf16.mxu0 %v2249
        %3120 = vmatpush1.bf16.msra.mxu0 %v2248
        %3121 = vmatprep.subr.bf16.mxu0 %v2261
        %3122 = vmatpush1.bf16.msra.mxu0 %v2260
        %3123 = vmatprep.subr.bf16.mxu0 %v2273
        %3124 = vmatpush1.bf16.msra.mxu0 %v2272
        %3125 = vmatprep.subr.bf16.mxu0 %v2285
        %3126 = vmatpush1.bf16.msra.mxu0 %v2284
        %3127 = vmatprep.subr.bf16.mxu0 %v2297
        %3128 = vmatpush1.bf16.msra.mxu0 %v2296
        %3129 = vmatprep.subr.bf16.mxu0 %v2309
        %3130 = vmatpush1.bf16.msra.mxu0 %v2308
        %3131 = vmatprep.subr.bf16.mxu0 %v2321
        %3132 = vmatpush1.bf16.msra.mxu0 %v2320
        %3133 = vmatprep.subr.bf16.mxu0 %v2333
        %3134 = vmatpush1.bf16.msra.mxu0 %v2332
        %3135 = vmatprep.subr.bf16.mxu0 %v2345
        %3136 = vmatpush1.bf16.msra.mxu0 %v2344
        %3137 = vmatprep.subr.bf16.mxu0 %v2357
        %3138 = vmatpush1.bf16.msra.mxu0 %v2356
        %3139 = vmatprep.subr.bf16.mxu0 %v2369
        %3140 = vmatpush1.bf16.msra.mxu0 %v2368
        %3141 = vmatprep.subr.bf16.mxu0 %v2381
        %3142 = vmatpush1.bf16.msra.mxu0 %v2380
        %3143 = vmatprep.subr.bf16.mxu0 %v2393
        %3144 = vmatpush1.bf16.msra.mxu0 %v2392
        %3145 = vmatprep.subr.bf16.mxu0 %v2405
        %3146 = vmatpush1.bf16.msra.mxu0 %v2404
        %3147 = vmatprep.subr.bf16.mxu0 %v2417
        %3148 = vmatpush1.bf16.msra.mxu0 %v2416
        %3149 = vmatprep.subr.bf16.mxu0 %v2429
        %3150 = vmatpush1.bf16.msra.mxu0 %v2428
        %3151 = vmatprep.mubr.bf16.mxu0 %v451
        %3152 = vmatmul.mubr.bf16.gmra.mrb[0].mxu0 %v450
        %v3153 = vpop.f32.mrb[0].mxu0
        %v3154 = vadd.f32 %v3111, %v3153
        %v3155 = vpop.f32.mrb[0].mxu0
        %v3156 = vadd.f32 %v3113, %v3155
        %v3157 = vpop.f32.mrb[0].mxu0
        %v3158 = vadd.f32 %v3115, %v3157
        %v3159 = vpop.f32.mrb[0].mxu0
        %v3160 = vadd.f32 %v3117, %v3159
        %3161 = vdwg.mxu0
        %3162 = vmatprep.subr.bf16.mxu0 %v2059
        %3163 = vmatpush1.bf16.msra.mxu0 %v2058
        %3164 = vmatprep.subr.bf16.mxu0 %v2071
        %3165 = vmatpush1.bf16.msra.mxu0 %v2070
        %3166 = vmatprep.subr.bf16.mxu0 %v2083
        %3167 = vmatpush1.bf16.msra.mxu0 %v2082
        %3168 = vmatprep.subr.bf16.mxu0 %v2095
        %3169 = vmatpush1.bf16.msra.mxu0 %v2094
        %3170 = vmatprep.subr.bf16.mxu0 %v2107
        %3171 = vmatpush1.bf16.msra.mxu0 %v2106
        %3172 = vmatprep.subr.bf16.mxu0 %v2119
        %3173 = vmatpush1.bf16.msra.mxu0 %v2118
        %3174 = vmatprep.subr.bf16.mxu0 %v2131
        %3175 = vmatpush1.bf16.msra.mxu0 %v2130
        %3176 = vmatprep.subr.bf16.mxu0 %v2143
        %3177 = vmatpush1.bf16.msra.mxu0 %v2142
        %3178 = vmatprep.subr.bf16.mxu0 %v2155
        %3179 = vmatpush1.bf16.msra.mxu0 %v2154
        %3180 = vmatprep.subr.bf16.mxu0 %v2167
        %3181 = vmatpush1.bf16.msra.mxu0 %v2166
        %3182 = vmatprep.subr.bf16.mxu0 %v2179
        %3183 = vmatpush1.bf16.msra.mxu0 %v2178
        %3184 = vmatprep.subr.bf16.mxu0 %v2191
        %3185 = vmatpush1.bf16.msra.mxu0 %v2190
        %3186 = vmatprep.subr.bf16.mxu0 %v2203
        %3187 = vmatpush1.bf16.msra.mxu0 %v2202
        %3188 = vmatprep.subr.bf16.mxu0 %v2215
        %3189 = vmatpush1.bf16.msra.mxu0 %v2214
        %3190 = vmatprep.subr.bf16.mxu0 %v2227
        %3191 = vmatpush1.bf16.msra.mxu0 %v2226
        %3192 = vmatprep.subr.bf16.mxu0 %v2239
        %3193 = vmatpush1.bf16.msra.mxu0 %v2238
        %3194 = vmatprep.mubr.bf16.mxu0 %v449
        %3195 = vmatmul.mubr.bf16.gmra.mrb[0].mxu0 %v448
        %v3196 = vpop.f32.mrb[0].mxu0
        %v3197 = vadd.f32 %v873, %v3196
        %v3198 = vpop.f32.mrb[0].mxu0
        %v3199 = vadd.f32 %v877, %v3198
        %v3200 = vpop.f32.mrb[0].mxu0
        %v3201 = vadd.f32 %v873, %v3200
        %v3202 = vpop.f32.mrb[0].mxu0
        %v3203 = vadd.f32 %v877, %v3202
        %3204 = vdwg.mxu0
        %3205 = vmatprep.subr.bf16.mxu0 %v2251
        %3206 = vmatpush1.bf16.msra.mxu0 %v2250
        %3207 = vmatprep.subr.bf16.mxu0 %v2263
        %3208 = vmatpush1.bf16.msra.mxu0 %v2262
        %3209 = vmatprep.subr.bf16.mxu0 %v2275
        %3210 = vmatpush1.bf16.msra.mxu0 %v2274
        %3211 = vmatprep.subr.bf16.mxu0 %v2287
        %3212 = vmatpush1.bf16.msra.mxu0 %v2286
        %3213 = vmatprep.subr.bf16.mxu0 %v2299
        %3214 = vmatpush1.bf16.msra.mxu0 %v2298
        %3215 = vmatprep.subr.bf16.mxu0 %v2311
        %3216 = vmatpush1.bf16.msra.mxu0 %v2310
        %3217 = vmatprep.subr.bf16.mxu0 %v2323
        %3218 = vmatpush1.bf16.msra.mxu0 %v2322
        %3219 = vmatprep.subr.bf16.mxu0 %v2335
        %3220 = vmatpush1.bf16.msra.mxu0 %v2334
        %3221 = vmatprep.subr.bf16.mxu0 %v2347
        %3222 = vmatpush1.bf16.msra.mxu0 %v2346
        %3223 = vmatprep.subr.bf16.mxu0 %v2359
        %3224 = vmatpush1.bf16.msra.mxu0 %v2358
        %3225 = vmatprep.subr.bf16.mxu0 %v2371
        %3226 = vmatpush1.bf16.msra.mxu0 %v2370
        %3227 = vmatprep.subr.bf16.mxu0 %v2383
        %3228 = vmatpush1.bf16.msra.mxu0 %v2382
        %3229 = vmatprep.subr.bf16.mxu0 %v2395
        %3230 = vmatpush1.bf16.msra.mxu0 %v2394
        %3231 = vmatprep.subr.bf16.mxu0 %v2407
        %3232 = vmatpush1.bf16.msra.mxu0 %v2406
        %3233 = vmatprep.subr.bf16.mxu0 %v2419
        %3234 = vmatpush1.bf16.msra.mxu0 %v2418
        %3235 = vmatprep.subr.bf16.mxu0 %v2431
        %3236 = vmatpush1.bf16.msra.mxu0 %v2430
        %3237 = vmatprep.mubr.bf16.mxu0 %v451
        %3238 = vmatmul.mubr.bf16.gmra.mrb[0].mxu0 %v450
        %v3239 = vpop.f32.mrb[0].mxu0
        %v3240 = vadd.f32 %v3197, %v3239
        %v3241 = vpop.f32.mrb[0].mxu0
        %v3242 = vadd.f32 %v3199, %v3241
        %v3243 = vpop.f32.mrb[0].mxu0
        %v3244 = vadd.f32 %v3201, %v3243
        %v3245 = vpop.f32.mrb[0].mxu0
        %v3246 = vadd.f32 %v3203, %v3245
        %3247 = vdwg.mxu0
        %3248 = vmatprep.subr.bf16.mxu0 %v2061
        %3249 = vmatpush1.bf16.msra.mxu0 %v2060
        %3250 = vmatprep.subr.bf16.mxu0 %v2073
        %3251 = vmatpush1.bf16.msra.mxu0 %v2072
        %3252 = vmatprep.subr.bf16.mxu0 %v2085
        %3253 = vmatpush1.bf16.msra.mxu0 %v2084
        %3254 = vmatprep.subr.bf16.mxu0 %v2097
        %3255 = vmatpush1.bf16.msra.mxu0 %v2096
        %3256 = vmatprep.subr.bf16.mxu0 %v2109
        %3257 = vmatpush1.bf16.msra.mxu0 %v2108
        %3258 = vmatprep.subr.bf16.mxu0 %v2121
        %3259 = vmatpush1.bf16.msra.mxu0 %v2120
        %3260 = vmatprep.subr.bf16.mxu0 %v2133
        %3261 = vmatpush1.bf16.msra.mxu0 %v2132
        %3262 = vmatprep.subr.bf16.mxu0 %v2145
        %3263 = vmatpush1.bf16.msra.mxu0 %v2144
        %3264 = vmatprep.subr.bf16.mxu0 %v2157
        %3265 = vmatpush1.bf16.msra.mxu0 %v2156
        %3266 = vmatprep.subr.bf16.mxu0 %v2169
        %3267 = vmatpush1.bf16.msra.mxu0 %v2168
        %3268 = vmatprep.subr.bf16.mxu0 %v2181
        %3269 = vmatpush1.bf16.msra.mxu0 %v2180
        %3270 = vmatprep.subr.bf16.mxu0 %v2193
        %3271 = vmatpush1.bf16.msra.mxu0 %v2192
        %3272 = vmatprep.subr.bf16.mxu0 %v2205
        %3273 = vmatpush1.bf16.msra.mxu0 %v2204
        %3274 = vmatprep.subr.bf16.mxu0 %v2217
        %3275 = vmatpush1.bf16.msra.mxu0 %v2216
        %3276 = vmatprep.subr.bf16.mxu0 %v2229
        %3277 = vmatpush1.bf16.msra.mxu0 %v2228
        %3278 = vmatprep.subr.bf16.mxu0 %v2241
        %3279 = vmatpush1.bf16.msra.mxu0 %v2240
        %3280 = vmatprep.mubr.bf16.mxu0 %v449
        %3281 = vmatmul.mubr.bf16.gmra.mrb[0].mxu0 %v448
        %v3282 = vpop.f32.mrb[0].mxu0
        %v3283 = vadd.f32 %v881, %v3282
        %v3284 = vpop.f32.mrb[0].mxu0
        %v3285 = vadd.f32 %v885, %v3284
        %v3286 = vpop.f32.mrb[0].mxu0
        %v3287 = vadd.f32 %v881, %v3286
        %v3288 = vpop.f32.mrb[0].mxu0
        %v3289 = vadd.f32 %v885, %v3288
        %3290 = vdwg.mxu0
        %3291 = vmatprep.subr.bf16.mxu0 %v2253
        %3292 = vmatpush1.bf16.msra.mxu0 %v2252
        %3293 = vmatprep.subr.bf16.mxu0 %v2265
        %3294 = vmatpush1.bf16.msra.mxu0 %v2264
        %3295 = vmatprep.subr.bf16.mxu0 %v2277
        %3296 = vmatpush1.bf16.msra.mxu0 %v2276
        %3297 = vmatprep.subr.bf16.mxu0 %v2289
        %3298 = vmatpush1.bf16.msra.mxu0 %v2288
        %3299 = vmatprep.subr.bf16.mxu0 %v2301
        %3300 = vmatpush1.bf16.msra.mxu0 %v2300
        %3301 = vmatprep.subr.bf16.mxu0 %v2313
        %3302 = vmatpush1.bf16.msra.mxu0 %v2312
        %3303 = vmatprep.subr.bf16.mxu0 %v2325
        %3304 = vmatpush1.bf16.msra.mxu0 %v2324
        %3305 = vmatprep.subr.bf16.mxu0 %v2337
        %3306 = vmatpush1.bf16.msra.mxu0 %v2336
        %3307 = vmatprep.subr.bf16.mxu0 %v2349
        %3308 = vmatpush1.bf16.msra.mxu0 %v2348
        %3309 = vmatprep.subr.bf16.mxu0 %v2361
        %3310 = vmatpush1.bf16.msra.mxu0 %v2360
        %3311 = vmatprep.subr.bf16.mxu0 %v2373
        %3312 = vmatpush1.bf16.msra.mxu0 %v2372
        %3313 = vmatprep.subr.bf16.mxu0 %v2385
        %3314 = vmatpush1.bf16.msra.mxu0 %v2384
        %3315 = vmatprep.subr.bf16.mxu0 %v2397
        %3316 = vmatpush1.bf16.msra.mxu0 %v2396
        %3317 = vmatprep.subr.bf16.mxu0 %v2409
        %3318 = vmatpush1.bf16.msra.mxu0 %v2408
        %3319 = vmatprep.subr.bf16.mxu0 %v2421
        %3320 = vmatpush1.bf16.msra.mxu0 %v2420
        %3321 = vmatprep.subr.bf16.mxu0 %v2433
        %3322 = vmatpush1.bf16.msra.mxu0 %v2432
        %3323 = vmatprep.mubr.bf16.mxu0 %v451
        %3324 = vmatmul.mubr.bf16.gmra.mrb[0].mxu0 %v450
        %v3325 = vpop.f32.mrb[0].mxu0
        %v3326 = vadd.f32 %v3283, %v3325
        %v3327 = vpop.f32.mrb[0].mxu0
        %v3328 = vadd.f32 %v3285, %v3327
        %v3329 = vpop.f32.mrb[0].mxu0
        %v3330 = vadd.f32 %v3287, %v3329
        %v3331 = vpop.f32.mrb[0].mxu0
        %v3332 = vadd.f32 %v3289, %v3331
        %3333 = vdwg.mxu0
        %v3334 = vpack.c.bf16 %v2896, %v2896
        %v3335 = vpack.c.bf16 %v2898, %v2898
        %v3336 = vpack.c.bf16 %v2982, %v2982
        %v3337 = vpack.c.bf16 %v2984, %v2984
        %v3338 = vpack.c.bf16 %v2900, %v2900
        %v3339 = vpack.c.bf16 %v2902, %v2902
        %v3340 = vpack.c.bf16 %v2986, %v2986
        %v3341 = vpack.c.bf16 %v2988, %v2988
        %v3342 = vpack.c.bf16 %v3068, %v3068
        %v3343 = vpack.c.bf16 %v3070, %v3070
        %v3344 = vpack.c.bf16 %v3154, %v3154
        %v3345 = vpack.c.bf16 %v3156, %v3156
        %v3346 = vpack.c.bf16 %v3072, %v3072
        %v3347 = vpack.c.bf16 %v3074, %v3074
        %v3348 = vpack.c.bf16 %v3158, %v3158
        %v3349 = vpack.c.bf16 %v3160, %v3160
        %v3350 = vpack.c.bf16 %v3240, %v3240
        %v3351 = vpack.c.bf16 %v3242, %v3242
        %v3352 = vpack.c.bf16 %v3326, %v3326
        %v3353 = vpack.c.bf16 %v3328, %v3328
        %v3354 = vpack.c.bf16 %v3244, %v3244
        %v3355 = vpack.c.bf16 %v3246, %v3246
        %v3356 = vpack.c.bf16 %v3330, %v3330
        %v3357 = vpack.c.bf16 %v3332, %v3332
        %3358 = vmatprep.subr.bf16.mxu0 0
        %3359 = vmatpush1.bf16.xpose.msra.mxu0 %v3342
        %3360 = vmatprep.subr.bf16.mxu0 0
        %3361 = vmatpush1.bf16.xpose.msra.mxu0 0
        %3362 = vmatprep.subr.bf16.mxu0 0
        %3363 = vmatpush1.bf16.xpose.msra.mxu0 0
        %3364 = vmatprep.subr.bf16.mxu0 0
        %3365 = vmatpush1.bf16.xpose.msra.mxu0 0
        %3366 = vmatprep.subr.bf16.mxu0 0
        %3367 = vmatpush1.bf16.xpose.msra.mxu0 0
        %3368 = vmatprep.subr.bf16.mxu0 0
        %3369 = vmatpush1.bf16.xpose.msra.mxu0 0
        %3370 = vmatprep.subr.bf16.mxu0 0
        %3371 = vmatpush1.bf16.xpose.msra.mxu0 0
        %3372 = vmatprep.subr.bf16.mxu0 0
        %3373 = vmatpush1.bf16.xpose.msra.mxu0 0
        %3374 = vmatprep.subr.bf16.mxu0 0
        %3375 = vmatpush1.bf16.xpose.msra.mxu0 0
        %3376 = vmatprep.subr.bf16.mxu0 0
        %3377 = vmatpush1.bf16.xpose.msra.mxu0 0
        %3378 = vmatprep.subr.bf16.mxu0 0
        %3379 = vmatpush1.bf16.xpose.msra.mxu0 0
        %3380 = vmatprep.subr.bf16.mxu0 0
        %3381 = vmatpush1.bf16.xpose.msra.mxu0 0
        %3382 = vmatprep.subr.bf16.mxu0 0
        %3383 = vmatpush1.bf16.xpose.msra.mxu0 0
        %3384 = vmatprep.subr.bf16.mxu0 0
        %3385 = vmatpush1.bf16.xpose.msra.mxu0 0
        %3386 = vmatprep.subr.bf16.mxu0 0
        %3387 = vmatpush1.bf16.xpose.msra.mxu0 0
        %3388 = vmatprep.subr.bf16.mxu0 0
        %3389 = vmatpush1.bf16.xpose.msra.mxu0 0
        %3390 = vmatprep.mubr.bf16.mxu0 0
        %3391 = vmatmul.mubr.bf16.gmra.mrb[0].mxu0 %v3334
        %v3392 = vpop.f32.mrb[0].mxu0
        %v3393 = vadd.f32 0.0, %v3392
        %v3394 = vpop.f32.mrb[0].mxu0
        %v3395 = vpop.f32.mrb[0].mxu0
        %v3396 = vpop.f32.mrb[0].mxu0
        %3397 = vdwg.mxu0
        %3398 = vmatprep.subr.bf16.mxu0 0
        %3399 = vmatpush1.bf16.xpose.msra.mxu0 %v3346
        %3400 = vmatprep.subr.bf16.mxu0 0
        %3401 = vmatpush1.bf16.xpose.msra.mxu0 0
        %3402 = vmatprep.subr.bf16.mxu0 0
        %3403 = vmatpush1.bf16.xpose.msra.mxu0 0
        %3404 = vmatprep.subr.bf16.mxu0 0
        %3405 = vmatpush1.bf16.xpose.msra.mxu0 0
        %3406 = vmatprep.subr.bf16.mxu0 0
        %3407 = vmatpush1.bf16.xpose.msra.mxu0 0
        %3408 = vmatprep.subr.bf16.mxu0 0
        %3409 = vmatpush1.bf16.xpose.msra.mxu0 0
        %3410 = vmatprep.subr.bf16.mxu0 0
        %3411 = vmatpush1.bf16.xpose.msra.mxu0 0
        %3412 = vmatprep.subr.bf16.mxu0 0
        %3413 = vmatpush1.bf16.xpose.msra.mxu0 0
        %3414 = vmatprep.subr.bf16.mxu0 0
        %3415 = vmatpush1.bf16.xpose.msra.mxu0 0
        %3416 = vmatprep.subr.bf16.mxu0 0
        %3417 = vmatpush1.bf16.xpose.msra.mxu0 0
        %3418 = vmatprep.subr.bf16.mxu0 0
        %3419 = vmatpush1.bf16.xpose.msra.mxu0 0
        %3420 = vmatprep.subr.bf16.mxu0 0
        %3421 = vmatpush1.bf16.xpose.msra.mxu0 0
        %3422 = vmatprep.subr.bf16.mxu0 0
        %3423 = vmatpush1.bf16.xpose.msra.mxu0 0
        %3424 = vmatprep.subr.bf16.mxu0 0
        %3425 = vmatpush1.bf16.xpose.msra.mxu0 0
        %3426 = vmatprep.subr.bf16.mxu0 0
        %3427 = vmatpush1.bf16.xpose.msra.mxu0 0
        %3428 = vmatprep.subr.bf16.mxu0 0
        %3429 = vmatpush1.bf16.xpose.msra.mxu0 0
        %3430 = vmatprep.mubr.bf16.mxu0 0
        %3431 = vmatmul.mubr.bf16.gmra.mrb[0].mxu0 %v3338
        %v3432 = vpop.f32.mrb[0].mxu0
        %v3433 = vadd.f32 0.0, %v3432
        %v3434 = vpop.f32.mrb[0].mxu0
        %v3435 = vpop.f32.mrb[0].mxu0
        %v3436 = vpop.f32.mrb[0].mxu0
        %3437 = vdwg.mxu0
        %v3438 = vmul.f32 %v3393, 0.088388346
        %v3439 = vmul.f32 %v3433, 0.088388346
        %vm3440 = vcmask 64512
        %v3441 = vsel %vm3440, %v3438, -inf
        %3442 = vmax.xlane.f32.xlu0 %v3441
        %v3443 = vpop.xlane.xlu0 %3442
        %v3444 = vsel %vm3440, %v3439, -inf
        %3445 = vmax.xlane.f32.xlu0 %v3444
        %v3446 = vpop.xlane.xlu0 %3445
        %v3447 = vsub.f32 %v3438, %v3443
        %v3448 = vsub.f32 %v3439, %v3446
        %v3449 = vmul.f32 %v3447, 1.442695
        %v3450 = vpow.pop %v3449
        %v3451 = vmul.f32 %v3448, 1.442695
        %v3452 = vpow.pop %v3451
        %v3453 = vsel %vm3440, %v3450, 0.0
        %3454 = vadd.xlane.f32.xlu0 %v3453
        %v3455 = vpop.xlane.xlu0 %3454
        %v3456 = vsel %vm3440, %v3452, 0.0
        %3457 = vadd.xlane.f32.xlu0 %v3456
        %v3458 = vpop.xlane.xlu0 %3457
        %v3459 = vrcp.pop %v3455
        %v3460 = vrcp.pop %v3458
        %v3461 = vmul.f32 %v3450, %v3459
        %v3462 = vmul.f32 %v3452, %v3460
        %v3463 = vpack.c.bf16 %v3461, %v3461
        %v3464 = vpack.c.bf16 %v3462, %v3462
        %v3466 = vsel %vm3440, %v3463, 0
        %vm3468 = vcmask 1043456
        %v3470 = vsel %vm3468, %v3350, 0
        %3472 = vmatprep.subr.bf16.mxu0 0
        %3473 = vmatpush1.bf16.msra.mxu0 %v3470
        %3474 = vmatprep.subr.bf16.mxu0 0
        %3475 = vmatpush1.bf16.msra.mxu0 0
        %3476 = vmatprep.subr.bf16.mxu0 0
        %3477 = vmatpush1.bf16.msra.mxu0 0
        %3478 = vmatprep.subr.bf16.mxu0 0
        %3479 = vmatpush1.bf16.msra.mxu0 0
        %3480 = vmatprep.subr.bf16.mxu0 0
        %3481 = vmatpush1.bf16.msra.mxu0 0
        %3482 = vmatprep.subr.bf16.mxu0 0
        %3483 = vmatpush1.bf16.msra.mxu0 0
        %3484 = vmatprep.subr.bf16.mxu0 0
        %3485 = vmatpush1.bf16.msra.mxu0 0
        %3486 = vmatprep.subr.bf16.mxu0 0
        %3487 = vmatpush1.bf16.msra.mxu0 0
        %3488 = vmatprep.subr.bf16.mxu0 0
        %3489 = vmatpush1.bf16.msra.mxu0 0
        %3490 = vmatprep.subr.bf16.mxu0 0
        %3491 = vmatpush1.bf16.msra.mxu0 0
        %3492 = vmatprep.subr.bf16.mxu0 0
        %3493 = vmatpush1.bf16.msra.mxu0 0
        %3494 = vmatprep.subr.bf16.mxu0 0
        %3495 = vmatpush1.bf16.msra.mxu0 0
        %3496 = vmatprep.subr.bf16.mxu0 0
        %3497 = vmatpush1.bf16.msra.mxu0 0
        %3498 = vmatprep.subr.bf16.mxu0 0
        %3499 = vmatpush1.bf16.msra.mxu0 0
        %3500 = vmatprep.subr.bf16.mxu0 0
        %3501 = vmatpush1.bf16.msra.mxu0 0
        %3502 = vmatprep.subr.bf16.mxu0 0
        %3503 = vmatpush1.bf16.msra.mxu0 0
        %3504 = vmatprep.mubr.bf16.mxu0 0
        %3505 = vmatmul.mubr.bf16.gmra.mrb[0].mxu0 %v3466
        %v3506 = vpop.f32.mrb[0].mxu0
        %v3507 = vadd.f32 0.0, %v3506
        %v3508 = vpop.f32.mrb[0].mxu0
        %v3509 = vpop.f32.mrb[0].mxu0
        %v3510 = vpop.f32.mrb[0].mxu0
        %3511 = vdwg.mxu0
        %v3513 = vsel %vm3440, %v3464, 0
        %v3516 = vsel %vm3468, %v3354, 0
        %3518 = vmatprep.subr.bf16.mxu0 0
        %3519 = vmatpush1.bf16.msra.mxu0 %v3516
        %3520 = vmatprep.subr.bf16.mxu0 0
        %3521 = vmatpush1.bf16.msra.mxu0 0
        %3522 = vmatprep.subr.bf16.mxu0 0
        %3523 = vmatpush1.bf16.msra.mxu0 0
        %3524 = vmatprep.subr.bf16.mxu0 0
        %3525 = vmatpush1.bf16.msra.mxu0 0
        %3526 = vmatprep.subr.bf16.mxu0 0
        %3527 = vmatpush1.bf16.msra.mxu0 0
        %3528 = vmatprep.subr.bf16.mxu0 0
        %3529 = vmatpush1.bf16.msra.mxu0 0
        %3530 = vmatprep.subr.bf16.mxu0 0
        %3531 = vmatpush1.bf16.msra.mxu0 0
        %3532 = vmatprep.subr.bf16.mxu0 0
        %3533 = vmatpush1.bf16.msra.mxu0 0
        %3534 = vmatprep.subr.bf16.mxu0 0
        %3535 = vmatpush1.bf16.msra.mxu0 0
        %3536 = vmatprep.subr.bf16.mxu0 0
        %3537 = vmatpush1.bf16.msra.mxu0 0
        %3538 = vmatprep.subr.bf16.mxu0 0
        %3539 = vmatpush1.bf16.msra.mxu0 0
        %3540 = vmatprep.subr.bf16.mxu0 0
        %3541 = vmatpush1.bf16.msra.mxu0 0
        %3542 = vmatprep.subr.bf16.mxu0 0
        %3543 = vmatpush1.bf16.msra.mxu0 0
        %3544 = vmatprep.subr.bf16.mxu0 0
        %3545 = vmatpush1.bf16.msra.mxu0 0
        %3546 = vmatprep.subr.bf16.mxu0 0
        %3547 = vmatpush1.bf16.msra.mxu0 0
        %3548 = vmatprep.subr.bf16.mxu0 0
        %3549 = vmatpush1.bf16.msra.mxu0 0
        %3550 = vmatprep.mubr.bf16.mxu0 0
        %3551 = vmatmul.mubr.bf16.gmra.mrb[0].mxu0 %v3513
        %v3552 = vpop.f32.mrb[0].mxu0
        %v3553 = vadd.f32 0.0, %v3552
        %v3554 = vpop.f32.mrb[0].mxu0
        %v3555 = vpop.f32.mrb[0].mxu0
        %v3556 = vpop.f32.mrb[0].mxu0
        %3557 = vdwg.mxu0
        %3558 = vmatprep.subr.bf16.mxu0 0
        %3559 = vmatpush1.bf16.xpose.msra.mxu0 %v3343
        %3560 = vmatprep.subr.bf16.mxu0 0
        %3561 = vmatpush1.bf16.xpose.msra.mxu0 0
        %3562 = vmatprep.subr.bf16.mxu0 0
        %3563 = vmatpush1.bf16.xpose.msra.mxu0 0
        %3564 = vmatprep.subr.bf16.mxu0 0
        %3565 = vmatpush1.bf16.xpose.msra.mxu0 0
        %3566 = vmatprep.subr.bf16.mxu0 0
        %3567 = vmatpush1.bf16.xpose.msra.mxu0 0
        %3568 = vmatprep.subr.bf16.mxu0 0
        %3569 = vmatpush1.bf16.xpose.msra.mxu0 0
        %3570 = vmatprep.subr.bf16.mxu0 0
        %3571 = vmatpush1.bf16.xpose.msra.mxu0 0
        %3572 = vmatprep.subr.bf16.mxu0 0
        %3573 = vmatpush1.bf16.xpose.msra.mxu0 0
        %3574 = vmatprep.subr.bf16.mxu0 0
        %3575 = vmatpush1.bf16.xpose.msra.mxu0 0
        %3576 = vmatprep.subr.bf16.mxu0 0
        %3577 = vmatpush1.bf16.xpose.msra.mxu0 0
        %3578 = vmatprep.subr.bf16.mxu0 0
        %3579 = vmatpush1.bf16.xpose.msra.mxu0 0
        %3580 = vmatprep.subr.bf16.mxu0 0
        %3581 = vmatpush1.bf16.xpose.msra.mxu0 0
        %3582 = vmatprep.subr.bf16.mxu0 0
        %3583 = vmatpush1.bf16.xpose.msra.mxu0 0
        %3584 = vmatprep.subr.bf16.mxu0 0
        %3585 = vmatpush1.bf16.xpose.msra.mxu0 0
        %3586 = vmatprep.subr.bf16.mxu0 0
        %3587 = vmatpush1.bf16.xpose.msra.mxu0 0
        %3588 = vmatprep.subr.bf16.mxu0 0
        %3589 = vmatpush1.bf16.xpose.msra.mxu0 0
        %3590 = vmatprep.mubr.bf16.mxu0 0
        %3591 = vmatmul.mubr.bf16.gmra.mrb[0].mxu0 %v3335
        %v3592 = vpop.f32.mrb[0].mxu0
        %v3593 = vadd.f32 0.0, %v3592
        %v3594 = vpop.f32.mrb[0].mxu0
        %v3595 = vpop.f32.mrb[0].mxu0
        %v3596 = vpop.f32.mrb[0].mxu0
        %3597 = vdwg.mxu0
        %3598 = vmatprep.subr.bf16.mxu0 0
        %3599 = vmatpush1.bf16.xpose.msra.mxu0 %v3347
        %3600 = vmatprep.subr.bf16.mxu0 0
        %3601 = vmatpush1.bf16.xpose.msra.mxu0 0
        %3602 = vmatprep.subr.bf16.mxu0 0
        %3603 = vmatpush1.bf16.xpose.msra.mxu0 0
        %3604 = vmatprep.subr.bf16.mxu0 0
        %3605 = vmatpush1.bf16.xpose.msra.mxu0 0
        %3606 = vmatprep.subr.bf16.mxu0 0
        %3607 = vmatpush1.bf16.xpose.msra.mxu0 0
        %3608 = vmatprep.subr.bf16.mxu0 0
        %3609 = vmatpush1.bf16.xpose.msra.mxu0 0
        %3610 = vmatprep.subr.bf16.mxu0 0
        %3611 = vmatpush1.bf16.xpose.msra.mxu0 0
        %3612 = vmatprep.subr.bf16.mxu0 0
        %3613 = vmatpush1.bf16.xpose.msra.mxu0 0
        %3614 = vmatprep.subr.bf16.mxu0 0
        %3615 = vmatpush1.bf16.xpose.msra.mxu0 0
        %3616 = vmatprep.subr.bf16.mxu0 0
        %3617 = vmatpush1.bf16.xpose.msra.mxu0 0
        %3618 = vmatprep.subr.bf16.mxu0 0
        %3619 = vmatpush1.bf16.xpose.msra.mxu0 0
        %3620 = vmatprep.subr.bf16.mxu0 0
        %3621 = vmatpush1.bf16.xpose.msra.mxu0 0
        %3622 = vmatprep.subr.bf16.mxu0 0
        %3623 = vmatpush1.bf16.xpose.msra.mxu0 0
        %3624 = vmatprep.subr.bf16.mxu0 0
        %3625 = vmatpush1.bf16.xpose.msra.mxu0 0
        %3626 = vmatprep.subr.bf16.mxu0 0
        %3627 = vmatpush1.bf16.xpose.msra.mxu0 0
        %3628 = vmatprep.subr.bf16.mxu0 0
        %3629 = vmatpush1.bf16.xpose.msra.mxu0 0
        %3630 = vmatprep.mubr.bf16.mxu0 0
        %3631 = vmatmul.mubr.bf16.gmra.mrb[0].mxu0 %v3339
        %v3632 = vpop.f32.mrb[0].mxu0
        %v3633 = vadd.f32 0.0, %v3632
        %v3634 = vpop.f32.mrb[0].mxu0
        %v3635 = vpop.f32.mrb[0].mxu0
        %v3636 = vpop.f32.mrb[0].mxu0
        %3637 = vdwg.mxu0
        %v3638 = vmul.f32 %v3593, 0.088388346
        %v3639 = vmul.f32 %v3633, 0.088388346
        %v3640 = vsel %vm3440, %v3638, -inf
        %3641 = vmax.xlane.f32.xlu0 %v3640
        %v3642 = vpop.xlane.xlu0 %3641
        %v3643 = vsel %vm3440, %v3639, -inf
        %3644 = vmax.xlane.f32.xlu0 %v3643
        %v3645 = vpop.xlane.xlu0 %3644
        %v3646 = vsub.f32 %v3638, %v3642
        %v3647 = vsub.f32 %v3639, %v3645
        %v3648 = vmul.f32 %v3646, 1.442695
        %v3649 = vpow.pop %v3648
        %v3650 = vmul.f32 %v3647, 1.442695
        %v3651 = vpow.pop %v3650
        %v3652 = vsel %vm3440, %v3649, 0.0
        %3653 = vadd.xlane.f32.xlu0 %v3652
        %v3654 = vpop.xlane.xlu0 %3653
        %v3655 = vsel %vm3440, %v3651, 0.0
        %3656 = vadd.xlane.f32.xlu0 %v3655
        %v3657 = vpop.xlane.xlu0 %3656
        %v3658 = vrcp.pop %v3654
        %v3659 = vrcp.pop %v3657
        %v3660 = vmul.f32 %v3649, %v3658
        %v3661 = vmul.f32 %v3651, %v3659
        %v3662 = vpack.c.bf16 %v3660, %v3660
        %v3663 = vpack.c.bf16 %v3661, %v3661
        %v3665 = vsel %vm3440, %v3662, 0
        %v3668 = vsel %vm3468, %v3351, 0
        %3670 = vmatprep.subr.bf16.mxu0 0
        %3671 = vmatpush1.bf16.msra.mxu0 %v3668
        %3672 = vmatprep.subr.bf16.mxu0 0
        %3673 = vmatpush1.bf16.msra.mxu0 0
        %3674 = vmatprep.subr.bf16.mxu0 0
        %3675 = vmatpush1.bf16.msra.mxu0 0
        %3676 = vmatprep.subr.bf16.mxu0 0
        %3677 = vmatpush1.bf16.msra.mxu0 0
        %3678 = vmatprep.subr.bf16.mxu0 0
        %3679 = vmatpush1.bf16.msra.mxu0 0
        %3680 = vmatprep.subr.bf16.mxu0 0
        %3681 = vmatpush1.bf16.msra.mxu0 0
        %3682 = vmatprep.subr.bf16.mxu0 0
        %3683 = vmatpush1.bf16.msra.mxu0 0
        %3684 = vmatprep.subr.bf16.mxu0 0
        %3685 = vmatpush1.bf16.msra.mxu0 0
        %3686 = vmatprep.subr.bf16.mxu0 0
        %3687 = vmatpush1.bf16.msra.mxu0 0
        %3688 = vmatprep.subr.bf16.mxu0 0
        %3689 = vmatpush1.bf16.msra.mxu0 0
        %3690 = vmatprep.subr.bf16.mxu0 0
        %3691 = vmatpush1.bf16.msra.mxu0 0
        %3692 = vmatprep.subr.bf16.mxu0 0
        %3693 = vmatpush1.bf16.msra.mxu0 0
        %3694 = vmatprep.subr.bf16.mxu0 0
        %3695 = vmatpush1.bf16.msra.mxu0 0
        %3696 = vmatprep.subr.bf16.mxu0 0
        %3697 = vmatpush1.bf16.msra.mxu0 0
        %3698 = vmatprep.subr.bf16.mxu0 0
        %3699 = vmatpush1.bf16.msra.mxu0 0
        %3700 = vmatprep.subr.bf16.mxu0 0
        %3701 = vmatpush1.bf16.msra.mxu0 0
        %3702 = vmatprep.mubr.bf16.mxu0 0
        %3703 = vmatmul.mubr.bf16.gmra.mrb[0].mxu0 %v3665
        %v3704 = vpop.f32.mrb[0].mxu0
        %v3705 = vadd.f32 0.0, %v3704
        %v3706 = vpop.f32.mrb[0].mxu0
        %v3707 = vpop.f32.mrb[0].mxu0
        %v3708 = vpop.f32.mrb[0].mxu0
        %3709 = vdwg.mxu0
        %v3711 = vsel %vm3440, %v3663, 0
        %v3714 = vsel %vm3468, %v3355, 0
        %3716 = vmatprep.subr.bf16.mxu0 0
        %3717 = vmatpush1.bf16.msra.mxu0 %v3714
        %3718 = vmatprep.subr.bf16.mxu0 0
        %3719 = vmatpush1.bf16.msra.mxu0 0
        %3720 = vmatprep.subr.bf16.mxu0 0
        %3721 = vmatpush1.bf16.msra.mxu0 0
        %3722 = vmatprep.subr.bf16.mxu0 0
        %3723 = vmatpush1.bf16.msra.mxu0 0
        %3724 = vmatprep.subr.bf16.mxu0 0
        %3725 = vmatpush1.bf16.msra.mxu0 0
        %3726 = vmatprep.subr.bf16.mxu0 0
        %3727 = vmatpush1.bf16.msra.mxu0 0
        %3728 = vmatprep.subr.bf16.mxu0 0
        %3729 = vmatpush1.bf16.msra.mxu0 0
        %3730 = vmatprep.subr.bf16.mxu0 0
        %3731 = vmatpush1.bf16.msra.mxu0 0
        %3732 = vmatprep.subr.bf16.mxu0 0
        %3733 = vmatpush1.bf16.msra.mxu0 0
        %3734 = vmatprep.subr.bf16.mxu0 0
        %3735 = vmatpush1.bf16.msra.mxu0 0
        %3736 = vmatprep.subr.bf16.mxu0 0
        %3737 = vmatpush1.bf16.msra.mxu0 0
        %3738 = vmatprep.subr.bf16.mxu0 0
        %3739 = vmatpush1.bf16.msra.mxu0 0
        %3740 = vmatprep.subr.bf16.mxu0 0
        %3741 = vmatpush1.bf16.msra.mxu0 0
        %3742 = vmatprep.subr.bf16.mxu0 0
        %3743 = vmatpush1.bf16.msra.mxu0 0
        %3744 = vmatprep.subr.bf16.mxu0 0
        %3745 = vmatpush1.bf16.msra.mxu0 0
        %3746 = vmatprep.subr.bf16.mxu0 0
        %3747 = vmatpush1.bf16.msra.mxu0 0
        %3748 = vmatprep.mubr.bf16.mxu0 0
        %3749 = vmatmul.mubr.bf16.gmra.mrb[0].mxu0 %v3711
        %v3750 = vpop.f32.mrb[0].mxu0
        %v3751 = vadd.f32 0.0, %v3750
        %v3752 = vpop.f32.mrb[0].mxu0
        %v3753 = vpop.f32.mrb[0].mxu0
        %v3754 = vpop.f32.mrb[0].mxu0
        %3755 = vdwg.mxu0
        %3756 = vmatprep.subr.bf16.mxu0 0
        %3757 = vmatpush1.bf16.xpose.msra.mxu0 %v3344
        %3758 = vmatprep.subr.bf16.mxu0 0
        %3759 = vmatpush1.bf16.xpose.msra.mxu0 0
        %3760 = vmatprep.subr.bf16.mxu0 0
        %3761 = vmatpush1.bf16.xpose.msra.mxu0 0
        %3762 = vmatprep.subr.bf16.mxu0 0
        %3763 = vmatpush1.bf16.xpose.msra.mxu0 0
        %3764 = vmatprep.subr.bf16.mxu0 0
        %3765 = vmatpush1.bf16.xpose.msra.mxu0 0
        %3766 = vmatprep.subr.bf16.mxu0 0
        %3767 = vmatpush1.bf16.xpose.msra.mxu0 0
        %3768 = vmatprep.subr.bf16.mxu0 0
        %3769 = vmatpush1.bf16.xpose.msra.mxu0 0
        %3770 = vmatprep.subr.bf16.mxu0 0
        %3771 = vmatpush1.bf16.xpose.msra.mxu0 0
        %3772 = vmatprep.subr.bf16.mxu0 0
        %3773 = vmatpush1.bf16.xpose.msra.mxu0 0
        %3774 = vmatprep.subr.bf16.mxu0 0
        %3775 = vmatpush1.bf16.xpose.msra.mxu0 0
        %3776 = vmatprep.subr.bf16.mxu0 0
        %3777 = vmatpush1.bf16.xpose.msra.mxu0 0
        %3778 = vmatprep.subr.bf16.mxu0 0
        %3779 = vmatpush1.bf16.xpose.msra.mxu0 0
        %3780 = vmatprep.subr.bf16.mxu0 0
        %3781 = vmatpush1.bf16.xpose.msra.mxu0 0
        %3782 = vmatprep.subr.bf16.mxu0 0
        %3783 = vmatpush1.bf16.xpose.msra.mxu0 0
        %3784 = vmatprep.subr.bf16.mxu0 0
        %3785 = vmatpush1.bf16.xpose.msra.mxu0 0
        %3786 = vmatprep.subr.bf16.mxu0 0
        %3787 = vmatpush1.bf16.xpose.msra.mxu0 0
        %3788 = vmatprep.mubr.bf16.mxu0 0
        %3789 = vmatmul.mubr.bf16.gmra.mrb[0].mxu0 %v3336
        %v3790 = vpop.f32.mrb[0].mxu0
        %v3791 = vadd.f32 0.0, %v3790
        %v3792 = vpop.f32.mrb[0].mxu0
        %v3793 = vpop.f32.mrb[0].mxu0
        %v3794 = vpop.f32.mrb[0].mxu0
        %3795 = vdwg.mxu0
        %3796 = vmatprep.subr.bf16.mxu0 0
        %3797 = vmatpush1.bf16.xpose.msra.mxu0 %v3348
        %3798 = vmatprep.subr.bf16.mxu0 0
        %3799 = vmatpush1.bf16.xpose.msra.mxu0 0
        %3800 = vmatprep.subr.bf16.mxu0 0
        %3801 = vmatpush1.bf16.xpose.msra.mxu0 0
        %3802 = vmatprep.subr.bf16.mxu0 0
        %3803 = vmatpush1.bf16.xpose.msra.mxu0 0
        %3804 = vmatprep.subr.bf16.mxu0 0
        %3805 = vmatpush1.bf16.xpose.msra.mxu0 0
        %3806 = vmatprep.subr.bf16.mxu0 0
        %3807 = vmatpush1.bf16.xpose.msra.mxu0 0
        %3808 = vmatprep.subr.bf16.mxu0 0
        %3809 = vmatpush1.bf16.xpose.msra.mxu0 0
        %3810 = vmatprep.subr.bf16.mxu0 0
        %3811 = vmatpush1.bf16.xpose.msra.mxu0 0
        %3812 = vmatprep.subr.bf16.mxu0 0
        %3813 = vmatpush1.bf16.xpose.msra.mxu0 0
        %3814 = vmatprep.subr.bf16.mxu0 0
        %3815 = vmatpush1.bf16.xpose.msra.mxu0 0
        %3816 = vmatprep.subr.bf16.mxu0 0
        %3817 = vmatpush1.bf16.xpose.msra.mxu0 0
        %3818 = vmatprep.subr.bf16.mxu0 0
        %3819 = vmatpush1.bf16.xpose.msra.mxu0 0
        %3820 = vmatprep.subr.bf16.mxu0 0
        %3821 = vmatpush1.bf16.xpose.msra.mxu0 0
        %3822 = vmatprep.subr.bf16.mxu0 0
        %3823 = vmatpush1.bf16.xpose.msra.mxu0 0
        %3824 = vmatprep.subr.bf16.mxu0 0
        %3825 = vmatpush1.bf16.xpose.msra.mxu0 0
        %3826 = vmatprep.subr.bf16.mxu0 0
        %3827 = vmatpush1.bf16.xpose.msra.mxu0 0
        %3828 = vmatprep.mubr.bf16.mxu0 0
        %3829 = vmatmul.mubr.bf16.gmra.mrb[0].mxu0 %v3340
        %v3830 = vpop.f32.mrb[0].mxu0
        %v3831 = vadd.f32 0.0, %v3830
        %v3832 = vpop.f32.mrb[0].mxu0
        %v3833 = vpop.f32.mrb[0].mxu0
        %v3834 = vpop.f32.mrb[0].mxu0
        %3835 = vdwg.mxu0
        %v3836 = vmul.f32 %v3791, 0.088388346
        %v3837 = vmul.f32 %v3831, 0.088388346
        %v3838 = vsel %vm3440, %v3836, -inf
        %3839 = vmax.xlane.f32.xlu0 %v3838
        %v3840 = vpop.xlane.xlu0 %3839
        %v3841 = vsel %vm3440, %v3837, -inf
        %3842 = vmax.xlane.f32.xlu0 %v3841
        %v3843 = vpop.xlane.xlu0 %3842
        %v3844 = vsub.f32 %v3836, %v3840
        %v3845 = vsub.f32 %v3837, %v3843
        %v3846 = vmul.f32 %v3844, 1.442695
        %v3847 = vpow.pop %v3846
        %v3848 = vmul.f32 %v3845, 1.442695
        %v3849 = vpow.pop %v3848
        %v3850 = vsel %vm3440, %v3847, 0.0
        %3851 = vadd.xlane.f32.xlu0 %v3850
        %v3852 = vpop.xlane.xlu0 %3851
        %v3853 = vsel %vm3440, %v3849, 0.0
        %3854 = vadd.xlane.f32.xlu0 %v3853
        %v3855 = vpop.xlane.xlu0 %3854
        %v3856 = vrcp.pop %v3852
        %v3857 = vrcp.pop %v3855
        %v3858 = vmul.f32 %v3847, %v3856
        %v3859 = vmul.f32 %v3849, %v3857
        %v3860 = vpack.c.bf16 %v3858, %v3858
        %v3861 = vpack.c.bf16 %v3859, %v3859
        %v3863 = vsel %vm3440, %v3860, 0
        %v3866 = vsel %vm3468, %v3352, 0
        %3868 = vmatprep.subr.bf16.mxu0 0
        %3869 = vmatpush1.bf16.msra.mxu0 %v3866
        %3870 = vmatprep.subr.bf16.mxu0 0
        %3871 = vmatpush1.bf16.msra.mxu0 0
        %3872 = vmatprep.subr.bf16.mxu0 0
        %3873 = vmatpush1.bf16.msra.mxu0 0
        %3874 = vmatprep.subr.bf16.mxu0 0
        %3875 = vmatpush1.bf16.msra.mxu0 0
        %3876 = vmatprep.subr.bf16.mxu0 0
        %3877 = vmatpush1.bf16.msra.mxu0 0
        %3878 = vmatprep.subr.bf16.mxu0 0
        %3879 = vmatpush1.bf16.msra.mxu0 0
        %3880 = vmatprep.subr.bf16.mxu0 0
        %3881 = vmatpush1.bf16.msra.mxu0 0
        %3882 = vmatprep.subr.bf16.mxu0 0
        %3883 = vmatpush1.bf16.msra.mxu0 0
        %3884 = vmatprep.subr.bf16.mxu0 0
        %3885 = vmatpush1.bf16.msra.mxu0 0
        %3886 = vmatprep.subr.bf16.mxu0 0
        %3887 = vmatpush1.bf16.msra.mxu0 0
        %3888 = vmatprep.subr.bf16.mxu0 0
        %3889 = vmatpush1.bf16.msra.mxu0 0
        %3890 = vmatprep.subr.bf16.mxu0 0
        %3891 = vmatpush1.bf16.msra.mxu0 0
        %3892 = vmatprep.subr.bf16.mxu0 0
        %3893 = vmatpush1.bf16.msra.mxu0 0
        %3894 = vmatprep.subr.bf16.mxu0 0
        %3895 = vmatpush1.bf16.msra.mxu0 0
        %3896 = vmatprep.subr.bf16.mxu0 0
        %3897 = vmatpush1.bf16.msra.mxu0 0
        %3898 = vmatprep.subr.bf16.mxu0 0
        %3899 = vmatpush1.bf16.msra.mxu0 0
        %3900 = vmatprep.mubr.bf16.mxu0 0
        %3901 = vmatmul.mubr.bf16.gmra.mrb[0].mxu0 %v3863
        %v3902 = vpop.f32.mrb[0].mxu0
        %v3903 = vadd.f32 0.0, %v3902
        %v3904 = vpop.f32.mrb[0].mxu0
        %v3905 = vpop.f32.mrb[0].mxu0
        %v3906 = vpop.f32.mrb[0].mxu0
        %3907 = vdwg.mxu0
        %v3909 = vsel %vm3440, %v3861, 0
        %v3912 = vsel %vm3468, %v3356, 0
        %3914 = vmatprep.subr.bf16.mxu0 0
        %3915 = vmatpush1.bf16.msra.mxu0 %v3912
        %3916 = vmatprep.subr.bf16.mxu0 0
        %3917 = vmatpush1.bf16.msra.mxu0 0
        %3918 = vmatprep.subr.bf16.mxu0 0
        %3919 = vmatpush1.bf16.msra.mxu0 0
        %3920 = vmatprep.subr.bf16.mxu0 0
        %3921 = vmatpush1.bf16.msra.mxu0 0
        %3922 = vmatprep.subr.bf16.mxu0 0
        %3923 = vmatpush1.bf16.msra.mxu0 0
        %3924 = vmatprep.subr.bf16.mxu0 0
        %3925 = vmatpush1.bf16.msra.mxu0 0
        %3926 = vmatprep.subr.bf16.mxu0 0
        %3927 = vmatpush1.bf16.msra.mxu0 0
        %3928 = vmatprep.subr.bf16.mxu0 0
        %3929 = vmatpush1.bf16.msra.mxu0 0
        %3930 = vmatprep.subr.bf16.mxu0 0
        %3931 = vmatpush1.bf16.msra.mxu0 0
        %3932 = vmatprep.subr.bf16.mxu0 0
        %3933 = vmatpush1.bf16.msra.mxu0 0
        %3934 = vmatprep.subr.bf16.mxu0 0
        %3935 = vmatpush1.bf16.msra.mxu0 0
        %3936 = vmatprep.subr.bf16.mxu0 0
        %3937 = vmatpush1.bf16.msra.mxu0 0
        %3938 = vmatprep.subr.bf16.mxu0 0
        %3939 = vmatpush1.bf16.msra.mxu0 0
        %3940 = vmatprep.subr.bf16.mxu0 0
        %3941 = vmatpush1.bf16.msra.mxu0 0
        %3942 = vmatprep.subr.bf16.mxu0 0
        %3943 = vmatpush1.bf16.msra.mxu0 0
        %3944 = vmatprep.subr.bf16.mxu0 0
        %3945 = vmatpush1.bf16.msra.mxu0 0
        %3946 = vmatprep.mubr.bf16.mxu0 0
        %3947 = vmatmul.mubr.bf16.gmra.mrb[0].mxu0 %v3909
        %v3948 = vpop.f32.mrb[0].mxu0
        %v3949 = vadd.f32 0.0, %v3948
        %v3950 = vpop.f32.mrb[0].mxu0
        %v3951 = vpop.f32.mrb[0].mxu0
        %v3952 = vpop.f32.mrb[0].mxu0
        %3953 = vdwg.mxu0
        %3954 = vmatprep.subr.bf16.mxu0 0
        %3955 = vmatpush1.bf16.xpose.msra.mxu0 %v3345
        %3956 = vmatprep.subr.bf16.mxu0 0
        %3957 = vmatpush1.bf16.xpose.msra.mxu0 0
        %3958 = vmatprep.subr.bf16.mxu0 0
        %3959 = vmatpush1.bf16.xpose.msra.mxu0 0
        %3960 = vmatprep.subr.bf16.mxu0 0
        %3961 = vmatpush1.bf16.xpose.msra.mxu0 0
        %3962 = vmatprep.subr.bf16.mxu0 0
        %3963 = vmatpush1.bf16.xpose.msra.mxu0 0
        %3964 = vmatprep.subr.bf16.mxu0 0
        %3965 = vmatpush1.bf16.xpose.msra.mxu0 0
        %3966 = vmatprep.subr.bf16.mxu0 0
        %3967 = vmatpush1.bf16.xpose.msra.mxu0 0
        %3968 = vmatprep.subr.bf16.mxu0 0
        %3969 = vmatpush1.bf16.xpose.msra.mxu0 0
        %3970 = vmatprep.subr.bf16.mxu0 0
        %3971 = vmatpush1.bf16.xpose.msra.mxu0 0
        %3972 = vmatprep.subr.bf16.mxu0 0
        %3973 = vmatpush1.bf16.xpose.msra.mxu0 0
        %3974 = vmatprep.subr.bf16.mxu0 0
        %3975 = vmatpush1.bf16.xpose.msra.mxu0 0
        %3976 = vmatprep.subr.bf16.mxu0 0
        %3977 = vmatpush1.bf16.xpose.msra.mxu0 0
        %3978 = vmatprep.subr.bf16.mxu0 0
        %3979 = vmatpush1.bf16.xpose.msra.mxu0 0
        %3980 = vmatprep.subr.bf16.mxu0 0
        %3981 = vmatpush1.bf16.xpose.msra.mxu0 0
        %3982 = vmatprep.subr.bf16.mxu0 0
        %3983 = vmatpush1.bf16.xpose.msra.mxu0 0
        %3984 = vmatprep.subr.bf16.mxu0 0
        %3985 = vmatpush1.bf16.xpose.msra.mxu0 0
        %3986 = vmatprep.mubr.bf16.mxu0 0
        %3987 = vmatmul.mubr.bf16.gmra.mrb[0].mxu0 %v3337
        %v3988 = vpop.f32.mrb[0].mxu0
        %v3989 = vadd.f32 0.0, %v3988
        %v3990 = vpop.f32.mrb[0].mxu0
        %v3991 = vpop.f32.mrb[0].mxu0
        %v3992 = vpop.f32.mrb[0].mxu0
        %3993 = vdwg.mxu0
        %3994 = vmatprep.subr.bf16.mxu0 0
        %3995 = vmatpush1.bf16.xpose.msra.mxu0 %v3349
        %3996 = vmatprep.subr.bf16.mxu0 0
        %3997 = vmatpush1.bf16.xpose.msra.mxu0 0
        %3998 = vmatprep.subr.bf16.mxu0 0
        %3999 = vmatpush1.bf16.xpose.msra.mxu0 0
        %4000 = vmatprep.subr.bf16.mxu0 0
        %4001 = vmatpush1.bf16.xpose.msra.mxu0 0
        %4002 = vmatprep.subr.bf16.mxu0 0
        %4003 = vmatpush1.bf16.xpose.msra.mxu0 0
        %4004 = vmatprep.subr.bf16.mxu0 0
        %4005 = vmatpush1.bf16.xpose.msra.mxu0 0
        %4006 = vmatprep.subr.bf16.mxu0 0
        %4007 = vmatpush1.bf16.xpose.msra.mxu0 0
        %4008 = vmatprep.subr.bf16.mxu0 0
        %4009 = vmatpush1.bf16.xpose.msra.mxu0 0
        %4010 = vmatprep.subr.bf16.mxu0 0
        %4011 = vmatpush1.bf16.xpose.msra.mxu0 0
        %4012 = vmatprep.subr.bf16.mxu0 0
        %4013 = vmatpush1.bf16.xpose.msra.mxu0 0
        %4014 = vmatprep.subr.bf16.mxu0 0
        %4015 = vmatpush1.bf16.xpose.msra.mxu0 0
        %4016 = vmatprep.subr.bf16.mxu0 0
        %4017 = vmatpush1.bf16.xpose.msra.mxu0 0
        %4018 = vmatprep.subr.bf16.mxu0 0
        %4019 = vmatpush1.bf16.xpose.msra.mxu0 0
        %4020 = vmatprep.subr.bf16.mxu0 0
        %4021 = vmatpush1.bf16.xpose.msra.mxu0 0
        %4022 = vmatprep.subr.bf16.mxu0 0
        %4023 = vmatpush1.bf16.xpose.msra.mxu0 0
        %4024 = vmatprep.subr.bf16.mxu0 0
        %4025 = vmatpush1.bf16.xpose.msra.mxu0 0
        %4026 = vmatprep.mubr.bf16.mxu0 0
        %4027 = vmatmul.mubr.bf16.gmra.mrb[0].mxu0 %v3341
        %v4028 = vpop.f32.mrb[0].mxu0
        %v4029 = vadd.f32 0.0, %v4028
        %v4030 = vpop.f32.mrb[0].mxu0
        %v4031 = vpop.f32.mrb[0].mxu0
        %v4032 = vpop.f32.mrb[0].mxu0
        %4033 = vdwg.mxu0
        %v4034 = vmul.f32 %v3989, 0.088388346
        %v4035 = vmul.f32 %v4029, 0.088388346
        %v4036 = vsel %vm3440, %v4034, -inf
        %4037 = vmax.xlane.f32.xlu0 %v4036
        %v4038 = vpop.xlane.xlu0 %4037
        %v4039 = vsel %vm3440, %v4035, -inf
        %4040 = vmax.xlane.f32.xlu0 %v4039
        %v4041 = vpop.xlane.xlu0 %4040
        %v4042 = vsub.f32 %v4034, %v4038
        %v4043 = vsub.f32 %v4035, %v4041
        %v4044 = vmul.f32 %v4042, 1.442695
        %v4045 = vpow.pop %v4044
        %v4046 = vmul.f32 %v4043, 1.442695
        %v4047 = vpow.pop %v4046
        %v4048 = vsel %vm3440, %v4045, 0.0
        %4049 = vadd.xlane.f32.xlu0 %v4048
        %v4050 = vpop.xlane.xlu0 %4049
        %v4051 = vsel %vm3440, %v4047, 0.0
        %4052 = vadd.xlane.f32.xlu0 %v4051
        %v4053 = vpop.xlane.xlu0 %4052
        %v4054 = vrcp.pop %v4050
        %v4055 = vrcp.pop %v4053
        %v4056 = vmul.f32 %v4045, %v4054
        %v4057 = vmul.f32 %v4047, %v4055
        %v4058 = vpack.c.bf16 %v4056, %v4056
        %v4059 = vpack.c.bf16 %v4057, %v4057
        %v4061 = vsel %vm3440, %v4058, 0
        %v4064 = vsel %vm3468, %v3353, 0
        %4066 = vmatprep.subr.bf16.mxu0 0
        %4067 = vmatpush1.bf16.msra.mxu0 %v4064
        %4068 = vmatprep.subr.bf16.mxu0 0
        %4069 = vmatpush1.bf16.msra.mxu0 0
        %4070 = vmatprep.subr.bf16.mxu0 0
        %4071 = vmatpush1.bf16.msra.mxu0 0
        %4072 = vmatprep.subr.bf16.mxu0 0
        %4073 = vmatpush1.bf16.msra.mxu0 0
        %4074 = vmatprep.subr.bf16.mxu0 0
        %4075 = vmatpush1.bf16.msra.mxu0 0
        %4076 = vmatprep.subr.bf16.mxu0 0
        %4077 = vmatpush1.bf16.msra.mxu0 0
        %4078 = vmatprep.subr.bf16.mxu0 0
        %4079 = vmatpush1.bf16.msra.mxu0 0
        %4080 = vmatprep.subr.bf16.mxu0 0
        %4081 = vmatpush1.bf16.msra.mxu0 0
        %4082 = vmatprep.subr.bf16.mxu0 0
        %4083 = vmatpush1.bf16.msra.mxu0 0
        %4084 = vmatprep.subr.bf16.mxu0 0
        %4085 = vmatpush1.bf16.msra.mxu0 0
        %4086 = vmatprep.subr.bf16.mxu0 0
        %4087 = vmatpush1.bf16.msra.mxu0 0
        %4088 = vmatprep.subr.bf16.mxu0 0
        %4089 = vmatpush1.bf16.msra.mxu0 0
        %4090 = vmatprep.subr.bf16.mxu0 0
        %4091 = vmatpush1.bf16.msra.mxu0 0
        %4092 = vmatprep.subr.bf16.mxu0 0
        %4093 = vmatpush1.bf16.msra.mxu0 0
        %4094 = vmatprep.subr.bf16.mxu0 0
        %4095 = vmatpush1.bf16.msra.mxu0 0
        %4096 = vmatprep.subr.bf16.mxu0 0
        %4097 = vmatpush1.bf16.msra.mxu0 0
        %4098 = vmatprep.mubr.bf16.mxu0 0
        %4099 = vmatmul.mubr.bf16.gmra.mrb[0].mxu0 %v4061
        %v4100 = vpop.f32.mrb[0].mxu0
        %v4101 = vadd.f32 0.0, %v4100
        %v4102 = vpop.f32.mrb[0].mxu0
        %v4103 = vpop.f32.mrb[0].mxu0
        %v4104 = vpop.f32.mrb[0].mxu0
        %4105 = vdwg.mxu0
        %v4107 = vsel %vm3440, %v4059, 0
        %v4110 = vsel %vm3468, %v3357, 0
        %4112 = vmatprep.subr.bf16.mxu0 0
        %4113 = vmatpush1.bf16.msra.mxu0 %v4110
        %4114 = vmatprep.subr.bf16.mxu0 0
        %4115 = vmatpush1.bf16.msra.mxu0 0
        %4116 = vmatprep.subr.bf16.mxu0 0
        %4117 = vmatpush1.bf16.msra.mxu0 0
        %4118 = vmatprep.subr.bf16.mxu0 0
        %4119 = vmatpush1.bf16.msra.mxu0 0
        %4120 = vmatprep.subr.bf16.mxu0 0
        %4121 = vmatpush1.bf16.msra.mxu0 0
        %4122 = vmatprep.subr.bf16.mxu0 0
        %4123 = vmatpush1.bf16.msra.mxu0 0
        %4124 = vmatprep.subr.bf16.mxu0 0
        %4125 = vmatpush1.bf16.msra.mxu0 0
        %4126 = vmatprep.subr.bf16.mxu0 0
        %4127 = vmatpush1.bf16.msra.mxu0 0
        %4128 = vmatprep.subr.bf16.mxu0 0
        %4129 = vmatpush1.bf16.msra.mxu0 0
        %4130 = vmatprep.subr.bf16.mxu0 0
        %4131 = vmatpush1.bf16.msra.mxu0 0
        %4132 = vmatprep.subr.bf16.mxu0 0
        %4133 = vmatpush1.bf16.msra.mxu0 0
        %4134 = vmatprep.subr.bf16.mxu0 0
        %4135 = vmatpush1.bf16.msra.mxu0 0
        %4136 = vmatprep.subr.bf16.mxu0 0
        %4137 = vmatpush1.bf16.msra.mxu0 0
        %4138 = vmatprep.subr.bf16.mxu0 0
        %4139 = vmatpush1.bf16.msra.mxu0 0
        %4140 = vmatprep.subr.bf16.mxu0 0
        %4141 = vmatpush1.bf16.msra.mxu0 0
        %4142 = vmatprep.subr.bf16.mxu0 0
        %4143 = vmatpush1.bf16.msra.mxu0 0
        %4144 = vmatprep.mubr.bf16.mxu0 0
        %4145 = vmatmul.mubr.bf16.gmra.mrb[0].mxu0 %v4107
        %v4146 = vpop.f32.mrb[0].mxu0
        %v4147 = vadd.f32 0.0, %v4146
        %v4148 = vpop.f32.mrb[0].mxu0
        %v4149 = vpop.f32.mrb[0].mxu0
        %v4150 = vpop.f32.mrb[0].mxu0
        %4151 = vdwg.mxu0
        %v4152 = vpack.c.bf16 %v3553, %v3507
        %v4153 = vpack.c.bf16 %v3751, %v3705
        %v4154 = vpack.c.bf16 %v3949, %v3903
        %v4155 = vpack.c.bf16 %v4147, %v4101
        %v4156 = vld [vmem:[%s338] sm:$0xff]
        %v4157 = vld [vmem:[%s338 + $0x8] sm:$0xff]
        %v4158 = vld [vmem:[%s338 + $0x10] sm:$0xff]
        %v4159 = vld [vmem:[%s338 + $0x18] sm:$0xff]
        %v4160 = vld [vmem:[%s338 + $0x20] sm:$0xff]
        %v4161 = vld [vmem:[%s338 + $0x28] sm:$0xff]
        %v4162 = vld [vmem:[%s338 + $0x30] sm:$0xff]
        %v4163 = vld [vmem:[%s338 + $0x38] sm:$0xff]
        %v4164 = vld [vmem:[%s338 + $0x40] sm:$0xff]
        %v4165 = vld [vmem:[%s338 + $0x48] sm:$0xff]
        %v4166 = vld [vmem:[%s338 + $0x50] sm:$0xff]
        %v4167 = vld [vmem:[%s338 + $0x58] sm:$0xff]
        %v4168 = vld [vmem:[%s338 + $0x60] sm:$0xff]
        %v4169 = vld [vmem:[%s338 + $0x68] sm:$0xff]
        %v4170 = vld [vmem:[%s338 + $0x70] sm:$0xff]
        %v4171 = vld [vmem:[%s338 + $0x78] sm:$0xff]
        %v4172 = vld [vmem:[%s338 + $0x80] sm:$0xff]
        %v4173 = vld [vmem:[%s338 + $0x88] sm:$0xff]
        %v4174 = vld [vmem:[%s338 + $0x90] sm:$0xff]
        %v4175 = vld [vmem:[%s338 + $0x98] sm:$0xff]
        %v4176 = vld [vmem:[%s338 + $0xa0] sm:$0xff]
        %v4177 = vld [vmem:[%s338 + $0xa8] sm:$0xff]
        %v4178 = vld [vmem:[%s338 + $0xb0] sm:$0xff]
        %v4179 = vld [vmem:[%s338 + $0xb8] sm:$0xff]
        %v4180 = vld [vmem:[%s338 + $0xc0] sm:$0xff]
        %v4181 = vld [vmem:[%s338 + $0xc8] sm:$0xff]
        %v4182 = vld [vmem:[%s338 + $0xd0] sm:$0xff]
        %v4183 = vld [vmem:[%s338 + $0xd8] sm:$0xff]
        %v4184 = vld [vmem:[%s338 + $0xe0] sm:$0xff]
        %v4185 = vld [vmem:[%s338 + $0xe8] sm:$0xff]
        %v4186 = vld [vmem:[%s338 + $0xf0] sm:$0xff]
        %v4187 = vld [vmem:[%s338 + $0xf8] sm:$0xff]
        %v4188 = vld [vmem:[%s338 + $0x100] sm:$0xff]
        %v4189 = vld [vmem:[%s338 + $0x108] sm:$0xff]
        %v4190 = vld [vmem:[%s338 + $0x110] sm:$0xff]
        %v4191 = vld [vmem:[%s338 + $0x118] sm:$0xff]
        %v4192 = vld [vmem:[%s338 + $0x120] sm:$0xff]
        %v4193 = vld [vmem:[%s338 + $0x128] sm:$0xff]
        %v4194 = vld [vmem:[%s338 + $0x130] sm:$0xff]
        %v4195 = vld [vmem:[%s338 + $0x138] sm:$0xff]
        %v4196 = vld [vmem:[%s338 + $0x140] sm:$0xff]
        %v4197 = vld [vmem:[%s338 + $0x148] sm:$0xff]
        %v4198 = vld [vmem:[%s338 + $0x150] sm:$0xff]
        %v4199 = vld [vmem:[%s338 + $0x158] sm:$0xff]
        %v4200 = vld [vmem:[%s338 + $0x160] sm:$0xff]
        %v4201 = vld [vmem:[%s338 + $0x168] sm:$0xff]
        %v4202 = vld [vmem:[%s338 + $0x170] sm:$0xff]
        %v4203 = vld [vmem:[%s338 + $0x178] sm:$0xff]
        %v4204 = vld [vmem:[%s338 + $0x180] sm:$0xff]
        %v4205 = vld [vmem:[%s338 + $0x188] sm:$0xff]
        %v4206 = vld [vmem:[%s338 + $0x190] sm:$0xff]
        %v4207 = vld [vmem:[%s338 + $0x198] sm:$0xff]
        %v4208 = vld [vmem:[%s338 + $0x1a0] sm:$0xff]
        %v4209 = vld [vmem:[%s338 + $0x1a8] sm:$0xff]
        %v4210 = vld [vmem:[%s338 + $0x1b0] sm:$0xff]
        %v4211 = vld [vmem:[%s338 + $0x1b8] sm:$0xff]
        %v4212 = vld [vmem:[%s338 + $0x1c0] sm:$0xff]
        %v4213 = vld [vmem:[%s338 + $0x1c8] sm:$0xff]
        %v4214 = vld [vmem:[%s338 + $0x1d0] sm:$0xff]
        %v4215 = vld [vmem:[%s338 + $0x1d8] sm:$0xff]
        %v4216 = vld [vmem:[%s338 + $0x1e0] sm:$0xff]
        %v4217 = vld [vmem:[%s338 + $0x1e8] sm:$0xff]
        %v4218 = vld [vmem:[%s338 + $0x1f0] sm:$0xff]
        %v4219 = vld [vmem:[%s338 + $0x1f8] sm:$0xff]
        %v4220 = vld [vmem:[%s338 + $0x200] sm:$0xff]
        %v4221 = vld [vmem:[%s338 + $0x208] sm:$0xff]
        %v4222 = vld [vmem:[%s338 + $0x210] sm:$0xff]
        %v4223 = vld [vmem:[%s338 + $0x218] sm:$0xff]
        %v4224 = vld [vmem:[%s338 + $0x220] sm:$0xff]
        %v4225 = vld [vmem:[%s338 + $0x228] sm:$0xff]
        %v4226 = vld [vmem:[%s338 + $0x230] sm:$0xff]
        %v4227 = vld [vmem:[%s338 + $0x238] sm:$0xff]
        %v4228 = vld [vmem:[%s338 + $0x240] sm:$0xff]
        %v4229 = vld [vmem:[%s338 + $0x248] sm:$0xff]
        %v4230 = vld [vmem:[%s338 + $0x250] sm:$0xff]
        %v4231 = vld [vmem:[%s338 + $0x258] sm:$0xff]
        %v4232 = vld [vmem:[%s338 + $0x260] sm:$0xff]
        %v4233 = vld [vmem:[%s338 + $0x268] sm:$0xff]
        %v4234 = vld [vmem:[%s338 + $0x270] sm:$0xff]
        %v4235 = vld [vmem:[%s338 + $0x278] sm:$0xff]
        %v4236 = vld [vmem:[%s338 + $0x280] sm:$0xff]
        %v4237 = vld [vmem:[%s338 + $0x288] sm:$0xff]
        %v4238 = vld [vmem:[%s338 + $0x290] sm:$0xff]
        %v4239 = vld [vmem:[%s338 + $0x298] sm:$0xff]
        %v4240 = vld [vmem:[%s338 + $0x2a0] sm:$0xff]
        %v4241 = vld [vmem:[%s338 + $0x2a8] sm:$0xff]
        %v4242 = vld [vmem:[%s338 + $0x2b0] sm:$0xff]
        %v4243 = vld [vmem:[%s338 + $0x2b8] sm:$0xff]
        %v4244 = vld [vmem:[%s338 + $0x2c0] sm:$0xff]
        %v4245 = vld [vmem:[%s338 + $0x2c8] sm:$0xff]
        %v4246 = vld [vmem:[%s338 + $0x2d0] sm:$0xff]
        %v4247 = vld [vmem:[%s338 + $0x2d8] sm:$0xff]
        %v4248 = vld [vmem:[%s338 + $0x2e0] sm:$0xff]
        %v4249 = vld [vmem:[%s338 + $0x2e8] sm:$0xff]
        %v4250 = vld [vmem:[%s338 + $0x2f0] sm:$0xff]
        %v4251 = vld [vmem:[%s338 + $0x2f8] sm:$0xff]
        %v4252 = vld [vmem:[%s338 + $0x300] sm:$0xff]
        %v4253 = vld [vmem:[%s338 + $0x308] sm:$0xff]
        %v4254 = vld [vmem:[%s338 + $0x310] sm:$0xff]
        %v4255 = vld [vmem:[%s338 + $0x318] sm:$0xff]
        %v4256 = vld [vmem:[%s338 + $0x320] sm:$0xff]
        %v4257 = vld [vmem:[%s338 + $0x328] sm:$0xff]
        %v4258 = vld [vmem:[%s338 + $0x330] sm:$0xff]
        %v4259 = vld [vmem:[%s338 + $0x338] sm:$0xff]
        %v4260 = vld [vmem:[%s338 + $0x340] sm:$0xff]
        %v4261 = vld [vmem:[%s338 + $0x348] sm:$0xff]
        %v4262 = vld [vmem:[%s338 + $0x350] sm:$0xff]
        %v4263 = vld [vmem:[%s338 + $0x358] sm:$0xff]
        %v4264 = vld [vmem:[%s338 + $0x360] sm:$0xff]
        %v4265 = vld [vmem:[%s338 + $0x368] sm:$0xff]
        %v4266 = vld [vmem:[%s338 + $0x370] sm:$0xff]
        %v4267 = vld [vmem:[%s338 + $0x378] sm:$0xff]
        %v4268 = vld [vmem:[%s338 + $0x380] sm:$0xff]
        %v4269 = vld [vmem:[%s338 + $0x388] sm:$0xff]
        %v4270 = vld [vmem:[%s338 + $0x390] sm:$0xff]
        %v4271 = vld [vmem:[%s338 + $0x398] sm:$0xff]
        %v4272 = vld [vmem:[%s338 + $0x3a0] sm:$0xff]
        %v4273 = vld [vmem:[%s338 + $0x3a8] sm:$0xff]
        %v4274 = vld [vmem:[%s338 + $0x3b0] sm:$0xff]
        %v4275 = vld [vmem:[%s338 + $0x3b8] sm:$0xff]
        %v4276 = vld [vmem:[%s338 + $0x3c0] sm:$0xff]
        %v4277 = vld [vmem:[%s338 + $0x3c8] sm:$0xff]
        %v4278 = vld [vmem:[%s338 + $0x3d0] sm:$0xff]
        %v4279 = vld [vmem:[%s338 + $0x3d8] sm:$0xff]
        %v4280 = vld [vmem:[%s338 + $0x3e0] sm:$0xff]
        %v4281 = vld [vmem:[%s338 + $0x3e8] sm:$0xff]
        %v4282 = vld [vmem:[%s338 + $0x3f0] sm:$0xff]
        %v4283 = vld [vmem:[%s338 + $0x3f8] sm:$0xff]
        %v4285 = vlaneseq
        %v4286 = vshrl.u32 %v4285, 7
        %v4287 = vsub.s32 0, %v4286
        %v4288 = vrot.slane %v432, %v4287
        %v4289 = vlaneseq
        %v4290 = vshrl.u32 %v4289, 7
        %v4291 = vsub.s32 1, %v4290
        %v4292 = vrot.slane %v432, %v4291
        %v4293 = vlaneseq
        %v4294 = vshrl.u32 %v4293, 7
        %v4295 = vsub.s32 2, %v4294
        %v4296 = vrot.slane %v432, %v4295
        %v4297 = vlaneseq
        %v4298 = vshrl.u32 %v4297, 7
        %v4299 = vsub.s32 3, %v4298
        %v4300 = vrot.slane %v432, %v4299
        %v4433 = vunpack.c.l.b16 %v4156
        %v4434 = vunpack.c.h.b16 %v4156
        %v4435 = vunpack.c.l.b16 %v4157
        %v4436 = vunpack.c.h.b16 %v4157
        %v4437 = vunpack.c.l.b16 %v4158
        %v4438 = vunpack.c.h.b16 %v4158
        %v4439 = vunpack.c.l.b16 %v4159
        %v4440 = vunpack.c.h.b16 %v4159
        %v4441 = vunpack.c.l.b16 %v4160
        %v4442 = vunpack.c.h.b16 %v4160
        %v4443 = vunpack.c.l.b16 %v4161
        %v4444 = vunpack.c.h.b16 %v4161
        %v4445 = vunpack.c.l.b16 %v4162
        %v4446 = vunpack.c.h.b16 %v4162
        %v4447 = vunpack.c.l.b16 %v4163
        %v4448 = vunpack.c.h.b16 %v4163
        %v4449 = vunpack.c.l.b16 %v4164
        %v4450 = vunpack.c.h.b16 %v4164
        %v4451 = vunpack.c.l.b16 %v4165
        %v4452 = vunpack.c.h.b16 %v4165
        %v4453 = vunpack.c.l.b16 %v4166
        %v4454 = vunpack.c.h.b16 %v4166
        %v4455 = vunpack.c.l.b16 %v4167
        %v4456 = vunpack.c.h.b16 %v4167
        %v4457 = vunpack.c.l.b16 %v4168
        %v4458 = vunpack.c.h.b16 %v4168
        %v4459 = vunpack.c.l.b16 %v4169
        %v4460 = vunpack.c.h.b16 %v4169
        %v4461 = vunpack.c.l.b16 %v4170
        %v4462 = vunpack.c.h.b16 %v4170
        %v4463 = vunpack.c.l.b16 %v4171
        %v4464 = vunpack.c.h.b16 %v4171
        %v4465 = vunpack.c.l.b16 %v4172
        %v4466 = vunpack.c.h.b16 %v4172
        %v4467 = vunpack.c.l.b16 %v4173
        %v4468 = vunpack.c.h.b16 %v4173
        %v4469 = vunpack.c.l.b16 %v4174
        %v4470 = vunpack.c.h.b16 %v4174
        %v4471 = vunpack.c.l.b16 %v4175
        %v4472 = vunpack.c.h.b16 %v4175
        %v4473 = vunpack.c.l.b16 %v4176
        %v4474 = vunpack.c.h.b16 %v4176
        %v4475 = vunpack.c.l.b16 %v4177
        %v4476 = vunpack.c.h.b16 %v4177
        %v4477 = vunpack.c.l.b16 %v4178
        %v4478 = vunpack.c.h.b16 %v4178
        %v4479 = vunpack.c.l.b16 %v4179
        %v4480 = vunpack.c.h.b16 %v4179
        %v4481 = vunpack.c.l.b16 %v4180
        %v4482 = vunpack.c.h.b16 %v4180
        %v4483 = vunpack.c.l.b16 %v4181
        %v4484 = vunpack.c.h.b16 %v4181
        %v4485 = vunpack.c.l.b16 %v4182
        %v4486 = vunpack.c.h.b16 %v4182
        %v4487 = vunpack.c.l.b16 %v4183
        %v4488 = vunpack.c.h.b16 %v4183
        %v4489 = vunpack.c.l.b16 %v4184
        %v4490 = vunpack.c.h.b16 %v4184
        %v4491 = vunpack.c.l.b16 %v4185
        %v4492 = vunpack.c.h.b16 %v4185
        %v4493 = vunpack.c.l.b16 %v4186
        %v4494 = vunpack.c.h.b16 %v4186
        %v4495 = vunpack.c.l.b16 %v4187
        %v4496 = vunpack.c.h.b16 %v4187
        %v4497 = vunpack.c.l.b16 %v4188
        %v4498 = vunpack.c.h.b16 %v4188
        %v4499 = vunpack.c.l.b16 %v4189
        %v4500 = vunpack.c.h.b16 %v4189
        %v4501 = vunpack.c.l.b16 %v4190
        %v4502 = vunpack.c.h.b16 %v4190
        %v4503 = vunpack.c.l.b16 %v4191
        %v4504 = vunpack.c.h.b16 %v4191
        %v4505 = vunpack.c.l.b16 %v4192
        %v4506 = vunpack.c.h.b16 %v4192
        %v4507 = vunpack.c.l.b16 %v4193
        %v4508 = vunpack.c.h.b16 %v4193
        %v4509 = vunpack.c.l.b16 %v4194
        %v4510 = vunpack.c.h.b16 %v4194
        %v4511 = vunpack.c.l.b16 %v4195
        %v4512 = vunpack.c.h.b16 %v4195
        %v4513 = vunpack.c.l.b16 %v4196
        %v4514 = vunpack.c.h.b16 %v4196
        %v4515 = vunpack.c.l.b16 %v4197
        %v4516 = vunpack.c.h.b16 %v4197
        %v4517 = vunpack.c.l.b16 %v4198
        %v4518 = vunpack.c.h.b16 %v4198
        %v4519 = vunpack.c.l.b16 %v4199
        %v4520 = vunpack.c.h.b16 %v4199
        %v4521 = vunpack.c.l.b16 %v4200
        %v4522 = vunpack.c.h.b16 %v4200
        %v4523 = vunpack.c.l.b16 %v4201
        %v4524 = vunpack.c.h.b16 %v4201
        %v4525 = vunpack.c.l.b16 %v4202
        %v4526 = vunpack.c.h.b16 %v4202
        %v4527 = vunpack.c.l.b16 %v4203
        %v4528 = vunpack.c.h.b16 %v4203
        %v4529 = vunpack.c.l.b16 %v4204
        %v4530 = vunpack.c.h.b16 %v4204
        %v4531 = vunpack.c.l.b16 %v4205
        %v4532 = vunpack.c.h.b16 %v4205
        %v4533 = vunpack.c.l.b16 %v4206
        %v4534 = vunpack.c.h.b16 %v4206
        %v4535 = vunpack.c.l.b16 %v4207
        %v4536 = vunpack.c.h.b16 %v4207
        %v4537 = vunpack.c.l.b16 %v4208
        %v4538 = vunpack.c.h.b16 %v4208
        %v4539 = vunpack.c.l.b16 %v4209
        %v4540 = vunpack.c.h.b16 %v4209
        %v4541 = vunpack.c.l.b16 %v4210
        %v4542 = vunpack.c.h.b16 %v4210
        %v4543 = vunpack.c.l.b16 %v4211
        %v4544 = vunpack.c.h.b16 %v4211
        %v4545 = vunpack.c.l.b16 %v4212
        %v4546 = vunpack.c.h.b16 %v4212
        %v4547 = vunpack.c.l.b16 %v4213
        %v4548 = vunpack.c.h.b16 %v4213
        %v4549 = vunpack.c.l.b16 %v4214
        %v4550 = vunpack.c.h.b16 %v4214
        %v4551 = vunpack.c.l.b16 %v4215
        %v4552 = vunpack.c.h.b16 %v4215
        %v4553 = vunpack.c.l.b16 %v4216
        %v4554 = vunpack.c.h.b16 %v4216
        %v4555 = vunpack.c.l.b16 %v4217
        %v4556 = vunpack.c.h.b16 %v4217
        %v4557 = vunpack.c.l.b16 %v4218
        %v4558 = vunpack.c.h.b16 %v4218
        %v4559 = vunpack.c.l.b16 %v4219
        %v4560 = vunpack.c.h.b16 %v4219
        %v4561 = vunpack.c.l.b16 %v4220
        %v4562 = vunpack.c.h.b16 %v4220
        %v4563 = vunpack.c.l.b16 %v4221
        %v4564 = vunpack.c.h.b16 %v4221
        %v4565 = vunpack.c.l.b16 %v4222
        %v4566 = vunpack.c.h.b16 %v4222
        %v4567 = vunpack.c.l.b16 %v4223
        %v4568 = vunpack.c.h.b16 %v4223
        %v4569 = vunpack.c.l.b16 %v4224
        %v4570 = vunpack.c.h.b16 %v4224
        %v4571 = vunpack.c.l.b16 %v4225
        %v4572 = vunpack.c.h.b16 %v4225
        %v4573 = vunpack.c.l.b16 %v4226
        %v4574 = vunpack.c.h.b16 %v4226
        %v4575 = vunpack.c.l.b16 %v4227
        %v4576 = vunpack.c.h.b16 %v4227
        %v4577 = vunpack.c.l.b16 %v4228
        %v4578 = vunpack.c.h.b16 %v4228
        %v4579 = vunpack.c.l.b16 %v4229
        %v4580 = vunpack.c.h.b16 %v4229
        %v4581 = vunpack.c.l.b16 %v4230
        %v4582 = vunpack.c.h.b16 %v4230
        %v4583 = vunpack.c.l.b16 %v4231
        %v4584 = vunpack.c.h.b16 %v4231
        %v4585 = vunpack.c.l.b16 %v4232
        %v4586 = vunpack.c.h.b16 %v4232
        %v4587 = vunpack.c.l.b16 %v4233
        %v4588 = vunpack.c.h.b16 %v4233
        %v4589 = vunpack.c.l.b16 %v4234
        %v4590 = vunpack.c.h.b16 %v4234
        %v4591 = vunpack.c.l.b16 %v4235
        %v4592 = vunpack.c.h.b16 %v4235
        %v4593 = vunpack.c.l.b16 %v4236
        %v4594 = vunpack.c.h.b16 %v4236
        %v4595 = vunpack.c.l.b16 %v4237
        %v4596 = vunpack.c.h.b16 %v4237
        %v4597 = vunpack.c.l.b16 %v4238
        %v4598 = vunpack.c.h.b16 %v4238
        %v4599 = vunpack.c.l.b16 %v4239
        %v4600 = vunpack.c.h.b16 %v4239
        %v4601 = vunpack.c.l.b16 %v4240
        %v4602 = vunpack.c.h.b16 %v4240
        %v4603 = vunpack.c.l.b16 %v4241
        %v4604 = vunpack.c.h.b16 %v4241
        %v4605 = vunpack.c.l.b16 %v4242
        %v4606 = vunpack.c.h.b16 %v4242
        %v4607 = vunpack.c.l.b16 %v4243
        %v4608 = vunpack.c.h.b16 %v4243
        %v4609 = vunpack.c.l.b16 %v4244
        %v4610 = vunpack.c.h.b16 %v4244
        %v4611 = vunpack.c.l.b16 %v4245
        %v4612 = vunpack.c.h.b16 %v4245
        %v4613 = vunpack.c.l.b16 %v4246
        %v4614 = vunpack.c.h.b16 %v4246
        %v4615 = vunpack.c.l.b16 %v4247
        %v4616 = vunpack.c.h.b16 %v4247
        %v4617 = vunpack.c.l.b16 %v4248
        %v4618 = vunpack.c.h.b16 %v4248
        %v4619 = vunpack.c.l.b16 %v4249
        %v4620 = vunpack.c.h.b16 %v4249
        %v4621 = vunpack.c.l.b16 %v4250
        %v4622 = vunpack.c.h.b16 %v4250
        %v4623 = vunpack.c.l.b16 %v4251
        %v4624 = vunpack.c.h.b16 %v4251
        %v4625 = vunpack.c.l.b16 %v4252
        %v4626 = vunpack.c.h.b16 %v4252
        %v4627 = vunpack.c.l.b16 %v4253
        %v4628 = vunpack.c.h.b16 %v4253
        %v4629 = vunpack.c.l.b16 %v4254
        %v4630 = vunpack.c.h.b16 %v4254
        %v4631 = vunpack.c.l.b16 %v4255
        %v4632 = vunpack.c.h.b16 %v4255
        %v4633 = vunpack.c.l.b16 %v4256
        %v4634 = vunpack.c.h.b16 %v4256
        %v4635 = vunpack.c.l.b16 %v4257
        %v4636 = vunpack.c.h.b16 %v4257
        %v4637 = vunpack.c.l.b16 %v4258
        %v4638 = vunpack.c.h.b16 %v4258
        %v4639 = vunpack.c.l.b16 %v4259
        %v4640 = vunpack.c.h.b16 %v4259
        %v4641 = vunpack.c.l.b16 %v4260
        %v4642 = vunpack.c.h.b16 %v4260
        %v4643 = vunpack.c.l.b16 %v4261
        %v4644 = vunpack.c.h.b16 %v4261
        %v4645 = vunpack.c.l.b16 %v4262
        %v4646 = vunpack.c.h.b16 %v4262
        %v4647 = vunpack.c.l.b16 %v4263
        %v4648 = vunpack.c.h.b16 %v4263
        %v4649 = vunpack.c.l.b16 %v4264
        %v4650 = vunpack.c.h.b16 %v4264
        %v4651 = vunpack.c.l.b16 %v4265
        %v4652 = vunpack.c.h.b16 %v4265
        %v4653 = vunpack.c.l.b16 %v4266
        %v4654 = vunpack.c.h.b16 %v4266
        %v4655 = vunpack.c.l.b16 %v4267
        %v4656 = vunpack.c.h.b16 %v4267
        %v4657 = vunpack.c.l.b16 %v4268
        %v4658 = vunpack.c.h.b16 %v4268
        %v4659 = vunpack.c.l.b16 %v4269
        %v4660 = vunpack.c.h.b16 %v4269
        %v4661 = vunpack.c.l.b16 %v4270
        %v4662 = vunpack.c.h.b16 %v4270
        %v4663 = vunpack.c.l.b16 %v4271
        %v4664 = vunpack.c.h.b16 %v4271
        %v4665 = vunpack.c.l.b16 %v4272
        %v4666 = vunpack.c.h.b16 %v4272
        %v4667 = vunpack.c.l.b16 %v4273
        %v4668 = vunpack.c.h.b16 %v4273
        %v4669 = vunpack.c.l.b16 %v4274
        %v4670 = vunpack.c.h.b16 %v4274
        %v4671 = vunpack.c.l.b16 %v4275
        %v4672 = vunpack.c.h.b16 %v4275
        %v4673 = vunpack.c.l.b16 %v4276
        %v4674 = vunpack.c.h.b16 %v4276
        %v4675 = vunpack.c.l.b16 %v4277
        %v4676 = vunpack.c.h.b16 %v4277
        %v4677 = vunpack.c.l.b16 %v4278
        %v4678 = vunpack.c.h.b16 %v4278
        %v4679 = vunpack.c.l.b16 %v4279
        %v4680 = vunpack.c.h.b16 %v4279
        %v4681 = vunpack.c.l.b16 %v4280
        %v4682 = vunpack.c.h.b16 %v4280
        %v4683 = vunpack.c.l.b16 %v4281
        %v4684 = vunpack.c.h.b16 %v4281
        %v4685 = vunpack.c.l.b16 %v4282
        %v4686 = vunpack.c.h.b16 %v4282
        %v4687 = vunpack.c.l.b16 %v4283
        %v4688 = vunpack.c.h.b16 %v4283
        %v4689 = vpack.c.b16 %v4437, %v4433
        %v4690 = vpack.c.b16 %v4438, %v4434
        %v4691 = vpack.c.b16 %v4439, %v4435
        %v4692 = vpack.c.b16 %v4440, %v4436
        %v4693 = vpack.c.b16 %v4445, %v4441
        %v4694 = vpack.c.b16 %v4446, %v4442
        %v4695 = vpack.c.b16 %v4447, %v4443
        %v4696 = vpack.c.b16 %v4448, %v4444
        %v4697 = vpack.c.b16 %v4453, %v4449
        %v4698 = vpack.c.b16 %v4454, %v4450
        %v4699 = vpack.c.b16 %v4455, %v4451
        %v4700 = vpack.c.b16 %v4456, %v4452
        %v4701 = vpack.c.b16 %v4461, %v4457
        %v4702 = vpack.c.b16 %v4462, %v4458
        %v4703 = vpack.c.b16 %v4463, %v4459
        %v4704 = vpack.c.b16 %v4464, %v4460
        %v4705 = vpack.c.b16 %v4469, %v4465
        %v4706 = vpack.c.b16 %v4470, %v4466
        %v4707 = vpack.c.b16 %v4471, %v4467
        %v4708 = vpack.c.b16 %v4472, %v4468
        %v4709 = vpack.c.b16 %v4477, %v4473
        %v4710 = vpack.c.b16 %v4478, %v4474
        %v4711 = vpack.c.b16 %v4479, %v4475
        %v4712 = vpack.c.b16 %v4480, %v4476
        %v4713 = vpack.c.b16 %v4485, %v4481
        %v4714 = vpack.c.b16 %v4486, %v4482
        %v4715 = vpack.c.b16 %v4487, %v4483
        %v4716 = vpack.c.b16 %v4488, %v4484
        %v4717 = vpack.c.b16 %v4493, %v4489
        %v4718 = vpack.c.b16 %v4494, %v4490
        %v4719 = vpack.c.b16 %v4495, %v4491
        %v4720 = vpack.c.b16 %v4496, %v4492
        %v4721 = vpack.c.b16 %v4501, %v4497
        %v4722 = vpack.c.b16 %v4502, %v4498
        %v4723 = vpack.c.b16 %v4503, %v4499
        %v4724 = vpack.c.b16 %v4504, %v4500
        %v4725 = vpack.c.b16 %v4509, %v4505
        %v4726 = vpack.c.b16 %v4510, %v4506
        %v4727 = vpack.c.b16 %v4511, %v4507
        %v4728 = vpack.c.b16 %v4512, %v4508
        %v4729 = vpack.c.b16 %v4517, %v4513
        %v4730 = vpack.c.b16 %v4518, %v4514
        %v4731 = vpack.c.b16 %v4519, %v4515
        %v4732 = vpack.c.b16 %v4520, %v4516
        %v4733 = vpack.c.b16 %v4525, %v4521
        %v4734 = vpack.c.b16 %v4526, %v4522
        %v4735 = vpack.c.b16 %v4527, %v4523
        %v4736 = vpack.c.b16 %v4528, %v4524
        %v4737 = vpack.c.b16 %v4533, %v4529
        %v4738 = vpack.c.b16 %v4534, %v4530
        %v4739 = vpack.c.b16 %v4535, %v4531
        %v4740 = vpack.c.b16 %v4536, %v4532
        %v4741 = vpack.c.b16 %v4541, %v4537
        %v4742 = vpack.c.b16 %v4542, %v4538
        %v4743 = vpack.c.b16 %v4543, %v4539
        %v4744 = vpack.c.b16 %v4544, %v4540
        %v4745 = vpack.c.b16 %v4549, %v4545
        %v4746 = vpack.c.b16 %v4550, %v4546
        %v4747 = vpack.c.b16 %v4551, %v4547
        %v4748 = vpack.c.b16 %v4552, %v4548
        %v4749 = vpack.c.b16 %v4557, %v4553
        %v4750 = vpack.c.b16 %v4558, %v4554
        %v4751 = vpack.c.b16 %v4559, %v4555
        %v4752 = vpack.c.b16 %v4560, %v4556
        %v4753 = vpack.c.b16 %v4565, %v4561
        %v4754 = vpack.c.b16 %v4566, %v4562
        %v4755 = vpack.c.b16 %v4567, %v4563
        %v4756 = vpack.c.b16 %v4568, %v4564
        %v4757 = vpack.c.b16 %v4573, %v4569
        %v4758 = vpack.c.b16 %v4574, %v4570
        %v4759 = vpack.c.b16 %v4575, %v4571
        %v4760 = vpack.c.b16 %v4576, %v4572
        %v4761 = vpack.c.b16 %v4581, %v4577
        %v4762 = vpack.c.b16 %v4582, %v4578
        %v4763 = vpack.c.b16 %v4583, %v4579
        %v4764 = vpack.c.b16 %v4584, %v4580
        %v4765 = vpack.c.b16 %v4589, %v4585
        %v4766 = vpack.c.b16 %v4590, %v4586
        %v4767 = vpack.c.b16 %v4591, %v4587
        %v4768 = vpack.c.b16 %v4592, %v4588
        %v4769 = vpack.c.b16 %v4597, %v4593
        %v4770 = vpack.c.b16 %v4598, %v4594
        %v4771 = vpack.c.b16 %v4599, %v4595
        %v4772 = vpack.c.b16 %v4600, %v4596
        %v4773 = vpack.c.b16 %v4605, %v4601
        %v4774 = vpack.c.b16 %v4606, %v4602
        %v4775 = vpack.c.b16 %v4607, %v4603
        %v4776 = vpack.c.b16 %v4608, %v4604
        %v4777 = vpack.c.b16 %v4613, %v4609
        %v4778 = vpack.c.b16 %v4614, %v4610
        %v4779 = vpack.c.b16 %v4615, %v4611
        %v4780 = vpack.c.b16 %v4616, %v4612
        %v4781 = vpack.c.b16 %v4621, %v4617
        %v4782 = vpack.c.b16 %v4622, %v4618
        %v4783 = vpack.c.b16 %v4623, %v4619
        %v4784 = vpack.c.b16 %v4624, %v4620
        %v4785 = vpack.c.b16 %v4629, %v4625
        %v4786 = vpack.c.b16 %v4630, %v4626
        %v4787 = vpack.c.b16 %v4631, %v4627
        %v4788 = vpack.c.b16 %v4632, %v4628
        %v4789 = vpack.c.b16 %v4637, %v4633
        %v4790 = vpack.c.b16 %v4638, %v4634
        %v4791 = vpack.c.b16 %v4639, %v4635
        %v4792 = vpack.c.b16 %v4640, %v4636
        %v4793 = vpack.c.b16 %v4645, %v4641
        %v4794 = vpack.c.b16 %v4646, %v4642
        %v4795 = vpack.c.b16 %v4647, %v4643
        %v4796 = vpack.c.b16 %v4648, %v4644
        %v4797 = vpack.c.b16 %v4653, %v4649
        %v4798 = vpack.c.b16 %v4654, %v4650
        %v4799 = vpack.c.b16 %v4655, %v4651
        %v4800 = vpack.c.b16 %v4656, %v4652
        %v4801 = vpack.c.b16 %v4661, %v4657
        %v4802 = vpack.c.b16 %v4662, %v4658
        %v4803 = vpack.c.b16 %v4663, %v4659
        %v4804 = vpack.c.b16 %v4664, %v4660
        %v4805 = vpack.c.b16 %v4669, %v4665
        %v4806 = vpack.c.b16 %v4670, %v4666
        %v4807 = vpack.c.b16 %v4671, %v4667
        %v4808 = vpack.c.b16 %v4672, %v4668
        %v4809 = vpack.c.b16 %v4677, %v4673
        %v4810 = vpack.c.b16 %v4678, %v4674
        %v4811 = vpack.c.b16 %v4679, %v4675
        %v4812 = vpack.c.b16 %v4680, %v4676
        %v4813 = vpack.c.b16 %v4685, %v4681
        %v4814 = vpack.c.b16 %v4686, %v4682
        %v4815 = vpack.c.b16 %v4687, %v4683
        %v4816 = vpack.c.b16 %v4688, %v4684
        %4945 = vmatprep.subr.bf16.mxu0 %v4690
        %4946 = vmatpush1.bf16.msra.mxu0 %v4689
        %4947 = vmatprep.subr.bf16.mxu0 %v4694
        %4948 = vmatpush1.bf16.msra.mxu0 %v4693
        %4949 = vmatprep.subr.bf16.mxu0 %v4698
        %4950 = vmatpush1.bf16.msra.mxu0 %v4697
        %4951 = vmatprep.subr.bf16.mxu0 %v4702
        %4952 = vmatpush1.bf16.msra.mxu0 %v4701
        %4953 = vmatprep.subr.bf16.mxu0 %v4706
        %4954 = vmatpush1.bf16.msra.mxu0 %v4705
        %4955 = vmatprep.subr.bf16.mxu0 %v4710
        %4956 = vmatpush1.bf16.msra.mxu0 %v4709
        %4957 = vmatprep.subr.bf16.mxu0 %v4714
        %4958 = vmatpush1.bf16.msra.mxu0 %v4713
        %4959 = vmatprep.subr.bf16.mxu0 %v4718
        %4960 = vmatpush1.bf16.msra.mxu0 %v4717
        %4961 = vmatprep.subr.bf16.mxu0 %v4722
        %4962 = vmatpush1.bf16.msra.mxu0 %v4721
        %4963 = vmatprep.subr.bf16.mxu0 %v4726
        %4964 = vmatpush1.bf16.msra.mxu0 %v4725
        %4965 = vmatprep.subr.bf16.mxu0 %v4730
        %4966 = vmatpush1.bf16.msra.mxu0 %v4729
        %4967 = vmatprep.subr.bf16.mxu0 %v4734
        %4968 = vmatpush1.bf16.msra.mxu0 %v4733
        %4969 = vmatprep.subr.bf16.mxu0 %v4738
        %4970 = vmatpush1.bf16.msra.mxu0 %v4737
        %4971 = vmatprep.subr.bf16.mxu0 %v4742
        %4972 = vmatpush1.bf16.msra.mxu0 %v4741
        %4973 = vmatprep.subr.bf16.mxu0 %v4746
        %4974 = vmatpush1.bf16.msra.mxu0 %v4745
        %4975 = vmatprep.subr.bf16.mxu0 %v4750
        %4976 = vmatpush1.bf16.msra.mxu0 %v4749
        %4977 = vmatprep.mubr.bf16.mxu0 %v4153
        %4978 = vmatmul.mubr.bf16.gmra.mrb[0].mxu0 %v4152
        %v4979 = vpop.f32.mrb[0].mxu0
        %v4980 = vadd.f32 %v4288, %v4979
        %v4981 = vpop.f32.mrb[0].mxu0
        %v4982 = vadd.f32 %v4292, %v4981
        %v4983 = vpop.f32.mrb[0].mxu0
        %v4984 = vadd.f32 %v4288, %v4983
        %v4985 = vpop.f32.mrb[0].mxu0
        %v4986 = vadd.f32 %v4292, %v4985
        %4987 = vdwg.mxu0
        %4988 = vmatprep.subr.bf16.mxu0 %v4754
        %4989 = vmatpush1.bf16.msra.mxu0 %v4753
        %4990 = vmatprep.subr.bf16.mxu0 %v4758
        %4991 = vmatpush1.bf16.msra.mxu0 %v4757
        %4992 = vmatprep.subr.bf16.mxu0 %v4762
        %4993 = vmatpush1.bf16.msra.mxu0 %v4761
        %4994 = vmatprep.subr.bf16.mxu0 %v4766
        %4995 = vmatpush1.bf16.msra.mxu0 %v4765
        %4996 = vmatprep.subr.bf16.mxu0 %v4770
        %4997 = vmatpush1.bf16.msra.mxu0 %v4769
        %4998 = vmatprep.subr.bf16.mxu0 %v4774
        %4999 = vmatpush1.bf16.msra.mxu0 %v4773
        %5000 = vmatprep.subr.bf16.mxu0 %v4778
        %5001 = vmatpush1.bf16.msra.mxu0 %v4777
        %5002 = vmatprep.subr.bf16.mxu0 %v4782
        %5003 = vmatpush1.bf16.msra.mxu0 %v4781
        %5004 = vmatprep.subr.bf16.mxu0 %v4786
        %5005 = vmatpush1.bf16.msra.mxu0 %v4785
        %5006 = vmatprep.subr.bf16.mxu0 %v4790
        %5007 = vmatpush1.bf16.msra.mxu0 %v4789
        %5008 = vmatprep.subr.bf16.mxu0 %v4794
        %5009 = vmatpush1.bf16.msra.mxu0 %v4793
        %5010 = vmatprep.subr.bf16.mxu0 %v4798
        %5011 = vmatpush1.bf16.msra.mxu0 %v4797
        %5012 = vmatprep.subr.bf16.mxu0 %v4802
        %5013 = vmatpush1.bf16.msra.mxu0 %v4801
        %5014 = vmatprep.subr.bf16.mxu0 %v4806
        %5015 = vmatpush1.bf16.msra.mxu0 %v4805
        %5016 = vmatprep.subr.bf16.mxu0 %v4810
        %5017 = vmatpush1.bf16.msra.mxu0 %v4809
        %5018 = vmatprep.subr.bf16.mxu0 %v4814
        %5019 = vmatpush1.bf16.msra.mxu0 %v4813
        %5020 = vmatprep.mubr.bf16.mxu0 %v4155
        %5021 = vmatmul.mubr.bf16.gmra.mrb[0].mxu0 %v4154
        %v5022 = vpop.f32.mrb[0].mxu0
        %v5023 = vadd.f32 %v4980, %v5022
        %v5024 = vpop.f32.mrb[0].mxu0
        %v5025 = vadd.f32 %v4982, %v5024
        %v5026 = vpop.f32.mrb[0].mxu0
        %v5027 = vadd.f32 %v4984, %v5026
        %v5028 = vpop.f32.mrb[0].mxu0
        %v5029 = vadd.f32 %v4986, %v5028
        %5030 = vdwg.mxu0
        %5031 = vmatprep.subr.bf16.mxu0 %v4692
        %5032 = vmatpush1.bf16.msra.mxu0 %v4691
        %5033 = vmatprep.subr.bf16.mxu0 %v4696
        %5034 = vmatpush1.bf16.msra.mxu0 %v4695
        %5035 = vmatprep.subr.bf16.mxu0 %v4700
        %5036 = vmatpush1.bf16.msra.mxu0 %v4699
        %5037 = vmatprep.subr.bf16.mxu0 %v4704
        %5038 = vmatpush1.bf16.msra.mxu0 %v4703
        %5039 = vmatprep.subr.bf16.mxu0 %v4708
        %5040 = vmatpush1.bf16.msra.mxu0 %v4707
        %5041 = vmatprep.subr.bf16.mxu0 %v4712
        %5042 = vmatpush1.bf16.msra.mxu0 %v4711
        %5043 = vmatprep.subr.bf16.mxu0 %v4716
        %5044 = vmatpush1.bf16.msra.mxu0 %v4715
        %5045 = vmatprep.subr.bf16.mxu0 %v4720
        %5046 = vmatpush1.bf16.msra.mxu0 %v4719
        %5047 = vmatprep.subr.bf16.mxu0 %v4724
        %5048 = vmatpush1.bf16.msra.mxu0 %v4723
        %5049 = vmatprep.subr.bf16.mxu0 %v4728
        %5050 = vmatpush1.bf16.msra.mxu0 %v4727
        %5051 = vmatprep.subr.bf16.mxu0 %v4732
        %5052 = vmatpush1.bf16.msra.mxu0 %v4731
        %5053 = vmatprep.subr.bf16.mxu0 %v4736
        %5054 = vmatpush1.bf16.msra.mxu0 %v4735
        %5055 = vmatprep.subr.bf16.mxu0 %v4740
        %5056 = vmatpush1.bf16.msra.mxu0 %v4739
        %5057 = vmatprep.subr.bf16.mxu0 %v4744
        %5058 = vmatpush1.bf16.msra.mxu0 %v4743
        %5059 = vmatprep.subr.bf16.mxu0 %v4748
        %5060 = vmatpush1.bf16.msra.mxu0 %v4747
        %5061 = vmatprep.subr.bf16.mxu0 %v4752
        %5062 = vmatpush1.bf16.msra.mxu0 %v4751
        %5063 = vmatprep.mubr.bf16.mxu0 %v4153
        %5064 = vmatmul.mubr.bf16.gmra.mrb[0].mxu0 %v4152
        %v5065 = vpop.f32.mrb[0].mxu0
        %v5066 = vadd.f32 %v4296, %v5065
        %v5067 = vpop.f32.mrb[0].mxu0
        %v5068 = vadd.f32 %v4300, %v5067
        %v5069 = vpop.f32.mrb[0].mxu0
        %v5070 = vadd.f32 %v4296, %v5069
        %v5071 = vpop.f32.mrb[0].mxu0
        %v5072 = vadd.f32 %v4300, %v5071
        %5073 = vdwg.mxu0
        %5074 = vmatprep.subr.bf16.mxu0 %v4756
        %5075 = vmatpush1.bf16.msra.mxu0 %v4755
        %5076 = vmatprep.subr.bf16.mxu0 %v4760
        %5077 = vmatpush1.bf16.msra.mxu0 %v4759
        %5078 = vmatprep.subr.bf16.mxu0 %v4764
        %5079 = vmatpush1.bf16.msra.mxu0 %v4763
        %5080 = vmatprep.subr.bf16.mxu0 %v4768
        %5081 = vmatpush1.bf16.msra.mxu0 %v4767
        %5082 = vmatprep.subr.bf16.mxu0 %v4772
        %5083 = vmatpush1.bf16.msra.mxu0 %v4771
        %5084 = vmatprep.subr.bf16.mxu0 %v4776
        %5085 = vmatpush1.bf16.msra.mxu0 %v4775
        %5086 = vmatprep.subr.bf16.mxu0 %v4780
        %5087 = vmatpush1.bf16.msra.mxu0 %v4779
        %5088 = vmatprep.subr.bf16.mxu0 %v4784
        %5089 = vmatpush1.bf16.msra.mxu0 %v4783
        %5090 = vmatprep.subr.bf16.mxu0 %v4788
        %5091 = vmatpush1.bf16.msra.mxu0 %v4787
        %5092 = vmatprep.subr.bf16.mxu0 %v4792
        %5093 = vmatpush1.bf16.msra.mxu0 %v4791
        %5094 = vmatprep.subr.bf16.mxu0 %v4796
        %5095 = vmatpush1.bf16.msra.mxu0 %v4795
        %5096 = vmatprep.subr.bf16.mxu0 %v4800
        %5097 = vmatpush1.bf16.msra.mxu0 %v4799
        %5098 = vmatprep.subr.bf16.mxu0 %v4804
        %5099 = vmatpush1.bf16.msra.mxu0 %v4803
        %5100 = vmatprep.subr.bf16.mxu0 %v4808
        %5101 = vmatpush1.bf16.msra.mxu0 %v4807
        %5102 = vmatprep.subr.bf16.mxu0 %v4812
        %5103 = vmatpush1.bf16.msra.mxu0 %v4811
        %5104 = vmatprep.subr.bf16.mxu0 %v4816
        %5105 = vmatpush1.bf16.msra.mxu0 %v4815
        %5106 = vmatprep.mubr.bf16.mxu0 %v4155
        %5107 = vmatmul.mubr.bf16.gmra.mrb[0].mxu0 %v4154
        %v5108 = vpop.f32.mrb[0].mxu0
        %v5109 = vadd.f32 %v5066, %v5108
        %v5110 = vpop.f32.mrb[0].mxu0
        %v5111 = vadd.f32 %v5068, %v5110
        %v5112 = vpop.f32.mrb[0].mxu0
        %v5113 = vadd.f32 %v5070, %v5112
        %v5114 = vpop.f32.mrb[0].mxu0
        %v5115 = vadd.f32 %v5072, %v5114
        %5116 = vdwg.mxu0
        %v5117 = vadd.f32 %v440, %v5023
        %v5118 = vadd.f32 %v441, %v5025
        %v5119 = vadd.f32 %v442, %v5109
        %v5120 = vadd.f32 %v443, %v5111
        %v5121 = vadd.f32 %v444, %v5027
        %v5122 = vadd.f32 %v445, %v5029
        %v5123 = vadd.f32 %v446, %v5113
        %v5124 = vadd.f32 %v447, %v5115
        %v5125 = vadd.f32 %v5117, %v5118
        %v5126 = vadd.f32 %v5125, %v5119
        %v5127 = vadd.f32 %v5126, %v5120
        %5128 = vadd.xlane.f32.xlu0 %v5127
        %v5129 = vpop.xlane.xlu0 %5128
        %v5130 = vadd.f32 %v5121, %v5122
        %v5131 = vadd.f32 %v5130, %v5123
        %v5132 = vadd.f32 %v5131, %v5124
        %5133 = vadd.xlane.f32.xlu0 %v5132
        %v5134 = vpop.xlane.xlu0 %5133
        %v5135 = vrcp.pop 512.0
        %v5136 = vmul.f32 %v5129, %v5135
        %v5137 = vmul.f32 %v5134, %v5135
        %v5138 = vsub.f32 %v5117, %v5136
        %v5139 = vsub.f32 %v5118, %v5136
        %v5140 = vsub.f32 %v5119, %v5136
        %v5141 = vsub.f32 %v5120, %v5136
        %v5142 = vsub.f32 %v5121, %v5137
        %v5143 = vsub.f32 %v5122, %v5137
        %v5144 = vsub.f32 %v5123, %v5137
        %v5145 = vsub.f32 %v5124, %v5137
        %v5146 = vmul.f32 %v5138, %v5138
        %v5147 = vmul.f32 %v5139, %v5139
        %v5148 = vmul.f32 %v5140, %v5140
        %v5149 = vmul.f32 %v5141, %v5141
        %v5150 = vmul.f32 %v5142, %v5142
        %v5151 = vmul.f32 %v5143, %v5143
        %v5152 = vmul.f32 %v5144, %v5144
        %v5153 = vmul.f32 %v5145, %v5145
        %v5154 = vadd.f32 %v5146, %v5147
        %v5155 = vadd.f32 %v5154, %v5148
        %v5156 = vadd.f32 %v5155, %v5149
        %5157 = vadd.xlane.f32.xlu0 %v5156
        %v5158 = vpop.xlane.xlu0 %5157
        %v5159 = vadd.f32 %v5150, %v5151
        %v5160 = vadd.f32 %v5159, %v5152
        %v5161 = vadd.f32 %v5160, %v5153
        %5162 = vadd.xlane.f32.xlu0 %v5161
        %v5163 = vpop.xlane.xlu0 %5162
        %v5164 = vmul.f32 %v5158, %v5135
        %v5165 = vmul.f32 %v5163, %v5135
        %v5166 = vadd.f32 %v5164, 1e-05
        %v5167 = vadd.f32 %v5165, 1e-05
        %v5168 = vrsqrt.pop %v5166
        %v5169 = vrsqrt.pop %v5167
        %v5170 = vmul.f32 %v5138, %v5168
        %v5171 = vmul.f32 %v5139, %v5168
        %v5172 = vmul.f32 %v5140, %v5168
        %v5173 = vmul.f32 %v5141, %v5168
        %v5174 = vmul.f32 %v5142, %v5169
        %v5175 = vmul.f32 %v5143, %v5169
        %v5176 = vmul.f32 %v5144, %v5169
        %v5177 = vmul.f32 %v5145, %v5169
        %v5179 = vlaneseq
        %v5180 = vshrl.u32 %v5179, 7
        %v5181 = vsub.s32 0, %v5180
        %v5182 = vrot.slane %v433, %v5181
        %v5183 = vlaneseq
        %v5184 = vshrl.u32 %v5183, 7
        %v5185 = vsub.s32 1, %v5184
        %v5186 = vrot.slane %v433, %v5185
        %v5187 = vlaneseq
        %v5188 = vshrl.u32 %v5187, 7
        %v5189 = vsub.s32 2, %v5188
        %v5190 = vrot.slane %v433, %v5189
        %v5191 = vlaneseq
        %v5192 = vshrl.u32 %v5191, 7
        %v5193 = vsub.s32 3, %v5192
        %v5194 = vrot.slane %v433, %v5193
        %v5199 = vmul.f32 %v5170, %v5182
        %v5200 = vmul.f32 %v5171, %v5186
        %v5201 = vmul.f32 %v5172, %v5190
        %v5202 = vmul.f32 %v5173, %v5194
        %v5203 = vmul.f32 %v5174, %v5182
        %v5204 = vmul.f32 %v5175, %v5186
        %v5205 = vmul.f32 %v5176, %v5190
        %v5206 = vmul.f32 %v5177, %v5194
        %v5208 = vlaneseq
        %v5209 = vshrl.u32 %v5208, 7
        %v5210 = vsub.s32 0, %v5209
        %v5211 = vrot.slane %v434, %v5210
        %v5212 = vlaneseq
        %v5213 = vshrl.u32 %v5212, 7
        %v5214 = vsub.s32 1, %v5213
        %v5215 = vrot.slane %v434, %v5214
        %v5216 = vlaneseq
        %v5217 = vshrl.u32 %v5216, 7
        %v5218 = vsub.s32 2, %v5217
        %v5219 = vrot.slane %v434, %v5218
        %v5220 = vlaneseq
        %v5221 = vshrl.u32 %v5220, 7
        %v5222 = vsub.s32 3, %v5221
        %v5223 = vrot.slane %v434, %v5222
        %v5228 = vadd.f32 %v5199, %v5211
        %v5229 = vadd.f32 %v5200, %v5215
        %v5230 = vadd.f32 %v5201, %v5219
        %v5231 = vadd.f32 %v5202, %v5223
        %v5232 = vadd.f32 %v5203, %v5211
        %v5233 = vadd.f32 %v5204, %v5215
        %v5234 = vadd.f32 %v5205, %v5219
        %v5235 = vadd.f32 %v5206, %v5223
        %v5236 = vpack.c.bf16 %v5232, %v5228
        %v5237 = vpack.c.bf16 %v5233, %v5229
        %v5238 = vpack.c.bf16 %v5234, %v5230
        %v5239 = vpack.c.bf16 %v5235, %v5231
        %v5240 = vld [vmem:[%s347] sm:$0xff]
        %v5241 = vld [vmem:[%s347 + $0x8] sm:$0xff]
        %v5242 = vld [vmem:[%s347 + $0x10] sm:$0xff]
        %v5243 = vld [vmem:[%s347 + $0x18] sm:$0xff]
        %v5244 = vld [vmem:[%s347 + $0x20] sm:$0xff]
        %v5245 = vld [vmem:[%s347 + $0x28] sm:$0xff]
        %v5246 = vld [vmem:[%s347 + $0x30] sm:$0xff]
        %v5247 = vld [vmem:[%s347 + $0x38] sm:$0xff]
        %v5248 = vld [vmem:[%s347 + $0x40] sm:$0xff]
        %v5249 = vld [vmem:[%s347 + $0x48] sm:$0xff]
        %v5250 = vld [vmem:[%s347 + $0x50] sm:$0xff]
        %v5251 = vld [vmem:[%s347 + $0x58] sm:$0xff]
        %v5252 = vld [vmem:[%s347 + $0x60] sm:$0xff]
        %v5253 = vld [vmem:[%s347 + $0x68] sm:$0xff]
        %v5254 = vld [vmem:[%s347 + $0x70] sm:$0xff]
        %v5255 = vld [vmem:[%s347 + $0x78] sm:$0xff]
        %v5256 = vld [vmem:[%s347 + $0x80] sm:$0xff]
        %v5257 = vld [vmem:[%s347 + $0x88] sm:$0xff]
        %v5258 = vld [vmem:[%s347 + $0x90] sm:$0xff]
        %v5259 = vld [vmem:[%s347 + $0x98] sm:$0xff]
        %v5260 = vld [vmem:[%s347 + $0xa0] sm:$0xff]
        %v5261 = vld [vmem:[%s347 + $0xa8] sm:$0xff]
        %v5262 = vld [vmem:[%s347 + $0xb0] sm:$0xff]
        %v5263 = vld [vmem:[%s347 + $0xb8] sm:$0xff]
        %v5264 = vld [vmem:[%s347 + $0xc0] sm:$0xff]
        %v5265 = vld [vmem:[%s347 + $0xc8] sm:$0xff]
        %v5266 = vld [vmem:[%s347 + $0xd0] sm:$0xff]
        %v5267 = vld [vmem:[%s347 + $0xd8] sm:$0xff]
        %v5268 = vld [vmem:[%s347 + $0xe0] sm:$0xff]
        %v5269 = vld [vmem:[%s347 + $0xe8] sm:$0xff]
        %v5270 = vld [vmem:[%s347 + $0xf0] sm:$0xff]
        %v5271 = vld [vmem:[%s347 + $0xf8] sm:$0xff]
        %v5272 = vld [vmem:[%s347 + $0x100] sm:$0xff]
        %v5273 = vld [vmem:[%s347 + $0x108] sm:$0xff]
        %v5274 = vld [vmem:[%s347 + $0x110] sm:$0xff]
        %v5275 = vld [vmem:[%s347 + $0x118] sm:$0xff]
        %v5276 = vld [vmem:[%s347 + $0x120] sm:$0xff]
        %v5277 = vld [vmem:[%s347 + $0x128] sm:$0xff]
        %v5278 = vld [vmem:[%s347 + $0x130] sm:$0xff]
        %v5279 = vld [vmem:[%s347 + $0x138] sm:$0xff]
        %v5280 = vld [vmem:[%s347 + $0x140] sm:$0xff]
        %v5281 = vld [vmem:[%s347 + $0x148] sm:$0xff]
        %v5282 = vld [vmem:[%s347 + $0x150] sm:$0xff]
        %v5283 = vld [vmem:[%s347 + $0x158] sm:$0xff]
        %v5284 = vld [vmem:[%s347 + $0x160] sm:$0xff]
        %v5285 = vld [vmem:[%s347 + $0x168] sm:$0xff]
        %v5286 = vld [vmem:[%s347 + $0x170] sm:$0xff]
        %v5287 = vld [vmem:[%s347 + $0x178] sm:$0xff]
        %v5288 = vld [vmem:[%s347 + $0x180] sm:$0xff]
        %v5289 = vld [vmem:[%s347 + $0x188] sm:$0xff]
        %v5290 = vld [vmem:[%s347 + $0x190] sm:$0xff]
        %v5291 = vld [vmem:[%s347 + $0x198] sm:$0xff]
        %v5292 = vld [vmem:[%s347 + $0x1a0] sm:$0xff]
        %v5293 = vld [vmem:[%s347 + $0x1a8] sm:$0xff]
        %v5294 = vld [vmem:[%s347 + $0x1b0] sm:$0xff]
        %v5295 = vld [vmem:[%s347 + $0x1b8] sm:$0xff]
        %v5296 = vld [vmem:[%s347 + $0x1c0] sm:$0xff]
        %v5297 = vld [vmem:[%s347 + $0x1c8] sm:$0xff]
        %v5298 = vld [vmem:[%s347 + $0x1d0] sm:$0xff]
        %v5299 = vld [vmem:[%s347 + $0x1d8] sm:$0xff]
        %v5300 = vld [vmem:[%s347 + $0x1e0] sm:$0xff]
        %v5301 = vld [vmem:[%s347 + $0x1e8] sm:$0xff]
        %v5302 = vld [vmem:[%s347 + $0x1f0] sm:$0xff]
        %v5303 = vld [vmem:[%s347 + $0x1f8] sm:$0xff]
        %v5304 = vld [vmem:[%s347 + $0x200] sm:$0xff]
        %v5305 = vld [vmem:[%s347 + $0x208] sm:$0xff]
        %v5306 = vld [vmem:[%s347 + $0x210] sm:$0xff]
        %v5307 = vld [vmem:[%s347 + $0x218] sm:$0xff]
        %v5308 = vld [vmem:[%s347 + $0x220] sm:$0xff]
        %v5309 = vld [vmem:[%s347 + $0x228] sm:$0xff]
        %v5310 = vld [vmem:[%s347 + $0x230] sm:$0xff]
        %v5311 = vld [vmem:[%s347 + $0x238] sm:$0xff]
        %v5312 = vld [vmem:[%s347 + $0x240] sm:$0xff]
        %v5313 = vld [vmem:[%s347 + $0x248] sm:$0xff]
        %v5314 = vld [vmem:[%s347 + $0x250] sm:$0xff]
        %v5315 = vld [vmem:[%s347 + $0x258] sm:$0xff]
        %v5316 = vld [vmem:[%s347 + $0x260] sm:$0xff]
        %v5317 = vld [vmem:[%s347 + $0x268] sm:$0xff]
        %v5318 = vld [vmem:[%s347 + $0x270] sm:$0xff]
        %v5319 = vld [vmem:[%s347 + $0x278] sm:$0xff]
        %v5320 = vld [vmem:[%s347 + $0x280] sm:$0xff]
        %v5321 = vld [vmem:[%s347 + $0x288] sm:$0xff]
        %v5322 = vld [vmem:[%s347 + $0x290] sm:$0xff]
        %v5323 = vld [vmem:[%s347 + $0x298] sm:$0xff]
        %v5324 = vld [vmem:[%s347 + $0x2a0] sm:$0xff]
        %v5325 = vld [vmem:[%s347 + $0x2a8] sm:$0xff]
        %v5326 = vld [vmem:[%s347 + $0x2b0] sm:$0xff]
        %v5327 = vld [vmem:[%s347 + $0x2b8] sm:$0xff]
        %v5328 = vld [vmem:[%s347 + $0x2c0] sm:$0xff]
        %v5329 = vld [vmem:[%s347 + $0x2c8] sm:$0xff]
        %v5330 = vld [vmem:[%s347 + $0x2d0] sm:$0xff]
        %v5331 = vld [vmem:[%s347 + $0x2d8] sm:$0xff]
        %v5332 = vld [vmem:[%s347 + $0x2e0] sm:$0xff]
        %v5333 = vld [vmem:[%s347 + $0x2e8] sm:$0xff]
        %v5334 = vld [vmem:[%s347 + $0x2f0] sm:$0xff]
        %v5335 = vld [vmem:[%s347 + $0x2f8] sm:$0xff]
        %v5336 = vld [vmem:[%s347 + $0x300] sm:$0xff]
        %v5337 = vld [vmem:[%s347 + $0x308] sm:$0xff]
        %v5338 = vld [vmem:[%s347 + $0x310] sm:$0xff]
        %v5339 = vld [vmem:[%s347 + $0x318] sm:$0xff]
        %v5340 = vld [vmem:[%s347 + $0x320] sm:$0xff]
        %v5341 = vld [vmem:[%s347 + $0x328] sm:$0xff]
        %v5342 = vld [vmem:[%s347 + $0x330] sm:$0xff]
        %v5343 = vld [vmem:[%s347 + $0x338] sm:$0xff]
        %v5344 = vld [vmem:[%s347 + $0x340] sm:$0xff]
        %v5345 = vld [vmem:[%s347 + $0x348] sm:$0xff]
        %v5346 = vld [vmem:[%s347 + $0x350] sm:$0xff]
        %v5347 = vld [vmem:[%s347 + $0x358] sm:$0xff]
        %v5348 = vld [vmem:[%s347 + $0x360] sm:$0xff]
        %v5349 = vld [vmem:[%s347 + $0x368] sm:$0xff]
        %v5350 = vld [vmem:[%s347 + $0x370] sm:$0xff]
        %v5351 = vld [vmem:[%s347 + $0x378] sm:$0xff]
        %v5352 = vld [vmem:[%s347 + $0x380] sm:$0xff]
        %v5353 = vld [vmem:[%s347 + $0x388] sm:$0xff]
        %v5354 = vld [vmem:[%s347 + $0x390] sm:$0xff]
        %v5355 = vld [vmem:[%s347 + $0x398] sm:$0xff]
        %v5356 = vld [vmem:[%s347 + $0x3a0] sm:$0xff]
        %v5357 = vld [vmem:[%s347 + $0x3a8] sm:$0xff]
        %v5358 = vld [vmem:[%s347 + $0x3b0] sm:$0xff]
        %v5359 = vld [vmem:[%s347 + $0x3b8] sm:$0xff]
        %v5360 = vld [vmem:[%s347 + $0x3c0] sm:$0xff]
        %v5361 = vld [vmem:[%s347 + $0x3c8] sm:$0xff]
        %v5362 = vld [vmem:[%s347 + $0x3d0] sm:$0xff]
        %v5363 = vld [vmem:[%s347 + $0x3d8] sm:$0xff]
        %v5364 = vld [vmem:[%s347 + $0x3e0] sm:$0xff]
        %v5365 = vld [vmem:[%s347 + $0x3e8] sm:$0xff]
        %v5366 = vld [vmem:[%s347 + $0x3f0] sm:$0xff]
        %v5367 = vld [vmem:[%s347 + $0x3f8] sm:$0xff]
        %v5368 = vld [vmem:[%s347 + $0x400] sm:$0xff]
        %v5369 = vld [vmem:[%s347 + $0x408] sm:$0xff]
        %v5370 = vld [vmem:[%s347 + $0x410] sm:$0xff]
        %v5371 = vld [vmem:[%s347 + $0x418] sm:$0xff]
        %v5372 = vld [vmem:[%s347 + $0x420] sm:$0xff]
        %v5373 = vld [vmem:[%s347 + $0x428] sm:$0xff]
        %v5374 = vld [vmem:[%s347 + $0x430] sm:$0xff]
        %v5375 = vld [vmem:[%s347 + $0x438] sm:$0xff]
        %v5376 = vld [vmem:[%s347 + $0x440] sm:$0xff]
        %v5377 = vld [vmem:[%s347 + $0x448] sm:$0xff]
        %v5378 = vld [vmem:[%s347 + $0x450] sm:$0xff]
        %v5379 = vld [vmem:[%s347 + $0x458] sm:$0xff]
        %v5380 = vld [vmem:[%s347 + $0x460] sm:$0xff]
        %v5381 = vld [vmem:[%s347 + $0x468] sm:$0xff]
        %v5382 = vld [vmem:[%s347 + $0x470] sm:$0xff]
        %v5383 = vld [vmem:[%s347 + $0x478] sm:$0xff]
        %v5384 = vld [vmem:[%s347 + $0x480] sm:$0xff]
        %v5385 = vld [vmem:[%s347 + $0x488] sm:$0xff]
        %v5386 = vld [vmem:[%s347 + $0x490] sm:$0xff]
        %v5387 = vld [vmem:[%s347 + $0x498] sm:$0xff]
        %v5388 = vld [vmem:[%s347 + $0x4a0] sm:$0xff]
        %v5389 = vld [vmem:[%s347 + $0x4a8] sm:$0xff]
        %v5390 = vld [vmem:[%s347 + $0x4b0] sm:$0xff]
        %v5391 = vld [vmem:[%s347 + $0x4b8] sm:$0xff]
        %v5392 = vld [vmem:[%s347 + $0x4c0] sm:$0xff]
        %v5393 = vld [vmem:[%s347 + $0x4c8] sm:$0xff]
        %v5394 = vld [vmem:[%s347 + $0x4d0] sm:$0xff]
        %v5395 = vld [vmem:[%s347 + $0x4d8] sm:$0xff]
        %v5396 = vld [vmem:[%s347 + $0x4e0] sm:$0xff]
        %v5397 = vld [vmem:[%s347 + $0x4e8] sm:$0xff]
        %v5398 = vld [vmem:[%s347 + $0x4f0] sm:$0xff]
        %v5399 = vld [vmem:[%s347 + $0x4f8] sm:$0xff]
        %v5400 = vld [vmem:[%s347 + $0x500] sm:$0xff]
        %v5401 = vld [vmem:[%s347 + $0x508] sm:$0xff]
        %v5402 = vld [vmem:[%s347 + $0x510] sm:$0xff]
        %v5403 = vld [vmem:[%s347 + $0x518] sm:$0xff]
        %v5404 = vld [vmem:[%s347 + $0x520] sm:$0xff]
        %v5405 = vld [vmem:[%s347 + $0x528] sm:$0xff]
        %v5406 = vld [vmem:[%s347 + $0x530] sm:$0xff]
        %v5407 = vld [vmem:[%s347 + $0x538] sm:$0xff]
        %v5408 = vld [vmem:[%s347 + $0x540] sm:$0xff]
        %v5409 = vld [vmem:[%s347 + $0x548] sm:$0xff]
        %v5410 = vld [vmem:[%s347 + $0x550] sm:$0xff]
        %v5411 = vld [vmem:[%s347 + $0x558] sm:$0xff]
        %v5412 = vld [vmem:[%s347 + $0x560] sm:$0xff]
        %v5413 = vld [vmem:[%s347 + $0x568] sm:$0xff]
        %v5414 = vld [vmem:[%s347 + $0x570] sm:$0xff]
        %v5415 = vld [vmem:[%s347 + $0x578] sm:$0xff]
        %v5416 = vld [vmem:[%s347 + $0x580] sm:$0xff]
        %v5417 = vld [vmem:[%s347 + $0x588] sm:$0xff]
        %v5418 = vld [vmem:[%s347 + $0x590] sm:$0xff]
        %v5419 = vld [vmem:[%s347 + $0x598] sm:$0xff]
        %v5420 = vld [vmem:[%s347 + $0x5a0] sm:$0xff]
        %v5421 = vld [vmem:[%s347 + $0x5a8] sm:$0xff]
        %v5422 = vld [vmem:[%s347 + $0x5b0] sm:$0xff]
        %v5423 = vld [vmem:[%s347 + $0x5b8] sm:$0xff]
        %v5424 = vld [vmem:[%s347 + $0x5c0] sm:$0xff]
        %v5425 = vld [vmem:[%s347 + $0x5c8] sm:$0xff]
        %v5426 = vld [vmem:[%s347 + $0x5d0] sm:$0xff]
        %v5427 = vld [vmem:[%s347 + $0x5d8] sm:$0xff]
        %v5428 = vld [vmem:[%s347 + $0x5e0] sm:$0xff]
        %v5429 = vld [vmem:[%s347 + $0x5e8] sm:$0xff]
        %v5430 = vld [vmem:[%s347 + $0x5f0] sm:$0xff]
        %v5431 = vld [vmem:[%s347 + $0x5f8] sm:$0xff]
        %v5432 = vld [vmem:[%s347 + $0x600] sm:$0xff]
        %v5433 = vld [vmem:[%s347 + $0x608] sm:$0xff]
        %v5434 = vld [vmem:[%s347 + $0x610] sm:$0xff]
        %v5435 = vld [vmem:[%s347 + $0x618] sm:$0xff]
        %v5436 = vld [vmem:[%s347 + $0x620] sm:$0xff]
        %v5437 = vld [vmem:[%s347 + $0x628] sm:$0xff]
        %v5438 = vld [vmem:[%s347 + $0x630] sm:$0xff]
        %v5439 = vld [vmem:[%s347 + $0x638] sm:$0xff]
        %v5440 = vld [vmem:[%s347 + $0x640] sm:$0xff]
        %v5441 = vld [vmem:[%s347 + $0x648] sm:$0xff]
        %v5442 = vld [vmem:[%s347 + $0x650] sm:$0xff]
        %v5443 = vld [vmem:[%s347 + $0x658] sm:$0xff]
        %v5444 = vld [vmem:[%s347 + $0x660] sm:$0xff]
        %v5445 = vld [vmem:[%s347 + $0x668] sm:$0xff]
        %v5446 = vld [vmem:[%s347 + $0x670] sm:$0xff]
        %v5447 = vld [vmem:[%s347 + $0x678] sm:$0xff]
        %v5448 = vld [vmem:[%s347 + $0x680] sm:$0xff]
        %v5449 = vld [vmem:[%s347 + $0x688] sm:$0xff]
        %v5450 = vld [vmem:[%s347 + $0x690] sm:$0xff]
        %v5451 = vld [vmem:[%s347 + $0x698] sm:$0xff]
        %v5452 = vld [vmem:[%s347 + $0x6a0] sm:$0xff]
        %v5453 = vld [vmem:[%s347 + $0x6a8] sm:$0xff]
        %v5454 = vld [vmem:[%s347 + $0x6b0] sm:$0xff]
        %v5455 = vld [vmem:[%s347 + $0x6b8] sm:$0xff]
        %v5456 = vld [vmem:[%s347 + $0x6c0] sm:$0xff]
        %v5457 = vld [vmem:[%s347 + $0x6c8] sm:$0xff]
        %v5458 = vld [vmem:[%s347 + $0x6d0] sm:$0xff]
        %v5459 = vld [vmem:[%s347 + $0x6d8] sm:$0xff]
        %v5460 = vld [vmem:[%s347 + $0x6e0] sm:$0xff]
        %v5461 = vld [vmem:[%s347 + $0x6e8] sm:$0xff]
        %v5462 = vld [vmem:[%s347 + $0x6f0] sm:$0xff]
        %v5463 = vld [vmem:[%s347 + $0x6f8] sm:$0xff]
        %v5464 = vld [vmem:[%s347 + $0x700] sm:$0xff]
        %v5465 = vld [vmem:[%s347 + $0x708] sm:$0xff]
        %v5466 = vld [vmem:[%s347 + $0x710] sm:$0xff]
        %v5467 = vld [vmem:[%s347 + $0x718] sm:$0xff]
        %v5468 = vld [vmem:[%s347 + $0x720] sm:$0xff]
        %v5469 = vld [vmem:[%s347 + $0x728] sm:$0xff]
        %v5470 = vld [vmem:[%s347 + $0x730] sm:$0xff]
        %v5471 = vld [vmem:[%s347 + $0x738] sm:$0xff]
        %v5472 = vld [vmem:[%s347 + $0x740] sm:$0xff]
        %v5473 = vld [vmem:[%s347 + $0x748] sm:$0xff]
        %v5474 = vld [vmem:[%s347 + $0x750] sm:$0xff]
        %v5475 = vld [vmem:[%s347 + $0x758] sm:$0xff]
        %v5476 = vld [vmem:[%s347 + $0x760] sm:$0xff]
        %v5477 = vld [vmem:[%s347 + $0x768] sm:$0xff]
        %v5478 = vld [vmem:[%s347 + $0x770] sm:$0xff]
        %v5479 = vld [vmem:[%s347 + $0x778] sm:$0xff]
        %v5480 = vld [vmem:[%s347 + $0x780] sm:$0xff]
        %v5481 = vld [vmem:[%s347 + $0x788] sm:$0xff]
        %v5482 = vld [vmem:[%s347 + $0x790] sm:$0xff]
        %v5483 = vld [vmem:[%s347 + $0x798] sm:$0xff]
        %v5484 = vld [vmem:[%s347 + $0x7a0] sm:$0xff]
        %v5485 = vld [vmem:[%s347 + $0x7a8] sm:$0xff]
        %v5486 = vld [vmem:[%s347 + $0x7b0] sm:$0xff]
        %v5487 = vld [vmem:[%s347 + $0x7b8] sm:$0xff]
        %v5488 = vld [vmem:[%s347 + $0x7c0] sm:$0xff]
        %v5489 = vld [vmem:[%s347 + $0x7c8] sm:$0xff]
        %v5490 = vld [vmem:[%s347 + $0x7d0] sm:$0xff]
        %v5491 = vld [vmem:[%s347 + $0x7d8] sm:$0xff]
        %v5492 = vld [vmem:[%s347 + $0x7e0] sm:$0xff]
        %v5493 = vld [vmem:[%s347 + $0x7e8] sm:$0xff]
        %v5494 = vld [vmem:[%s347 + $0x7f0] sm:$0xff]
        %v5495 = vld [vmem:[%s347 + $0x7f8] sm:$0xff]
        %v5496 = vld [vmem:[%s347 + $0x800] sm:$0xff]
        %v5497 = vld [vmem:[%s347 + $0x808] sm:$0xff]
        %v5498 = vld [vmem:[%s347 + $0x810] sm:$0xff]
        %v5499 = vld [vmem:[%s347 + $0x818] sm:$0xff]
        %v5500 = vld [vmem:[%s347 + $0x820] sm:$0xff]
        %v5501 = vld [vmem:[%s347 + $0x828] sm:$0xff]
        %v5502 = vld [vmem:[%s347 + $0x830] sm:$0xff]
        %v5503 = vld [vmem:[%s347 + $0x838] sm:$0xff]
        %v5504 = vld [vmem:[%s347 + $0x840] sm:$0xff]
        %v5505 = vld [vmem:[%s347 + $0x848] sm:$0xff]
        %v5506 = vld [vmem:[%s347 + $0x850] sm:$0xff]
        %v5507 = vld [vmem:[%s347 + $0x858] sm:$0xff]
        %v5508 = vld [vmem:[%s347 + $0x860] sm:$0xff]
        %v5509 = vld [vmem:[%s347 + $0x868] sm:$0xff]
        %v5510 = vld [vmem:[%s347 + $0x870] sm:$0xff]
        %v5511 = vld [vmem:[%s347 + $0x878] sm:$0xff]
        %v5512 = vld [vmem:[%s347 + $0x880] sm:$0xff]
        %v5513 = vld [vmem:[%s347 + $0x888] sm:$0xff]
        %v5514 = vld [vmem:[%s347 + $0x890] sm:$0xff]
        %v5515 = vld [vmem:[%s347 + $0x898] sm:$0xff]
        %v5516 = vld [vmem:[%s347 + $0x8a0] sm:$0xff]
        %v5517 = vld [vmem:[%s347 + $0x8a8] sm:$0xff]
        %v5518 = vld [vmem:[%s347 + $0x8b0] sm:$0xff]
        %v5519 = vld [vmem:[%s347 + $0x8b8] sm:$0xff]
        %v5520 = vld [vmem:[%s347 + $0x8c0] sm:$0xff]
        %v5521 = vld [vmem:[%s347 + $0x8c8] sm:$0xff]
        %v5522 = vld [vmem:[%s347 + $0x8d0] sm:$0xff]
        %v5523 = vld [vmem:[%s347 + $0x8d8] sm:$0xff]
        %v5524 = vld [vmem:[%s347 + $0x8e0] sm:$0xff]
        %v5525 = vld [vmem:[%s347 + $0x8e8] sm:$0xff]
        %v5526 = vld [vmem:[%s347 + $0x8f0] sm:$0xff]
        %v5527 = vld [vmem:[%s347 + $0x8f8] sm:$0xff]
        %v5528 = vld [vmem:[%s347 + $0x900] sm:$0xff]
        %v5529 = vld [vmem:[%s347 + $0x908] sm:$0xff]
        %v5530 = vld [vmem:[%s347 + $0x910] sm:$0xff]
        %v5531 = vld [vmem:[%s347 + $0x918] sm:$0xff]
        %v5532 = vld [vmem:[%s347 + $0x920] sm:$0xff]
        %v5533 = vld [vmem:[%s347 + $0x928] sm:$0xff]
        %v5534 = vld [vmem:[%s347 + $0x930] sm:$0xff]
        %v5535 = vld [vmem:[%s347 + $0x938] sm:$0xff]
        %v5536 = vld [vmem:[%s347 + $0x940] sm:$0xff]
        %v5537 = vld [vmem:[%s347 + $0x948] sm:$0xff]
        %v5538 = vld [vmem:[%s347 + $0x950] sm:$0xff]
        %v5539 = vld [vmem:[%s347 + $0x958] sm:$0xff]
        %v5540 = vld [vmem:[%s347 + $0x960] sm:$0xff]
        %v5541 = vld [vmem:[%s347 + $0x968] sm:$0xff]
        %v5542 = vld [vmem:[%s347 + $0x970] sm:$0xff]
        %v5543 = vld [vmem:[%s347 + $0x978] sm:$0xff]
        %v5544 = vld [vmem:[%s347 + $0x980] sm:$0xff]
        %v5545 = vld [vmem:[%s347 + $0x988] sm:$0xff]
        %v5546 = vld [vmem:[%s347 + $0x990] sm:$0xff]
        %v5547 = vld [vmem:[%s347 + $0x998] sm:$0xff]
        %v5548 = vld [vmem:[%s347 + $0x9a0] sm:$0xff]
        %v5549 = vld [vmem:[%s347 + $0x9a8] sm:$0xff]
        %v5550 = vld [vmem:[%s347 + $0x9b0] sm:$0xff]
        %v5551 = vld [vmem:[%s347 + $0x9b8] sm:$0xff]
        %v5552 = vld [vmem:[%s347 + $0x9c0] sm:$0xff]
        %v5553 = vld [vmem:[%s347 + $0x9c8] sm:$0xff]
        %v5554 = vld [vmem:[%s347 + $0x9d0] sm:$0xff]
        %v5555 = vld [vmem:[%s347 + $0x9d8] sm:$0xff]
        %v5556 = vld [vmem:[%s347 + $0x9e0] sm:$0xff]
        %v5557 = vld [vmem:[%s347 + $0x9e8] sm:$0xff]
        %v5558 = vld [vmem:[%s347 + $0x9f0] sm:$0xff]
        %v5559 = vld [vmem:[%s347 + $0x9f8] sm:$0xff]
        %v5560 = vld [vmem:[%s347 + $0xa00] sm:$0xff]
        %v5561 = vld [vmem:[%s347 + $0xa08] sm:$0xff]
        %v5562 = vld [vmem:[%s347 + $0xa10] sm:$0xff]
        %v5563 = vld [vmem:[%s347 + $0xa18] sm:$0xff]
        %v5564 = vld [vmem:[%s347 + $0xa20] sm:$0xff]
        %v5565 = vld [vmem:[%s347 + $0xa28] sm:$0xff]
        %v5566 = vld [vmem:[%s347 + $0xa30] sm:$0xff]
        %v5567 = vld [vmem:[%s347 + $0xa38] sm:$0xff]
        %v5568 = vld [vmem:[%s347 + $0xa40] sm:$0xff]
        %v5569 = vld [vmem:[%s347 + $0xa48] sm:$0xff]
        %v5570 = vld [vmem:[%s347 + $0xa50] sm:$0xff]
        %v5571 = vld [vmem:[%s347 + $0xa58] sm:$0xff]
        %v5572 = vld [vmem:[%s347 + $0xa60] sm:$0xff]
        %v5573 = vld [vmem:[%s347 + $0xa68] sm:$0xff]
        %v5574 = vld [vmem:[%s347 + $0xa70] sm:$0xff]
        %v5575 = vld [vmem:[%s347 + $0xa78] sm:$0xff]
        %v5576 = vld [vmem:[%s347 + $0xa80] sm:$0xff]
        %v5577 = vld [vmem:[%s347 + $0xa88] sm:$0xff]
        %v5578 = vld [vmem:[%s347 + $0xa90] sm:$0xff]
        %v5579 = vld [vmem:[%s347 + $0xa98] sm:$0xff]
        %v5580 = vld [vmem:[%s347 + $0xaa0] sm:$0xff]
        %v5581 = vld [vmem:[%s347 + $0xaa8] sm:$0xff]
        %v5582 = vld [vmem:[%s347 + $0xab0] sm:$0xff]
        %v5583 = vld [vmem:[%s347 + $0xab8] sm:$0xff]
        %v5584 = vld [vmem:[%s347 + $0xac0] sm:$0xff]
        %v5585 = vld [vmem:[%s347 + $0xac8] sm:$0xff]
        %v5586 = vld [vmem:[%s347 + $0xad0] sm:$0xff]
        %v5587 = vld [vmem:[%s347 + $0xad8] sm:$0xff]
        %v5588 = vld [vmem:[%s347 + $0xae0] sm:$0xff]
        %v5589 = vld [vmem:[%s347 + $0xae8] sm:$0xff]
        %v5590 = vld [vmem:[%s347 + $0xaf0] sm:$0xff]
        %v5591 = vld [vmem:[%s347 + $0xaf8] sm:$0xff]
        %v5592 = vld [vmem:[%s347 + $0xb00] sm:$0xff]
        %v5593 = vld [vmem:[%s347 + $0xb08] sm:$0xff]
        %v5594 = vld [vmem:[%s347 + $0xb10] sm:$0xff]
        %v5595 = vld [vmem:[%s347 + $0xb18] sm:$0xff]
        %v5596 = vld [vmem:[%s347 + $0xb20] sm:$0xff]
        %v5597 = vld [vmem:[%s347 + $0xb28] sm:$0xff]
        %v5598 = vld [vmem:[%s347 + $0xb30] sm:$0xff]
        %v5599 = vld [vmem:[%s347 + $0xb38] sm:$0xff]
        %v5600 = vld [vmem:[%s347 + $0xb40] sm:$0xff]
        %v5601 = vld [vmem:[%s347 + $0xb48] sm:$0xff]
        %v5602 = vld [vmem:[%s347 + $0xb50] sm:$0xff]
        %v5603 = vld [vmem:[%s347 + $0xb58] sm:$0xff]
        %v5604 = vld [vmem:[%s347 + $0xb60] sm:$0xff]
        %v5605 = vld [vmem:[%s347 + $0xb68] sm:$0xff]
        %v5606 = vld [vmem:[%s347 + $0xb70] sm:$0xff]
        %v5607 = vld [vmem:[%s347 + $0xb78] sm:$0xff]
        %v5608 = vld [vmem:[%s347 + $0xb80] sm:$0xff]
        %v5609 = vld [vmem:[%s347 + $0xb88] sm:$0xff]
        %v5610 = vld [vmem:[%s347 + $0xb90] sm:$0xff]
        %v5611 = vld [vmem:[%s347 + $0xb98] sm:$0xff]
        %v5612 = vld [vmem:[%s347 + $0xba0] sm:$0xff]
        %v5613 = vld [vmem:[%s347 + $0xba8] sm:$0xff]
        %v5614 = vld [vmem:[%s347 + $0xbb0] sm:$0xff]
        %v5615 = vld [vmem:[%s347 + $0xbb8] sm:$0xff]
        %v5616 = vld [vmem:[%s347 + $0xbc0] sm:$0xff]
        %v5617 = vld [vmem:[%s347 + $0xbc8] sm:$0xff]
        %v5618 = vld [vmem:[%s347 + $0xbd0] sm:$0xff]
        %v5619 = vld [vmem:[%s347 + $0xbd8] sm:$0xff]
        %v5620 = vld [vmem:[%s347 + $0xbe0] sm:$0xff]
        %v5621 = vld [vmem:[%s347 + $0xbe8] sm:$0xff]
        %v5622 = vld [vmem:[%s347 + $0xbf0] sm:$0xff]
        %v5623 = vld [vmem:[%s347 + $0xbf8] sm:$0xff]
        %v5624 = vld [vmem:[%s347 + $0xc00] sm:$0xff]
        %v5625 = vld [vmem:[%s347 + $0xc08] sm:$0xff]
        %v5626 = vld [vmem:[%s347 + $0xc10] sm:$0xff]
        %v5627 = vld [vmem:[%s347 + $0xc18] sm:$0xff]
        %v5628 = vld [vmem:[%s347 + $0xc20] sm:$0xff]
        %v5629 = vld [vmem:[%s347 + $0xc28] sm:$0xff]
        %v5630 = vld [vmem:[%s347 + $0xc30] sm:$0xff]
        %v5631 = vld [vmem:[%s347 + $0xc38] sm:$0xff]
        %v5632 = vld [vmem:[%s347 + $0xc40] sm:$0xff]
        %v5633 = vld [vmem:[%s347 + $0xc48] sm:$0xff]
        %v5634 = vld [vmem:[%s347 + $0xc50] sm:$0xff]
        %v5635 = vld [vmem:[%s347 + $0xc58] sm:$0xff]
        %v5636 = vld [vmem:[%s347 + $0xc60] sm:$0xff]
        %v5637 = vld [vmem:[%s347 + $0xc68] sm:$0xff]
        %v5638 = vld [vmem:[%s347 + $0xc70] sm:$0xff]
        %v5639 = vld [vmem:[%s347 + $0xc78] sm:$0xff]
        %v5640 = vld [vmem:[%s347 + $0xc80] sm:$0xff]
        %v5641 = vld [vmem:[%s347 + $0xc88] sm:$0xff]
        %v5642 = vld [vmem:[%s347 + $0xc90] sm:$0xff]
        %v5643 = vld [vmem:[%s347 + $0xc98] sm:$0xff]
        %v5644 = vld [vmem:[%s347 + $0xca0] sm:$0xff]
        %v5645 = vld [vmem:[%s347 + $0xca8] sm:$0xff]
        %v5646 = vld [vmem:[%s347 + $0xcb0] sm:$0xff]
        %v5647 = vld [vmem:[%s347 + $0xcb8] sm:$0xff]
        %v5648 = vld [vmem:[%s347 + $0xcc0] sm:$0xff]
        %v5649 = vld [vmem:[%s347 + $0xcc8] sm:$0xff]
        %v5650 = vld [vmem:[%s347 + $0xcd0] sm:$0xff]
        %v5651 = vld [vmem:[%s347 + $0xcd8] sm:$0xff]
        %v5652 = vld [vmem:[%s347 + $0xce0] sm:$0xff]
        %v5653 = vld [vmem:[%s347 + $0xce8] sm:$0xff]
        %v5654 = vld [vmem:[%s347 + $0xcf0] sm:$0xff]
        %v5655 = vld [vmem:[%s347 + $0xcf8] sm:$0xff]
        %v5656 = vld [vmem:[%s347 + $0xd00] sm:$0xff]
        %v5657 = vld [vmem:[%s347 + $0xd08] sm:$0xff]
        %v5658 = vld [vmem:[%s347 + $0xd10] sm:$0xff]
        %v5659 = vld [vmem:[%s347 + $0xd18] sm:$0xff]
        %v5660 = vld [vmem:[%s347 + $0xd20] sm:$0xff]
        %v5661 = vld [vmem:[%s347 + $0xd28] sm:$0xff]
        %v5662 = vld [vmem:[%s347 + $0xd30] sm:$0xff]
        %v5663 = vld [vmem:[%s347 + $0xd38] sm:$0xff]
        %v5664 = vld [vmem:[%s347 + $0xd40] sm:$0xff]
        %v5665 = vld [vmem:[%s347 + $0xd48] sm:$0xff]
        %v5666 = vld [vmem:[%s347 + $0xd50] sm:$0xff]
        %v5667 = vld [vmem:[%s347 + $0xd58] sm:$0xff]
        %v5668 = vld [vmem:[%s347 + $0xd60] sm:$0xff]
        %v5669 = vld [vmem:[%s347 + $0xd68] sm:$0xff]
        %v5670 = vld [vmem:[%s347 + $0xd70] sm:$0xff]
        %v5671 = vld [vmem:[%s347 + $0xd78] sm:$0xff]
        %v5672 = vld [vmem:[%s347 + $0xd80] sm:$0xff]
        %v5673 = vld [vmem:[%s347 + $0xd88] sm:$0xff]
        %v5674 = vld [vmem:[%s347 + $0xd90] sm:$0xff]
        %v5675 = vld [vmem:[%s347 + $0xd98] sm:$0xff]
        %v5676 = vld [vmem:[%s347 + $0xda0] sm:$0xff]
        %v5677 = vld [vmem:[%s347 + $0xda8] sm:$0xff]
        %v5678 = vld [vmem:[%s347 + $0xdb0] sm:$0xff]
        %v5679 = vld [vmem:[%s347 + $0xdb8] sm:$0xff]
        %v5680 = vld [vmem:[%s347 + $0xdc0] sm:$0xff]
        %v5681 = vld [vmem:[%s347 + $0xdc8] sm:$0xff]
        %v5682 = vld [vmem:[%s347 + $0xdd0] sm:$0xff]
        %v5683 = vld [vmem:[%s347 + $0xdd8] sm:$0xff]
        %v5684 = vld [vmem:[%s347 + $0xde0] sm:$0xff]
        %v5685 = vld [vmem:[%s347 + $0xde8] sm:$0xff]
        %v5686 = vld [vmem:[%s347 + $0xdf0] sm:$0xff]
        %v5687 = vld [vmem:[%s347 + $0xdf8] sm:$0xff]
        %v5688 = vld [vmem:[%s347 + $0xe00] sm:$0xff]
        %v5689 = vld [vmem:[%s347 + $0xe08] sm:$0xff]
        %v5690 = vld [vmem:[%s347 + $0xe10] sm:$0xff]
        %v5691 = vld [vmem:[%s347 + $0xe18] sm:$0xff]
        %v5692 = vld [vmem:[%s347 + $0xe20] sm:$0xff]
        %v5693 = vld [vmem:[%s347 + $0xe28] sm:$0xff]
        %v5694 = vld [vmem:[%s347 + $0xe30] sm:$0xff]
        %v5695 = vld [vmem:[%s347 + $0xe38] sm:$0xff]
        %v5696 = vld [vmem:[%s347 + $0xe40] sm:$0xff]
        %v5697 = vld [vmem:[%s347 + $0xe48] sm:$0xff]
        %v5698 = vld [vmem:[%s347 + $0xe50] sm:$0xff]
        %v5699 = vld [vmem:[%s347 + $0xe58] sm:$0xff]
        %v5700 = vld [vmem:[%s347 + $0xe60] sm:$0xff]
        %v5701 = vld [vmem:[%s347 + $0xe68] sm:$0xff]
        %v5702 = vld [vmem:[%s347 + $0xe70] sm:$0xff]
        %v5703 = vld [vmem:[%s347 + $0xe78] sm:$0xff]
        %v5704 = vld [vmem:[%s347 + $0xe80] sm:$0xff]
        %v5705 = vld [vmem:[%s347 + $0xe88] sm:$0xff]
        %v5706 = vld [vmem:[%s347 + $0xe90] sm:$0xff]
        %v5707 = vld [vmem:[%s347 + $0xe98] sm:$0xff]
        %v5708 = vld [vmem:[%s347 + $0xea0] sm:$0xff]
        %v5709 = vld [vmem:[%s347 + $0xea8] sm:$0xff]
        %v5710 = vld [vmem:[%s347 + $0xeb0] sm:$0xff]
        %v5711 = vld [vmem:[%s347 + $0xeb8] sm:$0xff]
        %v5712 = vld [vmem:[%s347 + $0xec0] sm:$0xff]
        %v5713 = vld [vmem:[%s347 + $0xec8] sm:$0xff]
        %v5714 = vld [vmem:[%s347 + $0xed0] sm:$0xff]
        %v5715 = vld [vmem:[%s347 + $0xed8] sm:$0xff]
        %v5716 = vld [vmem:[%s347 + $0xee0] sm:$0xff]
        %v5717 = vld [vmem:[%s347 + $0xee8] sm:$0xff]
        %v5718 = vld [vmem:[%s347 + $0xef0] sm:$0xff]
        %v5719 = vld [vmem:[%s347 + $0xef8] sm:$0xff]
        %v5720 = vld [vmem:[%s347 + $0xf00] sm:$0xff]
        %v5721 = vld [vmem:[%s347 + $0xf08] sm:$0xff]
        %v5722 = vld [vmem:[%s347 + $0xf10] sm:$0xff]
        %v5723 = vld [vmem:[%s347 + $0xf18] sm:$0xff]
        %v5724 = vld [vmem:[%s347 + $0xf20] sm:$0xff]
        %v5725 = vld [vmem:[%s347 + $0xf28] sm:$0xff]
        %v5726 = vld [vmem:[%s347 + $0xf30] sm:$0xff]
        %v5727 = vld [vmem:[%s347 + $0xf38] sm:$0xff]
        %v5728 = vld [vmem:[%s347 + $0xf40] sm:$0xff]
        %v5729 = vld [vmem:[%s347 + $0xf48] sm:$0xff]
        %v5730 = vld [vmem:[%s347 + $0xf50] sm:$0xff]
        %v5731 = vld [vmem:[%s347 + $0xf58] sm:$0xff]
        %v5732 = vld [vmem:[%s347 + $0xf60] sm:$0xff]
        %v5733 = vld [vmem:[%s347 + $0xf68] sm:$0xff]
        %v5734 = vld [vmem:[%s347 + $0xf70] sm:$0xff]
        %v5735 = vld [vmem:[%s347 + $0xf78] sm:$0xff]
        %v5736 = vld [vmem:[%s347 + $0xf80] sm:$0xff]
        %v5737 = vld [vmem:[%s347 + $0xf88] sm:$0xff]
        %v5738 = vld [vmem:[%s347 + $0xf90] sm:$0xff]
        %v5739 = vld [vmem:[%s347 + $0xf98] sm:$0xff]
        %v5740 = vld [vmem:[%s347 + $0xfa0] sm:$0xff]
        %v5741 = vld [vmem:[%s347 + $0xfa8] sm:$0xff]
        %v5742 = vld [vmem:[%s347 + $0xfb0] sm:$0xff]
        %v5743 = vld [vmem:[%s347 + $0xfb8] sm:$0xff]
        %v5744 = vld [vmem:[%s347 + $0xfc0] sm:$0xff]
        %v5745 = vld [vmem:[%s347 + $0xfc8] sm:$0xff]
        %v5746 = vld [vmem:[%s347 + $0xfd0] sm:$0xff]
        %v5747 = vld [vmem:[%s347 + $0xfd8] sm:$0xff]
        %v5748 = vld [vmem:[%s347 + $0xfe0] sm:$0xff]
        %v5749 = vld [vmem:[%s347 + $0xfe8] sm:$0xff]
        %v5750 = vld [vmem:[%s347 + $0xff0] sm:$0xff]
        %v5751 = vld [vmem:[%s347 + $0xff8] sm:$0xff]
        %v5754 = vlaneseq
        %v5755 = vshrl.u32 %v5754, 7
        %v5756 = vsub.s32 0, %v5755
        %v5757 = vrot.slane %v437, %v5756
        %v5758 = vlaneseq
        %v5759 = vshrl.u32 %v5758, 7
        %v5760 = vsub.s32 1, %v5759
        %v5761 = vrot.slane %v437, %v5760
        %v5762 = vlaneseq
        %v5763 = vshrl.u32 %v5762, 7
        %v5764 = vsub.s32 2, %v5763
        %v5765 = vrot.slane %v437, %v5764
        %v5766 = vlaneseq
        %v5767 = vshrl.u32 %v5766, 7
        %v5768 = vsub.s32 3, %v5767
        %v5769 = vrot.slane %v437, %v5768
        %v5770 = vlaneseq
        %v5771 = vshrl.u32 %v5770, 7
        %v5772 = vsub.s32 4, %v5771
        %v5773 = vrot.slane %v437, %v5772
        %v5774 = vlaneseq
        %v5775 = vshrl.u32 %v5774, 7
        %v5776 = vsub.s32 5, %v5775
        %v5777 = vrot.slane %v437, %v5776
        %v5778 = vlaneseq
        %v5779 = vshrl.u32 %v5778, 7
        %v5780 = vsub.s32 6, %v5779
        %v5781 = vrot.slane %v437, %v5780
        %v5782 = vlaneseq
        %v5783 = vshrl.u32 %v5782, 7
        %v5784 = vsub.s32 7, %v5783
        %v5785 = vrot.slane %v437, %v5784
        %v5786 = vlaneseq
        %v5787 = vshrl.u32 %v5786, 7
        %v5788 = vsub.s32 0, %v5787
        %v5789 = vrot.slane %v438, %v5788
        %v5790 = vlaneseq
        %v5791 = vshrl.u32 %v5790, 7
        %v5792 = vsub.s32 1, %v5791
        %v5793 = vrot.slane %v438, %v5792
        %v5794 = vlaneseq
        %v5795 = vshrl.u32 %v5794, 7
        %v5796 = vsub.s32 2, %v5795
        %v5797 = vrot.slane %v438, %v5796
        %v5798 = vlaneseq
        %v5799 = vshrl.u32 %v5798, 7
        %v5800 = vsub.s32 3, %v5799
        %v5801 = vrot.slane %v438, %v5800
        %v5802 = vlaneseq
        %v5803 = vshrl.u32 %v5802, 7
        %v5804 = vsub.s32 4, %v5803
        %v5805 = vrot.slane %v438, %v5804
        %v5806 = vlaneseq
        %v5807 = vshrl.u32 %v5806, 7
        %v5808 = vsub.s32 5, %v5807
        %v5809 = vrot.slane %v438, %v5808
        %v5810 = vlaneseq
        %v5811 = vshrl.u32 %v5810, 7
        %v5812 = vsub.s32 6, %v5811
        %v5813 = vrot.slane %v438, %v5812
        %v5814 = vlaneseq
        %v5815 = vshrl.u32 %v5814, 7
        %v5816 = vsub.s32 7, %v5815
        %v5817 = vrot.slane %v438, %v5816
        %v6346 = vunpack.c.l.b16 %v5240
        %v6347 = vunpack.c.h.b16 %v5240
        %v6348 = vunpack.c.l.b16 %v5241
        %v6349 = vunpack.c.h.b16 %v5241
        %v6350 = vunpack.c.l.b16 %v5242
        %v6351 = vunpack.c.h.b16 %v5242
        %v6352 = vunpack.c.l.b16 %v5243
        %v6353 = vunpack.c.h.b16 %v5243
        %v6354 = vunpack.c.l.b16 %v5244
        %v6355 = vunpack.c.h.b16 %v5244
        %v6356 = vunpack.c.l.b16 %v5245
        %v6357 = vunpack.c.h.b16 %v5245
        %v6358 = vunpack.c.l.b16 %v5246
        %v6359 = vunpack.c.h.b16 %v5246
        %v6360 = vunpack.c.l.b16 %v5247
        %v6361 = vunpack.c.h.b16 %v5247
        %v6362 = vunpack.c.l.b16 %v5248
        %v6363 = vunpack.c.h.b16 %v5248
        %v6364 = vunpack.c.l.b16 %v5249
        %v6365 = vunpack.c.h.b16 %v5249
        %v6366 = vunpack.c.l.b16 %v5250
        %v6367 = vunpack.c.h.b16 %v5250
        %v6368 = vunpack.c.l.b16 %v5251
        %v6369 = vunpack.c.h.b16 %v5251
        %v6370 = vunpack.c.l.b16 %v5252
        %v6371 = vunpack.c.h.b16 %v5252
        %v6372 = vunpack.c.l.b16 %v5253
        %v6373 = vunpack.c.h.b16 %v5253
        %v6374 = vunpack.c.l.b16 %v5254
        %v6375 = vunpack.c.h.b16 %v5254
        %v6376 = vunpack.c.l.b16 %v5255
        %v6377 = vunpack.c.h.b16 %v5255
        %v6378 = vunpack.c.l.b16 %v5256
        %v6379 = vunpack.c.h.b16 %v5256
        %v6380 = vunpack.c.l.b16 %v5257
        %v6381 = vunpack.c.h.b16 %v5257
        %v6382 = vunpack.c.l.b16 %v5258
        %v6383 = vunpack.c.h.b16 %v5258
        %v6384 = vunpack.c.l.b16 %v5259
        %v6385 = vunpack.c.h.b16 %v5259
        %v6386 = vunpack.c.l.b16 %v5260
        %v6387 = vunpack.c.h.b16 %v5260
        %v6388 = vunpack.c.l.b16 %v5261
        %v6389 = vunpack.c.h.b16 %v5261
        %v6390 = vunpack.c.l.b16 %v5262
        %v6391 = vunpack.c.h.b16 %v5262
        %v6392 = vunpack.c.l.b16 %v5263
        %v6393 = vunpack.c.h.b16 %v5263
        %v6394 = vunpack.c.l.b16 %v5264
        %v6395 = vunpack.c.h.b16 %v5264
        %v6396 = vunpack.c.l.b16 %v5265
        %v6397 = vunpack.c.h.b16 %v5265
        %v6398 = vunpack.c.l.b16 %v5266
        %v6399 = vunpack.c.h.b16 %v5266
        %v6400 = vunpack.c.l.b16 %v5267
        %v6401 = vunpack.c.h.b16 %v5267
        %v6402 = vunpack.c.l.b16 %v5268
        %v6403 = vunpack.c.h.b16 %v5268
        %v6404 = vunpack.c.l.b16 %v5269
        %v6405 = vunpack.c.h.b16 %v5269
        %v6406 = vunpack.c.l.b16 %v5270
        %v6407 = vunpack.c.h.b16 %v5270
        %v6408 = vunpack.c.l.b16 %v5271
        %v6409 = vunpack.c.h.b16 %v5271
        %v6410 = vunpack.c.l.b16 %v5272
        %v6411 = vunpack.c.h.b16 %v5272
        %v6412 = vunpack.c.l.b16 %v5273
        %v6413 = vunpack.c.h.b16 %v5273
        %v6414 = vunpack.c.l.b16 %v5274
        %v6415 = vunpack.c.h.b16 %v5274
        %v6416 = vunpack.c.l.b16 %v5275
        %v6417 = vunpack.c.h.b16 %v5275
        %v6418 = vunpack.c.l.b16 %v5276
        %v6419 = vunpack.c.h.b16 %v5276
        %v6420 = vunpack.c.l.b16 %v5277
        %v6421 = vunpack.c.h.b16 %v5277
        %v6422 = vunpack.c.l.b16 %v5278
        %v6423 = vunpack.c.h.b16 %v5278
        %v6424 = vunpack.c.l.b16 %v5279
        %v6425 = vunpack.c.h.b16 %v5279
        %v6426 = vunpack.c.l.b16 %v5280
        %v6427 = vunpack.c.h.b16 %v5280
        %v6428 = vunpack.c.l.b16 %v5281
        %v6429 = vunpack.c.h.b16 %v5281
        %v6430 = vunpack.c.l.b16 %v5282
        %v6431 = vunpack.c.h.b16 %v5282
        %v6432 = vunpack.c.l.b16 %v5283
        %v6433 = vunpack.c.h.b16 %v5283
        %v6434 = vunpack.c.l.b16 %v5284
        %v6435 = vunpack.c.h.b16 %v5284
        %v6436 = vunpack.c.l.b16 %v5285
        %v6437 = vunpack.c.h.b16 %v5285
        %v6438 = vunpack.c.l.b16 %v5286
        %v6439 = vunpack.c.h.b16 %v5286
        %v6440 = vunpack.c.l.b16 %v5287
        %v6441 = vunpack.c.h.b16 %v5287
        %v6442 = vunpack.c.l.b16 %v5288
        %v6443 = vunpack.c.h.b16 %v5288
        %v6444 = vunpack.c.l.b16 %v5289
        %v6445 = vunpack.c.h.b16 %v5289
        %v6446 = vunpack.c.l.b16 %v5290
        %v6447 = vunpack.c.h.b16 %v5290
        %v6448 = vunpack.c.l.b16 %v5291
        %v6449 = vunpack.c.h.b16 %v5291
        %v6450 = vunpack.c.l.b16 %v5292
        %v6451 = vunpack.c.h.b16 %v5292
        %v6452 = vunpack.c.l.b16 %v5293
        %v6453 = vunpack.c.h.b16 %v5293
        %v6454 = vunpack.c.l.b16 %v5294
        %v6455 = vunpack.c.h.b16 %v5294
        %v6456 = vunpack.c.l.b16 %v5295
        %v6457 = vunpack.c.h.b16 %v5295
        %v6458 = vunpack.c.l.b16 %v5296
        %v6459 = vunpack.c.h.b16 %v5296
        %v6460 = vunpack.c.l.b16 %v5297
        %v6461 = vunpack.c.h.b16 %v5297
        %v6462 = vunpack.c.l.b16 %v5298
        %v6463 = vunpack.c.h.b16 %v5298
        %v6464 = vunpack.c.l.b16 %v5299
        %v6465 = vunpack.c.h.b16 %v5299
        %v6466 = vunpack.c.l.b16 %v5300
        %v6467 = vunpack.c.h.b16 %v5300
        %v6468 = vunpack.c.l.b16 %v5301
        %v6469 = vunpack.c.h.b16 %v5301
        %v6470 = vunpack.c.l.b16 %v5302
        %v6471 = vunpack.c.h.b16 %v5302
        %v6472 = vunpack.c.l.b16 %v5303
        %v6473 = vunpack.c.h.b16 %v5303
        %v6474 = vunpack.c.l.b16 %v5304
        %v6475 = vunpack.c.h.b16 %v5304
        %v6476 = vunpack.c.l.b16 %v5305
        %v6477 = vunpack.c.h.b16 %v5305
        %v6478 = vunpack.c.l.b16 %v5306
        %v6479 = vunpack.c.h.b16 %v5306
        %v6480 = vunpack.c.l.b16 %v5307
        %v6481 = vunpack.c.h.b16 %v5307
        %v6482 = vunpack.c.l.b16 %v5308
        %v6483 = vunpack.c.h.b16 %v5308
        %v6484 = vunpack.c.l.b16 %v5309
        %v6485 = vunpack.c.h.b16 %v5309
        %v6486 = vunpack.c.l.b16 %v5310
        %v6487 = vunpack.c.h.b16 %v5310
        %v6488 = vunpack.c.l.b16 %v5311
        %v6489 = vunpack.c.h.b16 %v5311
        %v6490 = vunpack.c.l.b16 %v5312
        %v6491 = vunpack.c.h.b16 %v5312
        %v6492 = vunpack.c.l.b16 %v5313
        %v6493 = vunpack.c.h.b16 %v5313
        %v6494 = vunpack.c.l.b16 %v5314
        %v6495 = vunpack.c.h.b16 %v5314
        %v6496 = vunpack.c.l.b16 %v5315
        %v6497 = vunpack.c.h.b16 %v5315
        %v6498 = vunpack.c.l.b16 %v5316
        %v6499 = vunpack.c.h.b16 %v5316
        %v6500 = vunpack.c.l.b16 %v5317
        %v6501 = vunpack.c.h.b16 %v5317
        %v6502 = vunpack.c.l.b16 %v5318
        %v6503 = vunpack.c.h.b16 %v5318
        %v6504 = vunpack.c.l.b16 %v5319
        %v6505 = vunpack.c.h.b16 %v5319
        %v6506 = vunpack.c.l.b16 %v5320
        %v6507 = vunpack.c.h.b16 %v5320
        %v6508 = vunpack.c.l.b16 %v5321
        %v6509 = vunpack.c.h.b16 %v5321
        %v6510 = vunpack.c.l.b16 %v5322
        %v6511 = vunpack.c.h.b16 %v5322
        %v6512 = vunpack.c.l.b16 %v5323
        %v6513 = vunpack.c.h.b16 %v5323
        %v6514 = vunpack.c.l.b16 %v5324
        %v6515 = vunpack.c.h.b16 %v5324
        %v6516 = vunpack.c.l.b16 %v5325
        %v6517 = vunpack.c.h.b16 %v5325
        %v6518 = vunpack.c.l.b16 %v5326
        %v6519 = vunpack.c.h.b16 %v5326
        %v6520 = vunpack.c.l.b16 %v5327
        %v6521 = vunpack.c.h.b16 %v5327
        %v6522 = vunpack.c.l.b16 %v5328
        %v6523 = vunpack.c.h.b16 %v5328
        %v6524 = vunpack.c.l.b16 %v5329
        %v6525 = vunpack.c.h.b16 %v5329
        %v6526 = vunpack.c.l.b16 %v5330
        %v6527 = vunpack.c.h.b16 %v5330
        %v6528 = vunpack.c.l.b16 %v5331
        %v6529 = vunpack.c.h.b16 %v5331
        %v6530 = vunpack.c.l.b16 %v5332
        %v6531 = vunpack.c.h.b16 %v5332
        %v6532 = vunpack.c.l.b16 %v5333
        %v6533 = vunpack.c.h.b16 %v5333
        %v6534 = vunpack.c.l.b16 %v5334
        %v6535 = vunpack.c.h.b16 %v5334
        %v6536 = vunpack.c.l.b16 %v5335
        %v6537 = vunpack.c.h.b16 %v5335
        %v6538 = vunpack.c.l.b16 %v5336
        %v6539 = vunpack.c.h.b16 %v5336
        %v6540 = vunpack.c.l.b16 %v5337
        %v6541 = vunpack.c.h.b16 %v5337
        %v6542 = vunpack.c.l.b16 %v5338
        %v6543 = vunpack.c.h.b16 %v5338
        %v6544 = vunpack.c.l.b16 %v5339
        %v6545 = vunpack.c.h.b16 %v5339
        %v6546 = vunpack.c.l.b16 %v5340
        %v6547 = vunpack.c.h.b16 %v5340
        %v6548 = vunpack.c.l.b16 %v5341
        %v6549 = vunpack.c.h.b16 %v5341
        %v6550 = vunpack.c.l.b16 %v5342
        %v6551 = vunpack.c.h.b16 %v5342
        %v6552 = vunpack.c.l.b16 %v5343
        %v6553 = vunpack.c.h.b16 %v5343
        %v6554 = vunpack.c.l.b16 %v5344
        %v6555 = vunpack.c.h.b16 %v5344
        %v6556 = vunpack.c.l.b16 %v5345
        %v6557 = vunpack.c.h.b16 %v5345
        %v6558 = vunpack.c.l.b16 %v5346
        %v6559 = vunpack.c.h.b16 %v5346
        %v6560 = vunpack.c.l.b16 %v5347
        %v6561 = vunpack.c.h.b16 %v5347
        %v6562 = vunpack.c.l.b16 %v5348
        %v6563 = vunpack.c.h.b16 %v5348
        %v6564 = vunpack.c.l.b16 %v5349
        %v6565 = vunpack.c.h.b16 %v5349
        %v6566 = vunpack.c.l.b16 %v5350
        %v6567 = vunpack.c.h.b16 %v5350
        %v6568 = vunpack.c.l.b16 %v5351
        %v6569 = vunpack.c.h.b16 %v5351
        %v6570 = vunpack.c.l.b16 %v5352
        %v6571 = vunpack.c.h.b16 %v5352
        %v6572 = vunpack.c.l.b16 %v5353
        %v6573 = vunpack.c.h.b16 %v5353
        %v6574 = vunpack.c.l.b16 %v5354
        %v6575 = vunpack.c.h.b16 %v5354
        %v6576 = vunpack.c.l.b16 %v5355
        %v6577 = vunpack.c.h.b16 %v5355
        %v6578 = vunpack.c.l.b16 %v5356
        %v6579 = vunpack.c.h.b16 %v5356
        %v6580 = vunpack.c.l.b16 %v5357
        %v6581 = vunpack.c.h.b16 %v5357
        %v6582 = vunpack.c.l.b16 %v5358
        %v6583 = vunpack.c.h.b16 %v5358
        %v6584 = vunpack.c.l.b16 %v5359
        %v6585 = vunpack.c.h.b16 %v5359
        %v6586 = vunpack.c.l.b16 %v5360
        %v6587 = vunpack.c.h.b16 %v5360
        %v6588 = vunpack.c.l.b16 %v5361
        %v6589 = vunpack.c.h.b16 %v5361
        %v6590 = vunpack.c.l.b16 %v5362
        %v6591 = vunpack.c.h.b16 %v5362
        %v6592 = vunpack.c.l.b16 %v5363
        %v6593 = vunpack.c.h.b16 %v5363
        %v6594 = vunpack.c.l.b16 %v5364
        %v6595 = vunpack.c.h.b16 %v5364
        %v6596 = vunpack.c.l.b16 %v5365
        %v6597 = vunpack.c.h.b16 %v5365
        %v6598 = vunpack.c.l.b16 %v5366
        %v6599 = vunpack.c.h.b16 %v5366
        %v6600 = vunpack.c.l.b16 %v5367
        %v6601 = vunpack.c.h.b16 %v5367
        %v6602 = vunpack.c.l.b16 %v5368
        %v6603 = vunpack.c.h.b16 %v5368
        %v6604 = vunpack.c.l.b16 %v5369
        %v6605 = vunpack.c.h.b16 %v5369
        %v6606 = vunpack.c.l.b16 %v5370
        %v6607 = vunpack.c.h.b16 %v5370
        %v6608 = vunpack.c.l.b16 %v5371
        %v6609 = vunpack.c.h.b16 %v5371
        %v6610 = vunpack.c.l.b16 %v5372
        %v6611 = vunpack.c.h.b16 %v5372
        %v6612 = vunpack.c.l.b16 %v5373
        %v6613 = vunpack.c.h.b16 %v5373
        %v6614 = vunpack.c.l.b16 %v5374
        %v6615 = vunpack.c.h.b16 %v5374
        %v6616 = vunpack.c.l.b16 %v5375
        %v6617 = vunpack.c.h.b16 %v5375
        %v6618 = vunpack.c.l.b16 %v5376
        %v6619 = vunpack.c.h.b16 %v5376
        %v6620 = vunpack.c.l.b16 %v5377
        %v6621 = vunpack.c.h.b16 %v5377
        %v6622 = vunpack.c.l.b16 %v5378
        %v6623 = vunpack.c.h.b16 %v5378
        %v6624 = vunpack.c.l.b16 %v5379
        %v6625 = vunpack.c.h.b16 %v5379
        %v6626 = vunpack.c.l.b16 %v5380
        %v6627 = vunpack.c.h.b16 %v5380
        %v6628 = vunpack.c.l.b16 %v5381
        %v6629 = vunpack.c.h.b16 %v5381
        %v6630 = vunpack.c.l.b16 %v5382
        %v6631 = vunpack.c.h.b16 %v5382
        %v6632 = vunpack.c.l.b16 %v5383
        %v6633 = vunpack.c.h.b16 %v5383
        %v6634 = vunpack.c.l.b16 %v5384
        %v6635 = vunpack.c.h.b16 %v5384
        %v6636 = vunpack.c.l.b16 %v5385
        %v6637 = vunpack.c.h.b16 %v5385
        %v6638 = vunpack.c.l.b16 %v5386
        %v6639 = vunpack.c.h.b16 %v5386
        %v6640 = vunpack.c.l.b16 %v5387
        %v6641 = vunpack.c.h.b16 %v5387
        %v6642 = vunpack.c.l.b16 %v5388
        %v6643 = vunpack.c.h.b16 %v5388
        %v6644 = vunpack.c.l.b16 %v5389
        %v6645 = vunpack.c.h.b16 %v5389
        %v6646 = vunpack.c.l.b16 %v5390
        %v6647 = vunpack.c.h.b16 %v5390
        %v6648 = vunpack.c.l.b16 %v5391
        %v6649 = vunpack.c.h.b16 %v5391
        %v6650 = vunpack.c.l.b16 %v5392
        %v6651 = vunpack.c.h.b16 %v5392
        %v6652 = vunpack.c.l.b16 %v5393
        %v6653 = vunpack.c.h.b16 %v5393
        %v6654 = vunpack.c.l.b16 %v5394
        %v6655 = vunpack.c.h.b16 %v5394
        %v6656 = vunpack.c.l.b16 %v5395
        %v6657 = vunpack.c.h.b16 %v5395
        %v6658 = vunpack.c.l.b16 %v5396
        %v6659 = vunpack.c.h.b16 %v5396
        %v6660 = vunpack.c.l.b16 %v5397
        %v6661 = vunpack.c.h.b16 %v5397
        %v6662 = vunpack.c.l.b16 %v5398
        %v6663 = vunpack.c.h.b16 %v5398
        %v6664 = vunpack.c.l.b16 %v5399
        %v6665 = vunpack.c.h.b16 %v5399
        %v6666 = vunpack.c.l.b16 %v5400
        %v6667 = vunpack.c.h.b16 %v5400
        %v6668 = vunpack.c.l.b16 %v5401
        %v6669 = vunpack.c.h.b16 %v5401
        %v6670 = vunpack.c.l.b16 %v5402
        %v6671 = vunpack.c.h.b16 %v5402
        %v6672 = vunpack.c.l.b16 %v5403
        %v6673 = vunpack.c.h.b16 %v5403
        %v6674 = vunpack.c.l.b16 %v5404
        %v6675 = vunpack.c.h.b16 %v5404
        %v6676 = vunpack.c.l.b16 %v5405
        %v6677 = vunpack.c.h.b16 %v5405
        %v6678 = vunpack.c.l.b16 %v5406
        %v6679 = vunpack.c.h.b16 %v5406
        %v6680 = vunpack.c.l.b16 %v5407
        %v6681 = vunpack.c.h.b16 %v5407
        %v6682 = vunpack.c.l.b16 %v5408
        %v6683 = vunpack.c.h.b16 %v5408
        %v6684 = vunpack.c.l.b16 %v5409
        %v6685 = vunpack.c.h.b16 %v5409
        %v6686 = vunpack.c.l.b16 %v5410
        %v6687 = vunpack.c.h.b16 %v5410
        %v6688 = vunpack.c.l.b16 %v5411
        %v6689 = vunpack.c.h.b16 %v5411
        %v6690 = vunpack.c.l.b16 %v5412
        %v6691 = vunpack.c.h.b16 %v5412
        %v6692 = vunpack.c.l.b16 %v5413
        %v6693 = vunpack.c.h.b16 %v5413
        %v6694 = vunpack.c.l.b16 %v5414
        %v6695 = vunpack.c.h.b16 %v5414
        %v6696 = vunpack.c.l.b16 %v5415
        %v6697 = vunpack.c.h.b16 %v5415
        %v6698 = vunpack.c.l.b16 %v5416
        %v6699 = vunpack.c.h.b16 %v5416
        %v6700 = vunpack.c.l.b16 %v5417
        %v6701 = vunpack.c.h.b16 %v5417
        %v6702 = vunpack.c.l.b16 %v5418
        %v6703 = vunpack.c.h.b16 %v5418
        %v6704 = vunpack.c.l.b16 %v5419
        %v6705 = vunpack.c.h.b16 %v5419
        %v6706 = vunpack.c.l.b16 %v5420
        %v6707 = vunpack.c.h.b16 %v5420
        %v6708 = vunpack.c.l.b16 %v5421
        %v6709 = vunpack.c.h.b16 %v5421
        %v6710 = vunpack.c.l.b16 %v5422
        %v6711 = vunpack.c.h.b16 %v5422
        %v6712 = vunpack.c.l.b16 %v5423
        %v6713 = vunpack.c.h.b16 %v5423
        %v6714 = vunpack.c.l.b16 %v5424
        %v6715 = vunpack.c.h.b16 %v5424
        %v6716 = vunpack.c.l.b16 %v5425
        %v6717 = vunpack.c.h.b16 %v5425
        %v6718 = vunpack.c.l.b16 %v5426
        %v6719 = vunpack.c.h.b16 %v5426
        %v6720 = vunpack.c.l.b16 %v5427
        %v6721 = vunpack.c.h.b16 %v5427
        %v6722 = vunpack.c.l.b16 %v5428
        %v6723 = vunpack.c.h.b16 %v5428
        %v6724 = vunpack.c.l.b16 %v5429
        %v6725 = vunpack.c.h.b16 %v5429
        %v6726 = vunpack.c.l.b16 %v5430
        %v6727 = vunpack.c.h.b16 %v5430
        %v6728 = vunpack.c.l.b16 %v5431
        %v6729 = vunpack.c.h.b16 %v5431
        %v6730 = vunpack.c.l.b16 %v5432
        %v6731 = vunpack.c.h.b16 %v5432
        %v6732 = vunpack.c.l.b16 %v5433
        %v6733 = vunpack.c.h.b16 %v5433
        %v6734 = vunpack.c.l.b16 %v5434
        %v6735 = vunpack.c.h.b16 %v5434
        %v6736 = vunpack.c.l.b16 %v5435
        %v6737 = vunpack.c.h.b16 %v5435
        %v6738 = vunpack.c.l.b16 %v5436
        %v6739 = vunpack.c.h.b16 %v5436
        %v6740 = vunpack.c.l.b16 %v5437
        %v6741 = vunpack.c.h.b16 %v5437
        %v6742 = vunpack.c.l.b16 %v5438
        %v6743 = vunpack.c.h.b16 %v5438
        %v6744 = vunpack.c.l.b16 %v5439
        %v6745 = vunpack.c.h.b16 %v5439
        %v6746 = vunpack.c.l.b16 %v5440
        %v6747 = vunpack.c.h.b16 %v5440
        %v6748 = vunpack.c.l.b16 %v5441
        %v6749 = vunpack.c.h.b16 %v5441
        %v6750 = vunpack.c.l.b16 %v5442
        %v6751 = vunpack.c.h.b16 %v5442
        %v6752 = vunpack.c.l.b16 %v5443
        %v6753 = vunpack.c.h.b16 %v5443
        %v6754 = vunpack.c.l.b16 %v5444
        %v6755 = vunpack.c.h.b16 %v5444
        %v6756 = vunpack.c.l.b16 %v5445
        %v6757 = vunpack.c.h.b16 %v5445
        %v6758 = vunpack.c.l.b16 %v5446
        %v6759 = vunpack.c.h.b16 %v5446
        %v6760 = vunpack.c.l.b16 %v5447
        %v6761 = vunpack.c.h.b16 %v5447
        %v6762 = vunpack.c.l.b16 %v5448
        %v6763 = vunpack.c.h.b16 %v5448
        %v6764 = vunpack.c.l.b16 %v5449
        %v6765 = vunpack.c.h.b16 %v5449
        %v6766 = vunpack.c.l.b16 %v5450
        %v6767 = vunpack.c.h.b16 %v5450
        %v6768 = vunpack.c.l.b16 %v5451
        %v6769 = vunpack.c.h.b16 %v5451
        %v6770 = vunpack.c.l.b16 %v5452
        %v6771 = vunpack.c.h.b16 %v5452
        %v6772 = vunpack.c.l.b16 %v5453
        %v6773 = vunpack.c.h.b16 %v5453
        %v6774 = vunpack.c.l.b16 %v5454
        %v6775 = vunpack.c.h.b16 %v5454
        %v6776 = vunpack.c.l.b16 %v5455
        %v6777 = vunpack.c.h.b16 %v5455
        %v6778 = vunpack.c.l.b16 %v5456
        %v6779 = vunpack.c.h.b16 %v5456
        %v6780 = vunpack.c.l.b16 %v5457
        %v6781 = vunpack.c.h.b16 %v5457
        %v6782 = vunpack.c.l.b16 %v5458
        %v6783 = vunpack.c.h.b16 %v5458
        %v6784 = vunpack.c.l.b16 %v5459
        %v6785 = vunpack.c.h.b16 %v5459
        %v6786 = vunpack.c.l.b16 %v5460
        %v6787 = vunpack.c.h.b16 %v5460
        %v6788 = vunpack.c.l.b16 %v5461
        %v6789 = vunpack.c.h.b16 %v5461
        %v6790 = vunpack.c.l.b16 %v5462
        %v6791 = vunpack.c.h.b16 %v5462
        %v6792 = vunpack.c.l.b16 %v5463
        %v6793 = vunpack.c.h.b16 %v5463
        %v6794 = vunpack.c.l.b16 %v5464
        %v6795 = vunpack.c.h.b16 %v5464
        %v6796 = vunpack.c.l.b16 %v5465
        %v6797 = vunpack.c.h.b16 %v5465
        %v6798 = vunpack.c.l.b16 %v5466
        %v6799 = vunpack.c.h.b16 %v5466
        %v6800 = vunpack.c.l.b16 %v5467
        %v6801 = vunpack.c.h.b16 %v5467
        %v6802 = vunpack.c.l.b16 %v5468
        %v6803 = vunpack.c.h.b16 %v5468
        %v6804 = vunpack.c.l.b16 %v5469
        %v6805 = vunpack.c.h.b16 %v5469
        %v6806 = vunpack.c.l.b16 %v5470
        %v6807 = vunpack.c.h.b16 %v5470
        %v6808 = vunpack.c.l.b16 %v5471
        %v6809 = vunpack.c.h.b16 %v5471
        %v6810 = vunpack.c.l.b16 %v5472
        %v6811 = vunpack.c.h.b16 %v5472
        %v6812 = vunpack.c.l.b16 %v5473
        %v6813 = vunpack.c.h.b16 %v5473
        %v6814 = vunpack.c.l.b16 %v5474
        %v6815 = vunpack.c.h.b16 %v5474
        %v6816 = vunpack.c.l.b16 %v5475
        %v6817 = vunpack.c.h.b16 %v5475
        %v6818 = vunpack.c.l.b16 %v5476
        %v6819 = vunpack.c.h.b16 %v5476
        %v6820 = vunpack.c.l.b16 %v5477
        %v6821 = vunpack.c.h.b16 %v5477
        %v6822 = vunpack.c.l.b16 %v5478
        %v6823 = vunpack.c.h.b16 %v5478
        %v6824 = vunpack.c.l.b16 %v5479
        %v6825 = vunpack.c.h.b16 %v5479
        %v6826 = vunpack.c.l.b16 %v5480
        %v6827 = vunpack.c.h.b16 %v5480
        %v6828 = vunpack.c.l.b16 %v5481
        %v6829 = vunpack.c.h.b16 %v5481
        %v6830 = vunpack.c.l.b16 %v5482
        %v6831 = vunpack.c.h.b16 %v5482
        %v6832 = vunpack.c.l.b16 %v5483
        %v6833 = vunpack.c.h.b16 %v5483
        %v6834 = vunpack.c.l.b16 %v5484
        %v6835 = vunpack.c.h.b16 %v5484
        %v6836 = vunpack.c.l.b16 %v5485
        %v6837 = vunpack.c.h.b16 %v5485
        %v6838 = vunpack.c.l.b16 %v5486
        %v6839 = vunpack.c.h.b16 %v5486
        %v6840 = vunpack.c.l.b16 %v5487
        %v6841 = vunpack.c.h.b16 %v5487
        %v6842 = vunpack.c.l.b16 %v5488
        %v6843 = vunpack.c.h.b16 %v5488
        %v6844 = vunpack.c.l.b16 %v5489
        %v6845 = vunpack.c.h.b16 %v5489
        %v6846 = vunpack.c.l.b16 %v5490
        %v6847 = vunpack.c.h.b16 %v5490
        %v6848 = vunpack.c.l.b16 %v5491
        %v6849 = vunpack.c.h.b16 %v5491
        %v6850 = vunpack.c.l.b16 %v5492
        %v6851 = vunpack.c.h.b16 %v5492
        %v6852 = vunpack.c.l.b16 %v5493
        %v6853 = vunpack.c.h.b16 %v5493
        %v6854 = vunpack.c.l.b16 %v5494
        %v6855 = vunpack.c.h.b16 %v5494
        %v6856 = vunpack.c.l.b16 %v5495
        %v6857 = vunpack.c.h.b16 %v5495
        %v6858 = vunpack.c.l.b16 %v5496
        %v6859 = vunpack.c.h.b16 %v5496
        %v6860 = vunpack.c.l.b16 %v5497
        %v6861 = vunpack.c.h.b16 %v5497
        %v6862 = vunpack.c.l.b16 %v5498
        %v6863 = vunpack.c.h.b16 %v5498
        %v6864 = vunpack.c.l.b16 %v5499
        %v6865 = vunpack.c.h.b16 %v5499
        %v6866 = vunpack.c.l.b16 %v5500
        %v6867 = vunpack.c.h.b16 %v5500
        %v6868 = vunpack.c.l.b16 %v5501
        %v6869 = vunpack.c.h.b16 %v5501
        %v6870 = vunpack.c.l.b16 %v5502
        %v6871 = vunpack.c.h.b16 %v5502
        %v6872 = vunpack.c.l.b16 %v5503
        %v6873 = vunpack.c.h.b16 %v5503
        %v6874 = vunpack.c.l.b16 %v5504
        %v6875 = vunpack.c.h.b16 %v5504
        %v6876 = vunpack.c.l.b16 %v5505
        %v6877 = vunpack.c.h.b16 %v5505
        %v6878 = vunpack.c.l.b16 %v5506
        %v6879 = vunpack.c.h.b16 %v5506
        %v6880 = vunpack.c.l.b16 %v5507
        %v6881 = vunpack.c.h.b16 %v5507
        %v6882 = vunpack.c.l.b16 %v5508
        %v6883 = vunpack.c.h.b16 %v5508
        %v6884 = vunpack.c.l.b16 %v5509
        %v6885 = vunpack.c.h.b16 %v5509
        %v6886 = vunpack.c.l.b16 %v5510
        %v6887 = vunpack.c.h.b16 %v5510
        %v6888 = vunpack.c.l.b16 %v5511
        %v6889 = vunpack.c.h.b16 %v5511
        %v6890 = vunpack.c.l.b16 %v5512
        %v6891 = vunpack.c.h.b16 %v5512
        %v6892 = vunpack.c.l.b16 %v5513
        %v6893 = vunpack.c.h.b16 %v5513
        %v6894 = vunpack.c.l.b16 %v5514
        %v6895 = vunpack.c.h.b16 %v5514
        %v6896 = vunpack.c.l.b16 %v5515
        %v6897 = vunpack.c.h.b16 %v5515
        %v6898 = vunpack.c.l.b16 %v5516
        %v6899 = vunpack.c.h.b16 %v5516
        %v6900 = vunpack.c.l.b16 %v5517
        %v6901 = vunpack.c.h.b16 %v5517
        %v6902 = vunpack.c.l.b16 %v5518
        %v6903 = vunpack.c.h.b16 %v5518
        %v6904 = vunpack.c.l.b16 %v5519
        %v6905 = vunpack.c.h.b16 %v5519
        %v6906 = vunpack.c.l.b16 %v5520
        %v6907 = vunpack.c.h.b16 %v5520
        %v6908 = vunpack.c.l.b16 %v5521
        %v6909 = vunpack.c.h.b16 %v5521
        %v6910 = vunpack.c.l.b16 %v5522
        %v6911 = vunpack.c.h.b16 %v5522
        %v6912 = vunpack.c.l.b16 %v5523
        %v6913 = vunpack.c.h.b16 %v5523
        %v6914 = vunpack.c.l.b16 %v5524
        %v6915 = vunpack.c.h.b16 %v5524
        %v6916 = vunpack.c.l.b16 %v5525
        %v6917 = vunpack.c.h.b16 %v5525
        %v6918 = vunpack.c.l.b16 %v5526
        %v6919 = vunpack.c.h.b16 %v5526
        %v6920 = vunpack.c.l.b16 %v5527
        %v6921 = vunpack.c.h.b16 %v5527
        %v6922 = vunpack.c.l.b16 %v5528
        %v6923 = vunpack.c.h.b16 %v5528
        %v6924 = vunpack.c.l.b16 %v5529
        %v6925 = vunpack.c.h.b16 %v5529
        %v6926 = vunpack.c.l.b16 %v5530
        %v6927 = vunpack.c.h.b16 %v5530
        %v6928 = vunpack.c.l.b16 %v5531
        %v6929 = vunpack.c.h.b16 %v5531
        %v6930 = vunpack.c.l.b16 %v5532
        %v6931 = vunpack.c.h.b16 %v5532
        %v6932 = vunpack.c.l.b16 %v5533
        %v6933 = vunpack.c.h.b16 %v5533
        %v6934 = vunpack.c.l.b16 %v5534
        %v6935 = vunpack.c.h.b16 %v5534
        %v6936 = vunpack.c.l.b16 %v5535
        %v6937 = vunpack.c.h.b16 %v5535
        %v6938 = vunpack.c.l.b16 %v5536
        %v6939 = vunpack.c.h.b16 %v5536
        %v6940 = vunpack.c.l.b16 %v5537
        %v6941 = vunpack.c.h.b16 %v5537
        %v6942 = vunpack.c.l.b16 %v5538
        %v6943 = vunpack.c.h.b16 %v5538
        %v6944 = vunpack.c.l.b16 %v5539
        %v6945 = vunpack.c.h.b16 %v5539
        %v6946 = vunpack.c.l.b16 %v5540
        %v6947 = vunpack.c.h.b16 %v5540
        %v6948 = vunpack.c.l.b16 %v5541
        %v6949 = vunpack.c.h.b16 %v5541
        %v6950 = vunpack.c.l.b16 %v5542
        %v6951 = vunpack.c.h.b16 %v5542
        %v6952 = vunpack.c.l.b16 %v5543
        %v6953 = vunpack.c.h.b16 %v5543
        %v6954 = vunpack.c.l.b16 %v5544
        %v6955 = vunpack.c.h.b16 %v5544
        %v6956 = vunpack.c.l.b16 %v5545
        %v6957 = vunpack.c.h.b16 %v5545
        %v6958 = vunpack.c.l.b16 %v5546
        %v6959 = vunpack.c.h.b16 %v5546
        %v6960 = vunpack.c.l.b16 %v5547
        %v6961 = vunpack.c.h.b16 %v5547
        %v6962 = vunpack.c.l.b16 %v5548
        %v6963 = vunpack.c.h.b16 %v5548
        %v6964 = vunpack.c.l.b16 %v5549
        %v6965 = vunpack.c.h.b16 %v5549
        %v6966 = vunpack.c.l.b16 %v5550
        %v6967 = vunpack.c.h.b16 %v5550
        %v6968 = vunpack.c.l.b16 %v5551
        %v6969 = vunpack.c.h.b16 %v5551
        %v6970 = vunpack.c.l.b16 %v5552
        %v6971 = vunpack.c.h.b16 %v5552
        %v6972 = vunpack.c.l.b16 %v5553
        %v6973 = vunpack.c.h.b16 %v5553
        %v6974 = vunpack.c.l.b16 %v5554
        %v6975 = vunpack.c.h.b16 %v5554
        %v6976 = vunpack.c.l.b16 %v5555
        %v6977 = vunpack.c.h.b16 %v5555
        %v6978 = vunpack.c.l.b16 %v5556
        %v6979 = vunpack.c.h.b16 %v5556
        %v6980 = vunpack.c.l.b16 %v5557
        %v6981 = vunpack.c.h.b16 %v5557
        %v6982 = vunpack.c.l.b16 %v5558
        %v6983 = vunpack.c.h.b16 %v5558
        %v6984 = vunpack.c.l.b16 %v5559
        %v6985 = vunpack.c.h.b16 %v5559
        %v6986 = vunpack.c.l.b16 %v5560
        %v6987 = vunpack.c.h.b16 %v5560
        %v6988 = vunpack.c.l.b16 %v5561
        %v6989 = vunpack.c.h.b16 %v5561
        %v6990 = vunpack.c.l.b16 %v5562
        %v6991 = vunpack.c.h.b16 %v5562
        %v6992 = vunpack.c.l.b16 %v5563
        %v6993 = vunpack.c.h.b16 %v5563
        %v6994 = vunpack.c.l.b16 %v5564
        %v6995 = vunpack.c.h.b16 %v5564
        %v6996 = vunpack.c.l.b16 %v5565
        %v6997 = vunpack.c.h.b16 %v5565
        %v6998 = vunpack.c.l.b16 %v5566
        %v6999 = vunpack.c.h.b16 %v5566
        %v7000 = vunpack.c.l.b16 %v5567
        %v7001 = vunpack.c.h.b16 %v5567
        %v7002 = vunpack.c.l.b16 %v5568
        %v7003 = vunpack.c.h.b16 %v5568
        %v7004 = vunpack.c.l.b16 %v5569
        %v7005 = vunpack.c.h.b16 %v5569
        %v7006 = vunpack.c.l.b16 %v5570
        %v7007 = vunpack.c.h.b16 %v5570
        %v7008 = vunpack.c.l.b16 %v5571
        %v7009 = vunpack.c.h.b16 %v5571
        %v7010 = vunpack.c.l.b16 %v5572
        %v7011 = vunpack.c.h.b16 %v5572
        %v7012 = vunpack.c.l.b16 %v5573
        %v7013 = vunpack.c.h.b16 %v5573
        %v7014 = vunpack.c.l.b16 %v5574
        %v7015 = vunpack.c.h.b16 %v5574
        %v7016 = vunpack.c.l.b16 %v5575
        %v7017 = vunpack.c.h.b16 %v5575
        %v7018 = vunpack.c.l.b16 %v5576
        %v7019 = vunpack.c.h.b16 %v5576
        %v7020 = vunpack.c.l.b16 %v5577
        %v7021 = vunpack.c.h.b16 %v5577
        %v7022 = vunpack.c.l.b16 %v5578
        %v7023 = vunpack.c.h.b16 %v5578
        %v7024 = vunpack.c.l.b16 %v5579
        %v7025 = vunpack.c.h.b16 %v5579
        %v7026 = vunpack.c.l.b16 %v5580
        %v7027 = vunpack.c.h.b16 %v5580
        %v7028 = vunpack.c.l.b16 %v5581
        %v7029 = vunpack.c.h.b16 %v5581
        %v7030 = vunpack.c.l.b16 %v5582
        %v7031 = vunpack.c.h.b16 %v5582
        %v7032 = vunpack.c.l.b16 %v5583
        %v7033 = vunpack.c.h.b16 %v5583
        %v7034 = vunpack.c.l.b16 %v5584
        %v7035 = vunpack.c.h.b16 %v5584
        %v7036 = vunpack.c.l.b16 %v5585
        %v7037 = vunpack.c.h.b16 %v5585
        %v7038 = vunpack.c.l.b16 %v5586
        %v7039 = vunpack.c.h.b16 %v5586
        %v7040 = vunpack.c.l.b16 %v5587
        %v7041 = vunpack.c.h.b16 %v5587
        %v7042 = vunpack.c.l.b16 %v5588
        %v7043 = vunpack.c.h.b16 %v5588
        %v7044 = vunpack.c.l.b16 %v5589
        %v7045 = vunpack.c.h.b16 %v5589
        %v7046 = vunpack.c.l.b16 %v5590
        %v7047 = vunpack.c.h.b16 %v5590
        %v7048 = vunpack.c.l.b16 %v5591
        %v7049 = vunpack.c.h.b16 %v5591
        %v7050 = vunpack.c.l.b16 %v5592
        %v7051 = vunpack.c.h.b16 %v5592
        %v7052 = vunpack.c.l.b16 %v5593
        %v7053 = vunpack.c.h.b16 %v5593
        %v7054 = vunpack.c.l.b16 %v5594
        %v7055 = vunpack.c.h.b16 %v5594
        %v7056 = vunpack.c.l.b16 %v5595
        %v7057 = vunpack.c.h.b16 %v5595
        %v7058 = vunpack.c.l.b16 %v5596
        %v7059 = vunpack.c.h.b16 %v5596
        %v7060 = vunpack.c.l.b16 %v5597
        %v7061 = vunpack.c.h.b16 %v5597
        %v7062 = vunpack.c.l.b16 %v5598
        %v7063 = vunpack.c.h.b16 %v5598
        %v7064 = vunpack.c.l.b16 %v5599
        %v7065 = vunpack.c.h.b16 %v5599
        %v7066 = vunpack.c.l.b16 %v5600
        %v7067 = vunpack.c.h.b16 %v5600
        %v7068 = vunpack.c.l.b16 %v5601
        %v7069 = vunpack.c.h.b16 %v5601
        %v7070 = vunpack.c.l.b16 %v5602
        %v7071 = vunpack.c.h.b16 %v5602
        %v7072 = vunpack.c.l.b16 %v5603
        %v7073 = vunpack.c.h.b16 %v5603
        %v7074 = vunpack.c.l.b16 %v5604
        %v7075 = vunpack.c.h.b16 %v5604
        %v7076 = vunpack.c.l.b16 %v5605
        %v7077 = vunpack.c.h.b16 %v5605
        %v7078 = vunpack.c.l.b16 %v5606
        %v7079 = vunpack.c.h.b16 %v5606
        %v7080 = vunpack.c.l.b16 %v5607
        %v7081 = vunpack.c.h.b16 %v5607
        %v7082 = vunpack.c.l.b16 %v5608
        %v7083 = vunpack.c.h.b16 %v5608
        %v7084 = vunpack.c.l.b16 %v5609
        %v7085 = vunpack.c.h.b16 %v5609
        %v7086 = vunpack.c.l.b16 %v5610
        %v7087 = vunpack.c.h.b16 %v5610
        %v7088 = vunpack.c.l.b16 %v5611
        %v7089 = vunpack.c.h.b16 %v5611
        %v7090 = vunpack.c.l.b16 %v5612
        %v7091 = vunpack.c.h.b16 %v5612
        %v7092 = vunpack.c.l.b16 %v5613
        %v7093 = vunpack.c.h.b16 %v5613
        %v7094 = vunpack.c.l.b16 %v5614
        %v7095 = vunpack.c.h.b16 %v5614
        %v7096 = vunpack.c.l.b16 %v5615
        %v7097 = vunpack.c.h.b16 %v5615
        %v7098 = vunpack.c.l.b16 %v5616
        %v7099 = vunpack.c.h.b16 %v5616
        %v7100 = vunpack.c.l.b16 %v5617
        %v7101 = vunpack.c.h.b16 %v5617
        %v7102 = vunpack.c.l.b16 %v5618
        %v7103 = vunpack.c.h.b16 %v5618
        %v7104 = vunpack.c.l.b16 %v5619
        %v7105 = vunpack.c.h.b16 %v5619
        %v7106 = vunpack.c.l.b16 %v5620
        %v7107 = vunpack.c.h.b16 %v5620
        %v7108 = vunpack.c.l.b16 %v5621
        %v7109 = vunpack.c.h.b16 %v5621
        %v7110 = vunpack.c.l.b16 %v5622
        %v7111 = vunpack.c.h.b16 %v5622
        %v7112 = vunpack.c.l.b16 %v5623
        %v7113 = vunpack.c.h.b16 %v5623
        %v7114 = vunpack.c.l.b16 %v5624
        %v7115 = vunpack.c.h.b16 %v5624
        %v7116 = vunpack.c.l.b16 %v5625
        %v7117 = vunpack.c.h.b16 %v5625
        %v7118 = vunpack.c.l.b16 %v5626
        %v7119 = vunpack.c.h.b16 %v5626
        %v7120 = vunpack.c.l.b16 %v5627
        %v7121 = vunpack.c.h.b16 %v5627
        %v7122 = vunpack.c.l.b16 %v5628
        %v7123 = vunpack.c.h.b16 %v5628
        %v7124 = vunpack.c.l.b16 %v5629
        %v7125 = vunpack.c.h.b16 %v5629
        %v7126 = vunpack.c.l.b16 %v5630
        %v7127 = vunpack.c.h.b16 %v5630
        %v7128 = vunpack.c.l.b16 %v5631
        %v7129 = vunpack.c.h.b16 %v5631
        %v7130 = vunpack.c.l.b16 %v5632
        %v7131 = vunpack.c.h.b16 %v5632
        %v7132 = vunpack.c.l.b16 %v5633
        %v7133 = vunpack.c.h.b16 %v5633
        %v7134 = vunpack.c.l.b16 %v5634
        %v7135 = vunpack.c.h.b16 %v5634
        %v7136 = vunpack.c.l.b16 %v5635
        %v7137 = vunpack.c.h.b16 %v5635
        %v7138 = vunpack.c.l.b16 %v5636
        %v7139 = vunpack.c.h.b16 %v5636
        %v7140 = vunpack.c.l.b16 %v5637
        %v7141 = vunpack.c.h.b16 %v5637
        %v7142 = vunpack.c.l.b16 %v5638
        %v7143 = vunpack.c.h.b16 %v5638
        %v7144 = vunpack.c.l.b16 %v5639
        %v7145 = vunpack.c.h.b16 %v5639
        %v7146 = vunpack.c.l.b16 %v5640
        %v7147 = vunpack.c.h.b16 %v5640
        %v7148 = vunpack.c.l.b16 %v5641
        %v7149 = vunpack.c.h.b16 %v5641
        %v7150 = vunpack.c.l.b16 %v5642
        %v7151 = vunpack.c.h.b16 %v5642
        %v7152 = vunpack.c.l.b16 %v5643
        %v7153 = vunpack.c.h.b16 %v5643
        %v7154 = vunpack.c.l.b16 %v5644
        %v7155 = vunpack.c.h.b16 %v5644
        %v7156 = vunpack.c.l.b16 %v5645
        %v7157 = vunpack.c.h.b16 %v5645
        %v7158 = vunpack.c.l.b16 %v5646
        %v7159 = vunpack.c.h.b16 %v5646
        %v7160 = vunpack.c.l.b16 %v5647
        %v7161 = vunpack.c.h.b16 %v5647
        %v7162 = vunpack.c.l.b16 %v5648
        %v7163 = vunpack.c.h.b16 %v5648
        %v7164 = vunpack.c.l.b16 %v5649
        %v7165 = vunpack.c.h.b16 %v5649
        %v7166 = vunpack.c.l.b16 %v5650
        %v7167 = vunpack.c.h.b16 %v5650
        %v7168 = vunpack.c.l.b16 %v5651
        %v7169 = vunpack.c.h.b16 %v5651
        %v7170 = vunpack.c.l.b16 %v5652
        %v7171 = vunpack.c.h.b16 %v5652
        %v7172 = vunpack.c.l.b16 %v5653
        %v7173 = vunpack.c.h.b16 %v5653
        %v7174 = vunpack.c.l.b16 %v5654
        %v7175 = vunpack.c.h.b16 %v5654
        %v7176 = vunpack.c.l.b16 %v5655
        %v7177 = vunpack.c.h.b16 %v5655
        %v7178 = vunpack.c.l.b16 %v5656
        %v7179 = vunpack.c.h.b16 %v5656
        %v7180 = vunpack.c.l.b16 %v5657
        %v7181 = vunpack.c.h.b16 %v5657
        %v7182 = vunpack.c.l.b16 %v5658
        %v7183 = vunpack.c.h.b16 %v5658
        %v7184 = vunpack.c.l.b16 %v5659
        %v7185 = vunpack.c.h.b16 %v5659
        %v7186 = vunpack.c.l.b16 %v5660
        %v7187 = vunpack.c.h.b16 %v5660
        %v7188 = vunpack.c.l.b16 %v5661
        %v7189 = vunpack.c.h.b16 %v5661
        %v7190 = vunpack.c.l.b16 %v5662
        %v7191 = vunpack.c.h.b16 %v5662
        %v7192 = vunpack.c.l.b16 %v5663
        %v7193 = vunpack.c.h.b16 %v5663
        %v7194 = vunpack.c.l.b16 %v5664
        %v7195 = vunpack.c.h.b16 %v5664
        %v7196 = vunpack.c.l.b16 %v5665
        %v7197 = vunpack.c.h.b16 %v5665
        %v7198 = vunpack.c.l.b16 %v5666
        %v7199 = vunpack.c.h.b16 %v5666
        %v7200 = vunpack.c.l.b16 %v5667
        %v7201 = vunpack.c.h.b16 %v5667
        %v7202 = vunpack.c.l.b16 %v5668
        %v7203 = vunpack.c.h.b16 %v5668
        %v7204 = vunpack.c.l.b16 %v5669
        %v7205 = vunpack.c.h.b16 %v5669
        %v7206 = vunpack.c.l.b16 %v5670
        %v7207 = vunpack.c.h.b16 %v5670
        %v7208 = vunpack.c.l.b16 %v5671
        %v7209 = vunpack.c.h.b16 %v5671
        %v7210 = vunpack.c.l.b16 %v5672
        %v7211 = vunpack.c.h.b16 %v5672
        %v7212 = vunpack.c.l.b16 %v5673
        %v7213 = vunpack.c.h.b16 %v5673
        %v7214 = vunpack.c.l.b16 %v5674
        %v7215 = vunpack.c.h.b16 %v5674
        %v7216 = vunpack.c.l.b16 %v5675
        %v7217 = vunpack.c.h.b16 %v5675
        %v7218 = vunpack.c.l.b16 %v5676
        %v7219 = vunpack.c.h.b16 %v5676
        %v7220 = vunpack.c.l.b16 %v5677
        %v7221 = vunpack.c.h.b16 %v5677
        %v7222 = vunpack.c.l.b16 %v5678
        %v7223 = vunpack.c.h.b16 %v5678
        %v7224 = vunpack.c.l.b16 %v5679
        %v7225 = vunpack.c.h.b16 %v5679
        %v7226 = vunpack.c.l.b16 %v5680
        %v7227 = vunpack.c.h.b16 %v5680
        %v7228 = vunpack.c.l.b16 %v5681
        %v7229 = vunpack.c.h.b16 %v5681
        %v7230 = vunpack.c.l.b16 %v5682
        %v7231 = vunpack.c.h.b16 %v5682
        %v7232 = vunpack.c.l.b16 %v5683
        %v7233 = vunpack.c.h.b16 %v5683
        %v7234 = vunpack.c.l.b16 %v5684
        %v7235 = vunpack.c.h.b16 %v5684
        %v7236 = vunpack.c.l.b16 %v5685
        %v7237 = vunpack.c.h.b16 %v5685
        %v7238 = vunpack.c.l.b16 %v5686
        %v7239 = vunpack.c.h.b16 %v5686
        %v7240 = vunpack.c.l.b16 %v5687
        %v7241 = vunpack.c.h.b16 %v5687
        %v7242 = vunpack.c.l.b16 %v5688
        %v7243 = vunpack.c.h.b16 %v5688
        %v7244 = vunpack.c.l.b16 %v5689
        %v7245 = vunpack.c.h.b16 %v5689
        %v7246 = vunpack.c.l.b16 %v5690
        %v7247 = vunpack.c.h.b16 %v5690
        %v7248 = vunpack.c.l.b16 %v5691
        %v7249 = vunpack.c.h.b16 %v5691
        %v7250 = vunpack.c.l.b16 %v5692
        %v7251 = vunpack.c.h.b16 %v5692
        %v7252 = vunpack.c.l.b16 %v5693
        %v7253 = vunpack.c.h.b16 %v5693
        %v7254 = vunpack.c.l.b16 %v5694
        %v7255 = vunpack.c.h.b16 %v5694
        %v7256 = vunpack.c.l.b16 %v5695
        %v7257 = vunpack.c.h.b16 %v5695
        %v7258 = vunpack.c.l.b16 %v5696
        %v7259 = vunpack.c.h.b16 %v5696
        %v7260 = vunpack.c.l.b16 %v5697
        %v7261 = vunpack.c.h.b16 %v5697
        %v7262 = vunpack.c.l.b16 %v5698
        %v7263 = vunpack.c.h.b16 %v5698
        %v7264 = vunpack.c.l.b16 %v5699
        %v7265 = vunpack.c.h.b16 %v5699
        %v7266 = vunpack.c.l.b16 %v5700
        %v7267 = vunpack.c.h.b16 %v5700
        %v7268 = vunpack.c.l.b16 %v5701
        %v7269 = vunpack.c.h.b16 %v5701
        %v7270 = vunpack.c.l.b16 %v5702
        %v7271 = vunpack.c.h.b16 %v5702
        %v7272 = vunpack.c.l.b16 %v5703
        %v7273 = vunpack.c.h.b16 %v5703
        %v7274 = vunpack.c.l.b16 %v5704
        %v7275 = vunpack.c.h.b16 %v5704
        %v7276 = vunpack.c.l.b16 %v5705
        %v7277 = vunpack.c.h.b16 %v5705
        %v7278 = vunpack.c.l.b16 %v5706
        %v7279 = vunpack.c.h.b16 %v5706
        %v7280 = vunpack.c.l.b16 %v5707
        %v7281 = vunpack.c.h.b16 %v5707
        %v7282 = vunpack.c.l.b16 %v5708
        %v7283 = vunpack.c.h.b16 %v5708
        %v7284 = vunpack.c.l.b16 %v5709
        %v7285 = vunpack.c.h.b16 %v5709
        %v7286 = vunpack.c.l.b16 %v5710
        %v7287 = vunpack.c.h.b16 %v5710
        %v7288 = vunpack.c.l.b16 %v5711
        %v7289 = vunpack.c.h.b16 %v5711
        %v7290 = vunpack.c.l.b16 %v5712
        %v7291 = vunpack.c.h.b16 %v5712
        %v7292 = vunpack.c.l.b16 %v5713
        %v7293 = vunpack.c.h.b16 %v5713
        %v7294 = vunpack.c.l.b16 %v5714
        %v7295 = vunpack.c.h.b16 %v5714
        %v7296 = vunpack.c.l.b16 %v5715
        %v7297 = vunpack.c.h.b16 %v5715
        %v7298 = vunpack.c.l.b16 %v5716
        %v7299 = vunpack.c.h.b16 %v5716
        %v7300 = vunpack.c.l.b16 %v5717
        %v7301 = vunpack.c.h.b16 %v5717
        %v7302 = vunpack.c.l.b16 %v5718
        %v7303 = vunpack.c.h.b16 %v5718
        %v7304 = vunpack.c.l.b16 %v5719
        %v7305 = vunpack.c.h.b16 %v5719
        %v7306 = vunpack.c.l.b16 %v5720
        %v7307 = vunpack.c.h.b16 %v5720
        %v7308 = vunpack.c.l.b16 %v5721
        %v7309 = vunpack.c.h.b16 %v5721
        %v7310 = vunpack.c.l.b16 %v5722
        %v7311 = vunpack.c.h.b16 %v5722
        %v7312 = vunpack.c.l.b16 %v5723
        %v7313 = vunpack.c.h.b16 %v5723
        %v7314 = vunpack.c.l.b16 %v5724
        %v7315 = vunpack.c.h.b16 %v5724
        %v7316 = vunpack.c.l.b16 %v5725
        %v7317 = vunpack.c.h.b16 %v5725
        %v7318 = vunpack.c.l.b16 %v5726
        %v7319 = vunpack.c.h.b16 %v5726
        %v7320 = vunpack.c.l.b16 %v5727
        %v7321 = vunpack.c.h.b16 %v5727
        %v7322 = vunpack.c.l.b16 %v5728
        %v7323 = vunpack.c.h.b16 %v5728
        %v7324 = vunpack.c.l.b16 %v5729
        %v7325 = vunpack.c.h.b16 %v5729
        %v7326 = vunpack.c.l.b16 %v5730
        %v7327 = vunpack.c.h.b16 %v5730
        %v7328 = vunpack.c.l.b16 %v5731
        %v7329 = vunpack.c.h.b16 %v5731
        %v7330 = vunpack.c.l.b16 %v5732
        %v7331 = vunpack.c.h.b16 %v5732
        %v7332 = vunpack.c.l.b16 %v5733
        %v7333 = vunpack.c.h.b16 %v5733
        %v7334 = vunpack.c.l.b16 %v5734
        %v7335 = vunpack.c.h.b16 %v5734
        %v7336 = vunpack.c.l.b16 %v5735
        %v7337 = vunpack.c.h.b16 %v5735
        %v7338 = vunpack.c.l.b16 %v5736
        %v7339 = vunpack.c.h.b16 %v5736
        %v7340 = vunpack.c.l.b16 %v5737
        %v7341 = vunpack.c.h.b16 %v5737
        %v7342 = vunpack.c.l.b16 %v5738
        %v7343 = vunpack.c.h.b16 %v5738
        %v7344 = vunpack.c.l.b16 %v5739
        %v7345 = vunpack.c.h.b16 %v5739
        %v7346 = vunpack.c.l.b16 %v5740
        %v7347 = vunpack.c.h.b16 %v5740
        %v7348 = vunpack.c.l.b16 %v5741
        %v7349 = vunpack.c.h.b16 %v5741
        %v7350 = vunpack.c.l.b16 %v5742
        %v7351 = vunpack.c.h.b16 %v5742
        %v7352 = vunpack.c.l.b16 %v5743
        %v7353 = vunpack.c.h.b16 %v5743
        %v7354 = vunpack.c.l.b16 %v5744
        %v7355 = vunpack.c.h.b16 %v5744
        %v7356 = vunpack.c.l.b16 %v5745
        %v7357 = vunpack.c.h.b16 %v5745
        %v7358 = vunpack.c.l.b16 %v5746
        %v7359 = vunpack.c.h.b16 %v5746
        %v7360 = vunpack.c.l.b16 %v5747
        %v7361 = vunpack.c.h.b16 %v5747
        %v7362 = vunpack.c.l.b16 %v5748
        %v7363 = vunpack.c.h.b16 %v5748
        %v7364 = vunpack.c.l.b16 %v5749
        %v7365 = vunpack.c.h.b16 %v5749
        %v7366 = vunpack.c.l.b16 %v5750
        %v7367 = vunpack.c.h.b16 %v5750
        %v7368 = vunpack.c.l.b16 %v5751
        %v7369 = vunpack.c.h.b16 %v5751
        %v7370 = vpack.c.b16 %v6362, %v6346
        %v7371 = vpack.c.b16 %v6363, %v6347
        %v7372 = vpack.c.b16 %v6364, %v6348
        %v7373 = vpack.c.b16 %v6365, %v6349
        %v7374 = vpack.c.b16 %v6366, %v6350
        %v7375 = vpack.c.b16 %v6367, %v6351
        %v7376 = vpack.c.b16 %v6368, %v6352
        %v7377 = vpack.c.b16 %v6369, %v6353
        %v7378 = vpack.c.b16 %v6370, %v6354
        %v7379 = vpack.c.b16 %v6371, %v6355
        %v7380 = vpack.c.b16 %v6372, %v6356
        %v7381 = vpack.c.b16 %v6373, %v6357
        %v7382 = vpack.c.b16 %v6374, %v6358
        %v7383 = vpack.c.b16 %v6375, %v6359
        %v7384 = vpack.c.b16 %v6376, %v6360
        %v7385 = vpack.c.b16 %v6377, %v6361
        %v7386 = vpack.c.b16 %v6394, %v6378
        %v7387 = vpack.c.b16 %v6395, %v6379
        %v7388 = vpack.c.b16 %v6396, %v6380
        %v7389 = vpack.c.b16 %v6397, %v6381
        %v7390 = vpack.c.b16 %v6398, %v6382
        %v7391 = vpack.c.b16 %v6399, %v6383
        %v7392 = vpack.c.b16 %v6400, %v6384
        %v7393 = vpack.c.b16 %v6401, %v6385
        %v7394 = vpack.c.b16 %v6402, %v6386
        %v7395 = vpack.c.b16 %v6403, %v6387
        %v7396 = vpack.c.b16 %v6404, %v6388
        %v7397 = vpack.c.b16 %v6405, %v6389
        %v7398 = vpack.c.b16 %v6406, %v6390
        %v7399 = vpack.c.b16 %v6407, %v6391
        %v7400 = vpack.c.b16 %v6408, %v6392
        %v7401 = vpack.c.b16 %v6409, %v6393
        %v7402 = vpack.c.b16 %v6426, %v6410
        %v7403 = vpack.c.b16 %v6427, %v6411
        %v7404 = vpack.c.b16 %v6428, %v6412
        %v7405 = vpack.c.b16 %v6429, %v6413
        %v7406 = vpack.c.b16 %v6430, %v6414
        %v7407 = vpack.c.b16 %v6431, %v6415
        %v7408 = vpack.c.b16 %v6432, %v6416
        %v7409 = vpack.c.b16 %v6433, %v6417
        %v7410 = vpack.c.b16 %v6434, %v6418
        %v7411 = vpack.c.b16 %v6435, %v6419
        %v7412 = vpack.c.b16 %v6436, %v6420
        %v7413 = vpack.c.b16 %v6437, %v6421
        %v7414 = vpack.c.b16 %v6438, %v6422
        %v7415 = vpack.c.b16 %v6439, %v6423
        %v7416 = vpack.c.b16 %v6440, %v6424
        %v7417 = vpack.c.b16 %v6441, %v6425
        %v7418 = vpack.c.b16 %v6458, %v6442
        %v7419 = vpack.c.b16 %v6459, %v6443
        %v7420 = vpack.c.b16 %v6460, %v6444
        %v7421 = vpack.c.b16 %v6461, %v6445
        %v7422 = vpack.c.b16 %v6462, %v6446
        %v7423 = vpack.c.b16 %v6463, %v6447
        %v7424 = vpack.c.b16 %v6464, %v6448
        %v7425 = vpack.c.b16 %v6465, %v6449
        %v7426 = vpack.c.b16 %v6466, %v6450
        %v7427 = vpack.c.b16 %v6467, %v6451
        %v7428 = vpack.c.b16 %v6468, %v6452
        %v7429 = vpack.c.b16 %v6469, %v6453
        %v7430 = vpack.c.b16 %v6470, %v6454
        %v7431 = vpack.c.b16 %v6471, %v6455
        %v7432 = vpack.c.b16 %v6472, %v6456
        %v7433 = vpack.c.b16 %v6473, %v6457
        %v7434 = vpack.c.b16 %v6490, %v6474
        %v7435 = vpack.c.b16 %v6491, %v6475
        %v7436 = vpack.c.b16 %v6492, %v6476
        %v7437 = vpack.c.b16 %v6493, %v6477
        %v7438 = vpack.c.b16 %v6494, %v6478
        %v7439 = vpack.c.b16 %v6495, %v6479
        %v7440 = vpack.c.b16 %v6496, %v6480
        %v7441 = vpack.c.b16 %v6497, %v6481
        %v7442 = vpack.c.b16 %v6498, %v6482
        %v7443 = vpack.c.b16 %v6499, %v6483
        %v7444 = vpack.c.b16 %v6500, %v6484
        %v7445 = vpack.c.b16 %v6501, %v6485
        %v7446 = vpack.c.b16 %v6502, %v6486
        %v7447 = vpack.c.b16 %v6503, %v6487
        %v7448 = vpack.c.b16 %v6504, %v6488
        %v7449 = vpack.c.b16 %v6505, %v6489
        %v7450 = vpack.c.b16 %v6522, %v6506
        %v7451 = vpack.c.b16 %v6523, %v6507
        %v7452 = vpack.c.b16 %v6524, %v6508
        %v7453 = vpack.c.b16 %v6525, %v6509
        %v7454 = vpack.c.b16 %v6526, %v6510
        %v7455 = vpack.c.b16 %v6527, %v6511
        %v7456 = vpack.c.b16 %v6528, %v6512
        %v7457 = vpack.c.b16 %v6529, %v6513
        %v7458 = vpack.c.b16 %v6530, %v6514
        %v7459 = vpack.c.b16 %v6531, %v6515
        %v7460 = vpack.c.b16 %v6532, %v6516
        %v7461 = vpack.c.b16 %v6533, %v6517
        %v7462 = vpack.c.b16 %v6534, %v6518
        %v7463 = vpack.c.b16 %v6535, %v6519
        %v7464 = vpack.c.b16 %v6536, %v6520
        %v7465 = vpack.c.b16 %v6537, %v6521
        %v7466 = vpack.c.b16 %v6554, %v6538
        %v7467 = vpack.c.b16 %v6555, %v6539
        %v7468 = vpack.c.b16 %v6556, %v6540
        %v7469 = vpack.c.b16 %v6557, %v6541
        %v7470 = vpack.c.b16 %v6558, %v6542
        %v7471 = vpack.c.b16 %v6559, %v6543
        %v7472 = vpack.c.b16 %v6560, %v6544
        %v7473 = vpack.c.b16 %v6561, %v6545
        %v7474 = vpack.c.b16 %v6562, %v6546
        %v7475 = vpack.c.b16 %v6563, %v6547
        %v7476 = vpack.c.b16 %v6564, %v6548
        %v7477 = vpack.c.b16 %v6565, %v6549
        %v7478 = vpack.c.b16 %v6566, %v6550
        %v7479 = vpack.c.b16 %v6567, %v6551
        %v7480 = vpack.c.b16 %v6568, %v6552
        %v7481 = vpack.c.b16 %v6569, %v6553
        %v7482 = vpack.c.b16 %v6586, %v6570
        %v7483 = vpack.c.b16 %v6587, %v6571
        %v7484 = vpack.c.b16 %v6588, %v6572
        %v7485 = vpack.c.b16 %v6589, %v6573
        %v7486 = vpack.c.b16 %v6590, %v6574
        %v7487 = vpack.c.b16 %v6591, %v6575
        %v7488 = vpack.c.b16 %v6592, %v6576
        %v7489 = vpack.c.b16 %v6593, %v6577
        %v7490 = vpack.c.b16 %v6594, %v6578
        %v7491 = vpack.c.b16 %v6595, %v6579
        %v7492 = vpack.c.b16 %v6596, %v6580
        %v7493 = vpack.c.b16 %v6597, %v6581
        %v7494 = vpack.c.b16 %v6598, %v6582
        %v7495 = vpack.c.b16 %v6599, %v6583
        %v7496 = vpack.c.b16 %v6600, %v6584
        %v7497 = vpack.c.b16 %v6601, %v6585
        %v7498 = vpack.c.b16 %v6618, %v6602
        %v7499 = vpack.c.b16 %v6619, %v6603
        %v7500 = vpack.c.b16 %v6620, %v6604
        %v7501 = vpack.c.b16 %v6621, %v6605
        %v7502 = vpack.c.b16 %v6622, %v6606
        %v7503 = vpack.c.b16 %v6623, %v6607
        %v7504 = vpack.c.b16 %v6624, %v6608
        %v7505 = vpack.c.b16 %v6625, %v6609
        %v7506 = vpack.c.b16 %v6626, %v6610
        %v7507 = vpack.c.b16 %v6627, %v6611
        %v7508 = vpack.c.b16 %v6628, %v6612
        %v7509 = vpack.c.b16 %v6629, %v6613
        %v7510 = vpack.c.b16 %v6630, %v6614
        %v7511 = vpack.c.b16 %v6631, %v6615
        %v7512 = vpack.c.b16 %v6632, %v6616
        %v7513 = vpack.c.b16 %v6633, %v6617
        %v7514 = vpack.c.b16 %v6650, %v6634
        %v7515 = vpack.c.b16 %v6651, %v6635
        %v7516 = vpack.c.b16 %v6652, %v6636
        %v7517 = vpack.c.b16 %v6653, %v6637
        %v7518 = vpack.c.b16 %v6654, %v6638
        %v7519 = vpack.c.b16 %v6655, %v6639
        %v7520 = vpack.c.b16 %v6656, %v6640
        %v7521 = vpack.c.b16 %v6657, %v6641
        %v7522 = vpack.c.b16 %v6658, %v6642
        %v7523 = vpack.c.b16 %v6659, %v6643
        %v7524 = vpack.c.b16 %v6660, %v6644
        %v7525 = vpack.c.b16 %v6661, %v6645
        %v7526 = vpack.c.b16 %v6662, %v6646
        %v7527 = vpack.c.b16 %v6663, %v6647
        %v7528 = vpack.c.b16 %v6664, %v6648
        %v7529 = vpack.c.b16 %v6665, %v6649
        %v7530 = vpack.c.b16 %v6682, %v6666
        %v7531 = vpack.c.b16 %v6683, %v6667
        %v7532 = vpack.c.b16 %v6684, %v6668
        %v7533 = vpack.c.b16 %v6685, %v6669
        %v7534 = vpack.c.b16 %v6686, %v6670
        %v7535 = vpack.c.b16 %v6687, %v6671
        %v7536 = vpack.c.b16 %v6688, %v6672
        %v7537 = vpack.c.b16 %v6689, %v6673
        %v7538 = vpack.c.b16 %v6690, %v6674
        %v7539 = vpack.c.b16 %v6691, %v6675
        %v7540 = vpack.c.b16 %v6692, %v6676
        %v7541 = vpack.c.b16 %v6693, %v6677
        %v7542 = vpack.c.b16 %v6694, %v6678
        %v7543 = vpack.c.b16 %v6695, %v6679
        %v7544 = vpack.c.b16 %v6696, %v6680
        %v7545 = vpack.c.b16 %v6697, %v6681
        %v7546 = vpack.c.b16 %v6714, %v6698
        %v7547 = vpack.c.b16 %v6715, %v6699
        %v7548 = vpack.c.b16 %v6716, %v6700
        %v7549 = vpack.c.b16 %v6717, %v6701
        %v7550 = vpack.c.b16 %v6718, %v6702
        %v7551 = vpack.c.b16 %v6719, %v6703
        %v7552 = vpack.c.b16 %v6720, %v6704
        %v7553 = vpack.c.b16 %v6721, %v6705
        %v7554 = vpack.c.b16 %v6722, %v6706
        %v7555 = vpack.c.b16 %v6723, %v6707
        %v7556 = vpack.c.b16 %v6724, %v6708
        %v7557 = vpack.c.b16 %v6725, %v6709
        %v7558 = vpack.c.b16 %v6726, %v6710
        %v7559 = vpack.c.b16 %v6727, %v6711
        %v7560 = vpack.c.b16 %v6728, %v6712
        %v7561 = vpack.c.b16 %v6729, %v6713
        %v7562 = vpack.c.b16 %v6746, %v6730
        %v7563 = vpack.c.b16 %v6747, %v6731
        %v7564 = vpack.c.b16 %v6748, %v6732
        %v7565 = vpack.c.b16 %v6749, %v6733
        %v7566 = vpack.c.b16 %v6750, %v6734
        %v7567 = vpack.c.b16 %v6751, %v6735
        %v7568 = vpack.c.b16 %v6752, %v6736
        %v7569 = vpack.c.b16 %v6753, %v6737
        %v7570 = vpack.c.b16 %v6754, %v6738
        %v7571 = vpack.c.b16 %v6755, %v6739
        %v7572 = vpack.c.b16 %v6756, %v6740
        %v7573 = vpack.c.b16 %v6757, %v6741
        %v7574 = vpack.c.b16 %v6758, %v6742
        %v7575 = vpack.c.b16 %v6759, %v6743
        %v7576 = vpack.c.b16 %v6760, %v6744
        %v7577 = vpack.c.b16 %v6761, %v6745
        %v7578 = vpack.c.b16 %v6778, %v6762
        %v7579 = vpack.c.b16 %v6779, %v6763
        %v7580 = vpack.c.b16 %v6780, %v6764
        %v7581 = vpack.c.b16 %v6781, %v6765
        %v7582 = vpack.c.b16 %v6782, %v6766
        %v7583 = vpack.c.b16 %v6783, %v6767
        %v7584 = vpack.c.b16 %v6784, %v6768
        %v7585 = vpack.c.b16 %v6785, %v6769
        %v7586 = vpack.c.b16 %v6786, %v6770
        %v7587 = vpack.c.b16 %v6787, %v6771
        %v7588 = vpack.c.b16 %v6788, %v6772
        %v7589 = vpack.c.b16 %v6789, %v6773
        %v7590 = vpack.c.b16 %v6790, %v6774
        %v7591 = vpack.c.b16 %v6791, %v6775
        %v7592 = vpack.c.b16 %v6792, %v6776
        %v7593 = vpack.c.b16 %v6793, %v6777
        %v7594 = vpack.c.b16 %v6810, %v6794
        %v7595 = vpack.c.b16 %v6811, %v6795
        %v7596 = vpack.c.b16 %v6812, %v6796
        %v7597 = vpack.c.b16 %v6813, %v6797
        %v7598 = vpack.c.b16 %v6814, %v6798
        %v7599 = vpack.c.b16 %v6815, %v6799
        %v7600 = vpack.c.b16 %v6816, %v6800
        %v7601 = vpack.c.b16 %v6817, %v6801
        %v7602 = vpack.c.b16 %v6818, %v6802
        %v7603 = vpack.c.b16 %v6819, %v6803
        %v7604 = vpack.c.b16 %v6820, %v6804
        %v7605 = vpack.c.b16 %v6821, %v6805
        %v7606 = vpack.c.b16 %v6822, %v6806
        %v7607 = vpack.c.b16 %v6823, %v6807
        %v7608 = vpack.c.b16 %v6824, %v6808
        %v7609 = vpack.c.b16 %v6825, %v6809
        %v7610 = vpack.c.b16 %v6842, %v6826
        %v7611 = vpack.c.b16 %v6843, %v6827
        %v7612 = vpack.c.b16 %v6844, %v6828
        %v7613 = vpack.c.b16 %v6845, %v6829
        %v7614 = vpack.c.b16 %v6846, %v6830
        %v7615 = vpack.c.b16 %v6847, %v6831
        %v7616 = vpack.c.b16 %v6848, %v6832
        %v7617 = vpack.c.b16 %v6849, %v6833
        %v7618 = vpack.c.b16 %v6850, %v6834
        %v7619 = vpack.c.b16 %v6851, %v6835
        %v7620 = vpack.c.b16 %v6852, %v6836
        %v7621 = vpack.c.b16 %v6853, %v6837
        %v7622 = vpack.c.b16 %v6854, %v6838
        %v7623 = vpack.c.b16 %v6855, %v6839
        %v7624 = vpack.c.b16 %v6856, %v6840
        %v7625 = vpack.c.b16 %v6857, %v6841
        %v7626 = vpack.c.b16 %v6874, %v6858
        %v7627 = vpack.c.b16 %v6875, %v6859
        %v7628 = vpack.c.b16 %v6876, %v6860
        %v7629 = vpack.c.b16 %v6877, %v6861
        %v7630 = vpack.c.b16 %v6878, %v6862
        %v7631 = vpack.c.b16 %v6879, %v6863
        %v7632 = vpack.c.b16 %v6880, %v6864
        %v7633 = vpack.c.b16 %v6881, %v6865
        %v7634 = vpack.c.b16 %v6882, %v6866
        %v7635 = vpack.c.b16 %v6883, %v6867
        %v7636 = vpack.c.b16 %v6884, %v6868
        %v7637 = vpack.c.b16 %v6885, %v6869
        %v7638 = vpack.c.b16 %v6886, %v6870
        %v7639 = vpack.c.b16 %v6887, %v6871
        %v7640 = vpack.c.b16 %v6888, %v6872
        %v7641 = vpack.c.b16 %v6889, %v6873
        %v7642 = vpack.c.b16 %v6906, %v6890
        %v7643 = vpack.c.b16 %v6907, %v6891
        %v7644 = vpack.c.b16 %v6908, %v6892
        %v7645 = vpack.c.b16 %v6909, %v6893
        %v7646 = vpack.c.b16 %v6910, %v6894
        %v7647 = vpack.c.b16 %v6911, %v6895
        %v7648 = vpack.c.b16 %v6912, %v6896
        %v7649 = vpack.c.b16 %v6913, %v6897
        %v7650 = vpack.c.b16 %v6914, %v6898
        %v7651 = vpack.c.b16 %v6915, %v6899
        %v7652 = vpack.c.b16 %v6916, %v6900
        %v7653 = vpack.c.b16 %v6917, %v6901
        %v7654 = vpack.c.b16 %v6918, %v6902
        %v7655 = vpack.c.b16 %v6919, %v6903
        %v7656 = vpack.c.b16 %v6920, %v6904
        %v7657 = vpack.c.b16 %v6921, %v6905
        %v7658 = vpack.c.b16 %v6938, %v6922
        %v7659 = vpack.c.b16 %v6939, %v6923
        %v7660 = vpack.c.b16 %v6940, %v6924
        %v7661 = vpack.c.b16 %v6941, %v6925
        %v7662 = vpack.c.b16 %v6942, %v6926
        %v7663 = vpack.c.b16 %v6943, %v6927
        %v7664 = vpack.c.b16 %v6944, %v6928
        %v7665 = vpack.c.b16 %v6945, %v6929
        %v7666 = vpack.c.b16 %v6946, %v6930
        %v7667 = vpack.c.b16 %v6947, %v6931
        %v7668 = vpack.c.b16 %v6948, %v6932
        %v7669 = vpack.c.b16 %v6949, %v6933
        %v7670 = vpack.c.b16 %v6950, %v6934
        %v7671 = vpack.c.b16 %v6951, %v6935
        %v7672 = vpack.c.b16 %v6952, %v6936
        %v7673 = vpack.c.b16 %v6953, %v6937
        %v7674 = vpack.c.b16 %v6970, %v6954
        %v7675 = vpack.c.b16 %v6971, %v6955
        %v7676 = vpack.c.b16 %v6972, %v6956
        %v7677 = vpack.c.b16 %v6973, %v6957
        %v7678 = vpack.c.b16 %v6974, %v6958
        %v7679 = vpack.c.b16 %v6975, %v6959
        %v7680 = vpack.c.b16 %v6976, %v6960
        %v7681 = vpack.c.b16 %v6977, %v6961
        %v7682 = vpack.c.b16 %v6978, %v6962
        %v7683 = vpack.c.b16 %v6979, %v6963
        %v7684 = vpack.c.b16 %v6980, %v6964
        %v7685 = vpack.c.b16 %v6981, %v6965
        %v7686 = vpack.c.b16 %v6982, %v6966
        %v7687 = vpack.c.b16 %v6983, %v6967
        %v7688 = vpack.c.b16 %v6984, %v6968
        %v7689 = vpack.c.b16 %v6985, %v6969
        %v7690 = vpack.c.b16 %v7002, %v6986
        %v7691 = vpack.c.b16 %v7003, %v6987
        %v7692 = vpack.c.b16 %v7004, %v6988
        %v7693 = vpack.c.b16 %v7005, %v6989
        %v7694 = vpack.c.b16 %v7006, %v6990
        %v7695 = vpack.c.b16 %v7007, %v6991
        %v7696 = vpack.c.b16 %v7008, %v6992
        %v7697 = vpack.c.b16 %v7009, %v6993
        %v7698 = vpack.c.b16 %v7010, %v6994
        %v7699 = vpack.c.b16 %v7011, %v6995
        %v7700 = vpack.c.b16 %v7012, %v6996
        %v7701 = vpack.c.b16 %v7013, %v6997
        %v7702 = vpack.c.b16 %v7014, %v6998
        %v7703 = vpack.c.b16 %v7015, %v6999
        %v7704 = vpack.c.b16 %v7016, %v7000
        %v7705 = vpack.c.b16 %v7017, %v7001
        %v7706 = vpack.c.b16 %v7034, %v7018
        %v7707 = vpack.c.b16 %v7035, %v7019
        %v7708 = vpack.c.b16 %v7036, %v7020
        %v7709 = vpack.c.b16 %v7037, %v7021
        %v7710 = vpack.c.b16 %v7038, %v7022
        %v7711 = vpack.c.b16 %v7039, %v7023
        %v7712 = vpack.c.b16 %v7040, %v7024
        %v7713 = vpack.c.b16 %v7041, %v7025
        %v7714 = vpack.c.b16 %v7042, %v7026
        %v7715 = vpack.c.b16 %v7043, %v7027
        %v7716 = vpack.c.b16 %v7044, %v7028
        %v7717 = vpack.c.b16 %v7045, %v7029
        %v7718 = vpack.c.b16 %v7046, %v7030
        %v7719 = vpack.c.b16 %v7047, %v7031
        %v7720 = vpack.c.b16 %v7048, %v7032
        %v7721 = vpack.c.b16 %v7049, %v7033
        %v7722 = vpack.c.b16 %v7066, %v7050
        %v7723 = vpack.c.b16 %v7067, %v7051
        %v7724 = vpack.c.b16 %v7068, %v7052
        %v7725 = vpack.c.b16 %v7069, %v7053
        %v7726 = vpack.c.b16 %v7070, %v7054
        %v7727 = vpack.c.b16 %v7071, %v7055
        %v7728 = vpack.c.b16 %v7072, %v7056
        %v7729 = vpack.c.b16 %v7073, %v7057
        %v7730 = vpack.c.b16 %v7074, %v7058
        %v7731 = vpack.c.b16 %v7075, %v7059
        %v7732 = vpack.c.b16 %v7076, %v7060
        %v7733 = vpack.c.b16 %v7077, %v7061
        %v7734 = vpack.c.b16 %v7078, %v7062
        %v7735 = vpack.c.b16 %v7079, %v7063
        %v7736 = vpack.c.b16 %v7080, %v7064
        %v7737 = vpack.c.b16 %v7081, %v7065
        %v7738 = vpack.c.b16 %v7098, %v7082
        %v7739 = vpack.c.b16 %v7099, %v7083
        %v7740 = vpack.c.b16 %v7100, %v7084
        %v7741 = vpack.c.b16 %v7101, %v7085
        %v7742 = vpack.c.b16 %v7102, %v7086
        %v7743 = vpack.c.b16 %v7103, %v7087
        %v7744 = vpack.c.b16 %v7104, %v7088
        %v7745 = vpack.c.b16 %v7105, %v7089
        %v7746 = vpack.c.b16 %v7106, %v7090
        %v7747 = vpack.c.b16 %v7107, %v7091
        %v7748 = vpack.c.b16 %v7108, %v7092
        %v7749 = vpack.c.b16 %v7109, %v7093
        %v7750 = vpack.c.b16 %v7110, %v7094
        %v7751 = vpack.c.b16 %v7111, %v7095
        %v7752 = vpack.c.b16 %v7112, %v7096
        %v7753 = vpack.c.b16 %v7113, %v7097
        %v7754 = vpack.c.b16 %v7130, %v7114
        %v7755 = vpack.c.b16 %v7131, %v7115
        %v7756 = vpack.c.b16 %v7132, %v7116
        %v7757 = vpack.c.b16 %v7133, %v7117
        %v7758 = vpack.c.b16 %v7134, %v7118
        %v7759 = vpack.c.b16 %v7135, %v7119
        %v7760 = vpack.c.b16 %v7136, %v7120
        %v7761 = vpack.c.b16 %v7137, %v7121
        %v7762 = vpack.c.b16 %v7138, %v7122
        %v7763 = vpack.c.b16 %v7139, %v7123
        %v7764 = vpack.c.b16 %v7140, %v7124
        %v7765 = vpack.c.b16 %v7141, %v7125
        %v7766 = vpack.c.b16 %v7142, %v7126
        %v7767 = vpack.c.b16 %v7143, %v7127
        %v7768 = vpack.c.b16 %v7144, %v7128
        %v7769 = vpack.c.b16 %v7145, %v7129
        %v7770 = vpack.c.b16 %v7162, %v7146
        %v7771 = vpack.c.b16 %v7163, %v7147
        %v7772 = vpack.c.b16 %v7164, %v7148
        %v7773 = vpack.c.b16 %v7165, %v7149
        %v7774 = vpack.c.b16 %v7166, %v7150
        %v7775 = vpack.c.b16 %v7167, %v7151
        %v7776 = vpack.c.b16 %v7168, %v7152
        %v7777 = vpack.c.b16 %v7169, %v7153
        %v7778 = vpack.c.b16 %v7170, %v7154
        %v7779 = vpack.c.b16 %v7171, %v7155
        %v7780 = vpack.c.b16 %v7172, %v7156
        %v7781 = vpack.c.b16 %v7173, %v7157
        %v7782 = vpack.c.b16 %v7174, %v7158
        %v7783 = vpack.c.b16 %v7175, %v7159
        %v7784 = vpack.c.b16 %v7176, %v7160
        %v7785 = vpack.c.b16 %v7177, %v7161
        %v7786 = vpack.c.b16 %v7194, %v7178
        %v7787 = vpack.c.b16 %v7195, %v7179
        %v7788 = vpack.c.b16 %v7196, %v7180
        %v7789 = vpack.c.b16 %v7197, %v7181
        %v7790 = vpack.c.b16 %v7198, %v7182
        %v7791 = vpack.c.b16 %v7199, %v7183
        %v7792 = vpack.c.b16 %v7200, %v7184
        %v7793 = vpack.c.b16 %v7201, %v7185
        %v7794 = vpack.c.b16 %v7202, %v7186
        %v7795 = vpack.c.b16 %v7203, %v7187
        %v7796 = vpack.c.b16 %v7204, %v7188
        %v7797 = vpack.c.b16 %v7205, %v7189
        %v7798 = vpack.c.b16 %v7206, %v7190
        %v7799 = vpack.c.b16 %v7207, %v7191
        %v7800 = vpack.c.b16 %v7208, %v7192
        %v7801 = vpack.c.b16 %v7209, %v7193
        %v7802 = vpack.c.b16 %v7226, %v7210
        %v7803 = vpack.c.b16 %v7227, %v7211
        %v7804 = vpack.c.b16 %v7228, %v7212
        %v7805 = vpack.c.b16 %v7229, %v7213
        %v7806 = vpack.c.b16 %v7230, %v7214
        %v7807 = vpack.c.b16 %v7231, %v7215
        %v7808 = vpack.c.b16 %v7232, %v7216
        %v7809 = vpack.c.b16 %v7233, %v7217
        %v7810 = vpack.c.b16 %v7234, %v7218
        %v7811 = vpack.c.b16 %v7235, %v7219
        %v7812 = vpack.c.b16 %v7236, %v7220
        %v7813 = vpack.c.b16 %v7237, %v7221
        %v7814 = vpack.c.b16 %v7238, %v7222
        %v7815 = vpack.c.b16 %v7239, %v7223
        %v7816 = vpack.c.b16 %v7240, %v7224
        %v7817 = vpack.c.b16 %v7241, %v7225
        %v7818 = vpack.c.b16 %v7258, %v7242
        %v7819 = vpack.c.b16 %v7259, %v7243
        %v7820 = vpack.c.b16 %v7260, %v7244
        %v7821 = vpack.c.b16 %v7261, %v7245
        %v7822 = vpack.c.b16 %v7262, %v7246
        %v7823 = vpack.c.b16 %v7263, %v7247
        %v7824 = vpack.c.b16 %v7264, %v7248
        %v7825 = vpack.c.b16 %v7265, %v7249
        %v7826 = vpack.c.b16 %v7266, %v7250
        %v7827 = vpack.c.b16 %v7267, %v7251
        %v7828 = vpack.c.b16 %v7268, %v7252
        %v7829 = vpack.c.b16 %v7269, %v7253
        %v7830 = vpack.c.b16 %v7270, %v7254
        %v7831 = vpack.c.b16 %v7271, %v7255
        %v7832 = vpack.c.b16 %v7272, %v7256
        %v7833 = vpack.c.b16 %v7273, %v7257
        %v7834 = vpack.c.b16 %v7290, %v7274
        %v7835 = vpack.c.b16 %v7291, %v7275
        %v7836 = vpack.c.b16 %v7292, %v7276
        %v7837 = vpack.c.b16 %v7293, %v7277
        %v7838 = vpack.c.b16 %v7294, %v7278
        %v7839 = vpack.c.b16 %v7295, %v7279
        %v7840 = vpack.c.b16 %v7296, %v7280
        %v7841 = vpack.c.b16 %v7297, %v7281
        %v7842 = vpack.c.b16 %v7298, %v7282
        %v7843 = vpack.c.b16 %v7299, %v7283
        %v7844 = vpack.c.b16 %v7300, %v7284
        %v7845 = vpack.c.b16 %v7301, %v7285
        %v7846 = vpack.c.b16 %v7302, %v7286
        %v7847 = vpack.c.b16 %v7303, %v7287
        %v7848 = vpack.c.b16 %v7304, %v7288
        %v7849 = vpack.c.b16 %v7305, %v7289
        %v7850 = vpack.c.b16 %v7322, %v7306
        %v7851 = vpack.c.b16 %v7323, %v7307
        %v7852 = vpack.c.b16 %v7324, %v7308
        %v7853 = vpack.c.b16 %v7325, %v7309
        %v7854 = vpack.c.b16 %v7326, %v7310
        %v7855 = vpack.c.b16 %v7327, %v7311
        %v7856 = vpack.c.b16 %v7328, %v7312
        %v7857 = vpack.c.b16 %v7329, %v7313
        %v7858 = vpack.c.b16 %v7330, %v7314
        %v7859 = vpack.c.b16 %v7331, %v7315
        %v7860 = vpack.c.b16 %v7332, %v7316
        %v7861 = vpack.c.b16 %v7333, %v7317
        %v7862 = vpack.c.b16 %v7334, %v7318
        %v7863 = vpack.c.b16 %v7335, %v7319
        %v7864 = vpack.c.b16 %v7336, %v7320
        %v7865 = vpack.c.b16 %v7337, %v7321
        %v7866 = vpack.c.b16 %v7354, %v7338
        %v7867 = vpack.c.b16 %v7355, %v7339
        %v7868 = vpack.c.b16 %v7356, %v7340
        %v7869 = vpack.c.b16 %v7357, %v7341
        %v7870 = vpack.c.b16 %v7358, %v7342
        %v7871 = vpack.c.b16 %v7359, %v7343
        %v7872 = vpack.c.b16 %v7360, %v7344
        %v7873 = vpack.c.b16 %v7361, %v7345
        %v7874 = vpack.c.b16 %v7362, %v7346
        %v7875 = vpack.c.b16 %v7363, %v7347
        %v7876 = vpack.c.b16 %v7364, %v7348
        %v7877 = vpack.c.b16 %v7365, %v7349
        %v7878 = vpack.c.b16 %v7366, %v7350
        %v7879 = vpack.c.b16 %v7367, %v7351
        %v7880 = vpack.c.b16 %v7368, %v7352
        %v7881 = vpack.c.b16 %v7369, %v7353
        %8394 = vmatprep.subr.bf16.mxu0 %v7371
        %8395 = vmatpush1.bf16.msra.mxu0 %v7370
        %8396 = vmatprep.subr.bf16.mxu0 %v7387
        %8397 = vmatpush1.bf16.msra.mxu0 %v7386
        %8398 = vmatprep.subr.bf16.mxu0 %v7403
        %8399 = vmatpush1.bf16.msra.mxu0 %v7402
        %8400 = vmatprep.subr.bf16.mxu0 %v7419
        %8401 = vmatpush1.bf16.msra.mxu0 %v7418
        %8402 = vmatprep.subr.bf16.mxu0 %v7435
        %8403 = vmatpush1.bf16.msra.mxu0 %v7434
        %8404 = vmatprep.subr.bf16.mxu0 %v7451
        %8405 = vmatpush1.bf16.msra.mxu0 %v7450
        %8406 = vmatprep.subr.bf16.mxu0 %v7467
        %8407 = vmatpush1.bf16.msra.mxu0 %v7466
        %8408 = vmatprep.subr.bf16.mxu0 %v7483
        %8409 = vmatpush1.bf16.msra.mxu0 %v7482
        %8410 = vmatprep.subr.bf16.mxu0 %v7499
        %8411 = vmatpush1.bf16.msra.mxu0 %v7498
        %8412 = vmatprep.subr.bf16.mxu0 %v7515
        %8413 = vmatpush1.bf16.msra.mxu0 %v7514
        %8414 = vmatprep.subr.bf16.mxu0 %v7531
        %8415 = vmatpush1.bf16.msra.mxu0 %v7530
        %8416 = vmatprep.subr.bf16.mxu0 %v7547
        %8417 = vmatpush1.bf16.msra.mxu0 %v7546
        %8418 = vmatprep.subr.bf16.mxu0 %v7563
        %8419 = vmatpush1.bf16.msra.mxu0 %v7562
        %8420 = vmatprep.subr.bf16.mxu0 %v7579
        %8421 = vmatpush1.bf16.msra.mxu0 %v7578
        %8422 = vmatprep.subr.bf16.mxu0 %v7595
        %8423 = vmatpush1.bf16.msra.mxu0 %v7594
        %8424 = vmatprep.subr.bf16.mxu0 %v7611
        %8425 = vmatpush1.bf16.msra.mxu0 %v7610
        %8426 = vmatprep.mubr.bf16.mxu0 %v5237
        %8427 = vmatmul.mubr.bf16.gmra.mrb[0].mxu0 %v5236
        %v8428 = vpop.f32.mrb[0].mxu0
        %v8429 = vadd.f32 %v5757, %v8428
        %v8430 = vpop.f32.mrb[0].mxu0
        %v8431 = vadd.f32 %v5761, %v8430
        %v8432 = vpop.f32.mrb[0].mxu0
        %v8433 = vadd.f32 %v5757, %v8432
        %v8434 = vpop.f32.mrb[0].mxu0
        %v8435 = vadd.f32 %v5761, %v8434
        %8436 = vdwg.mxu0
        %8437 = vmatprep.subr.bf16.mxu0 %v7627
        %8438 = vmatpush1.bf16.msra.mxu0 %v7626
        %8439 = vmatprep.subr.bf16.mxu0 %v7643
        %8440 = vmatpush1.bf16.msra.mxu0 %v7642
        %8441 = vmatprep.subr.bf16.mxu0 %v7659
        %8442 = vmatpush1.bf16.msra.mxu0 %v7658
        %8443 = vmatprep.subr.bf16.mxu0 %v7675
        %8444 = vmatpush1.bf16.msra.mxu0 %v7674
        %8445 = vmatprep.subr.bf16.mxu0 %v7691
        %8446 = vmatpush1.bf16.msra.mxu0 %v7690
        %8447 = vmatprep.subr.bf16.mxu0 %v7707
        %8448 = vmatpush1.bf16.msra.mxu0 %v7706
        %8449 = vmatprep.subr.bf16.mxu0 %v7723
        %8450 = vmatpush1.bf16.msra.mxu0 %v7722
        %8451 = vmatprep.subr.bf16.mxu0 %v7739
        %8452 = vmatpush1.bf16.msra.mxu0 %v7738
        %8453 = vmatprep.subr.bf16.mxu0 %v7755
        %8454 = vmatpush1.bf16.msra.mxu0 %v7754
        %8455 = vmatprep.subr.bf16.mxu0 %v7771
        %8456 = vmatpush1.bf16.msra.mxu0 %v7770
        %8457 = vmatprep.subr.bf16.mxu0 %v7787
        %8458 = vmatpush1.bf16.msra.mxu0 %v7786
        %8459 = vmatprep.subr.bf16.mxu0 %v7803
        %8460 = vmatpush1.bf16.msra.mxu0 %v7802
        %8461 = vmatprep.subr.bf16.mxu0 %v7819
        %8462 = vmatpush1.bf16.msra.mxu0 %v7818
        %8463 = vmatprep.subr.bf16.mxu0 %v7835
        %8464 = vmatpush1.bf16.msra.mxu0 %v7834
        %8465 = vmatprep.subr.bf16.mxu0 %v7851
        %8466 = vmatpush1.bf16.msra.mxu0 %v7850
        %8467 = vmatprep.subr.bf16.mxu0 %v7867
        %8468 = vmatpush1.bf16.msra.mxu0 %v7866
        %8469 = vmatprep.mubr.bf16.mxu0 %v5239
        %8470 = vmatmul.mubr.bf16.gmra.mrb[0].mxu0 %v5238
        %v8471 = vpop.f32.mrb[0].mxu0
        %v8472 = vadd.f32 %v8429, %v8471
        %v8473 = vpop.f32.mrb[0].mxu0
        %v8474 = vadd.f32 %v8431, %v8473
        %v8475 = vpop.f32.mrb[0].mxu0
        %v8476 = vadd.f32 %v8433, %v8475
        %v8477 = vpop.f32.mrb[0].mxu0
        %v8478 = vadd.f32 %v8435, %v8477
        %8479 = vdwg.mxu0
        %8480 = vmatprep.subr.bf16.mxu0 %v7373
        %8481 = vmatpush1.bf16.msra.mxu0 %v7372
        %8482 = vmatprep.subr.bf16.mxu0 %v7389
        %8483 = vmatpush1.bf16.msra.mxu0 %v7388
        %8484 = vmatprep.subr.bf16.mxu0 %v7405
        %8485 = vmatpush1.bf16.msra.mxu0 %v7404
        %8486 = vmatprep.subr.bf16.mxu0 %v7421
        %8487 = vmatpush1.bf16.msra.mxu0 %v7420
        %8488 = vmatprep.subr.bf16.mxu0 %v7437
        %8489 = vmatpush1.bf16.msra.mxu0 %v7436
        %8490 = vmatprep.subr.bf16.mxu0 %v7453
        %8491 = vmatpush1.bf16.msra.mxu0 %v7452
        %8492 = vmatprep.subr.bf16.mxu0 %v7469
        %8493 = vmatpush1.bf16.msra.mxu0 %v7468
        %8494 = vmatprep.subr.bf16.mxu0 %v7485
        %8495 = vmatpush1.bf16.msra.mxu0 %v7484
        %8496 = vmatprep.subr.bf16.mxu0 %v7501
        %8497 = vmatpush1.bf16.msra.mxu0 %v7500
        %8498 = vmatprep.subr.bf16.mxu0 %v7517
        %8499 = vmatpush1.bf16.msra.mxu0 %v7516
        %8500 = vmatprep.subr.bf16.mxu0 %v7533
        %8501 = vmatpush1.bf16.msra.mxu0 %v7532
        %8502 = vmatprep.subr.bf16.mxu0 %v7549
        %8503 = vmatpush1.bf16.msra.mxu0 %v7548
        %8504 = vmatprep.subr.bf16.mxu0 %v7565
        %8505 = vmatpush1.bf16.msra.mxu0 %v7564
        %8506 = vmatprep.subr.bf16.mxu0 %v7581
        %8507 = vmatpush1.bf16.msra.mxu0 %v7580
        %8508 = vmatprep.subr.bf16.mxu0 %v7597
        %8509 = vmatpush1.bf16.msra.mxu0 %v7596
        %8510 = vmatprep.subr.bf16.mxu0 %v7613
        %8511 = vmatpush1.bf16.msra.mxu0 %v7612
        %8512 = vmatprep.mubr.bf16.mxu0 %v5237
        %8513 = vmatmul.mubr.bf16.gmra.mrb[0].mxu0 %v5236
        %v8514 = vpop.f32.mrb[0].mxu0
        %v8515 = vadd.f32 %v5765, %v8514
        %v8516 = vpop.f32.mrb[0].mxu0
        %v8517 = vadd.f32 %v5769, %v8516
        %v8518 = vpop.f32.mrb[0].mxu0
        %v8519 = vadd.f32 %v5765, %v8518
        %v8520 = vpop.f32.mrb[0].mxu0
        %v8521 = vadd.f32 %v5769, %v8520
        %8522 = vdwg.mxu0
        %8523 = vmatprep.subr.bf16.mxu0 %v7629
        %8524 = vmatpush1.bf16.msra.mxu0 %v7628
        %8525 = vmatprep.subr.bf16.mxu0 %v7645
        %8526 = vmatpush1.bf16.msra.mxu0 %v7644
        %8527 = vmatprep.subr.bf16.mxu0 %v7661
        %8528 = vmatpush1.bf16.msra.mxu0 %v7660
        %8529 = vmatprep.subr.bf16.mxu0 %v7677
        %8530 = vmatpush1.bf16.msra.mxu0 %v7676
        %8531 = vmatprep.subr.bf16.mxu0 %v7693
        %8532 = vmatpush1.bf16.msra.mxu0 %v7692
        %8533 = vmatprep.subr.bf16.mxu0 %v7709
        %8534 = vmatpush1.bf16.msra.mxu0 %v7708
        %8535 = vmatprep.subr.bf16.mxu0 %v7725
        %8536 = vmatpush1.bf16.msra.mxu0 %v7724
        %8537 = vmatprep.subr.bf16.mxu0 %v7741
        %8538 = vmatpush1.bf16.msra.mxu0 %v7740
        %8539 = vmatprep.subr.bf16.mxu0 %v7757
        %8540 = vmatpush1.bf16.msra.mxu0 %v7756
        %8541 = vmatprep.subr.bf16.mxu0 %v7773
        %8542 = vmatpush1.bf16.msra.mxu0 %v7772
        %8543 = vmatprep.subr.bf16.mxu0 %v7789
        %8544 = vmatpush1.bf16.msra.mxu0 %v7788
        %8545 = vmatprep.subr.bf16.mxu0 %v7805
        %8546 = vmatpush1.bf16.msra.mxu0 %v7804
        %8547 = vmatprep.subr.bf16.mxu0 %v7821
        %8548 = vmatpush1.bf16.msra.mxu0 %v7820
        %8549 = vmatprep.subr.bf16.mxu0 %v7837
        %8550 = vmatpush1.bf16.msra.mxu0 %v7836
        %8551 = vmatprep.subr.bf16.mxu0 %v7853
        %8552 = vmatpush1.bf16.msra.mxu0 %v7852
        %8553 = vmatprep.subr.bf16.mxu0 %v7869
        %8554 = vmatpush1.bf16.msra.mxu0 %v7868
        %8555 = vmatprep.mubr.bf16.mxu0 %v5239
        %8556 = vmatmul.mubr.bf16.gmra.mrb[0].mxu0 %v5238
        %v8557 = vpop.f32.mrb[0].mxu0
        %v8558 = vadd.f32 %v8515, %v8557
        %v8559 = vpop.f32.mrb[0].mxu0
        %v8560 = vadd.f32 %v8517, %v8559
        %v8561 = vpop.f32.mrb[0].mxu0
        %v8562 = vadd.f32 %v8519, %v8561
        %v8563 = vpop.f32.mrb[0].mxu0
        %v8564 = vadd.f32 %v8521, %v8563
        %8565 = vdwg.mxu0
        %8566 = vmatprep.subr.bf16.mxu0 %v7375
        %8567 = vmatpush1.bf16.msra.mxu0 %v7374
        %8568 = vmatprep.subr.bf16.mxu0 %v7391
        %8569 = vmatpush1.bf16.msra.mxu0 %v7390
        %8570 = vmatprep.subr.bf16.mxu0 %v7407
        %8571 = vmatpush1.bf16.msra.mxu0 %v7406
        %8572 = vmatprep.subr.bf16.mxu0 %v7423
        %8573 = vmatpush1.bf16.msra.mxu0 %v7422
        %8574 = vmatprep.subr.bf16.mxu0 %v7439
        %8575 = vmatpush1.bf16.msra.mxu0 %v7438
        %8576 = vmatprep.subr.bf16.mxu0 %v7455
        %8577 = vmatpush1.bf16.msra.mxu0 %v7454
        %8578 = vmatprep.subr.bf16.mxu0 %v7471
        %8579 = vmatpush1.bf16.msra.mxu0 %v7470
        %8580 = vmatprep.subr.bf16.mxu0 %v7487
        %8581 = vmatpush1.bf16.msra.mxu0 %v7486
        %8582 = vmatprep.subr.bf16.mxu0 %v7503
        %8583 = vmatpush1.bf16.msra.mxu0 %v7502
        %8584 = vmatprep.subr.bf16.mxu0 %v7519
        %8585 = vmatpush1.bf16.msra.mxu0 %v7518
        %8586 = vmatprep.subr.bf16.mxu0 %v7535
        %8587 = vmatpush1.bf16.msra.mxu0 %v7534
        %8588 = vmatprep.subr.bf16.mxu0 %v7551
        %8589 = vmatpush1.bf16.msra.mxu0 %v7550
        %8590 = vmatprep.subr.bf16.mxu0 %v7567
        %8591 = vmatpush1.bf16.msra.mxu0 %v7566
        %8592 = vmatprep.subr.bf16.mxu0 %v7583
        %8593 = vmatpush1.bf16.msra.mxu0 %v7582
        %8594 = vmatprep.subr.bf16.mxu0 %v7599
        %8595 = vmatpush1.bf16.msra.mxu0 %v7598
        %8596 = vmatprep.subr.bf16.mxu0 %v7615
        %8597 = vmatpush1.bf16.msra.mxu0 %v7614
        %8598 = vmatprep.mubr.bf16.mxu0 %v5237
        %8599 = vmatmul.mubr.bf16.gmra.mrb[0].mxu0 %v5236
        %v8600 = vpop.f32.mrb[0].mxu0
        %v8601 = vadd.f32 %v5773, %v8600
        %v8602 = vpop.f32.mrb[0].mxu0
        %v8603 = vadd.f32 %v5777, %v8602
        %v8604 = vpop.f32.mrb[0].mxu0
        %v8605 = vadd.f32 %v5773, %v8604
        %v8606 = vpop.f32.mrb[0].mxu0
        %v8607 = vadd.f32 %v5777, %v8606
        %8608 = vdwg.mxu0
        %8609 = vmatprep.subr.bf16.mxu0 %v7631
        %8610 = vmatpush1.bf16.msra.mxu0 %v7630
        %8611 = vmatprep.subr.bf16.mxu0 %v7647
        %8612 = vmatpush1.bf16.msra.mxu0 %v7646
        %8613 = vmatprep.subr.bf16.mxu0 %v7663
        %8614 = vmatpush1.bf16.msra.mxu0 %v7662
        %8615 = vmatprep.subr.bf16.mxu0 %v7679
        %8616 = vmatpush1.bf16.msra.mxu0 %v7678
        %8617 = vmatprep.subr.bf16.mxu0 %v7695
        %8618 = vmatpush1.bf16.msra.mxu0 %v7694
        %8619 = vmatprep.subr.bf16.mxu0 %v7711
        %8620 = vmatpush1.bf16.msra.mxu0 %v7710
        %8621 = vmatprep.subr.bf16.mxu0 %v7727
        %8622 = vmatpush1.bf16.msra.mxu0 %v7726
        %8623 = vmatprep.subr.bf16.mxu0 %v7743
        %8624 = vmatpush1.bf16.msra.mxu0 %v7742
        %8625 = vmatprep.subr.bf16.mxu0 %v7759
        %8626 = vmatpush1.bf16.msra.mxu0 %v7758
        %8627 = vmatprep.subr.bf16.mxu0 %v7775
        %8628 = vmatpush1.bf16.msra.mxu0 %v7774
        %8629 = vmatprep.subr.bf16.mxu0 %v7791
        %8630 = vmatpush1.bf16.msra.mxu0 %v7790
        %8631 = vmatprep.subr.bf16.mxu0 %v7807
        %8632 = vmatpush1.bf16.msra.mxu0 %v7806
        %8633 = vmatprep.subr.bf16.mxu0 %v7823
        %8634 = vmatpush1.bf16.msra.mxu0 %v7822
        %8635 = vmatprep.subr.bf16.mxu0 %v7839
        %8636 = vmatpush1.bf16.msra.mxu0 %v7838
        %8637 = vmatprep.subr.bf16.mxu0 %v7855
        %8638 = vmatpush1.bf16.msra.mxu0 %v7854
        %8639 = vmatprep.subr.bf16.mxu0 %v7871
        %8640 = vmatpush1.bf16.msra.mxu0 %v7870
        %8641 = vmatprep.mubr.bf16.mxu0 %v5239
        %8642 = vmatmul.mubr.bf16.gmra.mrb[0].mxu0 %v5238
        %v8643 = vpop.f32.mrb[0].mxu0
        %v8644 = vadd.f32 %v8601, %v8643
        %v8645 = vpop.f32.mrb[0].mxu0
        %v8646 = vadd.f32 %v8603, %v8645
        %v8647 = vpop.f32.mrb[0].mxu0
        %v8648 = vadd.f32 %v8605, %v8647
        %v8649 = vpop.f32.mrb[0].mxu0
        %v8650 = vadd.f32 %v8607, %v8649
        %8651 = vdwg.mxu0
        %8652 = vmatprep.subr.bf16.mxu0 %v7377
        %8653 = vmatpush1.bf16.msra.mxu0 %v7376
        %8654 = vmatprep.subr.bf16.mxu0 %v7393
        %8655 = vmatpush1.bf16.msra.mxu0 %v7392
        %8656 = vmatprep.subr.bf16.mxu0 %v7409
        %8657 = vmatpush1.bf16.msra.mxu0 %v7408
        %8658 = vmatprep.subr.bf16.mxu0 %v7425
        %8659 = vmatpush1.bf16.msra.mxu0 %v7424
        %8660 = vmatprep.subr.bf16.mxu0 %v7441
        %8661 = vmatpush1.bf16.msra.mxu0 %v7440
        %8662 = vmatprep.subr.bf16.mxu0 %v7457
        %8663 = vmatpush1.bf16.msra.mxu0 %v7456
        %8664 = vmatprep.subr.bf16.mxu0 %v7473
        %8665 = vmatpush1.bf16.msra.mxu0 %v7472
        %8666 = vmatprep.subr.bf16.mxu0 %v7489
        %8667 = vmatpush1.bf16.msra.mxu0 %v7488
        %8668 = vmatprep.subr.bf16.mxu0 %v7505
        %8669 = vmatpush1.bf16.msra.mxu0 %v7504
        %8670 = vmatprep.subr.bf16.mxu0 %v7521
        %8671 = vmatpush1.bf16.msra.mxu0 %v7520
        %8672 = vmatprep.subr.bf16.mxu0 %v7537
        %8673 = vmatpush1.bf16.msra.mxu0 %v7536
        %8674 = vmatprep.subr.bf16.mxu0 %v7553
        %8675 = vmatpush1.bf16.msra.mxu0 %v7552
        %8676 = vmatprep.subr.bf16.mxu0 %v7569
        %8677 = vmatpush1.bf16.msra.mxu0 %v7568
        %8678 = vmatprep.subr.bf16.mxu0 %v7585
        %8679 = vmatpush1.bf16.msra.mxu0 %v7584
        %8680 = vmatprep.subr.bf16.mxu0 %v7601
        %8681 = vmatpush1.bf16.msra.mxu0 %v7600
        %8682 = vmatprep.subr.bf16.mxu0 %v7617
        %8683 = vmatpush1.bf16.msra.mxu0 %v7616
        %8684 = vmatprep.mubr.bf16.mxu0 %v5237
        %8685 = vmatmul.mubr.bf16.gmra.mrb[0].mxu0 %v5236
        %v8686 = vpop.f32.mrb[0].mxu0
        %v8687 = vadd.f32 %v5781, %v8686
        %v8688 = vpop.f32.mrb[0].mxu0
        %v8689 = vadd.f32 %v5785, %v8688
        %v8690 = vpop.f32.mrb[0].mxu0
        %v8691 = vadd.f32 %v5781, %v8690
        %v8692 = vpop.f32.mrb[0].mxu0
        %v8693 = vadd.f32 %v5785, %v8692
        %8694 = vdwg.mxu0
        %8695 = vmatprep.subr.bf16.mxu0 %v7633
        %8696 = vmatpush1.bf16.msra.mxu0 %v7632
        %8697 = vmatprep.subr.bf16.mxu0 %v7649
        %8698 = vmatpush1.bf16.msra.mxu0 %v7648
        %8699 = vmatprep.subr.bf16.mxu0 %v7665
        %8700 = vmatpush1.bf16.msra.mxu0 %v7664
        %8701 = vmatprep.subr.bf16.mxu0 %v7681
        %8702 = vmatpush1.bf16.msra.mxu0 %v7680
        %8703 = vmatprep.subr.bf16.mxu0 %v7697
        %8704 = vmatpush1.bf16.msra.mxu0 %v7696
        %8705 = vmatprep.subr.bf16.mxu0 %v7713
        %8706 = vmatpush1.bf16.msra.mxu0 %v7712
        %8707 = vmatprep.subr.bf16.mxu0 %v7729
        %8708 = vmatpush1.bf16.msra.mxu0 %v7728
        %8709 = vmatprep.subr.bf16.mxu0 %v7745
        %8710 = vmatpush1.bf16.msra.mxu0 %v7744
        %8711 = vmatprep.subr.bf16.mxu0 %v7761
        %8712 = vmatpush1.bf16.msra.mxu0 %v7760
        %8713 = vmatprep.subr.bf16.mxu0 %v7777
        %8714 = vmatpush1.bf16.msra.mxu0 %v7776
        %8715 = vmatprep.subr.bf16.mxu0 %v7793
        %8716 = vmatpush1.bf16.msra.mxu0 %v7792
        %8717 = vmatprep.subr.bf16.mxu0 %v7809
        %8718 = vmatpush1.bf16.msra.mxu0 %v7808
        %8719 = vmatprep.subr.bf16.mxu0 %v7825
        %8720 = vmatpush1.bf16.msra.mxu0 %v7824
        %8721 = vmatprep.subr.bf16.mxu0 %v7841
        %8722 = vmatpush1.bf16.msra.mxu0 %v7840
        %8723 = vmatprep.subr.bf16.mxu0 %v7857
        %8724 = vmatpush1.bf16.msra.mxu0 %v7856
        %8725 = vmatprep.subr.bf16.mxu0 %v7873
        %8726 = vmatpush1.bf16.msra.mxu0 %v7872
        %8727 = vmatprep.mubr.bf16.mxu0 %v5239
        %8728 = vmatmul.mubr.bf16.gmra.mrb[0].mxu0 %v5238
        %v8729 = vpop.f32.mrb[0].mxu0
        %v8730 = vadd.f32 %v8687, %v8729
        %v8731 = vpop.f32.mrb[0].mxu0
        %v8732 = vadd.f32 %v8689, %v8731
        %v8733 = vpop.f32.mrb[0].mxu0
        %v8734 = vadd.f32 %v8691, %v8733
        %v8735 = vpop.f32.mrb[0].mxu0
        %v8736 = vadd.f32 %v8693, %v8735
        %8737 = vdwg.mxu0
        %8738 = vmatprep.subr.bf16.mxu0 %v7379
        %8739 = vmatpush1.bf16.msra.mxu0 %v7378
        %8740 = vmatprep.subr.bf16.mxu0 %v7395
        %8741 = vmatpush1.bf16.msra.mxu0 %v7394
        %8742 = vmatprep.subr.bf16.mxu0 %v7411
        %8743 = vmatpush1.bf16.msra.mxu0 %v7410
        %8744 = vmatprep.subr.bf16.mxu0 %v7427
        %8745 = vmatpush1.bf16.msra.mxu0 %v7426
        %8746 = vmatprep.subr.bf16.mxu0 %v7443
        %8747 = vmatpush1.bf16.msra.mxu0 %v7442
        %8748 = vmatprep.subr.bf16.mxu0 %v7459
        %8749 = vmatpush1.bf16.msra.mxu0 %v7458
        %8750 = vmatprep.subr.bf16.mxu0 %v7475
        %8751 = vmatpush1.bf16.msra.mxu0 %v7474
        %8752 = vmatprep.subr.bf16.mxu0 %v7491
        %8753 = vmatpush1.bf16.msra.mxu0 %v7490
        %8754 = vmatprep.subr.bf16.mxu0 %v7507
        %8755 = vmatpush1.bf16.msra.mxu0 %v7506
        %8756 = vmatprep.subr.bf16.mxu0 %v7523
        %8757 = vmatpush1.bf16.msra.mxu0 %v7522
        %8758 = vmatprep.subr.bf16.mxu0 %v7539
        %8759 = vmatpush1.bf16.msra.mxu0 %v7538
        %8760 = vmatprep.subr.bf16.mxu0 %v7555
        %8761 = vmatpush1.bf16.msra.mxu0 %v7554
        %8762 = vmatprep.subr.bf16.mxu0 %v7571
        %8763 = vmatpush1.bf16.msra.mxu0 %v7570
        %8764 = vmatprep.subr.bf16.mxu0 %v7587
        %8765 = vmatpush1.bf16.msra.mxu0 %v7586
        %8766 = vmatprep.subr.bf16.mxu0 %v7603
        %8767 = vmatpush1.bf16.msra.mxu0 %v7602
        %8768 = vmatprep.subr.bf16.mxu0 %v7619
        %8769 = vmatpush1.bf16.msra.mxu0 %v7618
        %8770 = vmatprep.mubr.bf16.mxu0 %v5237
        %8771 = vmatmul.mubr.bf16.gmra.mrb[0].mxu0 %v5236
        %v8772 = vpop.f32.mrb[0].mxu0
        %v8773 = vadd.f32 %v5789, %v8772
        %v8774 = vpop.f32.mrb[0].mxu0
        %v8775 = vadd.f32 %v5793, %v8774
        %v8776 = vpop.f32.mrb[0].mxu0
        %v8777 = vadd.f32 %v5789, %v8776
        %v8778 = vpop.f32.mrb[0].mxu0
        %v8779 = vadd.f32 %v5793, %v8778
        %8780 = vdwg.mxu0
        %8781 = vmatprep.subr.bf16.mxu0 %v7635
        %8782 = vmatpush1.bf16.msra.mxu0 %v7634
        %8783 = vmatprep.subr.bf16.mxu0 %v7651
        %8784 = vmatpush1.bf16.msra.mxu0 %v7650
        %8785 = vmatprep.subr.bf16.mxu0 %v7667
        %8786 = vmatpush1.bf16.msra.mxu0 %v7666
        %8787 = vmatprep.subr.bf16.mxu0 %v7683
        %8788 = vmatpush1.bf16.msra.mxu0 %v7682
        %8789 = vmatprep.subr.bf16.mxu0 %v7699
        %8790 = vmatpush1.bf16.msra.mxu0 %v7698
        %8791 = vmatprep.subr.bf16.mxu0 %v7715
        %8792 = vmatpush1.bf16.msra.mxu0 %v7714
        %8793 = vmatprep.subr.bf16.mxu0 %v7731
        %8794 = vmatpush1.bf16.msra.mxu0 %v7730
        %8795 = vmatprep.subr.bf16.mxu0 %v7747
        %8796 = vmatpush1.bf16.msra.mxu0 %v7746
        %8797 = vmatprep.subr.bf16.mxu0 %v7763
        %8798 = vmatpush1.bf16.msra.mxu0 %v7762
        %8799 = vmatprep.subr.bf16.mxu0 %v7779
        %8800 = vmatpush1.bf16.msra.mxu0 %v7778
        %8801 = vmatprep.subr.bf16.mxu0 %v7795
        %8802 = vmatpush1.bf16.msra.mxu0 %v7794
        %8803 = vmatprep.subr.bf16.mxu0 %v7811
        %8804 = vmatpush1.bf16.msra.mxu0 %v7810
        %8805 = vmatprep.subr.bf16.mxu0 %v7827
        %8806 = vmatpush1.bf16.msra.mxu0 %v7826
        %8807 = vmatprep.subr.bf16.mxu0 %v7843
        %8808 = vmatpush1.bf16.msra.mxu0 %v7842
        %8809 = vmatprep.subr.bf16.mxu0 %v7859
        %8810 = vmatpush1.bf16.msra.mxu0 %v7858
        %8811 = vmatprep.subr.bf16.mxu0 %v7875
        %8812 = vmatpush1.bf16.msra.mxu0 %v7874
        %8813 = vmatprep.mubr.bf16.mxu0 %v5239
        %8814 = vmatmul.mubr.bf16.gmra.mrb[0].mxu0 %v5238
        %v8815 = vpop.f32.mrb[0].mxu0
        %v8816 = vadd.f32 %v8773, %v8815
        %v8817 = vpop.f32.mrb[0].mxu0
        %v8818 = vadd.f32 %v8775, %v8817
        %v8819 = vpop.f32.mrb[0].mxu0
        %v8820 = vadd.f32 %v8777, %v8819
        %v8821 = vpop.f32.mrb[0].mxu0
        %v8822 = vadd.f32 %v8779, %v8821
        %8823 = vdwg.mxu0
        %8824 = vmatprep.subr.bf16.mxu0 %v7381
        %8825 = vmatpush1.bf16.msra.mxu0 %v7380
        %8826 = vmatprep.subr.bf16.mxu0 %v7397
        %8827 = vmatpush1.bf16.msra.mxu0 %v7396
        %8828 = vmatprep.subr.bf16.mxu0 %v7413
        %8829 = vmatpush1.bf16.msra.mxu0 %v7412
        %8830 = vmatprep.subr.bf16.mxu0 %v7429
        %8831 = vmatpush1.bf16.msra.mxu0 %v7428
        %8832 = vmatprep.subr.bf16.mxu0 %v7445
        %8833 = vmatpush1.bf16.msra.mxu0 %v7444
        %8834 = vmatprep.subr.bf16.mxu0 %v7461
        %8835 = vmatpush1.bf16.msra.mxu0 %v7460
        %8836 = vmatprep.subr.bf16.mxu0 %v7477
        %8837 = vmatpush1.bf16.msra.mxu0 %v7476
        %8838 = vmatprep.subr.bf16.mxu0 %v7493
        %8839 = vmatpush1.bf16.msra.mxu0 %v7492
        %8840 = vmatprep.subr.bf16.mxu0 %v7509
        %8841 = vmatpush1.bf16.msra.mxu0 %v7508
        %8842 = vmatprep.subr.bf16.mxu0 %v7525
        %8843 = vmatpush1.bf16.msra.mxu0 %v7524
        %8844 = vmatprep.subr.bf16.mxu0 %v7541
        %8845 = vmatpush1.bf16.msra.mxu0 %v7540
        %8846 = vmatprep.subr.bf16.mxu0 %v7557
        %8847 = vmatpush1.bf16.msra.mxu0 %v7556
        %8848 = vmatprep.subr.bf16.mxu0 %v7573
        %8849 = vmatpush1.bf16.msra.mxu0 %v7572
        %8850 = vmatprep.subr.bf16.mxu0 %v7589
        %8851 = vmatpush1.bf16.msra.mxu0 %v7588
        %8852 = vmatprep.subr.bf16.mxu0 %v7605
        %8853 = vmatpush1.bf16.msra.mxu0 %v7604
        %8854 = vmatprep.subr.bf16.mxu0 %v7621
        %8855 = vmatpush1.bf16.msra.mxu0 %v7620
        %8856 = vmatprep.mubr.bf16.mxu0 %v5237
        %8857 = vmatmul.mubr.bf16.gmra.mrb[0].mxu0 %v5236
        %v8858 = vpop.f32.mrb[0].mxu0
        %v8859 = vadd.f32 %v5797, %v8858
        %v8860 = vpop.f32.mrb[0].mxu0
        %v8861 = vadd.f32 %v5801, %v8860
        %v8862 = vpop.f32.mrb[0].mxu0
        %v8863 = vadd.f32 %v5797, %v8862
        %v8864 = vpop.f32.mrb[0].mxu0
        %v8865 = vadd.f32 %v5801, %v8864
        %8866 = vdwg.mxu0
        %8867 = vmatprep.subr.bf16.mxu0 %v7637
        %8868 = vmatpush1.bf16.msra.mxu0 %v7636
        %8869 = vmatprep.subr.bf16.mxu0 %v7653
        %8870 = vmatpush1.bf16.msra.mxu0 %v7652
        %8871 = vmatprep.subr.bf16.mxu0 %v7669
        %8872 = vmatpush1.bf16.msra.mxu0 %v7668
        %8873 = vmatprep.subr.bf16.mxu0 %v7685
        %8874 = vmatpush1.bf16.msra.mxu0 %v7684
        %8875 = vmatprep.subr.bf16.mxu0 %v7701
        %8876 = vmatpush1.bf16.msra.mxu0 %v7700
        %8877 = vmatprep.subr.bf16.mxu0 %v7717
        %8878 = vmatpush1.bf16.msra.mxu0 %v7716
        %8879 = vmatprep.subr.bf16.mxu0 %v7733
        %8880 = vmatpush1.bf16.msra.mxu0 %v7732
        %8881 = vmatprep.subr.bf16.mxu0 %v7749
        %8882 = vmatpush1.bf16.msra.mxu0 %v7748
        %8883 = vmatprep.subr.bf16.mxu0 %v7765
        %8884 = vmatpush1.bf16.msra.mxu0 %v7764
        %8885 = vmatprep.subr.bf16.mxu0 %v7781
        %8886 = vmatpush1.bf16.msra.mxu0 %v7780
        %8887 = vmatprep.subr.bf16.mxu0 %v7797
        %8888 = vmatpush1.bf16.msra.mxu0 %v7796
        %8889 = vmatprep.subr.bf16.mxu0 %v7813
        %8890 = vmatpush1.bf16.msra.mxu0 %v7812
        %8891 = vmatprep.subr.bf16.mxu0 %v7829
        %8892 = vmatpush1.bf16.msra.mxu0 %v7828
        %8893 = vmatprep.subr.bf16.mxu0 %v7845
        %8894 = vmatpush1.bf16.msra.mxu0 %v7844
        %8895 = vmatprep.subr.bf16.mxu0 %v7861
        %8896 = vmatpush1.bf16.msra.mxu0 %v7860
        %8897 = vmatprep.subr.bf16.mxu0 %v7877
        %8898 = vmatpush1.bf16.msra.mxu0 %v7876
        %8899 = vmatprep.mubr.bf16.mxu0 %v5239
        %8900 = vmatmul.mubr.bf16.gmra.mrb[0].mxu0 %v5238
        %v8901 = vpop.f32.mrb[0].mxu0
        %v8902 = vadd.f32 %v8859, %v8901
        %v8903 = vpop.f32.mrb[0].mxu0
        %v8904 = vadd.f32 %v8861, %v8903
        %v8905 = vpop.f32.mrb[0].mxu0
        %v8906 = vadd.f32 %v8863, %v8905
        %v8907 = vpop.f32.mrb[0].mxu0
        %v8908 = vadd.f32 %v8865, %v8907
        %8909 = vdwg.mxu0
        %8910 = vmatprep.subr.bf16.mxu0 %v7383
        %8911 = vmatpush1.bf16.msra.mxu0 %v7382
        %8912 = vmatprep.subr.bf16.mxu0 %v7399
        %8913 = vmatpush1.bf16.msra.mxu0 %v7398
        %8914 = vmatprep.subr.bf16.mxu0 %v7415
        %8915 = vmatpush1.bf16.msra.mxu0 %v7414
        %8916 = vmatprep.subr.bf16.mxu0 %v7431
        %8917 = vmatpush1.bf16.msra.mxu0 %v7430
        %8918 = vmatprep.subr.bf16.mxu0 %v7447
        %8919 = vmatpush1.bf16.msra.mxu0 %v7446
        %8920 = vmatprep.subr.bf16.mxu0 %v7463
        %8921 = vmatpush1.bf16.msra.mxu0 %v7462
        %8922 = vmatprep.subr.bf16.mxu0 %v7479
        %8923 = vmatpush1.bf16.msra.mxu0 %v7478
        %8924 = vmatprep.subr.bf16.mxu0 %v7495
        %8925 = vmatpush1.bf16.msra.mxu0 %v7494
        %8926 = vmatprep.subr.bf16.mxu0 %v7511
        %8927 = vmatpush1.bf16.msra.mxu0 %v7510
        %8928 = vmatprep.subr.bf16.mxu0 %v7527
        %8929 = vmatpush1.bf16.msra.mxu0 %v7526
        %8930 = vmatprep.subr.bf16.mxu0 %v7543
        %8931 = vmatpush1.bf16.msra.mxu0 %v7542
        %8932 = vmatprep.subr.bf16.mxu0 %v7559
        %8933 = vmatpush1.bf16.msra.mxu0 %v7558
        %8934 = vmatprep.subr.bf16.mxu0 %v7575
        %8935 = vmatpush1.bf16.msra.mxu0 %v7574
        %8936 = vmatprep.subr.bf16.mxu0 %v7591
        %8937 = vmatpush1.bf16.msra.mxu0 %v7590
        %8938 = vmatprep.subr.bf16.mxu0 %v7607
        %8939 = vmatpush1.bf16.msra.mxu0 %v7606
        %8940 = vmatprep.subr.bf16.mxu0 %v7623
        %8941 = vmatpush1.bf16.msra.mxu0 %v7622
        %8942 = vmatprep.mubr.bf16.mxu0 %v5237
        %8943 = vmatmul.mubr.bf16.gmra.mrb[0].mxu0 %v5236
        %v8944 = vpop.f32.mrb[0].mxu0
        %v8945 = vadd.f32 %v5805, %v8944
        %v8946 = vpop.f32.mrb[0].mxu0
        %v8947 = vadd.f32 %v5809, %v8946
        %v8948 = vpop.f32.mrb[0].mxu0
        %v8949 = vadd.f32 %v5805, %v8948
        %v8950 = vpop.f32.mrb[0].mxu0
        %v8951 = vadd.f32 %v5809, %v8950
        %8952 = vdwg.mxu0
        %8953 = vmatprep.subr.bf16.mxu0 %v7639
        %8954 = vmatpush1.bf16.msra.mxu0 %v7638
        %8955 = vmatprep.subr.bf16.mxu0 %v7655
        %8956 = vmatpush1.bf16.msra.mxu0 %v7654
        %8957 = vmatprep.subr.bf16.mxu0 %v7671
        %8958 = vmatpush1.bf16.msra.mxu0 %v7670
        %8959 = vmatprep.subr.bf16.mxu0 %v7687
        %8960 = vmatpush1.bf16.msra.mxu0 %v7686
        %8961 = vmatprep.subr.bf16.mxu0 %v7703
        %8962 = vmatpush1.bf16.msra.mxu0 %v7702
        %8963 = vmatprep.subr.bf16.mxu0 %v7719
        %8964 = vmatpush1.bf16.msra.mxu0 %v7718
        %8965 = vmatprep.subr.bf16.mxu0 %v7735
        %8966 = vmatpush1.bf16.msra.mxu0 %v7734
        %8967 = vmatprep.subr.bf16.mxu0 %v7751
        %8968 = vmatpush1.bf16.msra.mxu0 %v7750
        %8969 = vmatprep.subr.bf16.mxu0 %v7767
        %8970 = vmatpush1.bf16.msra.mxu0 %v7766
        %8971 = vmatprep.subr.bf16.mxu0 %v7783
        %8972 = vmatpush1.bf16.msra.mxu0 %v7782
        %8973 = vmatprep.subr.bf16.mxu0 %v7799
        %8974 = vmatpush1.bf16.msra.mxu0 %v7798
        %8975 = vmatprep.subr.bf16.mxu0 %v7815
        %8976 = vmatpush1.bf16.msra.mxu0 %v7814
        %8977 = vmatprep.subr.bf16.mxu0 %v7831
        %8978 = vmatpush1.bf16.msra.mxu0 %v7830
        %8979 = vmatprep.subr.bf16.mxu0 %v7847
        %8980 = vmatpush1.bf16.msra.mxu0 %v7846
        %8981 = vmatprep.subr.bf16.mxu0 %v7863
        %8982 = vmatpush1.bf16.msra.mxu0 %v7862
        %8983 = vmatprep.subr.bf16.mxu0 %v7879
        %8984 = vmatpush1.bf16.msra.mxu0 %v7878
        %8985 = vmatprep.mubr.bf16.mxu0 %v5239
        %8986 = vmatmul.mubr.bf16.gmra.mrb[0].mxu0 %v5238
        %v8987 = vpop.f32.mrb[0].mxu0
        %v8988 = vadd.f32 %v8945, %v8987
        %v8989 = vpop.f32.mrb[0].mxu0
        %v8990 = vadd.f32 %v8947, %v8989
        %v8991 = vpop.f32.mrb[0].mxu0
        %v8992 = vadd.f32 %v8949, %v8991
        %v8993 = vpop.f32.mrb[0].mxu0
        %v8994 = vadd.f32 %v8951, %v8993
        %8995 = vdwg.mxu0
        %8996 = vmatprep.subr.bf16.mxu0 %v7385
        %8997 = vmatpush1.bf16.msra.mxu0 %v7384
        %8998 = vmatprep.subr.bf16.mxu0 %v7401
        %8999 = vmatpush1.bf16.msra.mxu0 %v7400
        %9000 = vmatprep.subr.bf16.mxu0 %v7417
        %9001 = vmatpush1.bf16.msra.mxu0 %v7416
        %9002 = vmatprep.subr.bf16.mxu0 %v7433
        %9003 = vmatpush1.bf16.msra.mxu0 %v7432
        %9004 = vmatprep.subr.bf16.mxu0 %v7449
        %9005 = vmatpush1.bf16.msra.mxu0 %v7448
        %9006 = vmatprep.subr.bf16.mxu0 %v7465
        %9007 = vmatpush1.bf16.msra.mxu0 %v7464
        %9008 = vmatprep.subr.bf16.mxu0 %v7481
        %9009 = vmatpush1.bf16.msra.mxu0 %v7480
        %9010 = vmatprep.subr.bf16.mxu0 %v7497
        %9011 = vmatpush1.bf16.msra.mxu0 %v7496
        %9012 = vmatprep.subr.bf16.mxu0 %v7513
        %9013 = vmatpush1.bf16.msra.mxu0 %v7512
        %9014 = vmatprep.subr.bf16.mxu0 %v7529
        %9015 = vmatpush1.bf16.msra.mxu0 %v7528
        %9016 = vmatprep.subr.bf16.mxu0 %v7545
        %9017 = vmatpush1.bf16.msra.mxu0 %v7544
        %9018 = vmatprep.subr.bf16.mxu0 %v7561
        %9019 = vmatpush1.bf16.msra.mxu0 %v7560
        %9020 = vmatprep.subr.bf16.mxu0 %v7577
        %9021 = vmatpush1.bf16.msra.mxu0 %v7576
        %9022 = vmatprep.subr.bf16.mxu0 %v7593
        %9023 = vmatpush1.bf16.msra.mxu0 %v7592
        %9024 = vmatprep.subr.bf16.mxu0 %v7609
        %9025 = vmatpush1.bf16.msra.mxu0 %v7608
        %9026 = vmatprep.subr.bf16.mxu0 %v7625
        %9027 = vmatpush1.bf16.msra.mxu0 %v7624
        %9028 = vmatprep.mubr.bf16.mxu0 %v5237
        %9029 = vmatmul.mubr.bf16.gmra.mrb[0].mxu0 %v5236
        %v9030 = vpop.f32.mrb[0].mxu0
        %v9031 = vadd.f32 %v5813, %v9030
        %v9032 = vpop.f32.mrb[0].mxu0
        %v9033 = vadd.f32 %v5817, %v9032
        %v9034 = vpop.f32.mrb[0].mxu0
        %v9035 = vadd.f32 %v5813, %v9034
        %v9036 = vpop.f32.mrb[0].mxu0
        %v9037 = vadd.f32 %v5817, %v9036
        %9038 = vdwg.mxu0
        %9039 = vmatprep.subr.bf16.mxu0 %v7641
        %9040 = vmatpush1.bf16.msra.mxu0 %v7640
        %9041 = vmatprep.subr.bf16.mxu0 %v7657
        %9042 = vmatpush1.bf16.msra.mxu0 %v7656
        %9043 = vmatprep.subr.bf16.mxu0 %v7673
        %9044 = vmatpush1.bf16.msra.mxu0 %v7672
        %9045 = vmatprep.subr.bf16.mxu0 %v7689
        %9046 = vmatpush1.bf16.msra.mxu0 %v7688
        %9047 = vmatprep.subr.bf16.mxu0 %v7705
        %9048 = vmatpush1.bf16.msra.mxu0 %v7704
        %9049 = vmatprep.subr.bf16.mxu0 %v7721
        %9050 = vmatpush1.bf16.msra.mxu0 %v7720
        %9051 = vmatprep.subr.bf16.mxu0 %v7737
        %9052 = vmatpush1.bf16.msra.mxu0 %v7736
        %9053 = vmatprep.subr.bf16.mxu0 %v7753
        %9054 = vmatpush1.bf16.msra.mxu0 %v7752
        %9055 = vmatprep.subr.bf16.mxu0 %v7769
        %9056 = vmatpush1.bf16.msra.mxu0 %v7768
        %9057 = vmatprep.subr.bf16.mxu0 %v7785
        %9058 = vmatpush1.bf16.msra.mxu0 %v7784
        %9059 = vmatprep.subr.bf16.mxu0 %v7801
        %9060 = vmatpush1.bf16.msra.mxu0 %v7800
        %9061 = vmatprep.subr.bf16.mxu0 %v7817
        %9062 = vmatpush1.bf16.msra.mxu0 %v7816
        %9063 = vmatprep.subr.bf16.mxu0 %v7833
        %9064 = vmatpush1.bf16.msra.mxu0 %v7832
        %9065 = vmatprep.subr.bf16.mxu0 %v7849
        %9066 = vmatpush1.bf16.msra.mxu0 %v7848
        %9067 = vmatprep.subr.bf16.mxu0 %v7865
        %9068 = vmatpush1.bf16.msra.mxu0 %v7864
        %9069 = vmatprep.subr.bf16.mxu0 %v7881
        %9070 = vmatpush1.bf16.msra.mxu0 %v7880
        %9071 = vmatprep.mubr.bf16.mxu0 %v5239
        %9072 = vmatmul.mubr.bf16.gmra.mrb[0].mxu0 %v5238
        %v9073 = vpop.f32.mrb[0].mxu0
        %v9074 = vadd.f32 %v9031, %v9073
        %v9075 = vpop.f32.mrb[0].mxu0
        %v9076 = vadd.f32 %v9033, %v9075
        %v9077 = vpop.f32.mrb[0].mxu0
        %v9078 = vadd.f32 %v9035, %v9077
        %v9079 = vpop.f32.mrb[0].mxu0
        %v9080 = vadd.f32 %v9037, %v9079
        %9081 = vdwg.mxu0
        %v9082 = vmax.f32 %v8472, 0.0
        %v9083 = vmax.f32 %v8474, 0.0
        %v9084 = vmax.f32 %v8558, 0.0
        %v9085 = vmax.f32 %v8560, 0.0
        %v9086 = vmax.f32 %v8644, 0.0
        %v9087 = vmax.f32 %v8646, 0.0
        %v9088 = vmax.f32 %v8730, 0.0
        %v9089 = vmax.f32 %v8732, 0.0
        %v9090 = vmax.f32 %v8816, 0.0
        %v9091 = vmax.f32 %v8818, 0.0
        %v9092 = vmax.f32 %v8902, 0.0
        %v9093 = vmax.f32 %v8904, 0.0
        %v9094 = vmax.f32 %v8988, 0.0
        %v9095 = vmax.f32 %v8990, 0.0
        %v9096 = vmax.f32 %v9074, 0.0
        %v9097 = vmax.f32 %v9076, 0.0
        %v9098 = vmax.f32 %v8476, 0.0
        %v9099 = vmax.f32 %v8478, 0.0
        %v9100 = vmax.f32 %v8562, 0.0
        %v9101 = vmax.f32 %v8564, 0.0
        %v9102 = vmax.f32 %v8648, 0.0
        %v9103 = vmax.f32 %v8650, 0.0
        %v9104 = vmax.f32 %v8734, 0.0
        %v9105 = vmax.f32 %v8736, 0.0
        %v9106 = vmax.f32 %v8820, 0.0
        %v9107 = vmax.f32 %v8822, 0.0
        %v9108 = vmax.f32 %v8906, 0.0
        %v9109 = vmax.f32 %v8908, 0.0
        %v9110 = vmax.f32 %v8992, 0.0
        %v9111 = vmax.f32 %v8994, 0.0
        %v9112 = vmax.f32 %v9078, 0.0
        %v9113 = vmax.f32 %v9080, 0.0
        %v9114 = vpack.c.bf16 %v9098, %v9082
        %v9115 = vpack.c.bf16 %v9099, %v9083
        %v9116 = vpack.c.bf16 %v9100, %v9084
        %v9117 = vpack.c.bf16 %v9101, %v9085
        %v9118 = vpack.c.bf16 %v9102, %v9086
        %v9119 = vpack.c.bf16 %v9103, %v9087
        %v9120 = vpack.c.bf16 %v9104, %v9088
        %v9121 = vpack.c.bf16 %v9105, %v9089
        %v9122 = vpack.c.bf16 %v9106, %v9090
        %v9123 = vpack.c.bf16 %v9107, %v9091
        %v9124 = vpack.c.bf16 %v9108, %v9092
        %v9125 = vpack.c.bf16 %v9109, %v9093
        %v9126 = vpack.c.bf16 %v9110, %v9094
        %v9127 = vpack.c.bf16 %v9111, %v9095
        %v9128 = vpack.c.bf16 %v9112, %v9096
        %v9129 = vpack.c.bf16 %v9113, %v9097
        %v9130 = vld [vmem:[%s356] sm:$0xff]
        %v9131 = vld [vmem:[%s356 + $0x8] sm:$0xff]
        %v9132 = vld [vmem:[%s356 + $0x10] sm:$0xff]
        %v9133 = vld [vmem:[%s356 + $0x18] sm:$0xff]
        %v9134 = vld [vmem:[%s356 + $0x20] sm:$0xff]
        %v9135 = vld [vmem:[%s356 + $0x28] sm:$0xff]
        %v9136 = vld [vmem:[%s356 + $0x30] sm:$0xff]
        %v9137 = vld [vmem:[%s356 + $0x38] sm:$0xff]
        %v9138 = vld [vmem:[%s356 + $0x40] sm:$0xff]
        %v9139 = vld [vmem:[%s356 + $0x48] sm:$0xff]
        %v9140 = vld [vmem:[%s356 + $0x50] sm:$0xff]
        %v9141 = vld [vmem:[%s356 + $0x58] sm:$0xff]
        %v9142 = vld [vmem:[%s356 + $0x60] sm:$0xff]
        %v9143 = vld [vmem:[%s356 + $0x68] sm:$0xff]
        %v9144 = vld [vmem:[%s356 + $0x70] sm:$0xff]
        %v9145 = vld [vmem:[%s356 + $0x78] sm:$0xff]
        %v9146 = vld [vmem:[%s356 + $0x80] sm:$0xff]
        %v9147 = vld [vmem:[%s356 + $0x88] sm:$0xff]
        %v9148 = vld [vmem:[%s356 + $0x90] sm:$0xff]
        %v9149 = vld [vmem:[%s356 + $0x98] sm:$0xff]
        %v9150 = vld [vmem:[%s356 + $0xa0] sm:$0xff]
        %v9151 = vld [vmem:[%s356 + $0xa8] sm:$0xff]
        %v9152 = vld [vmem:[%s356 + $0xb0] sm:$0xff]
        %v9153 = vld [vmem:[%s356 + $0xb8] sm:$0xff]
        %v9154 = vld [vmem:[%s356 + $0xc0] sm:$0xff]
        %v9155 = vld [vmem:[%s356 + $0xc8] sm:$0xff]
        %v9156 = vld [vmem:[%s356 + $0xd0] sm:$0xff]
        %v9157 = vld [vmem:[%s356 + $0xd8] sm:$0xff]
        %v9158 = vld [vmem:[%s356 + $0xe0] sm:$0xff]
        %v9159 = vld [vmem:[%s356 + $0xe8] sm:$0xff]
        %v9160 = vld [vmem:[%s356 + $0xf0] sm:$0xff]
        %v9161 = vld [vmem:[%s356 + $0xf8] sm:$0xff]
        %v9162 = vld [vmem:[%s356 + $0x100] sm:$0xff]
        %v9163 = vld [vmem:[%s356 + $0x108] sm:$0xff]
        %v9164 = vld [vmem:[%s356 + $0x110] sm:$0xff]
        %v9165 = vld [vmem:[%s356 + $0x118] sm:$0xff]
        %v9166 = vld [vmem:[%s356 + $0x120] sm:$0xff]
        %v9167 = vld [vmem:[%s356 + $0x128] sm:$0xff]
        %v9168 = vld [vmem:[%s356 + $0x130] sm:$0xff]
        %v9169 = vld [vmem:[%s356 + $0x138] sm:$0xff]
        %v9170 = vld [vmem:[%s356 + $0x140] sm:$0xff]
        %v9171 = vld [vmem:[%s356 + $0x148] sm:$0xff]
        %v9172 = vld [vmem:[%s356 + $0x150] sm:$0xff]
        %v9173 = vld [vmem:[%s356 + $0x158] sm:$0xff]
        %v9174 = vld [vmem:[%s356 + $0x160] sm:$0xff]
        %v9175 = vld [vmem:[%s356 + $0x168] sm:$0xff]
        %v9176 = vld [vmem:[%s356 + $0x170] sm:$0xff]
        %v9177 = vld [vmem:[%s356 + $0x178] sm:$0xff]
        %v9178 = vld [vmem:[%s356 + $0x180] sm:$0xff]
        %v9179 = vld [vmem:[%s356 + $0x188] sm:$0xff]
        %v9180 = vld [vmem:[%s356 + $0x190] sm:$0xff]
        %v9181 = vld [vmem:[%s356 + $0x198] sm:$0xff]
        %v9182 = vld [vmem:[%s356 + $0x1a0] sm:$0xff]
        %v9183 = vld [vmem:[%s356 + $0x1a8] sm:$0xff]
        %v9184 = vld [vmem:[%s356 + $0x1b0] sm:$0xff]
        %v9185 = vld [vmem:[%s356 + $0x1b8] sm:$0xff]
        %v9186 = vld [vmem:[%s356 + $0x1c0] sm:$0xff]
        %v9187 = vld [vmem:[%s356 + $0x1c8] sm:$0xff]
        %v9188 = vld [vmem:[%s356 + $0x1d0] sm:$0xff]
        %v9189 = vld [vmem:[%s356 + $0x1d8] sm:$0xff]
        %v9190 = vld [vmem:[%s356 + $0x1e0] sm:$0xff]
        %v9191 = vld [vmem:[%s356 + $0x1e8] sm:$0xff]
        %v9192 = vld [vmem:[%s356 + $0x1f0] sm:$0xff]
        %v9193 = vld [vmem:[%s356 + $0x1f8] sm:$0xff]
        %v9194 = vld [vmem:[%s356 + $0x200] sm:$0xff]
        %v9195 = vld [vmem:[%s356 + $0x208] sm:$0xff]
        %v9196 = vld [vmem:[%s356 + $0x210] sm:$0xff]
        %v9197 = vld [vmem:[%s356 + $0x218] sm:$0xff]
        %v9198 = vld [vmem:[%s356 + $0x220] sm:$0xff]
        %v9199 = vld [vmem:[%s356 + $0x228] sm:$0xff]
        %v9200 = vld [vmem:[%s356 + $0x230] sm:$0xff]
        %v9201 = vld [vmem:[%s356 + $0x238] sm:$0xff]
        %v9202 = vld [vmem:[%s356 + $0x240] sm:$0xff]
        %v9203 = vld [vmem:[%s356 + $0x248] sm:$0xff]
        %v9204 = vld [vmem:[%s356 + $0x250] sm:$0xff]
        %v9205 = vld [vmem:[%s356 + $0x258] sm:$0xff]
        %v9206 = vld [vmem:[%s356 + $0x260] sm:$0xff]
        %v9207 = vld [vmem:[%s356 + $0x268] sm:$0xff]
        %v9208 = vld [vmem:[%s356 + $0x270] sm:$0xff]
        %v9209 = vld [vmem:[%s356 + $0x278] sm:$0xff]
        %v9210 = vld [vmem:[%s356 + $0x280] sm:$0xff]
        %v9211 = vld [vmem:[%s356 + $0x288] sm:$0xff]
        %v9212 = vld [vmem:[%s356 + $0x290] sm:$0xff]
        %v9213 = vld [vmem:[%s356 + $0x298] sm:$0xff]
        %v9214 = vld [vmem:[%s356 + $0x2a0] sm:$0xff]
        %v9215 = vld [vmem:[%s356 + $0x2a8] sm:$0xff]
        %v9216 = vld [vmem:[%s356 + $0x2b0] sm:$0xff]
        %v9217 = vld [vmem:[%s356 + $0x2b8] sm:$0xff]
        %v9218 = vld [vmem:[%s356 + $0x2c0] sm:$0xff]
        %v9219 = vld [vmem:[%s356 + $0x2c8] sm:$0xff]
        %v9220 = vld [vmem:[%s356 + $0x2d0] sm:$0xff]
        %v9221 = vld [vmem:[%s356 + $0x2d8] sm:$0xff]
        %v9222 = vld [vmem:[%s356 + $0x2e0] sm:$0xff]
        %v9223 = vld [vmem:[%s356 + $0x2e8] sm:$0xff]
        %v9224 = vld [vmem:[%s356 + $0x2f0] sm:$0xff]
        %v9225 = vld [vmem:[%s356 + $0x2f8] sm:$0xff]
        %v9226 = vld [vmem:[%s356 + $0x300] sm:$0xff]
        %v9227 = vld [vmem:[%s356 + $0x308] sm:$0xff]
        %v9228 = vld [vmem:[%s356 + $0x310] sm:$0xff]
        %v9229 = vld [vmem:[%s356 + $0x318] sm:$0xff]
        %v9230 = vld [vmem:[%s356 + $0x320] sm:$0xff]
        %v9231 = vld [vmem:[%s356 + $0x328] sm:$0xff]
        %v9232 = vld [vmem:[%s356 + $0x330] sm:$0xff]
        %v9233 = vld [vmem:[%s356 + $0x338] sm:$0xff]
        %v9234 = vld [vmem:[%s356 + $0x340] sm:$0xff]
        %v9235 = vld [vmem:[%s356 + $0x348] sm:$0xff]
        %v9236 = vld [vmem:[%s356 + $0x350] sm:$0xff]
        %v9237 = vld [vmem:[%s356 + $0x358] sm:$0xff]
        %v9238 = vld [vmem:[%s356 + $0x360] sm:$0xff]
        %v9239 = vld [vmem:[%s356 + $0x368] sm:$0xff]
        %v9240 = vld [vmem:[%s356 + $0x370] sm:$0xff]
        %v9241 = vld [vmem:[%s356 + $0x378] sm:$0xff]
        %v9242 = vld [vmem:[%s356 + $0x380] sm:$0xff]
        %v9243 = vld [vmem:[%s356 + $0x388] sm:$0xff]
        %v9244 = vld [vmem:[%s356 + $0x390] sm:$0xff]
        %v9245 = vld [vmem:[%s356 + $0x398] sm:$0xff]
        %v9246 = vld [vmem:[%s356 + $0x3a0] sm:$0xff]
        %v9247 = vld [vmem:[%s356 + $0x3a8] sm:$0xff]
        %v9248 = vld [vmem:[%s356 + $0x3b0] sm:$0xff]
        %v9249 = vld [vmem:[%s356 + $0x3b8] sm:$0xff]
        %v9250 = vld [vmem:[%s356 + $0x3c0] sm:$0xff]
        %v9251 = vld [vmem:[%s356 + $0x3c8] sm:$0xff]
        %v9252 = vld [vmem:[%s356 + $0x3d0] sm:$0xff]
        %v9253 = vld [vmem:[%s356 + $0x3d8] sm:$0xff]
        %v9254 = vld [vmem:[%s356 + $0x3e0] sm:$0xff]
        %v9255 = vld [vmem:[%s356 + $0x3e8] sm:$0xff]
        %v9256 = vld [vmem:[%s356 + $0x3f0] sm:$0xff]
        %v9257 = vld [vmem:[%s356 + $0x3f8] sm:$0xff]
        %v9258 = vld [vmem:[%s356 + $0x400] sm:$0xff]
        %v9259 = vld [vmem:[%s356 + $0x408] sm:$0xff]
        %v9260 = vld [vmem:[%s356 + $0x410] sm:$0xff]
        %v9261 = vld [vmem:[%s356 + $0x418] sm:$0xff]
        %v9262 = vld [vmem:[%s356 + $0x420] sm:$0xff]
        %v9263 = vld [vmem:[%s356 + $0x428] sm:$0xff]
        %v9264 = vld [vmem:[%s356 + $0x430] sm:$0xff]
        %v9265 = vld [vmem:[%s356 + $0x438] sm:$0xff]
        %v9266 = vld [vmem:[%s356 + $0x440] sm:$0xff]
        %v9267 = vld [vmem:[%s356 + $0x448] sm:$0xff]
        %v9268 = vld [vmem:[%s356 + $0x450] sm:$0xff]
        %v9269 = vld [vmem:[%s356 + $0x458] sm:$0xff]
        %v9270 = vld [vmem:[%s356 + $0x460] sm:$0xff]
        %v9271 = vld [vmem:[%s356 + $0x468] sm:$0xff]
        %v9272 = vld [vmem:[%s356 + $0x470] sm:$0xff]
        %v9273 = vld [vmem:[%s356 + $0x478] sm:$0xff]
        %v9274 = vld [vmem:[%s356 + $0x480] sm:$0xff]
        %v9275 = vld [vmem:[%s356 + $0x488] sm:$0xff]
        %v9276 = vld [vmem:[%s356 + $0x490] sm:$0xff]
        %v9277 = vld [vmem:[%s356 + $0x498] sm:$0xff]
        %v9278 = vld [vmem:[%s356 + $0x4a0] sm:$0xff]
        %v9279 = vld [vmem:[%s356 + $0x4a8] sm:$0xff]
        %v9280 = vld [vmem:[%s356 + $0x4b0] sm:$0xff]
        %v9281 = vld [vmem:[%s356 + $0x4b8] sm:$0xff]
        %v9282 = vld [vmem:[%s356 + $0x4c0] sm:$0xff]
        %v9283 = vld [vmem:[%s356 + $0x4c8] sm:$0xff]
        %v9284 = vld [vmem:[%s356 + $0x4d0] sm:$0xff]
        %v9285 = vld [vmem:[%s356 + $0x4d8] sm:$0xff]
        %v9286 = vld [vmem:[%s356 + $0x4e0] sm:$0xff]
        %v9287 = vld [vmem:[%s356 + $0x4e8] sm:$0xff]
        %v9288 = vld [vmem:[%s356 + $0x4f0] sm:$0xff]
        %v9289 = vld [vmem:[%s356 + $0x4f8] sm:$0xff]
        %v9290 = vld [vmem:[%s356 + $0x500] sm:$0xff]
        %v9291 = vld [vmem:[%s356 + $0x508] sm:$0xff]
        %v9292 = vld [vmem:[%s356 + $0x510] sm:$0xff]
        %v9293 = vld [vmem:[%s356 + $0x518] sm:$0xff]
        %v9294 = vld [vmem:[%s356 + $0x520] sm:$0xff]
        %v9295 = vld [vmem:[%s356 + $0x528] sm:$0xff]
        %v9296 = vld [vmem:[%s356 + $0x530] sm:$0xff]
        %v9297 = vld [vmem:[%s356 + $0x538] sm:$0xff]
        %v9298 = vld [vmem:[%s356 + $0x540] sm:$0xff]
        %v9299 = vld [vmem:[%s356 + $0x548] sm:$0xff]
        %v9300 = vld [vmem:[%s356 + $0x550] sm:$0xff]
        %v9301 = vld [vmem:[%s356 + $0x558] sm:$0xff]
        %v9302 = vld [vmem:[%s356 + $0x560] sm:$0xff]
        %v9303 = vld [vmem:[%s356 + $0x568] sm:$0xff]
        %v9304 = vld [vmem:[%s356 + $0x570] sm:$0xff]
        %v9305 = vld [vmem:[%s356 + $0x578] sm:$0xff]
        %v9306 = vld [vmem:[%s356 + $0x580] sm:$0xff]
        %v9307 = vld [vmem:[%s356 + $0x588] sm:$0xff]
        %v9308 = vld [vmem:[%s356 + $0x590] sm:$0xff]
        %v9309 = vld [vmem:[%s356 + $0x598] sm:$0xff]
        %v9310 = vld [vmem:[%s356 + $0x5a0] sm:$0xff]
        %v9311 = vld [vmem:[%s356 + $0x5a8] sm:$0xff]
        %v9312 = vld [vmem:[%s356 + $0x5b0] sm:$0xff]
        %v9313 = vld [vmem:[%s356 + $0x5b8] sm:$0xff]
        %v9314 = vld [vmem:[%s356 + $0x5c0] sm:$0xff]
        %v9315 = vld [vmem:[%s356 + $0x5c8] sm:$0xff]
        %v9316 = vld [vmem:[%s356 + $0x5d0] sm:$0xff]
        %v9317 = vld [vmem:[%s356 + $0x5d8] sm:$0xff]
        %v9318 = vld [vmem:[%s356 + $0x5e0] sm:$0xff]
        %v9319 = vld [vmem:[%s356 + $0x5e8] sm:$0xff]
        %v9320 = vld [vmem:[%s356 + $0x5f0] sm:$0xff]
        %v9321 = vld [vmem:[%s356 + $0x5f8] sm:$0xff]
        %v9322 = vld [vmem:[%s356 + $0x600] sm:$0xff]
        %v9323 = vld [vmem:[%s356 + $0x608] sm:$0xff]
        %v9324 = vld [vmem:[%s356 + $0x610] sm:$0xff]
        %v9325 = vld [vmem:[%s356 + $0x618] sm:$0xff]
        %v9326 = vld [vmem:[%s356 + $0x620] sm:$0xff]
        %v9327 = vld [vmem:[%s356 + $0x628] sm:$0xff]
        %v9328 = vld [vmem:[%s356 + $0x630] sm:$0xff]
        %v9329 = vld [vmem:[%s356 + $0x638] sm:$0xff]
        %v9330 = vld [vmem:[%s356 + $0x640] sm:$0xff]
        %v9331 = vld [vmem:[%s356 + $0x648] sm:$0xff]
        %v9332 = vld [vmem:[%s356 + $0x650] sm:$0xff]
        %v9333 = vld [vmem:[%s356 + $0x658] sm:$0xff]
        %v9334 = vld [vmem:[%s356 + $0x660] sm:$0xff]
        %v9335 = vld [vmem:[%s356 + $0x668] sm:$0xff]
        %v9336 = vld [vmem:[%s356 + $0x670] sm:$0xff]
        %v9337 = vld [vmem:[%s356 + $0x678] sm:$0xff]
        %v9338 = vld [vmem:[%s356 + $0x680] sm:$0xff]
        %v9339 = vld [vmem:[%s356 + $0x688] sm:$0xff]
        %v9340 = vld [vmem:[%s356 + $0x690] sm:$0xff]
        %v9341 = vld [vmem:[%s356 + $0x698] sm:$0xff]
        %v9342 = vld [vmem:[%s356 + $0x6a0] sm:$0xff]
        %v9343 = vld [vmem:[%s356 + $0x6a8] sm:$0xff]
        %v9344 = vld [vmem:[%s356 + $0x6b0] sm:$0xff]
        %v9345 = vld [vmem:[%s356 + $0x6b8] sm:$0xff]
        %v9346 = vld [vmem:[%s356 + $0x6c0] sm:$0xff]
        %v9347 = vld [vmem:[%s356 + $0x6c8] sm:$0xff]
        %v9348 = vld [vmem:[%s356 + $0x6d0] sm:$0xff]
        %v9349 = vld [vmem:[%s356 + $0x6d8] sm:$0xff]
        %v9350 = vld [vmem:[%s356 + $0x6e0] sm:$0xff]
        %v9351 = vld [vmem:[%s356 + $0x6e8] sm:$0xff]
        %v9352 = vld [vmem:[%s356 + $0x6f0] sm:$0xff]
        %v9353 = vld [vmem:[%s356 + $0x6f8] sm:$0xff]
        %v9354 = vld [vmem:[%s356 + $0x700] sm:$0xff]
        %v9355 = vld [vmem:[%s356 + $0x708] sm:$0xff]
        %v9356 = vld [vmem:[%s356 + $0x710] sm:$0xff]
        %v9357 = vld [vmem:[%s356 + $0x718] sm:$0xff]
        %v9358 = vld [vmem:[%s356 + $0x720] sm:$0xff]
        %v9359 = vld [vmem:[%s356 + $0x728] sm:$0xff]
        %v9360 = vld [vmem:[%s356 + $0x730] sm:$0xff]
        %v9361 = vld [vmem:[%s356 + $0x738] sm:$0xff]
        %v9362 = vld [vmem:[%s356 + $0x740] sm:$0xff]
        %v9363 = vld [vmem:[%s356 + $0x748] sm:$0xff]
        %v9364 = vld [vmem:[%s356 + $0x750] sm:$0xff]
        %v9365 = vld [vmem:[%s356 + $0x758] sm:$0xff]
        %v9366 = vld [vmem:[%s356 + $0x760] sm:$0xff]
        %v9367 = vld [vmem:[%s356 + $0x768] sm:$0xff]
        %v9368 = vld [vmem:[%s356 + $0x770] sm:$0xff]
        %v9369 = vld [vmem:[%s356 + $0x778] sm:$0xff]
        %v9370 = vld [vmem:[%s356 + $0x780] sm:$0xff]
        %v9371 = vld [vmem:[%s356 + $0x788] sm:$0xff]
        %v9372 = vld [vmem:[%s356 + $0x790] sm:$0xff]
        %v9373 = vld [vmem:[%s356 + $0x798] sm:$0xff]
        %v9374 = vld [vmem:[%s356 + $0x7a0] sm:$0xff]
        %v9375 = vld [vmem:[%s356 + $0x7a8] sm:$0xff]
        %v9376 = vld [vmem:[%s356 + $0x7b0] sm:$0xff]
        %v9377 = vld [vmem:[%s356 + $0x7b8] sm:$0xff]
        %v9378 = vld [vmem:[%s356 + $0x7c0] sm:$0xff]
        %v9379 = vld [vmem:[%s356 + $0x7c8] sm:$0xff]
        %v9380 = vld [vmem:[%s356 + $0x7d0] sm:$0xff]
        %v9381 = vld [vmem:[%s356 + $0x7d8] sm:$0xff]
        %v9382 = vld [vmem:[%s356 + $0x7e0] sm:$0xff]
        %v9383 = vld [vmem:[%s356 + $0x7e8] sm:$0xff]
        %v9384 = vld [vmem:[%s356 + $0x7f0] sm:$0xff]
        %v9385 = vld [vmem:[%s356 + $0x7f8] sm:$0xff]
        %v9386 = vld [vmem:[%s356 + $0x800] sm:$0xff]
        %v9387 = vld [vmem:[%s356 + $0x808] sm:$0xff]
        %v9388 = vld [vmem:[%s356 + $0x810] sm:$0xff]
        %v9389 = vld [vmem:[%s356 + $0x818] sm:$0xff]
        %v9390 = vld [vmem:[%s356 + $0x820] sm:$0xff]
        %v9391 = vld [vmem:[%s356 + $0x828] sm:$0xff]
        %v9392 = vld [vmem:[%s356 + $0x830] sm:$0xff]
        %v9393 = vld [vmem:[%s356 + $0x838] sm:$0xff]
        %v9394 = vld [vmem:[%s356 + $0x840] sm:$0xff]
        %v9395 = vld [vmem:[%s356 + $0x848] sm:$0xff]
        %v9396 = vld [vmem:[%s356 + $0x850] sm:$0xff]
        %v9397 = vld [vmem:[%s356 + $0x858] sm:$0xff]
        %v9398 = vld [vmem:[%s356 + $0x860] sm:$0xff]
        %v9399 = vld [vmem:[%s356 + $0x868] sm:$0xff]
        %v9400 = vld [vmem:[%s356 + $0x870] sm:$0xff]
        %v9401 = vld [vmem:[%s356 + $0x878] sm:$0xff]
        %v9402 = vld [vmem:[%s356 + $0x880] sm:$0xff]
        %v9403 = vld [vmem:[%s356 + $0x888] sm:$0xff]
        %v9404 = vld [vmem:[%s356 + $0x890] sm:$0xff]
        %v9405 = vld [vmem:[%s356 + $0x898] sm:$0xff]
        %v9406 = vld [vmem:[%s356 + $0x8a0] sm:$0xff]
        %v9407 = vld [vmem:[%s356 + $0x8a8] sm:$0xff]
        %v9408 = vld [vmem:[%s356 + $0x8b0] sm:$0xff]
        %v9409 = vld [vmem:[%s356 + $0x8b8] sm:$0xff]
        %v9410 = vld [vmem:[%s356 + $0x8c0] sm:$0xff]
        %v9411 = vld [vmem:[%s356 + $0x8c8] sm:$0xff]
        %v9412 = vld [vmem:[%s356 + $0x8d0] sm:$0xff]
        %v9413 = vld [vmem:[%s356 + $0x8d8] sm:$0xff]
        %v9414 = vld [vmem:[%s356 + $0x8e0] sm:$0xff]
        %v9415 = vld [vmem:[%s356 + $0x8e8] sm:$0xff]
        %v9416 = vld [vmem:[%s356 + $0x8f0] sm:$0xff]
        %v9417 = vld [vmem:[%s356 + $0x8f8] sm:$0xff]
        %v9418 = vld [vmem:[%s356 + $0x900] sm:$0xff]
        %v9419 = vld [vmem:[%s356 + $0x908] sm:$0xff]
        %v9420 = vld [vmem:[%s356 + $0x910] sm:$0xff]
        %v9421 = vld [vmem:[%s356 + $0x918] sm:$0xff]
        %v9422 = vld [vmem:[%s356 + $0x920] sm:$0xff]
        %v9423 = vld [vmem:[%s356 + $0x928] sm:$0xff]
        %v9424 = vld [vmem:[%s356 + $0x930] sm:$0xff]
        %v9425 = vld [vmem:[%s356 + $0x938] sm:$0xff]
        %v9426 = vld [vmem:[%s356 + $0x940] sm:$0xff]
        %v9427 = vld [vmem:[%s356 + $0x948] sm:$0xff]
        %v9428 = vld [vmem:[%s356 + $0x950] sm:$0xff]
        %v9429 = vld [vmem:[%s356 + $0x958] sm:$0xff]
        %v9430 = vld [vmem:[%s356 + $0x960] sm:$0xff]
        %v9431 = vld [vmem:[%s356 + $0x968] sm:$0xff]
        %v9432 = vld [vmem:[%s356 + $0x970] sm:$0xff]
        %v9433 = vld [vmem:[%s356 + $0x978] sm:$0xff]
        %v9434 = vld [vmem:[%s356 + $0x980] sm:$0xff]
        %v9435 = vld [vmem:[%s356 + $0x988] sm:$0xff]
        %v9436 = vld [vmem:[%s356 + $0x990] sm:$0xff]
        %v9437 = vld [vmem:[%s356 + $0x998] sm:$0xff]
        %v9438 = vld [vmem:[%s356 + $0x9a0] sm:$0xff]
        %v9439 = vld [vmem:[%s356 + $0x9a8] sm:$0xff]
        %v9440 = vld [vmem:[%s356 + $0x9b0] sm:$0xff]
        %v9441 = vld [vmem:[%s356 + $0x9b8] sm:$0xff]
        %v9442 = vld [vmem:[%s356 + $0x9c0] sm:$0xff]
        %v9443 = vld [vmem:[%s356 + $0x9c8] sm:$0xff]
        %v9444 = vld [vmem:[%s356 + $0x9d0] sm:$0xff]
        %v9445 = vld [vmem:[%s356 + $0x9d8] sm:$0xff]
        %v9446 = vld [vmem:[%s356 + $0x9e0] sm:$0xff]
        %v9447 = vld [vmem:[%s356 + $0x9e8] sm:$0xff]
        %v9448 = vld [vmem:[%s356 + $0x9f0] sm:$0xff]
        %v9449 = vld [vmem:[%s356 + $0x9f8] sm:$0xff]
        %v9450 = vld [vmem:[%s356 + $0xa00] sm:$0xff]
        %v9451 = vld [vmem:[%s356 + $0xa08] sm:$0xff]
        %v9452 = vld [vmem:[%s356 + $0xa10] sm:$0xff]
        %v9453 = vld [vmem:[%s356 + $0xa18] sm:$0xff]
        %v9454 = vld [vmem:[%s356 + $0xa20] sm:$0xff]
        %v9455 = vld [vmem:[%s356 + $0xa28] sm:$0xff]
        %v9456 = vld [vmem:[%s356 + $0xa30] sm:$0xff]
        %v9457 = vld [vmem:[%s356 + $0xa38] sm:$0xff]
        %v9458 = vld [vmem:[%s356 + $0xa40] sm:$0xff]
        %v9459 = vld [vmem:[%s356 + $0xa48] sm:$0xff]
        %v9460 = vld [vmem:[%s356 + $0xa50] sm:$0xff]
        %v9461 = vld [vmem:[%s356 + $0xa58] sm:$0xff]
        %v9462 = vld [vmem:[%s356 + $0xa60] sm:$0xff]
        %v9463 = vld [vmem:[%s356 + $0xa68] sm:$0xff]
        %v9464 = vld [vmem:[%s356 + $0xa70] sm:$0xff]
        %v9465 = vld [vmem:[%s356 + $0xa78] sm:$0xff]
        %v9466 = vld [vmem:[%s356 + $0xa80] sm:$0xff]
        %v9467 = vld [vmem:[%s356 + $0xa88] sm:$0xff]
        %v9468 = vld [vmem:[%s356 + $0xa90] sm:$0xff]
        %v9469 = vld [vmem:[%s356 + $0xa98] sm:$0xff]
        %v9470 = vld [vmem:[%s356 + $0xaa0] sm:$0xff]
        %v9471 = vld [vmem:[%s356 + $0xaa8] sm:$0xff]
        %v9472 = vld [vmem:[%s356 + $0xab0] sm:$0xff]
        %v9473 = vld [vmem:[%s356 + $0xab8] sm:$0xff]
        %v9474 = vld [vmem:[%s356 + $0xac0] sm:$0xff]
        %v9475 = vld [vmem:[%s356 + $0xac8] sm:$0xff]
        %v9476 = vld [vmem:[%s356 + $0xad0] sm:$0xff]
        %v9477 = vld [vmem:[%s356 + $0xad8] sm:$0xff]
        %v9478 = vld [vmem:[%s356 + $0xae0] sm:$0xff]
        %v9479 = vld [vmem:[%s356 + $0xae8] sm:$0xff]
        %v9480 = vld [vmem:[%s356 + $0xaf0] sm:$0xff]
        %v9481 = vld [vmem:[%s356 + $0xaf8] sm:$0xff]
        %v9482 = vld [vmem:[%s356 + $0xb00] sm:$0xff]
        %v9483 = vld [vmem:[%s356 + $0xb08] sm:$0xff]
        %v9484 = vld [vmem:[%s356 + $0xb10] sm:$0xff]
        %v9485 = vld [vmem:[%s356 + $0xb18] sm:$0xff]
        %v9486 = vld [vmem:[%s356 + $0xb20] sm:$0xff]
        %v9487 = vld [vmem:[%s356 + $0xb28] sm:$0xff]
        %v9488 = vld [vmem:[%s356 + $0xb30] sm:$0xff]
        %v9489 = vld [vmem:[%s356 + $0xb38] sm:$0xff]
        %v9490 = vld [vmem:[%s356 + $0xb40] sm:$0xff]
        %v9491 = vld [vmem:[%s356 + $0xb48] sm:$0xff]
        %v9492 = vld [vmem:[%s356 + $0xb50] sm:$0xff]
        %v9493 = vld [vmem:[%s356 + $0xb58] sm:$0xff]
        %v9494 = vld [vmem:[%s356 + $0xb60] sm:$0xff]
        %v9495 = vld [vmem:[%s356 + $0xb68] sm:$0xff]
        %v9496 = vld [vmem:[%s356 + $0xb70] sm:$0xff]
        %v9497 = vld [vmem:[%s356 + $0xb78] sm:$0xff]
        %v9498 = vld [vmem:[%s356 + $0xb80] sm:$0xff]
        %v9499 = vld [vmem:[%s356 + $0xb88] sm:$0xff]
        %v9500 = vld [vmem:[%s356 + $0xb90] sm:$0xff]
        %v9501 = vld [vmem:[%s356 + $0xb98] sm:$0xff]
        %v9502 = vld [vmem:[%s356 + $0xba0] sm:$0xff]
        %v9503 = vld [vmem:[%s356 + $0xba8] sm:$0xff]
        %v9504 = vld [vmem:[%s356 + $0xbb0] sm:$0xff]
        %v9505 = vld [vmem:[%s356 + $0xbb8] sm:$0xff]
        %v9506 = vld [vmem:[%s356 + $0xbc0] sm:$0xff]
        %v9507 = vld [vmem:[%s356 + $0xbc8] sm:$0xff]
        %v9508 = vld [vmem:[%s356 + $0xbd0] sm:$0xff]
        %v9509 = vld [vmem:[%s356 + $0xbd8] sm:$0xff]
        %v9510 = vld [vmem:[%s356 + $0xbe0] sm:$0xff]
        %v9511 = vld [vmem:[%s356 + $0xbe8] sm:$0xff]
        %v9512 = vld [vmem:[%s356 + $0xbf0] sm:$0xff]
        %v9513 = vld [vmem:[%s356 + $0xbf8] sm:$0xff]
        %v9514 = vld [vmem:[%s356 + $0xc00] sm:$0xff]
        %v9515 = vld [vmem:[%s356 + $0xc08] sm:$0xff]
        %v9516 = vld [vmem:[%s356 + $0xc10] sm:$0xff]
        %v9517 = vld [vmem:[%s356 + $0xc18] sm:$0xff]
        %v9518 = vld [vmem:[%s356 + $0xc20] sm:$0xff]
        %v9519 = vld [vmem:[%s356 + $0xc28] sm:$0xff]
        %v9520 = vld [vmem:[%s356 + $0xc30] sm:$0xff]
        %v9521 = vld [vmem:[%s356 + $0xc38] sm:$0xff]
        %v9522 = vld [vmem:[%s356 + $0xc40] sm:$0xff]
        %v9523 = vld [vmem:[%s356 + $0xc48] sm:$0xff]
        %v9524 = vld [vmem:[%s356 + $0xc50] sm:$0xff]
        %v9525 = vld [vmem:[%s356 + $0xc58] sm:$0xff]
        %v9526 = vld [vmem:[%s356 + $0xc60] sm:$0xff]
        %v9527 = vld [vmem:[%s356 + $0xc68] sm:$0xff]
        %v9528 = vld [vmem:[%s356 + $0xc70] sm:$0xff]
        %v9529 = vld [vmem:[%s356 + $0xc78] sm:$0xff]
        %v9530 = vld [vmem:[%s356 + $0xc80] sm:$0xff]
        %v9531 = vld [vmem:[%s356 + $0xc88] sm:$0xff]
        %v9532 = vld [vmem:[%s356 + $0xc90] sm:$0xff]
        %v9533 = vld [vmem:[%s356 + $0xc98] sm:$0xff]
        %v9534 = vld [vmem:[%s356 + $0xca0] sm:$0xff]
        %v9535 = vld [vmem:[%s356 + $0xca8] sm:$0xff]
        %v9536 = vld [vmem:[%s356 + $0xcb0] sm:$0xff]
        %v9537 = vld [vmem:[%s356 + $0xcb8] sm:$0xff]
        %v9538 = vld [vmem:[%s356 + $0xcc0] sm:$0xff]
        %v9539 = vld [vmem:[%s356 + $0xcc8] sm:$0xff]
        %v9540 = vld [vmem:[%s356 + $0xcd0] sm:$0xff]
        %v9541 = vld [vmem:[%s356 + $0xcd8] sm:$0xff]
        %v9542 = vld [vmem:[%s356 + $0xce0] sm:$0xff]
        %v9543 = vld [vmem:[%s356 + $0xce8] sm:$0xff]
        %v9544 = vld [vmem:[%s356 + $0xcf0] sm:$0xff]
        %v9545 = vld [vmem:[%s356 + $0xcf8] sm:$0xff]
        %v9546 = vld [vmem:[%s356 + $0xd00] sm:$0xff]
        %v9547 = vld [vmem:[%s356 + $0xd08] sm:$0xff]
        %v9548 = vld [vmem:[%s356 + $0xd10] sm:$0xff]
        %v9549 = vld [vmem:[%s356 + $0xd18] sm:$0xff]
        %v9550 = vld [vmem:[%s356 + $0xd20] sm:$0xff]
        %v9551 = vld [vmem:[%s356 + $0xd28] sm:$0xff]
        %v9552 = vld [vmem:[%s356 + $0xd30] sm:$0xff]
        %v9553 = vld [vmem:[%s356 + $0xd38] sm:$0xff]
        %v9554 = vld [vmem:[%s356 + $0xd40] sm:$0xff]
        %v9555 = vld [vmem:[%s356 + $0xd48] sm:$0xff]
        %v9556 = vld [vmem:[%s356 + $0xd50] sm:$0xff]
        %v9557 = vld [vmem:[%s356 + $0xd58] sm:$0xff]
        %v9558 = vld [vmem:[%s356 + $0xd60] sm:$0xff]
        %v9559 = vld [vmem:[%s356 + $0xd68] sm:$0xff]
        %v9560 = vld [vmem:[%s356 + $0xd70] sm:$0xff]
        %v9561 = vld [vmem:[%s356 + $0xd78] sm:$0xff]
        %v9562 = vld [vmem:[%s356 + $0xd80] sm:$0xff]
        %v9563 = vld [vmem:[%s356 + $0xd88] sm:$0xff]
        %v9564 = vld [vmem:[%s356 + $0xd90] sm:$0xff]
        %v9565 = vld [vmem:[%s356 + $0xd98] sm:$0xff]
        %v9566 = vld [vmem:[%s356 + $0xda0] sm:$0xff]
        %v9567 = vld [vmem:[%s356 + $0xda8] sm:$0xff]
        %v9568 = vld [vmem:[%s356 + $0xdb0] sm:$0xff]
        %v9569 = vld [vmem:[%s356 + $0xdb8] sm:$0xff]
        %v9570 = vld [vmem:[%s356 + $0xdc0] sm:$0xff]
        %v9571 = vld [vmem:[%s356 + $0xdc8] sm:$0xff]
        %v9572 = vld [vmem:[%s356 + $0xdd0] sm:$0xff]
        %v9573 = vld [vmem:[%s356 + $0xdd8] sm:$0xff]
        %v9574 = vld [vmem:[%s356 + $0xde0] sm:$0xff]
        %v9575 = vld [vmem:[%s356 + $0xde8] sm:$0xff]
        %v9576 = vld [vmem:[%s356 + $0xdf0] sm:$0xff]
        %v9577 = vld [vmem:[%s356 + $0xdf8] sm:$0xff]
        %v9578 = vld [vmem:[%s356 + $0xe00] sm:$0xff]
        %v9579 = vld [vmem:[%s356 + $0xe08] sm:$0xff]
        %v9580 = vld [vmem:[%s356 + $0xe10] sm:$0xff]
        %v9581 = vld [vmem:[%s356 + $0xe18] sm:$0xff]
        %v9582 = vld [vmem:[%s356 + $0xe20] sm:$0xff]
        %v9583 = vld [vmem:[%s356 + $0xe28] sm:$0xff]
        %v9584 = vld [vmem:[%s356 + $0xe30] sm:$0xff]
        %v9585 = vld [vmem:[%s356 + $0xe38] sm:$0xff]
        %v9586 = vld [vmem:[%s356 + $0xe40] sm:$0xff]
        %v9587 = vld [vmem:[%s356 + $0xe48] sm:$0xff]
        %v9588 = vld [vmem:[%s356 + $0xe50] sm:$0xff]
        %v9589 = vld [vmem:[%s356 + $0xe58] sm:$0xff]
        %v9590 = vld [vmem:[%s356 + $0xe60] sm:$0xff]
        %v9591 = vld [vmem:[%s356 + $0xe68] sm:$0xff]
        %v9592 = vld [vmem:[%s356 + $0xe70] sm:$0xff]
        %v9593 = vld [vmem:[%s356 + $0xe78] sm:$0xff]
        %v9594 = vld [vmem:[%s356 + $0xe80] sm:$0xff]
        %v9595 = vld [vmem:[%s356 + $0xe88] sm:$0xff]
        %v9596 = vld [vmem:[%s356 + $0xe90] sm:$0xff]
        %v9597 = vld [vmem:[%s356 + $0xe98] sm:$0xff]
        %v9598 = vld [vmem:[%s356 + $0xea0] sm:$0xff]
        %v9599 = vld [vmem:[%s356 + $0xea8] sm:$0xff]
        %v9600 = vld [vmem:[%s356 + $0xeb0] sm:$0xff]
        %v9601 = vld [vmem:[%s356 + $0xeb8] sm:$0xff]
        %v9602 = vld [vmem:[%s356 + $0xec0] sm:$0xff]
        %v9603 = vld [vmem:[%s356 + $0xec8] sm:$0xff]
        %v9604 = vld [vmem:[%s356 + $0xed0] sm:$0xff]
        %v9605 = vld [vmem:[%s356 + $0xed8] sm:$0xff]
        %v9606 = vld [vmem:[%s356 + $0xee0] sm:$0xff]
        %v9607 = vld [vmem:[%s356 + $0xee8] sm:$0xff]
        %v9608 = vld [vmem:[%s356 + $0xef0] sm:$0xff]
        %v9609 = vld [vmem:[%s356 + $0xef8] sm:$0xff]
        %v9610 = vld [vmem:[%s356 + $0xf00] sm:$0xff]
        %v9611 = vld [vmem:[%s356 + $0xf08] sm:$0xff]
        %v9612 = vld [vmem:[%s356 + $0xf10] sm:$0xff]
        %v9613 = vld [vmem:[%s356 + $0xf18] sm:$0xff]
        %v9614 = vld [vmem:[%s356 + $0xf20] sm:$0xff]
        %v9615 = vld [vmem:[%s356 + $0xf28] sm:$0xff]
        %v9616 = vld [vmem:[%s356 + $0xf30] sm:$0xff]
        %v9617 = vld [vmem:[%s356 + $0xf38] sm:$0xff]
        %v9618 = vld [vmem:[%s356 + $0xf40] sm:$0xff]
        %v9619 = vld [vmem:[%s356 + $0xf48] sm:$0xff]
        %v9620 = vld [vmem:[%s356 + $0xf50] sm:$0xff]
        %v9621 = vld [vmem:[%s356 + $0xf58] sm:$0xff]
        %v9622 = vld [vmem:[%s356 + $0xf60] sm:$0xff]
        %v9623 = vld [vmem:[%s356 + $0xf68] sm:$0xff]
        %v9624 = vld [vmem:[%s356 + $0xf70] sm:$0xff]
        %v9625 = vld [vmem:[%s356 + $0xf78] sm:$0xff]
        %v9626 = vld [vmem:[%s356 + $0xf80] sm:$0xff]
        %v9627 = vld [vmem:[%s356 + $0xf88] sm:$0xff]
        %v9628 = vld [vmem:[%s356 + $0xf90] sm:$0xff]
        %v9629 = vld [vmem:[%s356 + $0xf98] sm:$0xff]
        %v9630 = vld [vmem:[%s356 + $0xfa0] sm:$0xff]
        %v9631 = vld [vmem:[%s356 + $0xfa8] sm:$0xff]
        %v9632 = vld [vmem:[%s356 + $0xfb0] sm:$0xff]
        %v9633 = vld [vmem:[%s356 + $0xfb8] sm:$0xff]
        %v9634 = vld [vmem:[%s356 + $0xfc0] sm:$0xff]
        %v9635 = vld [vmem:[%s356 + $0xfc8] sm:$0xff]
        %v9636 = vld [vmem:[%s356 + $0xfd0] sm:$0xff]
        %v9637 = vld [vmem:[%s356 + $0xfd8] sm:$0xff]
        %v9638 = vld [vmem:[%s356 + $0xfe0] sm:$0xff]
        %v9639 = vld [vmem:[%s356 + $0xfe8] sm:$0xff]
        %v9640 = vld [vmem:[%s356 + $0xff0] sm:$0xff]
        %v9641 = vld [vmem:[%s356 + $0xff8] sm:$0xff]
        %v9643 = vlaneseq
        %v9644 = vshrl.u32 %v9643, 7
        %v9645 = vsub.s32 0, %v9644
        %v9646 = vrot.slane %v439, %v9645
        %v9647 = vlaneseq
        %v9648 = vshrl.u32 %v9647, 7
        %v9649 = vsub.s32 1, %v9648
        %v9650 = vrot.slane %v439, %v9649
        %v9651 = vlaneseq
        %v9652 = vshrl.u32 %v9651, 7
        %v9653 = vsub.s32 2, %v9652
        %v9654 = vrot.slane %v439, %v9653
        %v9655 = vlaneseq
        %v9656 = vshrl.u32 %v9655, 7
        %v9657 = vsub.s32 3, %v9656
        %v9658 = vrot.slane %v439, %v9657
        %v10175 = vunpack.c.l.b16 %v9130
        %v10176 = vunpack.c.h.b16 %v9130
        %v10177 = vunpack.c.l.b16 %v9131
        %v10178 = vunpack.c.h.b16 %v9131
        %v10179 = vunpack.c.l.b16 %v9132
        %v10180 = vunpack.c.h.b16 %v9132
        %v10181 = vunpack.c.l.b16 %v9133
        %v10182 = vunpack.c.h.b16 %v9133
        %v10183 = vunpack.c.l.b16 %v9134
        %v10184 = vunpack.c.h.b16 %v9134
        %v10185 = vunpack.c.l.b16 %v9135
        %v10186 = vunpack.c.h.b16 %v9135
        %v10187 = vunpack.c.l.b16 %v9136
        %v10188 = vunpack.c.h.b16 %v9136
        %v10189 = vunpack.c.l.b16 %v9137
        %v10190 = vunpack.c.h.b16 %v9137
        %v10191 = vunpack.c.l.b16 %v9138
        %v10192 = vunpack.c.h.b16 %v9138
        %v10193 = vunpack.c.l.b16 %v9139
        %v10194 = vunpack.c.h.b16 %v9139
        %v10195 = vunpack.c.l.b16 %v9140
        %v10196 = vunpack.c.h.b16 %v9140
        %v10197 = vunpack.c.l.b16 %v9141
        %v10198 = vunpack.c.h.b16 %v9141
        %v10199 = vunpack.c.l.b16 %v9142
        %v10200 = vunpack.c.h.b16 %v9142
        %v10201 = vunpack.c.l.b16 %v9143
        %v10202 = vunpack.c.h.b16 %v9143
        %v10203 = vunpack.c.l.b16 %v9144
        %v10204 = vunpack.c.h.b16 %v9144
        %v10205 = vunpack.c.l.b16 %v9145
        %v10206 = vunpack.c.h.b16 %v9145
        %v10207 = vunpack.c.l.b16 %v9146
        %v10208 = vunpack.c.h.b16 %v9146
        %v10209 = vunpack.c.l.b16 %v9147
        %v10210 = vunpack.c.h.b16 %v9147
        %v10211 = vunpack.c.l.b16 %v9148
        %v10212 = vunpack.c.h.b16 %v9148
        %v10213 = vunpack.c.l.b16 %v9149
        %v10214 = vunpack.c.h.b16 %v9149
        %v10215 = vunpack.c.l.b16 %v9150
        %v10216 = vunpack.c.h.b16 %v9150
        %v10217 = vunpack.c.l.b16 %v9151
        %v10218 = vunpack.c.h.b16 %v9151
        %v10219 = vunpack.c.l.b16 %v9152
        %v10220 = vunpack.c.h.b16 %v9152
        %v10221 = vunpack.c.l.b16 %v9153
        %v10222 = vunpack.c.h.b16 %v9153
        %v10223 = vunpack.c.l.b16 %v9154
        %v10224 = vunpack.c.h.b16 %v9154
        %v10225 = vunpack.c.l.b16 %v9155
        %v10226 = vunpack.c.h.b16 %v9155
        %v10227 = vunpack.c.l.b16 %v9156
        %v10228 = vunpack.c.h.b16 %v9156
        %v10229 = vunpack.c.l.b16 %v9157
        %v10230 = vunpack.c.h.b16 %v9157
        %v10231 = vunpack.c.l.b16 %v9158
        %v10232 = vunpack.c.h.b16 %v9158
        %v10233 = vunpack.c.l.b16 %v9159
        %v10234 = vunpack.c.h.b16 %v9159
        %v10235 = vunpack.c.l.b16 %v9160
        %v10236 = vunpack.c.h.b16 %v9160
        %v10237 = vunpack.c.l.b16 %v9161
        %v10238 = vunpack.c.h.b16 %v9161
        %v10239 = vunpack.c.l.b16 %v9162
        %v10240 = vunpack.c.h.b16 %v9162
        %v10241 = vunpack.c.l.b16 %v9163
        %v10242 = vunpack.c.h.b16 %v9163
        %v10243 = vunpack.c.l.b16 %v9164
        %v10244 = vunpack.c.h.b16 %v9164
        %v10245 = vunpack.c.l.b16 %v9165
        %v10246 = vunpack.c.h.b16 %v9165
        %v10247 = vunpack.c.l.b16 %v9166
        %v10248 = vunpack.c.h.b16 %v9166
        %v10249 = vunpack.c.l.b16 %v9167
        %v10250 = vunpack.c.h.b16 %v9167
        %v10251 = vunpack.c.l.b16 %v9168
        %v10252 = vunpack.c.h.b16 %v9168
        %v10253 = vunpack.c.l.b16 %v9169
        %v10254 = vunpack.c.h.b16 %v9169
        %v10255 = vunpack.c.l.b16 %v9170
        %v10256 = vunpack.c.h.b16 %v9170
        %v10257 = vunpack.c.l.b16 %v9171
        %v10258 = vunpack.c.h.b16 %v9171
        %v10259 = vunpack.c.l.b16 %v9172
        %v10260 = vunpack.c.h.b16 %v9172
        %v10261 = vunpack.c.l.b16 %v9173
        %v10262 = vunpack.c.h.b16 %v9173
        %v10263 = vunpack.c.l.b16 %v9174
        %v10264 = vunpack.c.h.b16 %v9174
        %v10265 = vunpack.c.l.b16 %v9175
        %v10266 = vunpack.c.h.b16 %v9175
        %v10267 = vunpack.c.l.b16 %v9176
        %v10268 = vunpack.c.h.b16 %v9176
        %v10269 = vunpack.c.l.b16 %v9177
        %v10270 = vunpack.c.h.b16 %v9177
        %v10271 = vunpack.c.l.b16 %v9178
        %v10272 = vunpack.c.h.b16 %v9178
        %v10273 = vunpack.c.l.b16 %v9179
        %v10274 = vunpack.c.h.b16 %v9179
        %v10275 = vunpack.c.l.b16 %v9180
        %v10276 = vunpack.c.h.b16 %v9180
        %v10277 = vunpack.c.l.b16 %v9181
        %v10278 = vunpack.c.h.b16 %v9181
        %v10279 = vunpack.c.l.b16 %v9182
        %v10280 = vunpack.c.h.b16 %v9182
        %v10281 = vunpack.c.l.b16 %v9183
        %v10282 = vunpack.c.h.b16 %v9183
        %v10283 = vunpack.c.l.b16 %v9184
        %v10284 = vunpack.c.h.b16 %v9184
        %v10285 = vunpack.c.l.b16 %v9185
        %v10286 = vunpack.c.h.b16 %v9185
        %v10287 = vunpack.c.l.b16 %v9186
        %v10288 = vunpack.c.h.b16 %v9186
        %v10289 = vunpack.c.l.b16 %v9187
        %v10290 = vunpack.c.h.b16 %v9187
        %v10291 = vunpack.c.l.b16 %v9188
        %v10292 = vunpack.c.h.b16 %v9188
        %v10293 = vunpack.c.l.b16 %v9189
        %v10294 = vunpack.c.h.b16 %v9189
        %v10295 = vunpack.c.l.b16 %v9190
        %v10296 = vunpack.c.h.b16 %v9190
        %v10297 = vunpack.c.l.b16 %v9191
        %v10298 = vunpack.c.h.b16 %v9191
        %v10299 = vunpack.c.l.b16 %v9192
        %v10300 = vunpack.c.h.b16 %v9192
        %v10301 = vunpack.c.l.b16 %v9193
        %v10302 = vunpack.c.h.b16 %v9193
        %v10303 = vunpack.c.l.b16 %v9194
        %v10304 = vunpack.c.h.b16 %v9194
        %v10305 = vunpack.c.l.b16 %v9195
        %v10306 = vunpack.c.h.b16 %v9195
        %v10307 = vunpack.c.l.b16 %v9196
        %v10308 = vunpack.c.h.b16 %v9196
        %v10309 = vunpack.c.l.b16 %v9197
        %v10310 = vunpack.c.h.b16 %v9197
        %v10311 = vunpack.c.l.b16 %v9198
        %v10312 = vunpack.c.h.b16 %v9198
        %v10313 = vunpack.c.l.b16 %v9199
        %v10314 = vunpack.c.h.b16 %v9199
        %v10315 = vunpack.c.l.b16 %v9200
        %v10316 = vunpack.c.h.b16 %v9200
        %v10317 = vunpack.c.l.b16 %v9201
        %v10318 = vunpack.c.h.b16 %v9201
        %v10319 = vunpack.c.l.b16 %v9202
        %v10320 = vunpack.c.h.b16 %v9202
        %v10321 = vunpack.c.l.b16 %v9203
        %v10322 = vunpack.c.h.b16 %v9203
        %v10323 = vunpack.c.l.b16 %v9204
        %v10324 = vunpack.c.h.b16 %v9204
        %v10325 = vunpack.c.l.b16 %v9205
        %v10326 = vunpack.c.h.b16 %v9205
        %v10327 = vunpack.c.l.b16 %v9206
        %v10328 = vunpack.c.h.b16 %v9206
        %v10329 = vunpack.c.l.b16 %v9207
        %v10330 = vunpack.c.h.b16 %v9207
        %v10331 = vunpack.c.l.b16 %v9208
        %v10332 = vunpack.c.h.b16 %v9208
        %v10333 = vunpack.c.l.b16 %v9209
        %v10334 = vunpack.c.h.b16 %v9209
        %v10335 = vunpack.c.l.b16 %v9210
        %v10336 = vunpack.c.h.b16 %v9210
        %v10337 = vunpack.c.l.b16 %v9211
        %v10338 = vunpack.c.h.b16 %v9211
        %v10339 = vunpack.c.l.b16 %v9212
        %v10340 = vunpack.c.h.b16 %v9212
        %v10341 = vunpack.c.l.b16 %v9213
        %v10342 = vunpack.c.h.b16 %v9213
        %v10343 = vunpack.c.l.b16 %v9214
        %v10344 = vunpack.c.h.b16 %v9214
        %v10345 = vunpack.c.l.b16 %v9215
        %v10346 = vunpack.c.h.b16 %v9215
        %v10347 = vunpack.c.l.b16 %v9216
        %v10348 = vunpack.c.h.b16 %v9216
        %v10349 = vunpack.c.l.b16 %v9217
        %v10350 = vunpack.c.h.b16 %v9217
        %v10351 = vunpack.c.l.b16 %v9218
        %v10352 = vunpack.c.h.b16 %v9218
        %v10353 = vunpack.c.l.b16 %v9219
        %v10354 = vunpack.c.h.b16 %v9219
        %v10355 = vunpack.c.l.b16 %v9220
        %v10356 = vunpack.c.h.b16 %v9220
        %v10357 = vunpack.c.l.b16 %v9221
        %v10358 = vunpack.c.h.b16 %v9221
        %v10359 = vunpack.c.l.b16 %v9222
        %v10360 = vunpack.c.h.b16 %v9222
        %v10361 = vunpack.c.l.b16 %v9223
        %v10362 = vunpack.c.h.b16 %v9223
        %v10363 = vunpack.c.l.b16 %v9224
        %v10364 = vunpack.c.h.b16 %v9224
        %v10365 = vunpack.c.l.b16 %v9225
        %v10366 = vunpack.c.h.b16 %v9225
        %v10367 = vunpack.c.l.b16 %v9226
        %v10368 = vunpack.c.h.b16 %v9226
        %v10369 = vunpack.c.l.b16 %v9227
        %v10370 = vunpack.c.h.b16 %v9227
        %v10371 = vunpack.c.l.b16 %v9228
        %v10372 = vunpack.c.h.b16 %v9228
        %v10373 = vunpack.c.l.b16 %v9229
        %v10374 = vunpack.c.h.b16 %v9229
        %v10375 = vunpack.c.l.b16 %v9230
        %v10376 = vunpack.c.h.b16 %v9230
        %v10377 = vunpack.c.l.b16 %v9231
        %v10378 = vunpack.c.h.b16 %v9231
        %v10379 = vunpack.c.l.b16 %v9232
        %v10380 = vunpack.c.h.b16 %v9232
        %v10381 = vunpack.c.l.b16 %v9233
        %v10382 = vunpack.c.h.b16 %v9233
        %v10383 = vunpack.c.l.b16 %v9234
        %v10384 = vunpack.c.h.b16 %v9234
        %v10385 = vunpack.c.l.b16 %v9235
        %v10386 = vunpack.c.h.b16 %v9235
        %v10387 = vunpack.c.l.b16 %v9236
        %v10388 = vunpack.c.h.b16 %v9236
        %v10389 = vunpack.c.l.b16 %v9237
        %v10390 = vunpack.c.h.b16 %v9237
        %v10391 = vunpack.c.l.b16 %v9238
        %v10392 = vunpack.c.h.b16 %v9238
        %v10393 = vunpack.c.l.b16 %v9239
        %v10394 = vunpack.c.h.b16 %v9239
        %v10395 = vunpack.c.l.b16 %v9240
        %v10396 = vunpack.c.h.b16 %v9240
        %v10397 = vunpack.c.l.b16 %v9241
        %v10398 = vunpack.c.h.b16 %v9241
        %v10399 = vunpack.c.l.b16 %v9242
        %v10400 = vunpack.c.h.b16 %v9242
        %v10401 = vunpack.c.l.b16 %v9243
        %v10402 = vunpack.c.h.b16 %v9243
        %v10403 = vunpack.c.l.b16 %v9244
        %v10404 = vunpack.c.h.b16 %v9244
        %v10405 = vunpack.c.l.b16 %v9245
        %v10406 = vunpack.c.h.b16 %v9245
        %v10407 = vunpack.c.l.b16 %v9246
        %v10408 = vunpack.c.h.b16 %v9246
        %v10409 = vunpack.c.l.b16 %v9247
        %v10410 = vunpack.c.h.b16 %v9247
        %v10411 = vunpack.c.l.b16 %v9248
        %v10412 = vunpack.c.h.b16 %v9248
        %v10413 = vunpack.c.l.b16 %v9249
        %v10414 = vunpack.c.h.b16 %v9249
        %v10415 = vunpack.c.l.b16 %v9250
        %v10416 = vunpack.c.h.b16 %v9250
        %v10417 = vunpack.c.l.b16 %v9251
        %v10418 = vunpack.c.h.b16 %v9251
        %v10419 = vunpack.c.l.b16 %v9252
        %v10420 = vunpack.c.h.b16 %v9252
        %v10421 = vunpack.c.l.b16 %v9253
        %v10422 = vunpack.c.h.b16 %v9253
        %v10423 = vunpack.c.l.b16 %v9254
        %v10424 = vunpack.c.h.b16 %v9254
        %v10425 = vunpack.c.l.b16 %v9255
        %v10426 = vunpack.c.h.b16 %v9255
        %v10427 = vunpack.c.l.b16 %v9256
        %v10428 = vunpack.c.h.b16 %v9256
        %v10429 = vunpack.c.l.b16 %v9257
        %v10430 = vunpack.c.h.b16 %v9257
        %v10431 = vunpack.c.l.b16 %v9258
        %v10432 = vunpack.c.h.b16 %v9258
        %v10433 = vunpack.c.l.b16 %v9259
        %v10434 = vunpack.c.h.b16 %v9259
        %v10435 = vunpack.c.l.b16 %v9260
        %v10436 = vunpack.c.h.b16 %v9260
        %v10437 = vunpack.c.l.b16 %v9261
        %v10438 = vunpack.c.h.b16 %v9261
        %v10439 = vunpack.c.l.b16 %v9262
        %v10440 = vunpack.c.h.b16 %v9262
        %v10441 = vunpack.c.l.b16 %v9263
        %v10442 = vunpack.c.h.b16 %v9263
        %v10443 = vunpack.c.l.b16 %v9264
        %v10444 = vunpack.c.h.b16 %v9264
        %v10445 = vunpack.c.l.b16 %v9265
        %v10446 = vunpack.c.h.b16 %v9265
        %v10447 = vunpack.c.l.b16 %v9266
        %v10448 = vunpack.c.h.b16 %v9266
        %v10449 = vunpack.c.l.b16 %v9267
        %v10450 = vunpack.c.h.b16 %v9267
        %v10451 = vunpack.c.l.b16 %v9268
        %v10452 = vunpack.c.h.b16 %v9268
        %v10453 = vunpack.c.l.b16 %v9269
        %v10454 = vunpack.c.h.b16 %v9269
        %v10455 = vunpack.c.l.b16 %v9270
        %v10456 = vunpack.c.h.b16 %v9270
        %v10457 = vunpack.c.l.b16 %v9271
        %v10458 = vunpack.c.h.b16 %v9271
        %v10459 = vunpack.c.l.b16 %v9272
        %v10460 = vunpack.c.h.b16 %v9272
        %v10461 = vunpack.c.l.b16 %v9273
        %v10462 = vunpack.c.h.b16 %v9273
        %v10463 = vunpack.c.l.b16 %v9274
        %v10464 = vunpack.c.h.b16 %v9274
        %v10465 = vunpack.c.l.b16 %v9275
        %v10466 = vunpack.c.h.b16 %v9275
        %v10467 = vunpack.c.l.b16 %v9276
        %v10468 = vunpack.c.h.b16 %v9276
        %v10469 = vunpack.c.l.b16 %v9277
        %v10470 = vunpack.c.h.b16 %v9277
        %v10471 = vunpack.c.l.b16 %v9278
        %v10472 = vunpack.c.h.b16 %v9278
        %v10473 = vunpack.c.l.b16 %v9279
        %v10474 = vunpack.c.h.b16 %v9279
        %v10475 = vunpack.c.l.b16 %v9280
        %v10476 = vunpack.c.h.b16 %v9280
        %v10477 = vunpack.c.l.b16 %v9281
        %v10478 = vunpack.c.h.b16 %v9281
        %v10479 = vunpack.c.l.b16 %v9282
        %v10480 = vunpack.c.h.b16 %v9282
        %v10481 = vunpack.c.l.b16 %v9283
        %v10482 = vunpack.c.h.b16 %v9283
        %v10483 = vunpack.c.l.b16 %v9284
        %v10484 = vunpack.c.h.b16 %v9284
        %v10485 = vunpack.c.l.b16 %v9285
        %v10486 = vunpack.c.h.b16 %v9285
        %v10487 = vunpack.c.l.b16 %v9286
        %v10488 = vunpack.c.h.b16 %v9286
        %v10489 = vunpack.c.l.b16 %v9287
        %v10490 = vunpack.c.h.b16 %v9287
        %v10491 = vunpack.c.l.b16 %v9288
        %v10492 = vunpack.c.h.b16 %v9288
        %v10493 = vunpack.c.l.b16 %v9289
        %v10494 = vunpack.c.h.b16 %v9289
        %v10495 = vunpack.c.l.b16 %v9290
        %v10496 = vunpack.c.h.b16 %v9290
        %v10497 = vunpack.c.l.b16 %v9291
        %v10498 = vunpack.c.h.b16 %v9291
        %v10499 = vunpack.c.l.b16 %v9292
        %v10500 = vunpack.c.h.b16 %v9292
        %v10501 = vunpack.c.l.b16 %v9293
        %v10502 = vunpack.c.h.b16 %v9293
        %v10503 = vunpack.c.l.b16 %v9294
        %v10504 = vunpack.c.h.b16 %v9294
        %v10505 = vunpack.c.l.b16 %v9295
        %v10506 = vunpack.c.h.b16 %v9295
        %v10507 = vunpack.c.l.b16 %v9296
        %v10508 = vunpack.c.h.b16 %v9296
        %v10509 = vunpack.c.l.b16 %v9297
        %v10510 = vunpack.c.h.b16 %v9297
        %v10511 = vunpack.c.l.b16 %v9298
        %v10512 = vunpack.c.h.b16 %v9298
        %v10513 = vunpack.c.l.b16 %v9299
        %v10514 = vunpack.c.h.b16 %v9299
        %v10515 = vunpack.c.l.b16 %v9300
        %v10516 = vunpack.c.h.b16 %v9300
        %v10517 = vunpack.c.l.b16 %v9301
        %v10518 = vunpack.c.h.b16 %v9301
        %v10519 = vunpack.c.l.b16 %v9302
        %v10520 = vunpack.c.h.b16 %v9302
        %v10521 = vunpack.c.l.b16 %v9303
        %v10522 = vunpack.c.h.b16 %v9303
        %v10523 = vunpack.c.l.b16 %v9304
        %v10524 = vunpack.c.h.b16 %v9304
        %v10525 = vunpack.c.l.b16 %v9305
        %v10526 = vunpack.c.h.b16 %v9305
        %v10527 = vunpack.c.l.b16 %v9306
        %v10528 = vunpack.c.h.b16 %v9306
        %v10529 = vunpack.c.l.b16 %v9307
        %v10530 = vunpack.c.h.b16 %v9307
        %v10531 = vunpack.c.l.b16 %v9308
        %v10532 = vunpack.c.h.b16 %v9308
        %v10533 = vunpack.c.l.b16 %v9309
        %v10534 = vunpack.c.h.b16 %v9309
        %v10535 = vunpack.c.l.b16 %v9310
        %v10536 = vunpack.c.h.b16 %v9310
        %v10537 = vunpack.c.l.b16 %v9311
        %v10538 = vunpack.c.h.b16 %v9311
        %v10539 = vunpack.c.l.b16 %v9312
        %v10540 = vunpack.c.h.b16 %v9312
        %v10541 = vunpack.c.l.b16 %v9313
        %v10542 = vunpack.c.h.b16 %v9313
        %v10543 = vunpack.c.l.b16 %v9314
        %v10544 = vunpack.c.h.b16 %v9314
        %v10545 = vunpack.c.l.b16 %v9315
        %v10546 = vunpack.c.h.b16 %v9315
        %v10547 = vunpack.c.l.b16 %v9316
        %v10548 = vunpack.c.h.b16 %v9316
        %v10549 = vunpack.c.l.b16 %v9317
        %v10550 = vunpack.c.h.b16 %v9317
        %v10551 = vunpack.c.l.b16 %v9318
        %v10552 = vunpack.c.h.b16 %v9318
        %v10553 = vunpack.c.l.b16 %v9319
        %v10554 = vunpack.c.h.b16 %v9319
        %v10555 = vunpack.c.l.b16 %v9320
        %v10556 = vunpack.c.h.b16 %v9320
        %v10557 = vunpack.c.l.b16 %v9321
        %v10558 = vunpack.c.h.b16 %v9321
        %v10559 = vunpack.c.l.b16 %v9322
        %v10560 = vunpack.c.h.b16 %v9322
        %v10561 = vunpack.c.l.b16 %v9323
        %v10562 = vunpack.c.h.b16 %v9323
        %v10563 = vunpack.c.l.b16 %v9324
        %v10564 = vunpack.c.h.b16 %v9324
        %v10565 = vunpack.c.l.b16 %v9325
        %v10566 = vunpack.c.h.b16 %v9325
        %v10567 = vunpack.c.l.b16 %v9326
        %v10568 = vunpack.c.h.b16 %v9326
        %v10569 = vunpack.c.l.b16 %v9327
        %v10570 = vunpack.c.h.b16 %v9327
        %v10571 = vunpack.c.l.b16 %v9328
        %v10572 = vunpack.c.h.b16 %v9328
        %v10573 = vunpack.c.l.b16 %v9329
        %v10574 = vunpack.c.h.b16 %v9329
        %v10575 = vunpack.c.l.b16 %v9330
        %v10576 = vunpack.c.h.b16 %v9330
        %v10577 = vunpack.c.l.b16 %v9331
        %v10578 = vunpack.c.h.b16 %v9331
        %v10579 = vunpack.c.l.b16 %v9332
        %v10580 = vunpack.c.h.b16 %v9332
        %v10581 = vunpack.c.l.b16 %v9333
        %v10582 = vunpack.c.h.b16 %v9333
        %v10583 = vunpack.c.l.b16 %v9334
        %v10584 = vunpack.c.h.b16 %v9334
        %v10585 = vunpack.c.l.b16 %v9335
        %v10586 = vunpack.c.h.b16 %v9335
        %v10587 = vunpack.c.l.b16 %v9336
        %v10588 = vunpack.c.h.b16 %v9336
        %v10589 = vunpack.c.l.b16 %v9337
        %v10590 = vunpack.c.h.b16 %v9337
        %v10591 = vunpack.c.l.b16 %v9338
        %v10592 = vunpack.c.h.b16 %v9338
        %v10593 = vunpack.c.l.b16 %v9339
        %v10594 = vunpack.c.h.b16 %v9339
        %v10595 = vunpack.c.l.b16 %v9340
        %v10596 = vunpack.c.h.b16 %v9340
        %v10597 = vunpack.c.l.b16 %v9341
        %v10598 = vunpack.c.h.b16 %v9341
        %v10599 = vunpack.c.l.b16 %v9342
        %v10600 = vunpack.c.h.b16 %v9342
        %v10601 = vunpack.c.l.b16 %v9343
        %v10602 = vunpack.c.h.b16 %v9343
        %v10603 = vunpack.c.l.b16 %v9344
        %v10604 = vunpack.c.h.b16 %v9344
        %v10605 = vunpack.c.l.b16 %v9345
        %v10606 = vunpack.c.h.b16 %v9345
        %v10607 = vunpack.c.l.b16 %v9346
        %v10608 = vunpack.c.h.b16 %v9346
        %v10609 = vunpack.c.l.b16 %v9347
        %v10610 = vunpack.c.h.b16 %v9347
        %v10611 = vunpack.c.l.b16 %v9348
        %v10612 = vunpack.c.h.b16 %v9348
        %v10613 = vunpack.c.l.b16 %v9349
        %v10614 = vunpack.c.h.b16 %v9349
        %v10615 = vunpack.c.l.b16 %v9350
        %v10616 = vunpack.c.h.b16 %v9350
        %v10617 = vunpack.c.l.b16 %v9351
        %v10618 = vunpack.c.h.b16 %v9351
        %v10619 = vunpack.c.l.b16 %v9352
        %v10620 = vunpack.c.h.b16 %v9352
        %v10621 = vunpack.c.l.b16 %v9353
        %v10622 = vunpack.c.h.b16 %v9353
        %v10623 = vunpack.c.l.b16 %v9354
        %v10624 = vunpack.c.h.b16 %v9354
        %v10625 = vunpack.c.l.b16 %v9355
        %v10626 = vunpack.c.h.b16 %v9355
        %v10627 = vunpack.c.l.b16 %v9356
        %v10628 = vunpack.c.h.b16 %v9356
        %v10629 = vunpack.c.l.b16 %v9357
        %v10630 = vunpack.c.h.b16 %v9357
        %v10631 = vunpack.c.l.b16 %v9358
        %v10632 = vunpack.c.h.b16 %v9358
        %v10633 = vunpack.c.l.b16 %v9359
        %v10634 = vunpack.c.h.b16 %v9359
        %v10635 = vunpack.c.l.b16 %v9360
        %v10636 = vunpack.c.h.b16 %v9360
        %v10637 = vunpack.c.l.b16 %v9361
        %v10638 = vunpack.c.h.b16 %v9361
        %v10639 = vunpack.c.l.b16 %v9362
        %v10640 = vunpack.c.h.b16 %v9362
        %v10641 = vunpack.c.l.b16 %v9363
        %v10642 = vunpack.c.h.b16 %v9363
        %v10643 = vunpack.c.l.b16 %v9364
        %v10644 = vunpack.c.h.b16 %v9364
        %v10645 = vunpack.c.l.b16 %v9365
        %v10646 = vunpack.c.h.b16 %v9365
        %v10647 = vunpack.c.l.b16 %v9366
        %v10648 = vunpack.c.h.b16 %v9366
        %v10649 = vunpack.c.l.b16 %v9367
        %v10650 = vunpack.c.h.b16 %v9367
        %v10651 = vunpack.c.l.b16 %v9368
        %v10652 = vunpack.c.h.b16 %v9368
        %v10653 = vunpack.c.l.b16 %v9369
        %v10654 = vunpack.c.h.b16 %v9369
        %v10655 = vunpack.c.l.b16 %v9370
        %v10656 = vunpack.c.h.b16 %v9370
        %v10657 = vunpack.c.l.b16 %v9371
        %v10658 = vunpack.c.h.b16 %v9371
        %v10659 = vunpack.c.l.b16 %v9372
        %v10660 = vunpack.c.h.b16 %v9372
        %v10661 = vunpack.c.l.b16 %v9373
        %v10662 = vunpack.c.h.b16 %v9373
        %v10663 = vunpack.c.l.b16 %v9374
        %v10664 = vunpack.c.h.b16 %v9374
        %v10665 = vunpack.c.l.b16 %v9375
        %v10666 = vunpack.c.h.b16 %v9375
        %v10667 = vunpack.c.l.b16 %v9376
        %v10668 = vunpack.c.h.b16 %v9376
        %v10669 = vunpack.c.l.b16 %v9377
        %v10670 = vunpack.c.h.b16 %v9377
        %v10671 = vunpack.c.l.b16 %v9378
        %v10672 = vunpack.c.h.b16 %v9378
        %v10673 = vunpack.c.l.b16 %v9379
        %v10674 = vunpack.c.h.b16 %v9379
        %v10675 = vunpack.c.l.b16 %v9380
        %v10676 = vunpack.c.h.b16 %v9380
        %v10677 = vunpack.c.l.b16 %v9381
        %v10678 = vunpack.c.h.b16 %v9381
        %v10679 = vunpack.c.l.b16 %v9382
        %v10680 = vunpack.c.h.b16 %v9382
        %v10681 = vunpack.c.l.b16 %v9383
        %v10682 = vunpack.c.h.b16 %v9383
        %v10683 = vunpack.c.l.b16 %v9384
        %v10684 = vunpack.c.h.b16 %v9384
        %v10685 = vunpack.c.l.b16 %v9385
        %v10686 = vunpack.c.h.b16 %v9385
        %v10687 = vunpack.c.l.b16 %v9386
        %v10688 = vunpack.c.h.b16 %v9386
        %v10689 = vunpack.c.l.b16 %v9387
        %v10690 = vunpack.c.h.b16 %v9387
        %v10691 = vunpack.c.l.b16 %v9388
        %v10692 = vunpack.c.h.b16 %v9388
        %v10693 = vunpack.c.l.b16 %v9389
        %v10694 = vunpack.c.h.b16 %v9389
        %v10695 = vunpack.c.l.b16 %v9390
        %v10696 = vunpack.c.h.b16 %v9390
        %v10697 = vunpack.c.l.b16 %v9391
        %v10698 = vunpack.c.h.b16 %v9391
        %v10699 = vunpack.c.l.b16 %v9392
        %v10700 = vunpack.c.h.b16 %v9392
        %v10701 = vunpack.c.l.b16 %v9393
        %v10702 = vunpack.c.h.b16 %v9393
        %v10703 = vunpack.c.l.b16 %v9394
        %v10704 = vunpack.c.h.b16 %v9394
        %v10705 = vunpack.c.l.b16 %v9395
        %v10706 = vunpack.c.h.b16 %v9395
        %v10707 = vunpack.c.l.b16 %v9396
        %v10708 = vunpack.c.h.b16 %v9396
        %v10709 = vunpack.c.l.b16 %v9397
        %v10710 = vunpack.c.h.b16 %v9397
        %v10711 = vunpack.c.l.b16 %v9398
        %v10712 = vunpack.c.h.b16 %v9398
        %v10713 = vunpack.c.l.b16 %v9399
        %v10714 = vunpack.c.h.b16 %v9399
        %v10715 = vunpack.c.l.b16 %v9400
        %v10716 = vunpack.c.h.b16 %v9400
        %v10717 = vunpack.c.l.b16 %v9401
        %v10718 = vunpack.c.h.b16 %v9401
        %v10719 = vunpack.c.l.b16 %v9402
        %v10720 = vunpack.c.h.b16 %v9402
        %v10721 = vunpack.c.l.b16 %v9403
        %v10722 = vunpack.c.h.b16 %v9403
        %v10723 = vunpack.c.l.b16 %v9404
        %v10724 = vunpack.c.h.b16 %v9404
        %v10725 = vunpack.c.l.b16 %v9405
        %v10726 = vunpack.c.h.b16 %v9405
        %v10727 = vunpack.c.l.b16 %v9406
        %v10728 = vunpack.c.h.b16 %v9406
        %v10729 = vunpack.c.l.b16 %v9407
        %v10730 = vunpack.c.h.b16 %v9407
        %v10731 = vunpack.c.l.b16 %v9408
        %v10732 = vunpack.c.h.b16 %v9408
        %v10733 = vunpack.c.l.b16 %v9409
        %v10734 = vunpack.c.h.b16 %v9409
        %v10735 = vunpack.c.l.b16 %v9410
        %v10736 = vunpack.c.h.b16 %v9410
        %v10737 = vunpack.c.l.b16 %v9411
        %v10738 = vunpack.c.h.b16 %v9411
        %v10739 = vunpack.c.l.b16 %v9412
        %v10740 = vunpack.c.h.b16 %v9412
        %v10741 = vunpack.c.l.b16 %v9413
        %v10742 = vunpack.c.h.b16 %v9413
        %v10743 = vunpack.c.l.b16 %v9414
        %v10744 = vunpack.c.h.b16 %v9414
        %v10745 = vunpack.c.l.b16 %v9415
        %v10746 = vunpack.c.h.b16 %v9415
        %v10747 = vunpack.c.l.b16 %v9416
        %v10748 = vunpack.c.h.b16 %v9416
        %v10749 = vunpack.c.l.b16 %v9417
        %v10750 = vunpack.c.h.b16 %v9417
        %v10751 = vunpack.c.l.b16 %v9418
        %v10752 = vunpack.c.h.b16 %v9418
        %v10753 = vunpack.c.l.b16 %v9419
        %v10754 = vunpack.c.h.b16 %v9419
        %v10755 = vunpack.c.l.b16 %v9420
        %v10756 = vunpack.c.h.b16 %v9420
        %v10757 = vunpack.c.l.b16 %v9421
        %v10758 = vunpack.c.h.b16 %v9421
        %v10759 = vunpack.c.l.b16 %v9422
        %v10760 = vunpack.c.h.b16 %v9422
        %v10761 = vunpack.c.l.b16 %v9423
        %v10762 = vunpack.c.h.b16 %v9423
        %v10763 = vunpack.c.l.b16 %v9424
        %v10764 = vunpack.c.h.b16 %v9424
        %v10765 = vunpack.c.l.b16 %v9425
        %v10766 = vunpack.c.h.b16 %v9425
        %v10767 = vunpack.c.l.b16 %v9426
        %v10768 = vunpack.c.h.b16 %v9426
        %v10769 = vunpack.c.l.b16 %v9427
        %v10770 = vunpack.c.h.b16 %v9427
        %v10771 = vunpack.c.l.b16 %v9428
        %v10772 = vunpack.c.h.b16 %v9428
        %v10773 = vunpack.c.l.b16 %v9429
        %v10774 = vunpack.c.h.b16 %v9429
        %v10775 = vunpack.c.l.b16 %v9430
        %v10776 = vunpack.c.h.b16 %v9430
        %v10777 = vunpack.c.l.b16 %v9431
        %v10778 = vunpack.c.h.b16 %v9431
        %v10779 = vunpack.c.l.b16 %v9432
        %v10780 = vunpack.c.h.b16 %v9432
        %v10781 = vunpack.c.l.b16 %v9433
        %v10782 = vunpack.c.h.b16 %v9433
        %v10783 = vunpack.c.l.b16 %v9434
        %v10784 = vunpack.c.h.b16 %v9434
        %v10785 = vunpack.c.l.b16 %v9435
        %v10786 = vunpack.c.h.b16 %v9435
        %v10787 = vunpack.c.l.b16 %v9436
        %v10788 = vunpack.c.h.b16 %v9436
        %v10789 = vunpack.c.l.b16 %v9437
        %v10790 = vunpack.c.h.b16 %v9437
        %v10791 = vunpack.c.l.b16 %v9438
        %v10792 = vunpack.c.h.b16 %v9438
        %v10793 = vunpack.c.l.b16 %v9439
        %v10794 = vunpack.c.h.b16 %v9439
        %v10795 = vunpack.c.l.b16 %v9440
        %v10796 = vunpack.c.h.b16 %v9440
        %v10797 = vunpack.c.l.b16 %v9441
        %v10798 = vunpack.c.h.b16 %v9441
        %v10799 = vunpack.c.l.b16 %v9442
        %v10800 = vunpack.c.h.b16 %v9442
        %v10801 = vunpack.c.l.b16 %v9443
        %v10802 = vunpack.c.h.b16 %v9443
        %v10803 = vunpack.c.l.b16 %v9444
        %v10804 = vunpack.c.h.b16 %v9444
        %v10805 = vunpack.c.l.b16 %v9445
        %v10806 = vunpack.c.h.b16 %v9445
        %v10807 = vunpack.c.l.b16 %v9446
        %v10808 = vunpack.c.h.b16 %v9446
        %v10809 = vunpack.c.l.b16 %v9447
        %v10810 = vunpack.c.h.b16 %v9447
        %v10811 = vunpack.c.l.b16 %v9448
        %v10812 = vunpack.c.h.b16 %v9448
        %v10813 = vunpack.c.l.b16 %v9449
        %v10814 = vunpack.c.h.b16 %v9449
        %v10815 = vunpack.c.l.b16 %v9450
        %v10816 = vunpack.c.h.b16 %v9450
        %v10817 = vunpack.c.l.b16 %v9451
        %v10818 = vunpack.c.h.b16 %v9451
        %v10819 = vunpack.c.l.b16 %v9452
        %v10820 = vunpack.c.h.b16 %v9452
        %v10821 = vunpack.c.l.b16 %v9453
        %v10822 = vunpack.c.h.b16 %v9453
        %v10823 = vunpack.c.l.b16 %v9454
        %v10824 = vunpack.c.h.b16 %v9454
        %v10825 = vunpack.c.l.b16 %v9455
        %v10826 = vunpack.c.h.b16 %v9455
        %v10827 = vunpack.c.l.b16 %v9456
        %v10828 = vunpack.c.h.b16 %v9456
        %v10829 = vunpack.c.l.b16 %v9457
        %v10830 = vunpack.c.h.b16 %v9457
        %v10831 = vunpack.c.l.b16 %v9458
        %v10832 = vunpack.c.h.b16 %v9458
        %v10833 = vunpack.c.l.b16 %v9459
        %v10834 = vunpack.c.h.b16 %v9459
        %v10835 = vunpack.c.l.b16 %v9460
        %v10836 = vunpack.c.h.b16 %v9460
        %v10837 = vunpack.c.l.b16 %v9461
        %v10838 = vunpack.c.h.b16 %v9461
        %v10839 = vunpack.c.l.b16 %v9462
        %v10840 = vunpack.c.h.b16 %v9462
        %v10841 = vunpack.c.l.b16 %v9463
        %v10842 = vunpack.c.h.b16 %v9463
        %v10843 = vunpack.c.l.b16 %v9464
        %v10844 = vunpack.c.h.b16 %v9464
        %v10845 = vunpack.c.l.b16 %v9465
        %v10846 = vunpack.c.h.b16 %v9465
        %v10847 = vunpack.c.l.b16 %v9466
        %v10848 = vunpack.c.h.b16 %v9466
        %v10849 = vunpack.c.l.b16 %v9467
        %v10850 = vunpack.c.h.b16 %v9467
        %v10851 = vunpack.c.l.b16 %v9468
        %v10852 = vunpack.c.h.b16 %v9468
        %v10853 = vunpack.c.l.b16 %v9469
        %v10854 = vunpack.c.h.b16 %v9469
        %v10855 = vunpack.c.l.b16 %v9470
        %v10856 = vunpack.c.h.b16 %v9470
        %v10857 = vunpack.c.l.b16 %v9471
        %v10858 = vunpack.c.h.b16 %v9471
        %v10859 = vunpack.c.l.b16 %v9472
        %v10860 = vunpack.c.h.b16 %v9472
        %v10861 = vunpack.c.l.b16 %v9473
        %v10862 = vunpack.c.h.b16 %v9473
        %v10863 = vunpack.c.l.b16 %v9474
        %v10864 = vunpack.c.h.b16 %v9474
        %v10865 = vunpack.c.l.b16 %v9475
        %v10866 = vunpack.c.h.b16 %v9475
        %v10867 = vunpack.c.l.b16 %v9476
        %v10868 = vunpack.c.h.b16 %v9476
        %v10869 = vunpack.c.l.b16 %v9477
        %v10870 = vunpack.c.h.b16 %v9477
        %v10871 = vunpack.c.l.b16 %v9478
        %v10872 = vunpack.c.h.b16 %v9478
        %v10873 = vunpack.c.l.b16 %v9479
        %v10874 = vunpack.c.h.b16 %v9479
        %v10875 = vunpack.c.l.b16 %v9480
        %v10876 = vunpack.c.h.b16 %v9480
        %v10877 = vunpack.c.l.b16 %v9481
        %v10878 = vunpack.c.h.b16 %v9481
        %v10879 = vunpack.c.l.b16 %v9482
        %v10880 = vunpack.c.h.b16 %v9482
        %v10881 = vunpack.c.l.b16 %v9483
        %v10882 = vunpack.c.h.b16 %v9483
        %v10883 = vunpack.c.l.b16 %v9484
        %v10884 = vunpack.c.h.b16 %v9484
        %v10885 = vunpack.c.l.b16 %v9485
        %v10886 = vunpack.c.h.b16 %v9485
        %v10887 = vunpack.c.l.b16 %v9486
        %v10888 = vunpack.c.h.b16 %v9486
        %v10889 = vunpack.c.l.b16 %v9487
        %v10890 = vunpack.c.h.b16 %v9487
        %v10891 = vunpack.c.l.b16 %v9488
        %v10892 = vunpack.c.h.b16 %v9488
        %v10893 = vunpack.c.l.b16 %v9489
        %v10894 = vunpack.c.h.b16 %v9489
        %v10895 = vunpack.c.l.b16 %v9490
        %v10896 = vunpack.c.h.b16 %v9490
        %v10897 = vunpack.c.l.b16 %v9491
        %v10898 = vunpack.c.h.b16 %v9491
        %v10899 = vunpack.c.l.b16 %v9492
        %v10900 = vunpack.c.h.b16 %v9492
        %v10901 = vunpack.c.l.b16 %v9493
        %v10902 = vunpack.c.h.b16 %v9493
        %v10903 = vunpack.c.l.b16 %v9494
        %v10904 = vunpack.c.h.b16 %v9494
        %v10905 = vunpack.c.l.b16 %v9495
        %v10906 = vunpack.c.h.b16 %v9495
        %v10907 = vunpack.c.l.b16 %v9496
        %v10908 = vunpack.c.h.b16 %v9496
        %v10909 = vunpack.c.l.b16 %v9497
        %v10910 = vunpack.c.h.b16 %v9497
        %v10911 = vunpack.c.l.b16 %v9498
        %v10912 = vunpack.c.h.b16 %v9498
        %v10913 = vunpack.c.l.b16 %v9499
        %v10914 = vunpack.c.h.b16 %v9499
        %v10915 = vunpack.c.l.b16 %v9500
        %v10916 = vunpack.c.h.b16 %v9500
        %v10917 = vunpack.c.l.b16 %v9501
        %v10918 = vunpack.c.h.b16 %v9501
        %v10919 = vunpack.c.l.b16 %v9502
        %v10920 = vunpack.c.h.b16 %v9502
        %v10921 = vunpack.c.l.b16 %v9503
        %v10922 = vunpack.c.h.b16 %v9503
        %v10923 = vunpack.c.l.b16 %v9504
        %v10924 = vunpack.c.h.b16 %v9504
        %v10925 = vunpack.c.l.b16 %v9505
        %v10926 = vunpack.c.h.b16 %v9505
        %v10927 = vunpack.c.l.b16 %v9506
        %v10928 = vunpack.c.h.b16 %v9506
        %v10929 = vunpack.c.l.b16 %v9507
        %v10930 = vunpack.c.h.b16 %v9507
        %v10931 = vunpack.c.l.b16 %v9508
        %v10932 = vunpack.c.h.b16 %v9508
        %v10933 = vunpack.c.l.b16 %v9509
        %v10934 = vunpack.c.h.b16 %v9509
        %v10935 = vunpack.c.l.b16 %v9510
        %v10936 = vunpack.c.h.b16 %v9510
        %v10937 = vunpack.c.l.b16 %v9511
        %v10938 = vunpack.c.h.b16 %v9511
        %v10939 = vunpack.c.l.b16 %v9512
        %v10940 = vunpack.c.h.b16 %v9512
        %v10941 = vunpack.c.l.b16 %v9513
        %v10942 = vunpack.c.h.b16 %v9513
        %v10943 = vunpack.c.l.b16 %v9514
        %v10944 = vunpack.c.h.b16 %v9514
        %v10945 = vunpack.c.l.b16 %v9515
        %v10946 = vunpack.c.h.b16 %v9515
        %v10947 = vunpack.c.l.b16 %v9516
        %v10948 = vunpack.c.h.b16 %v9516
        %v10949 = vunpack.c.l.b16 %v9517
        %v10950 = vunpack.c.h.b16 %v9517
        %v10951 = vunpack.c.l.b16 %v9518
        %v10952 = vunpack.c.h.b16 %v9518
        %v10953 = vunpack.c.l.b16 %v9519
        %v10954 = vunpack.c.h.b16 %v9519
        %v10955 = vunpack.c.l.b16 %v9520
        %v10956 = vunpack.c.h.b16 %v9520
        %v10957 = vunpack.c.l.b16 %v9521
        %v10958 = vunpack.c.h.b16 %v9521
        %v10959 = vunpack.c.l.b16 %v9522
        %v10960 = vunpack.c.h.b16 %v9522
        %v10961 = vunpack.c.l.b16 %v9523
        %v10962 = vunpack.c.h.b16 %v9523
        %v10963 = vunpack.c.l.b16 %v9524
        %v10964 = vunpack.c.h.b16 %v9524
        %v10965 = vunpack.c.l.b16 %v9525
        %v10966 = vunpack.c.h.b16 %v9525
        %v10967 = vunpack.c.l.b16 %v9526
        %v10968 = vunpack.c.h.b16 %v9526
        %v10969 = vunpack.c.l.b16 %v9527
        %v10970 = vunpack.c.h.b16 %v9527
        %v10971 = vunpack.c.l.b16 %v9528
        %v10972 = vunpack.c.h.b16 %v9528
        %v10973 = vunpack.c.l.b16 %v9529
        %v10974 = vunpack.c.h.b16 %v9529
        %v10975 = vunpack.c.l.b16 %v9530
        %v10976 = vunpack.c.h.b16 %v9530
        %v10977 = vunpack.c.l.b16 %v9531
        %v10978 = vunpack.c.h.b16 %v9531
        %v10979 = vunpack.c.l.b16 %v9532
        %v10980 = vunpack.c.h.b16 %v9532
        %v10981 = vunpack.c.l.b16 %v9533
        %v10982 = vunpack.c.h.b16 %v9533
        %v10983 = vunpack.c.l.b16 %v9534
        %v10984 = vunpack.c.h.b16 %v9534
        %v10985 = vunpack.c.l.b16 %v9535
        %v10986 = vunpack.c.h.b16 %v9535
        %v10987 = vunpack.c.l.b16 %v9536
        %v10988 = vunpack.c.h.b16 %v9536
        %v10989 = vunpack.c.l.b16 %v9537
        %v10990 = vunpack.c.h.b16 %v9537
        %v10991 = vunpack.c.l.b16 %v9538
        %v10992 = vunpack.c.h.b16 %v9538
        %v10993 = vunpack.c.l.b16 %v9539
        %v10994 = vunpack.c.h.b16 %v9539
        %v10995 = vunpack.c.l.b16 %v9540
        %v10996 = vunpack.c.h.b16 %v9540
        %v10997 = vunpack.c.l.b16 %v9541
        %v10998 = vunpack.c.h.b16 %v9541
        %v10999 = vunpack.c.l.b16 %v9542
        %v11000 = vunpack.c.h.b16 %v9542
        %v11001 = vunpack.c.l.b16 %v9543
        %v11002 = vunpack.c.h.b16 %v9543
        %v11003 = vunpack.c.l.b16 %v9544
        %v11004 = vunpack.c.h.b16 %v9544
        %v11005 = vunpack.c.l.b16 %v9545
        %v11006 = vunpack.c.h.b16 %v9545
        %v11007 = vunpack.c.l.b16 %v9546
        %v11008 = vunpack.c.h.b16 %v9546
        %v11009 = vunpack.c.l.b16 %v9547
        %v11010 = vunpack.c.h.b16 %v9547
        %v11011 = vunpack.c.l.b16 %v9548
        %v11012 = vunpack.c.h.b16 %v9548
        %v11013 = vunpack.c.l.b16 %v9549
        %v11014 = vunpack.c.h.b16 %v9549
        %v11015 = vunpack.c.l.b16 %v9550
        %v11016 = vunpack.c.h.b16 %v9550
        %v11017 = vunpack.c.l.b16 %v9551
        %v11018 = vunpack.c.h.b16 %v9551
        %v11019 = vunpack.c.l.b16 %v9552
        %v11020 = vunpack.c.h.b16 %v9552
        %v11021 = vunpack.c.l.b16 %v9553
        %v11022 = vunpack.c.h.b16 %v9553
        %v11023 = vunpack.c.l.b16 %v9554
        %v11024 = vunpack.c.h.b16 %v9554
        %v11025 = vunpack.c.l.b16 %v9555
        %v11026 = vunpack.c.h.b16 %v9555
        %v11027 = vunpack.c.l.b16 %v9556
        %v11028 = vunpack.c.h.b16 %v9556
        %v11029 = vunpack.c.l.b16 %v9557
        %v11030 = vunpack.c.h.b16 %v9557
        %v11031 = vunpack.c.l.b16 %v9558
        %v11032 = vunpack.c.h.b16 %v9558
        %v11033 = vunpack.c.l.b16 %v9559
        %v11034 = vunpack.c.h.b16 %v9559
        %v11035 = vunpack.c.l.b16 %v9560
        %v11036 = vunpack.c.h.b16 %v9560
        %v11037 = vunpack.c.l.b16 %v9561
        %v11038 = vunpack.c.h.b16 %v9561
        %v11039 = vunpack.c.l.b16 %v9562
        %v11040 = vunpack.c.h.b16 %v9562
        %v11041 = vunpack.c.l.b16 %v9563
        %v11042 = vunpack.c.h.b16 %v9563
        %v11043 = vunpack.c.l.b16 %v9564
        %v11044 = vunpack.c.h.b16 %v9564
        %v11045 = vunpack.c.l.b16 %v9565
        %v11046 = vunpack.c.h.b16 %v9565
        %v11047 = vunpack.c.l.b16 %v9566
        %v11048 = vunpack.c.h.b16 %v9566
        %v11049 = vunpack.c.l.b16 %v9567
        %v11050 = vunpack.c.h.b16 %v9567
        %v11051 = vunpack.c.l.b16 %v9568
        %v11052 = vunpack.c.h.b16 %v9568
        %v11053 = vunpack.c.l.b16 %v9569
        %v11054 = vunpack.c.h.b16 %v9569
        %v11055 = vunpack.c.l.b16 %v9570
        %v11056 = vunpack.c.h.b16 %v9570
        %v11057 = vunpack.c.l.b16 %v9571
        %v11058 = vunpack.c.h.b16 %v9571
        %v11059 = vunpack.c.l.b16 %v9572
        %v11060 = vunpack.c.h.b16 %v9572
        %v11061 = vunpack.c.l.b16 %v9573
        %v11062 = vunpack.c.h.b16 %v9573
        %v11063 = vunpack.c.l.b16 %v9574
        %v11064 = vunpack.c.h.b16 %v9574
        %v11065 = vunpack.c.l.b16 %v9575
        %v11066 = vunpack.c.h.b16 %v9575
        %v11067 = vunpack.c.l.b16 %v9576
        %v11068 = vunpack.c.h.b16 %v9576
        %v11069 = vunpack.c.l.b16 %v9577
        %v11070 = vunpack.c.h.b16 %v9577
        %v11071 = vunpack.c.l.b16 %v9578
        %v11072 = vunpack.c.h.b16 %v9578
        %v11073 = vunpack.c.l.b16 %v9579
        %v11074 = vunpack.c.h.b16 %v9579
        %v11075 = vunpack.c.l.b16 %v9580
        %v11076 = vunpack.c.h.b16 %v9580
        %v11077 = vunpack.c.l.b16 %v9581
        %v11078 = vunpack.c.h.b16 %v9581
        %v11079 = vunpack.c.l.b16 %v9582
        %v11080 = vunpack.c.h.b16 %v9582
        %v11081 = vunpack.c.l.b16 %v9583
        %v11082 = vunpack.c.h.b16 %v9583
        %v11083 = vunpack.c.l.b16 %v9584
        %v11084 = vunpack.c.h.b16 %v9584
        %v11085 = vunpack.c.l.b16 %v9585
        %v11086 = vunpack.c.h.b16 %v9585
        %v11087 = vunpack.c.l.b16 %v9586
        %v11088 = vunpack.c.h.b16 %v9586
        %v11089 = vunpack.c.l.b16 %v9587
        %v11090 = vunpack.c.h.b16 %v9587
        %v11091 = vunpack.c.l.b16 %v9588
        %v11092 = vunpack.c.h.b16 %v9588
        %v11093 = vunpack.c.l.b16 %v9589
        %v11094 = vunpack.c.h.b16 %v9589
        %v11095 = vunpack.c.l.b16 %v9590
        %v11096 = vunpack.c.h.b16 %v9590
        %v11097 = vunpack.c.l.b16 %v9591
        %v11098 = vunpack.c.h.b16 %v9591
        %v11099 = vunpack.c.l.b16 %v9592
        %v11100 = vunpack.c.h.b16 %v9592
        %v11101 = vunpack.c.l.b16 %v9593
        %v11102 = vunpack.c.h.b16 %v9593
        %v11103 = vunpack.c.l.b16 %v9594
        %v11104 = vunpack.c.h.b16 %v9594
        %v11105 = vunpack.c.l.b16 %v9595
        %v11106 = vunpack.c.h.b16 %v9595
        %v11107 = vunpack.c.l.b16 %v9596
        %v11108 = vunpack.c.h.b16 %v9596
        %v11109 = vunpack.c.l.b16 %v9597
        %v11110 = vunpack.c.h.b16 %v9597
        %v11111 = vunpack.c.l.b16 %v9598
        %v11112 = vunpack.c.h.b16 %v9598
        %v11113 = vunpack.c.l.b16 %v9599
        %v11114 = vunpack.c.h.b16 %v9599
        %v11115 = vunpack.c.l.b16 %v9600
        %v11116 = vunpack.c.h.b16 %v9600
        %v11117 = vunpack.c.l.b16 %v9601
        %v11118 = vunpack.c.h.b16 %v9601
        %v11119 = vunpack.c.l.b16 %v9602
        %v11120 = vunpack.c.h.b16 %v9602
        %v11121 = vunpack.c.l.b16 %v9603
        %v11122 = vunpack.c.h.b16 %v9603
        %v11123 = vunpack.c.l.b16 %v9604
        %v11124 = vunpack.c.h.b16 %v9604
        %v11125 = vunpack.c.l.b16 %v9605
        %v11126 = vunpack.c.h.b16 %v9605
        %v11127 = vunpack.c.l.b16 %v9606
        %v11128 = vunpack.c.h.b16 %v9606
        %v11129 = vunpack.c.l.b16 %v9607
        %v11130 = vunpack.c.h.b16 %v9607
        %v11131 = vunpack.c.l.b16 %v9608
        %v11132 = vunpack.c.h.b16 %v9608
        %v11133 = vunpack.c.l.b16 %v9609
        %v11134 = vunpack.c.h.b16 %v9609
        %v11135 = vunpack.c.l.b16 %v9610
        %v11136 = vunpack.c.h.b16 %v9610
        %v11137 = vunpack.c.l.b16 %v9611
        %v11138 = vunpack.c.h.b16 %v9611
        %v11139 = vunpack.c.l.b16 %v9612
        %v11140 = vunpack.c.h.b16 %v9612
        %v11141 = vunpack.c.l.b16 %v9613
        %v11142 = vunpack.c.h.b16 %v9613
        %v11143 = vunpack.c.l.b16 %v9614
        %v11144 = vunpack.c.h.b16 %v9614
        %v11145 = vunpack.c.l.b16 %v9615
        %v11146 = vunpack.c.h.b16 %v9615
        %v11147 = vunpack.c.l.b16 %v9616
        %v11148 = vunpack.c.h.b16 %v9616
        %v11149 = vunpack.c.l.b16 %v9617
        %v11150 = vunpack.c.h.b16 %v9617
        %v11151 = vunpack.c.l.b16 %v9618
        %v11152 = vunpack.c.h.b16 %v9618
        %v11153 = vunpack.c.l.b16 %v9619
        %v11154 = vunpack.c.h.b16 %v9619
        %v11155 = vunpack.c.l.b16 %v9620
        %v11156 = vunpack.c.h.b16 %v9620
        %v11157 = vunpack.c.l.b16 %v9621
        %v11158 = vunpack.c.h.b16 %v9621
        %v11159 = vunpack.c.l.b16 %v9622
        %v11160 = vunpack.c.h.b16 %v9622
        %v11161 = vunpack.c.l.b16 %v9623
        %v11162 = vunpack.c.h.b16 %v9623
        %v11163 = vunpack.c.l.b16 %v9624
        %v11164 = vunpack.c.h.b16 %v9624
        %v11165 = vunpack.c.l.b16 %v9625
        %v11166 = vunpack.c.h.b16 %v9625
        %v11167 = vunpack.c.l.b16 %v9626
        %v11168 = vunpack.c.h.b16 %v9626
        %v11169 = vunpack.c.l.b16 %v9627
        %v11170 = vunpack.c.h.b16 %v9627
        %v11171 = vunpack.c.l.b16 %v9628
        %v11172 = vunpack.c.h.b16 %v9628
        %v11173 = vunpack.c.l.b16 %v9629
        %v11174 = vunpack.c.h.b16 %v9629
        %v11175 = vunpack.c.l.b16 %v9630
        %v11176 = vunpack.c.h.b16 %v9630
        %v11177 = vunpack.c.l.b16 %v9631
        %v11178 = vunpack.c.h.b16 %v9631
        %v11179 = vunpack.c.l.b16 %v9632
        %v11180 = vunpack.c.h.b16 %v9632
        %v11181 = vunpack.c.l.b16 %v9633
        %v11182 = vunpack.c.h.b16 %v9633
        %v11183 = vunpack.c.l.b16 %v9634
        %v11184 = vunpack.c.h.b16 %v9634
        %v11185 = vunpack.c.l.b16 %v9635
        %v11186 = vunpack.c.h.b16 %v9635
        %v11187 = vunpack.c.l.b16 %v9636
        %v11188 = vunpack.c.h.b16 %v9636
        %v11189 = vunpack.c.l.b16 %v9637
        %v11190 = vunpack.c.h.b16 %v9637
        %v11191 = vunpack.c.l.b16 %v9638
        %v11192 = vunpack.c.h.b16 %v9638
        %v11193 = vunpack.c.l.b16 %v9639
        %v11194 = vunpack.c.h.b16 %v9639
        %v11195 = vunpack.c.l.b16 %v9640
        %v11196 = vunpack.c.h.b16 %v9640
        %v11197 = vunpack.c.l.b16 %v9641
        %v11198 = vunpack.c.h.b16 %v9641
        %v11199 = vpack.c.b16 %v10179, %v10175
        %v11200 = vpack.c.b16 %v10180, %v10176
        %v11201 = vpack.c.b16 %v10181, %v10177
        %v11202 = vpack.c.b16 %v10182, %v10178
        %v11203 = vpack.c.b16 %v10187, %v10183
        %v11204 = vpack.c.b16 %v10188, %v10184
        %v11205 = vpack.c.b16 %v10189, %v10185
        %v11206 = vpack.c.b16 %v10190, %v10186
        %v11207 = vpack.c.b16 %v10195, %v10191
        %v11208 = vpack.c.b16 %v10196, %v10192
        %v11209 = vpack.c.b16 %v10197, %v10193
        %v11210 = vpack.c.b16 %v10198, %v10194
        %v11211 = vpack.c.b16 %v10203, %v10199
        %v11212 = vpack.c.b16 %v10204, %v10200
        %v11213 = vpack.c.b16 %v10205, %v10201
        %v11214 = vpack.c.b16 %v10206, %v10202
        %v11215 = vpack.c.b16 %v10211, %v10207
        %v11216 = vpack.c.b16 %v10212, %v10208
        %v11217 = vpack.c.b16 %v10213, %v10209
        %v11218 = vpack.c.b16 %v10214, %v10210
        %v11219 = vpack.c.b16 %v10219, %v10215
        %v11220 = vpack.c.b16 %v10220, %v10216
        %v11221 = vpack.c.b16 %v10221, %v10217
        %v11222 = vpack.c.b16 %v10222, %v10218
        %v11223 = vpack.c.b16 %v10227, %v10223
        %v11224 = vpack.c.b16 %v10228, %v10224
        %v11225 = vpack.c.b16 %v10229, %v10225
        %v11226 = vpack.c.b16 %v10230, %v10226
        %v11227 = vpack.c.b16 %v10235, %v10231
        %v11228 = vpack.c.b16 %v10236, %v10232
        %v11229 = vpack.c.b16 %v10237, %v10233
        %v11230 = vpack.c.b16 %v10238, %v10234
        %v11231 = vpack.c.b16 %v10243, %v10239
        %v11232 = vpack.c.b16 %v10244, %v10240
        %v11233 = vpack.c.b16 %v10245, %v10241
        %v11234 = vpack.c.b16 %v10246, %v10242
        %v11235 = vpack.c.b16 %v10251, %v10247
        %v11236 = vpack.c.b16 %v10252, %v10248
        %v11237 = vpack.c.b16 %v10253, %v10249
        %v11238 = vpack.c.b16 %v10254, %v10250
        %v11239 = vpack.c.b16 %v10259, %v10255
        %v11240 = vpack.c.b16 %v10260, %v10256
        %v11241 = vpack.c.b16 %v10261, %v10257
        %v11242 = vpack.c.b16 %v10262, %v10258
        %v11243 = vpack.c.b16 %v10267, %v10263
        %v11244 = vpack.c.b16 %v10268, %v10264
        %v11245 = vpack.c.b16 %v10269, %v10265
        %v11246 = vpack.c.b16 %v10270, %v10266
        %v11247 = vpack.c.b16 %v10275, %v10271
        %v11248 = vpack.c.b16 %v10276, %v10272
        %v11249 = vpack.c.b16 %v10277, %v10273
        %v11250 = vpack.c.b16 %v10278, %v10274
        %v11251 = vpack.c.b16 %v10283, %v10279
        %v11252 = vpack.c.b16 %v10284, %v10280
        %v11253 = vpack.c.b16 %v10285, %v10281
        %v11254 = vpack.c.b16 %v10286, %v10282
        %v11255 = vpack.c.b16 %v10291, %v10287
        %v11256 = vpack.c.b16 %v10292, %v10288
        %v11257 = vpack.c.b16 %v10293, %v10289
        %v11258 = vpack.c.b16 %v10294, %v10290
        %v11259 = vpack.c.b16 %v10299, %v10295
        %v11260 = vpack.c.b16 %v10300, %v10296
        %v11261 = vpack.c.b16 %v10301, %v10297
        %v11262 = vpack.c.b16 %v10302, %v10298
        %v11263 = vpack.c.b16 %v10307, %v10303
        %v11264 = vpack.c.b16 %v10308, %v10304
        %v11265 = vpack.c.b16 %v10309, %v10305
        %v11266 = vpack.c.b16 %v10310, %v10306
        %v11267 = vpack.c.b16 %v10315, %v10311
        %v11268 = vpack.c.b16 %v10316, %v10312
        %v11269 = vpack.c.b16 %v10317, %v10313
        %v11270 = vpack.c.b16 %v10318, %v10314
        %v11271 = vpack.c.b16 %v10323, %v10319
        %v11272 = vpack.c.b16 %v10324, %v10320
        %v11273 = vpack.c.b16 %v10325, %v10321
        %v11274 = vpack.c.b16 %v10326, %v10322
        %v11275 = vpack.c.b16 %v10331, %v10327
        %v11276 = vpack.c.b16 %v10332, %v10328
        %v11277 = vpack.c.b16 %v10333, %v10329
        %v11278 = vpack.c.b16 %v10334, %v10330
        %v11279 = vpack.c.b16 %v10339, %v10335
        %v11280 = vpack.c.b16 %v10340, %v10336
        %v11281 = vpack.c.b16 %v10341, %v10337
        %v11282 = vpack.c.b16 %v10342, %v10338
        %v11283 = vpack.c.b16 %v10347, %v10343
        %v11284 = vpack.c.b16 %v10348, %v10344
        %v11285 = vpack.c.b16 %v10349, %v10345
        %v11286 = vpack.c.b16 %v10350, %v10346
        %v11287 = vpack.c.b16 %v10355, %v10351
        %v11288 = vpack.c.b16 %v10356, %v10352
        %v11289 = vpack.c.b16 %v10357, %v10353
        %v11290 = vpack.c.b16 %v10358, %v10354
        %v11291 = vpack.c.b16 %v10363, %v10359
        %v11292 = vpack.c.b16 %v10364, %v10360
        %v11293 = vpack.c.b16 %v10365, %v10361
        %v11294 = vpack.c.b16 %v10366, %v10362
        %v11295 = vpack.c.b16 %v10371, %v10367
        %v11296 = vpack.c.b16 %v10372, %v10368
        %v11297 = vpack.c.b16 %v10373, %v10369
        %v11298 = vpack.c.b16 %v10374, %v10370
        %v11299 = vpack.c.b16 %v10379, %v10375
        %v11300 = vpack.c.b16 %v10380, %v10376
        %v11301 = vpack.c.b16 %v10381, %v10377
        %v11302 = vpack.c.b16 %v10382, %v10378
        %v11303 = vpack.c.b16 %v10387, %v10383
        %v11304 = vpack.c.b16 %v10388, %v10384
        %v11305 = vpack.c.b16 %v10389, %v10385
        %v11306 = vpack.c.b16 %v10390, %v10386
        %v11307 = vpack.c.b16 %v10395, %v10391
        %v11308 = vpack.c.b16 %v10396, %v10392
        %v11309 = vpack.c.b16 %v10397, %v10393
        %v11310 = vpack.c.b16 %v10398, %v10394
        %v11311 = vpack.c.b16 %v10403, %v10399
        %v11312 = vpack.c.b16 %v10404, %v10400
        %v11313 = vpack.c.b16 %v10405, %v10401
        %v11314 = vpack.c.b16 %v10406, %v10402
        %v11315 = vpack.c.b16 %v10411, %v10407
        %v11316 = vpack.c.b16 %v10412, %v10408
        %v11317 = vpack.c.b16 %v10413, %v10409
        %v11318 = vpack.c.b16 %v10414, %v10410
        %v11319 = vpack.c.b16 %v10419, %v10415
        %v11320 = vpack.c.b16 %v10420, %v10416
        %v11321 = vpack.c.b16 %v10421, %v10417
        %v11322 = vpack.c.b16 %v10422, %v10418
        %v11323 = vpack.c.b16 %v10427, %v10423
        %v11324 = vpack.c.b16 %v10428, %v10424
        %v11325 = vpack.c.b16 %v10429, %v10425
        %v11326 = vpack.c.b16 %v10430, %v10426
        %v11327 = vpack.c.b16 %v10435, %v10431
        %v11328 = vpack.c.b16 %v10436, %v10432
        %v11329 = vpack.c.b16 %v10437, %v10433
        %v11330 = vpack.c.b16 %v10438, %v10434
        %v11331 = vpack.c.b16 %v10443, %v10439
        %v11332 = vpack.c.b16 %v10444, %v10440
        %v11333 = vpack.c.b16 %v10445, %v10441
        %v11334 = vpack.c.b16 %v10446, %v10442
        %v11335 = vpack.c.b16 %v10451, %v10447
        %v11336 = vpack.c.b16 %v10452, %v10448
        %v11337 = vpack.c.b16 %v10453, %v10449
        %v11338 = vpack.c.b16 %v10454, %v10450
        %v11339 = vpack.c.b16 %v10459, %v10455
        %v11340 = vpack.c.b16 %v10460, %v10456
        %v11341 = vpack.c.b16 %v10461, %v10457
        %v11342 = vpack.c.b16 %v10462, %v10458
        %v11343 = vpack.c.b16 %v10467, %v10463
        %v11344 = vpack.c.b16 %v10468, %v10464
        %v11345 = vpack.c.b16 %v10469, %v10465
        %v11346 = vpack.c.b16 %v10470, %v10466
        %v11347 = vpack.c.b16 %v10475, %v10471
        %v11348 = vpack.c.b16 %v10476, %v10472
        %v11349 = vpack.c.b16 %v10477, %v10473
        %v11350 = vpack.c.b16 %v10478, %v10474
        %v11351 = vpack.c.b16 %v10483, %v10479
        %v11352 = vpack.c.b16 %v10484, %v10480
        %v11353 = vpack.c.b16 %v10485, %v10481
        %v11354 = vpack.c.b16 %v10486, %v10482
        %v11355 = vpack.c.b16 %v10491, %v10487
        %v11356 = vpack.c.b16 %v10492, %v10488
        %v11357 = vpack.c.b16 %v10493, %v10489
        %v11358 = vpack.c.b16 %v10494, %v10490
        %v11359 = vpack.c.b16 %v10499, %v10495
        %v11360 = vpack.c.b16 %v10500, %v10496
        %v11361 = vpack.c.b16 %v10501, %v10497
        %v11362 = vpack.c.b16 %v10502, %v10498
        %v11363 = vpack.c.b16 %v10507, %v10503
        %v11364 = vpack.c.b16 %v10508, %v10504
        %v11365 = vpack.c.b16 %v10509, %v10505
        %v11366 = vpack.c.b16 %v10510, %v10506
        %v11367 = vpack.c.b16 %v10515, %v10511
        %v11368 = vpack.c.b16 %v10516, %v10512
        %v11369 = vpack.c.b16 %v10517, %v10513
        %v11370 = vpack.c.b16 %v10518, %v10514
        %v11371 = vpack.c.b16 %v10523, %v10519
        %v11372 = vpack.c.b16 %v10524, %v10520
        %v11373 = vpack.c.b16 %v10525, %v10521
        %v11374 = vpack.c.b16 %v10526, %v10522
        %v11375 = vpack.c.b16 %v10531, %v10527
        %v11376 = vpack.c.b16 %v10532, %v10528
        %v11377 = vpack.c.b16 %v10533, %v10529
        %v11378 = vpack.c.b16 %v10534, %v10530
        %v11379 = vpack.c.b16 %v10539, %v10535
        %v11380 = vpack.c.b16 %v10540, %v10536
        %v11381 = vpack.c.b16 %v10541, %v10537
        %v11382 = vpack.c.b16 %v10542, %v10538
        %v11383 = vpack.c.b16 %v10547, %v10543
        %v11384 = vpack.c.b16 %v10548, %v10544
        %v11385 = vpack.c.b16 %v10549, %v10545
        %v11386 = vpack.c.b16 %v10550, %v10546
        %v11387 = vpack.c.b16 %v10555, %v10551
        %v11388 = vpack.c.b16 %v10556, %v10552
        %v11389 = vpack.c.b16 %v10557, %v10553
        %v11390 = vpack.c.b16 %v10558, %v10554
        %v11391 = vpack.c.b16 %v10563, %v10559
        %v11392 = vpack.c.b16 %v10564, %v10560
        %v11393 = vpack.c.b16 %v10565, %v10561
        %v11394 = vpack.c.b16 %v10566, %v10562
        %v11395 = vpack.c.b16 %v10571, %v10567
        %v11396 = vpack.c.b16 %v10572, %v10568
        %v11397 = vpack.c.b16 %v10573, %v10569
        %v11398 = vpack.c.b16 %v10574, %v10570
        %v11399 = vpack.c.b16 %v10579, %v10575
        %v11400 = vpack.c.b16 %v10580, %v10576
        %v11401 = vpack.c.b16 %v10581, %v10577
        %v11402 = vpack.c.b16 %v10582, %v10578
        %v11403 = vpack.c.b16 %v10587, %v10583
        %v11404 = vpack.c.b16 %v10588, %v10584
        %v11405 = vpack.c.b16 %v10589, %v10585
        %v11406 = vpack.c.b16 %v10590, %v10586
        %v11407 = vpack.c.b16 %v10595, %v10591
        %v11408 = vpack.c.b16 %v10596, %v10592
        %v11409 = vpack.c.b16 %v10597, %v10593
        %v11410 = vpack.c.b16 %v10598, %v10594
        %v11411 = vpack.c.b16 %v10603, %v10599
        %v11412 = vpack.c.b16 %v10604, %v10600
        %v11413 = vpack.c.b16 %v10605, %v10601
        %v11414 = vpack.c.b16 %v10606, %v10602
        %v11415 = vpack.c.b16 %v10611, %v10607
        %v11416 = vpack.c.b16 %v10612, %v10608
        %v11417 = vpack.c.b16 %v10613, %v10609
        %v11418 = vpack.c.b16 %v10614, %v10610
        %v11419 = vpack.c.b16 %v10619, %v10615
        %v11420 = vpack.c.b16 %v10620, %v10616
        %v11421 = vpack.c.b16 %v10621, %v10617
        %v11422 = vpack.c.b16 %v10622, %v10618
        %v11423 = vpack.c.b16 %v10627, %v10623
        %v11424 = vpack.c.b16 %v10628, %v10624
        %v11425 = vpack.c.b16 %v10629, %v10625
        %v11426 = vpack.c.b16 %v10630, %v10626
        %v11427 = vpack.c.b16 %v10635, %v10631
        %v11428 = vpack.c.b16 %v10636, %v10632
        %v11429 = vpack.c.b16 %v10637, %v10633
        %v11430 = vpack.c.b16 %v10638, %v10634
        %v11431 = vpack.c.b16 %v10643, %v10639
        %v11432 = vpack.c.b16 %v10644, %v10640
        %v11433 = vpack.c.b16 %v10645, %v10641
        %v11434 = vpack.c.b16 %v10646, %v10642
        %v11435 = vpack.c.b16 %v10651, %v10647
        %v11436 = vpack.c.b16 %v10652, %v10648
        %v11437 = vpack.c.b16 %v10653, %v10649
        %v11438 = vpack.c.b16 %v10654, %v10650
        %v11439 = vpack.c.b16 %v10659, %v10655
        %v11440 = vpack.c.b16 %v10660, %v10656
        %v11441 = vpack.c.b16 %v10661, %v10657
        %v11442 = vpack.c.b16 %v10662, %v10658
        %v11443 = vpack.c.b16 %v10667, %v10663
        %v11444 = vpack.c.b16 %v10668, %v10664
        %v11445 = vpack.c.b16 %v10669, %v10665
        %v11446 = vpack.c.b16 %v10670, %v10666
        %v11447 = vpack.c.b16 %v10675, %v10671
        %v11448 = vpack.c.b16 %v10676, %v10672
        %v11449 = vpack.c.b16 %v10677, %v10673
        %v11450 = vpack.c.b16 %v10678, %v10674
        %v11451 = vpack.c.b16 %v10683, %v10679
        %v11452 = vpack.c.b16 %v10684, %v10680
        %v11453 = vpack.c.b16 %v10685, %v10681
        %v11454 = vpack.c.b16 %v10686, %v10682
        %v11455 = vpack.c.b16 %v10691, %v10687
        %v11456 = vpack.c.b16 %v10692, %v10688
        %v11457 = vpack.c.b16 %v10693, %v10689
        %v11458 = vpack.c.b16 %v10694, %v10690
        %v11459 = vpack.c.b16 %v10699, %v10695
        %v11460 = vpack.c.b16 %v10700, %v10696
        %v11461 = vpack.c.b16 %v10701, %v10697
        %v11462 = vpack.c.b16 %v10702, %v10698
        %v11463 = vpack.c.b16 %v10707, %v10703
        %v11464 = vpack.c.b16 %v10708, %v10704
        %v11465 = vpack.c.b16 %v10709, %v10705
        %v11466 = vpack.c.b16 %v10710, %v10706
        %v11467 = vpack.c.b16 %v10715, %v10711
        %v11468 = vpack.c.b16 %v10716, %v10712
        %v11469 = vpack.c.b16 %v10717, %v10713
        %v11470 = vpack.c.b16 %v10718, %v10714
        %v11471 = vpack.c.b16 %v10723, %v10719
        %v11472 = vpack.c.b16 %v10724, %v10720
        %v11473 = vpack.c.b16 %v10725, %v10721
        %v11474 = vpack.c.b16 %v10726, %v10722
        %v11475 = vpack.c.b16 %v10731, %v10727
        %v11476 = vpack.c.b16 %v10732, %v10728
        %v11477 = vpack.c.b16 %v10733, %v10729
        %v11478 = vpack.c.b16 %v10734, %v10730
        %v11479 = vpack.c.b16 %v10739, %v10735
        %v11480 = vpack.c.b16 %v10740, %v10736
        %v11481 = vpack.c.b16 %v10741, %v10737
        %v11482 = vpack.c.b16 %v10742, %v10738
        %v11483 = vpack.c.b16 %v10747, %v10743
        %v11484 = vpack.c.b16 %v10748, %v10744
        %v11485 = vpack.c.b16 %v10749, %v10745
        %v11486 = vpack.c.b16 %v10750, %v10746
        %v11487 = vpack.c.b16 %v10755, %v10751
        %v11488 = vpack.c.b16 %v10756, %v10752
        %v11489 = vpack.c.b16 %v10757, %v10753
        %v11490 = vpack.c.b16 %v10758, %v10754
        %v11491 = vpack.c.b16 %v10763, %v10759
        %v11492 = vpack.c.b16 %v10764, %v10760
        %v11493 = vpack.c.b16 %v10765, %v10761
        %v11494 = vpack.c.b16 %v10766, %v10762
        %v11495 = vpack.c.b16 %v10771, %v10767
        %v11496 = vpack.c.b16 %v10772, %v10768
        %v11497 = vpack.c.b16 %v10773, %v10769
        %v11498 = vpack.c.b16 %v10774, %v10770
        %v11499 = vpack.c.b16 %v10779, %v10775
        %v11500 = vpack.c.b16 %v10780, %v10776
        %v11501 = vpack.c.b16 %v10781, %v10777
        %v11502 = vpack.c.b16 %v10782, %v10778
        %v11503 = vpack.c.b16 %v10787, %v10783
        %v11504 = vpack.c.b16 %v10788, %v10784
        %v11505 = vpack.c.b16 %v10789, %v10785
        %v11506 = vpack.c.b16 %v10790, %v10786
        %v11507 = vpack.c.b16 %v10795, %v10791
        %v11508 = vpack.c.b16 %v10796, %v10792
        %v11509 = vpack.c.b16 %v10797, %v10793
        %v11510 = vpack.c.b16 %v10798, %v10794
        %v11511 = vpack.c.b16 %v10803, %v10799
        %v11512 = vpack.c.b16 %v10804, %v10800
        %v11513 = vpack.c.b16 %v10805, %v10801
        %v11514 = vpack.c.b16 %v10806, %v10802
        %v11515 = vpack.c.b16 %v10811, %v10807
        %v11516 = vpack.c.b16 %v10812, %v10808
        %v11517 = vpack.c.b16 %v10813, %v10809
        %v11518 = vpack.c.b16 %v10814, %v10810
        %v11519 = vpack.c.b16 %v10819, %v10815
        %v11520 = vpack.c.b16 %v10820, %v10816
        %v11521 = vpack.c.b16 %v10821, %v10817
        %v11522 = vpack.c.b16 %v10822, %v10818
        %v11523 = vpack.c.b16 %v10827, %v10823
        %v11524 = vpack.c.b16 %v10828, %v10824
        %v11525 = vpack.c.b16 %v10829, %v10825
        %v11526 = vpack.c.b16 %v10830, %v10826
        %v11527 = vpack.c.b16 %v10835, %v10831
        %v11528 = vpack.c.b16 %v10836, %v10832
        %v11529 = vpack.c.b16 %v10837, %v10833
        %v11530 = vpack.c.b16 %v10838, %v10834
        %v11531 = vpack.c.b16 %v10843, %v10839
        %v11532 = vpack.c.b16 %v10844, %v10840
        %v11533 = vpack.c.b16 %v10845, %v10841
        %v11534 = vpack.c.b16 %v10846, %v10842
        %v11535 = vpack.c.b16 %v10851, %v10847
        %v11536 = vpack.c.b16 %v10852, %v10848
        %v11537 = vpack.c.b16 %v10853, %v10849
        %v11538 = vpack.c.b16 %v10854, %v10850
        %v11539 = vpack.c.b16 %v10859, %v10855
        %v11540 = vpack.c.b16 %v10860, %v10856
        %v11541 = vpack.c.b16 %v10861, %v10857
        %v11542 = vpack.c.b16 %v10862, %v10858
        %v11543 = vpack.c.b16 %v10867, %v10863
        %v11544 = vpack.c.b16 %v10868, %v10864
        %v11545 = vpack.c.b16 %v10869, %v10865
        %v11546 = vpack.c.b16 %v10870, %v10866
        %v11547 = vpack.c.b16 %v10875, %v10871
        %v11548 = vpack.c.b16 %v10876, %v10872
        %v11549 = vpack.c.b16 %v10877, %v10873
        %v11550 = vpack.c.b16 %v10878, %v10874
        %v11551 = vpack.c.b16 %v10883, %v10879
        %v11552 = vpack.c.b16 %v10884, %v10880
        %v11553 = vpack.c.b16 %v10885, %v10881
        %v11554 = vpack.c.b16 %v10886, %v10882
        %v11555 = vpack.c.b16 %v10891, %v10887
        %v11556 = vpack.c.b16 %v10892, %v10888
        %v11557 = vpack.c.b16 %v10893, %v10889
        %v11558 = vpack.c.b16 %v10894, %v10890
        %v11559 = vpack.c.b16 %v10899, %v10895
        %v11560 = vpack.c.b16 %v10900, %v10896
        %v11561 = vpack.c.b16 %v10901, %v10897
        %v11562 = vpack.c.b16 %v10902, %v10898
        %v11563 = vpack.c.b16 %v10907, %v10903
        %v11564 = vpack.c.b16 %v10908, %v10904
        %v11565 = vpack.c.b16 %v10909, %v10905
        %v11566 = vpack.c.b16 %v10910, %v10906
        %v11567 = vpack.c.b16 %v10915, %v10911
        %v11568 = vpack.c.b16 %v10916, %v10912
        %v11569 = vpack.c.b16 %v10917, %v10913
        %v11570 = vpack.c.b16 %v10918, %v10914
        %v11571 = vpack.c.b16 %v10923, %v10919
        %v11572 = vpack.c.b16 %v10924, %v10920
        %v11573 = vpack.c.b16 %v10925, %v10921
        %v11574 = vpack.c.b16 %v10926, %v10922
        %v11575 = vpack.c.b16 %v10931, %v10927
        %v11576 = vpack.c.b16 %v10932, %v10928
        %v11577 = vpack.c.b16 %v10933, %v10929
        %v11578 = vpack.c.b16 %v10934, %v10930
        %v11579 = vpack.c.b16 %v10939, %v10935
        %v11580 = vpack.c.b16 %v10940, %v10936
        %v11581 = vpack.c.b16 %v10941, %v10937
        %v11582 = vpack.c.b16 %v10942, %v10938
        %v11583 = vpack.c.b16 %v10947, %v10943
        %v11584 = vpack.c.b16 %v10948, %v10944
        %v11585 = vpack.c.b16 %v10949, %v10945
        %v11586 = vpack.c.b16 %v10950, %v10946
        %v11587 = vpack.c.b16 %v10955, %v10951
        %v11588 = vpack.c.b16 %v10956, %v10952
        %v11589 = vpack.c.b16 %v10957, %v10953
        %v11590 = vpack.c.b16 %v10958, %v10954
        %v11591 = vpack.c.b16 %v10963, %v10959
        %v11592 = vpack.c.b16 %v10964, %v10960
        %v11593 = vpack.c.b16 %v10965, %v10961
        %v11594 = vpack.c.b16 %v10966, %v10962
        %v11595 = vpack.c.b16 %v10971, %v10967
        %v11596 = vpack.c.b16 %v10972, %v10968
        %v11597 = vpack.c.b16 %v10973, %v10969
        %v11598 = vpack.c.b16 %v10974, %v10970
        %v11599 = vpack.c.b16 %v10979, %v10975
        %v11600 = vpack.c.b16 %v10980, %v10976
        %v11601 = vpack.c.b16 %v10981, %v10977
        %v11602 = vpack.c.b16 %v10982, %v10978
        %v11603 = vpack.c.b16 %v10987, %v10983
        %v11604 = vpack.c.b16 %v10988, %v10984
        %v11605 = vpack.c.b16 %v10989, %v10985
        %v11606 = vpack.c.b16 %v10990, %v10986
        %v11607 = vpack.c.b16 %v10995, %v10991
        %v11608 = vpack.c.b16 %v10996, %v10992
        %v11609 = vpack.c.b16 %v10997, %v10993
        %v11610 = vpack.c.b16 %v10998, %v10994
        %v11611 = vpack.c.b16 %v11003, %v10999
        %v11612 = vpack.c.b16 %v11004, %v11000
        %v11613 = vpack.c.b16 %v11005, %v11001
        %v11614 = vpack.c.b16 %v11006, %v11002
        %v11615 = vpack.c.b16 %v11011, %v11007
        %v11616 = vpack.c.b16 %v11012, %v11008
        %v11617 = vpack.c.b16 %v11013, %v11009
        %v11618 = vpack.c.b16 %v11014, %v11010
        %v11619 = vpack.c.b16 %v11019, %v11015
        %v11620 = vpack.c.b16 %v11020, %v11016
        %v11621 = vpack.c.b16 %v11021, %v11017
        %v11622 = vpack.c.b16 %v11022, %v11018
        %v11623 = vpack.c.b16 %v11027, %v11023
        %v11624 = vpack.c.b16 %v11028, %v11024
        %v11625 = vpack.c.b16 %v11029, %v11025
        %v11626 = vpack.c.b16 %v11030, %v11026
        %v11627 = vpack.c.b16 %v11035, %v11031
        %v11628 = vpack.c.b16 %v11036, %v11032
        %v11629 = vpack.c.b16 %v11037, %v11033
        %v11630 = vpack.c.b16 %v11038, %v11034
        %v11631 = vpack.c.b16 %v11043, %v11039
        %v11632 = vpack.c.b16 %v11044, %v11040
        %v11633 = vpack.c.b16 %v11045, %v11041
        %v11634 = vpack.c.b16 %v11046, %v11042
        %v11635 = vpack.c.b16 %v11051, %v11047
        %v11636 = vpack.c.b16 %v11052, %v11048
        %v11637 = vpack.c.b16 %v11053, %v11049
        %v11638 = vpack.c.b16 %v11054, %v11050
        %v11639 = vpack.c.b16 %v11059, %v11055
        %v11640 = vpack.c.b16 %v11060, %v11056
        %v11641 = vpack.c.b16 %v11061, %v11057
        %v11642 = vpack.c.b16 %v11062, %v11058
        %v11643 = vpack.c.b16 %v11067, %v11063
        %v11644 = vpack.c.b16 %v11068, %v11064
        %v11645 = vpack.c.b16 %v11069, %v11065
        %v11646 = vpack.c.b16 %v11070, %v11066
        %v11647 = vpack.c.b16 %v11075, %v11071
        %v11648 = vpack.c.b16 %v11076, %v11072
        %v11649 = vpack.c.b16 %v11077, %v11073
        %v11650 = vpack.c.b16 %v11078, %v11074
        %v11651 = vpack.c.b16 %v11083, %v11079
        %v11652 = vpack.c.b16 %v11084, %v11080
        %v11653 = vpack.c.b16 %v11085, %v11081
        %v11654 = vpack.c.b16 %v11086, %v11082
        %v11655 = vpack.c.b16 %v11091, %v11087
        %v11656 = vpack.c.b16 %v11092, %v11088
        %v11657 = vpack.c.b16 %v11093, %v11089
        %v11658 = vpack.c.b16 %v11094, %v11090
        %v11659 = vpack.c.b16 %v11099, %v11095
        %v11660 = vpack.c.b16 %v11100, %v11096
        %v11661 = vpack.c.b16 %v11101, %v11097
        %v11662 = vpack.c.b16 %v11102, %v11098
        %v11663 = vpack.c.b16 %v11107, %v11103
        %v11664 = vpack.c.b16 %v11108, %v11104
        %v11665 = vpack.c.b16 %v11109, %v11105
        %v11666 = vpack.c.b16 %v11110, %v11106
        %v11667 = vpack.c.b16 %v11115, %v11111
        %v11668 = vpack.c.b16 %v11116, %v11112
        %v11669 = vpack.c.b16 %v11117, %v11113
        %v11670 = vpack.c.b16 %v11118, %v11114
        %v11671 = vpack.c.b16 %v11123, %v11119
        %v11672 = vpack.c.b16 %v11124, %v11120
        %v11673 = vpack.c.b16 %v11125, %v11121
        %v11674 = vpack.c.b16 %v11126, %v11122
        %v11675 = vpack.c.b16 %v11131, %v11127
        %v11676 = vpack.c.b16 %v11132, %v11128
        %v11677 = vpack.c.b16 %v11133, %v11129
        %v11678 = vpack.c.b16 %v11134, %v11130
        %v11679 = vpack.c.b16 %v11139, %v11135
        %v11680 = vpack.c.b16 %v11140, %v11136
        %v11681 = vpack.c.b16 %v11141, %v11137
        %v11682 = vpack.c.b16 %v11142, %v11138
        %v11683 = vpack.c.b16 %v11147, %v11143
        %v11684 = vpack.c.b16 %v11148, %v11144
        %v11685 = vpack.c.b16 %v11149, %v11145
        %v11686 = vpack.c.b16 %v11150, %v11146
        %v11687 = vpack.c.b16 %v11155, %v11151
        %v11688 = vpack.c.b16 %v11156, %v11152
        %v11689 = vpack.c.b16 %v11157, %v11153
        %v11690 = vpack.c.b16 %v11158, %v11154
        %v11691 = vpack.c.b16 %v11163, %v11159
        %v11692 = vpack.c.b16 %v11164, %v11160
        %v11693 = vpack.c.b16 %v11165, %v11161
        %v11694 = vpack.c.b16 %v11166, %v11162
        %v11695 = vpack.c.b16 %v11171, %v11167
        %v11696 = vpack.c.b16 %v11172, %v11168
        %v11697 = vpack.c.b16 %v11173, %v11169
        %v11698 = vpack.c.b16 %v11174, %v11170
        %v11699 = vpack.c.b16 %v11179, %v11175
        %v11700 = vpack.c.b16 %v11180, %v11176
        %v11701 = vpack.c.b16 %v11181, %v11177
        %v11702 = vpack.c.b16 %v11182, %v11178
        %v11703 = vpack.c.b16 %v11187, %v11183
        %v11704 = vpack.c.b16 %v11188, %v11184
        %v11705 = vpack.c.b16 %v11189, %v11185
        %v11706 = vpack.c.b16 %v11190, %v11186
        %v11707 = vpack.c.b16 %v11195, %v11191
        %v11708 = vpack.c.b16 %v11196, %v11192
        %v11709 = vpack.c.b16 %v11197, %v11193
        %v11710 = vpack.c.b16 %v11198, %v11194
        %12223 = vmatprep.subr.bf16.mxu0 %v11200
        %12224 = vmatpush1.bf16.msra.mxu0 %v11199
        %12225 = vmatprep.subr.bf16.mxu0 %v11204
        %12226 = vmatpush1.bf16.msra.mxu0 %v11203
        %12227 = vmatprep.subr.bf16.mxu0 %v11208
        %12228 = vmatpush1.bf16.msra.mxu0 %v11207
        %12229 = vmatprep.subr.bf16.mxu0 %v11212
        %12230 = vmatpush1.bf16.msra.mxu0 %v11211
        %12231 = vmatprep.subr.bf16.mxu0 %v11216
        %12232 = vmatpush1.bf16.msra.mxu0 %v11215
        %12233 = vmatprep.subr.bf16.mxu0 %v11220
        %12234 = vmatpush1.bf16.msra.mxu0 %v11219
        %12235 = vmatprep.subr.bf16.mxu0 %v11224
        %12236 = vmatpush1.bf16.msra.mxu0 %v11223
        %12237 = vmatprep.subr.bf16.mxu0 %v11228
        %12238 = vmatpush1.bf16.msra.mxu0 %v11227
        %12239 = vmatprep.subr.bf16.mxu0 %v11232
        %12240 = vmatpush1.bf16.msra.mxu0 %v11231
        %12241 = vmatprep.subr.bf16.mxu0 %v11236
        %12242 = vmatpush1.bf16.msra.mxu0 %v11235
        %12243 = vmatprep.subr.bf16.mxu0 %v11240
        %12244 = vmatpush1.bf16.msra.mxu0 %v11239
        %12245 = vmatprep.subr.bf16.mxu0 %v11244
        %12246 = vmatpush1.bf16.msra.mxu0 %v11243
        %12247 = vmatprep.subr.bf16.mxu0 %v11248
        %12248 = vmatpush1.bf16.msra.mxu0 %v11247
        %12249 = vmatprep.subr.bf16.mxu0 %v11252
        %12250 = vmatpush1.bf16.msra.mxu0 %v11251
        %12251 = vmatprep.subr.bf16.mxu0 %v11256
        %12252 = vmatpush1.bf16.msra.mxu0 %v11255
        %12253 = vmatprep.subr.bf16.mxu0 %v11260
        %12254 = vmatpush1.bf16.msra.mxu0 %v11259
        %12255 = vmatprep.mubr.bf16.mxu0 %v9115
        %12256 = vmatmul.mubr.bf16.gmra.mrb[0].mxu0 %v9114
        %v12257 = vpop.f32.mrb[0].mxu0
        %v12258 = vadd.f32 %v9646, %v12257
        %v12259 = vpop.f32.mrb[0].mxu0
        %v12260 = vadd.f32 %v9650, %v12259
        %v12261 = vpop.f32.mrb[0].mxu0
        %v12262 = vadd.f32 %v9646, %v12261
        %v12263 = vpop.f32.mrb[0].mxu0
        %v12264 = vadd.f32 %v9650, %v12263
        %12265 = vdwg.mxu0
        %12266 = vmatprep.subr.bf16.mxu0 %v11264
        %12267 = vmatpush1.bf16.msra.mxu0 %v11263
        %12268 = vmatprep.subr.bf16.mxu0 %v11268
        %12269 = vmatpush1.bf16.msra.mxu0 %v11267
        %12270 = vmatprep.subr.bf16.mxu0 %v11272
        %12271 = vmatpush1.bf16.msra.mxu0 %v11271
        %12272 = vmatprep.subr.bf16.mxu0 %v11276
        %12273 = vmatpush1.bf16.msra.mxu0 %v11275
        %12274 = vmatprep.subr.bf16.mxu0 %v11280
        %12275 = vmatpush1.bf16.msra.mxu0 %v11279
        %12276 = vmatprep.subr.bf16.mxu0 %v11284
        %12277 = vmatpush1.bf16.msra.mxu0 %v11283
        %12278 = vmatprep.subr.bf16.mxu0 %v11288
        %12279 = vmatpush1.bf16.msra.mxu0 %v11287
        %12280 = vmatprep.subr.bf16.mxu0 %v11292
        %12281 = vmatpush1.bf16.msra.mxu0 %v11291
        %12282 = vmatprep.subr.bf16.mxu0 %v11296
        %12283 = vmatpush1.bf16.msra.mxu0 %v11295
        %12284 = vmatprep.subr.bf16.mxu0 %v11300
        %12285 = vmatpush1.bf16.msra.mxu0 %v11299
        %12286 = vmatprep.subr.bf16.mxu0 %v11304
        %12287 = vmatpush1.bf16.msra.mxu0 %v11303
        %12288 = vmatprep.subr.bf16.mxu0 %v11308
        %12289 = vmatpush1.bf16.msra.mxu0 %v11307
        %12290 = vmatprep.subr.bf16.mxu0 %v11312
        %12291 = vmatpush1.bf16.msra.mxu0 %v11311
        %12292 = vmatprep.subr.bf16.mxu0 %v11316
        %12293 = vmatpush1.bf16.msra.mxu0 %v11315
        %12294 = vmatprep.subr.bf16.mxu0 %v11320
        %12295 = vmatpush1.bf16.msra.mxu0 %v11319
        %12296 = vmatprep.subr.bf16.mxu0 %v11324
        %12297 = vmatpush1.bf16.msra.mxu0 %v11323
        %12298 = vmatprep.mubr.bf16.mxu0 %v9117
        %12299 = vmatmul.mubr.bf16.gmra.mrb[0].mxu0 %v9116
        %v12300 = vpop.f32.mrb[0].mxu0
        %v12301 = vadd.f32 %v12258, %v12300
        %v12302 = vpop.f32.mrb[0].mxu0
        %v12303 = vadd.f32 %v12260, %v12302
        %v12304 = vpop.f32.mrb[0].mxu0
        %v12305 = vadd.f32 %v12262, %v12304
        %v12306 = vpop.f32.mrb[0].mxu0
        %v12307 = vadd.f32 %v12264, %v12306
        %12308 = vdwg.mxu0
        %12309 = vmatprep.subr.bf16.mxu0 %v11328
        %12310 = vmatpush1.bf16.msra.mxu0 %v11327
        %12311 = vmatprep.subr.bf16.mxu0 %v11332
        %12312 = vmatpush1.bf16.msra.mxu0 %v11331
        %12313 = vmatprep.subr.bf16.mxu0 %v11336
        %12314 = vmatpush1.bf16.msra.mxu0 %v11335
        %12315 = vmatprep.subr.bf16.mxu0 %v11340
        %12316 = vmatpush1.bf16.msra.mxu0 %v11339
        %12317 = vmatprep.subr.bf16.mxu0 %v11344
        %12318 = vmatpush1.bf16.msra.mxu0 %v11343
        %12319 = vmatprep.subr.bf16.mxu0 %v11348
        %12320 = vmatpush1.bf16.msra.mxu0 %v11347
        %12321 = vmatprep.subr.bf16.mxu0 %v11352
        %12322 = vmatpush1.bf16.msra.mxu0 %v11351
        %12323 = vmatprep.subr.bf16.mxu0 %v11356
        %12324 = vmatpush1.bf16.msra.mxu0 %v11355
        %12325 = vmatprep.subr.bf16.mxu0 %v11360
        %12326 = vmatpush1.bf16.msra.mxu0 %v11359
        %12327 = vmatprep.subr.bf16.mxu0 %v11364
        %12328 = vmatpush1.bf16.msra.mxu0 %v11363
        %12329 = vmatprep.subr.bf16.mxu0 %v11368
        %12330 = vmatpush1.bf16.msra.mxu0 %v11367
        %12331 = vmatprep.subr.bf16.mxu0 %v11372
        %12332 = vmatpush1.bf16.msra.mxu0 %v11371
        %12333 = vmatprep.subr.bf16.mxu0 %v11376
        %12334 = vmatpush1.bf16.msra.mxu0 %v11375
        %12335 = vmatprep.subr.bf16.mxu0 %v11380
        %12336 = vmatpush1.bf16.msra.mxu0 %v11379
        %12337 = vmatprep.subr.bf16.mxu0 %v11384
        %12338 = vmatpush1.bf16.msra.mxu0 %v11383
        %12339 = vmatprep.subr.bf16.mxu0 %v11388
        %12340 = vmatpush1.bf16.msra.mxu0 %v11387
        %12341 = vmatprep.mubr.bf16.mxu0 %v9119
        %12342 = vmatmul.mubr.bf16.gmra.mrb[0].mxu0 %v9118
        %v12343 = vpop.f32.mrb[0].mxu0
        %v12344 = vadd.f32 %v12301, %v12343
        %v12345 = vpop.f32.mrb[0].mxu0
        %v12346 = vadd.f32 %v12303, %v12345
        %v12347 = vpop.f32.mrb[0].mxu0
        %v12348 = vadd.f32 %v12305, %v12347
        %v12349 = vpop.f32.mrb[0].mxu0
        %v12350 = vadd.f32 %v12307, %v12349
        %12351 = vdwg.mxu0
        %12352 = vmatprep.subr.bf16.mxu0 %v11392
        %12353 = vmatpush1.bf16.msra.mxu0 %v11391
        %12354 = vmatprep.subr.bf16.mxu0 %v11396
        %12355 = vmatpush1.bf16.msra.mxu0 %v11395
        %12356 = vmatprep.subr.bf16.mxu0 %v11400
        %12357 = vmatpush1.bf16.msra.mxu0 %v11399
        %12358 = vmatprep.subr.bf16.mxu0 %v11404
        %12359 = vmatpush1.bf16.msra.mxu0 %v11403
        %12360 = vmatprep.subr.bf16.mxu0 %v11408
        %12361 = vmatpush1.bf16.msra.mxu0 %v11407
        %12362 = vmatprep.subr.bf16.mxu0 %v11412
        %12363 = vmatpush1.bf16.msra.mxu0 %v11411
        %12364 = vmatprep.subr.bf16.mxu0 %v11416
        %12365 = vmatpush1.bf16.msra.mxu0 %v11415
        %12366 = vmatprep.subr.bf16.mxu0 %v11420
        %12367 = vmatpush1.bf16.msra.mxu0 %v11419
        %12368 = vmatprep.subr.bf16.mxu0 %v11424
        %12369 = vmatpush1.bf16.msra.mxu0 %v11423
        %12370 = vmatprep.subr.bf16.mxu0 %v11428
        %12371 = vmatpush1.bf16.msra.mxu0 %v11427
        %12372 = vmatprep.subr.bf16.mxu0 %v11432
        %12373 = vmatpush1.bf16.msra.mxu0 %v11431
        %12374 = vmatprep.subr.bf16.mxu0 %v11436
        %12375 = vmatpush1.bf16.msra.mxu0 %v11435
        %12376 = vmatprep.subr.bf16.mxu0 %v11440
        %12377 = vmatpush1.bf16.msra.mxu0 %v11439
        %12378 = vmatprep.subr.bf16.mxu0 %v11444
        %12379 = vmatpush1.bf16.msra.mxu0 %v11443
        %12380 = vmatprep.subr.bf16.mxu0 %v11448
        %12381 = vmatpush1.bf16.msra.mxu0 %v11447
        %12382 = vmatprep.subr.bf16.mxu0 %v11452
        %12383 = vmatpush1.bf16.msra.mxu0 %v11451
        %12384 = vmatprep.mubr.bf16.mxu0 %v9121
        %12385 = vmatmul.mubr.bf16.gmra.mrb[0].mxu0 %v9120
        %v12386 = vpop.f32.mrb[0].mxu0
        %v12387 = vadd.f32 %v12344, %v12386
        %v12388 = vpop.f32.mrb[0].mxu0
        %v12389 = vadd.f32 %v12346, %v12388
        %v12390 = vpop.f32.mrb[0].mxu0
        %v12391 = vadd.f32 %v12348, %v12390
        %v12392 = vpop.f32.mrb[0].mxu0
        %v12393 = vadd.f32 %v12350, %v12392
        %12394 = vdwg.mxu0
        %12395 = vmatprep.subr.bf16.mxu0 %v11456
        %12396 = vmatpush1.bf16.msra.mxu0 %v11455
        %12397 = vmatprep.subr.bf16.mxu0 %v11460
        %12398 = vmatpush1.bf16.msra.mxu0 %v11459
        %12399 = vmatprep.subr.bf16.mxu0 %v11464
        %12400 = vmatpush1.bf16.msra.mxu0 %v11463
        %12401 = vmatprep.subr.bf16.mxu0 %v11468
        %12402 = vmatpush1.bf16.msra.mxu0 %v11467
        %12403 = vmatprep.subr.bf16.mxu0 %v11472
        %12404 = vmatpush1.bf16.msra.mxu0 %v11471
        %12405 = vmatprep.subr.bf16.mxu0 %v11476
        %12406 = vmatpush1.bf16.msra.mxu0 %v11475
        %12407 = vmatprep.subr.bf16.mxu0 %v11480
        %12408 = vmatpush1.bf16.msra.mxu0 %v11479
        %12409 = vmatprep.subr.bf16.mxu0 %v11484
        %12410 = vmatpush1.bf16.msra.mxu0 %v11483
        %12411 = vmatprep.subr.bf16.mxu0 %v11488
        %12412 = vmatpush1.bf16.msra.mxu0 %v11487
        %12413 = vmatprep.subr.bf16.mxu0 %v11492
        %12414 = vmatpush1.bf16.msra.mxu0 %v11491
        %12415 = vmatprep.subr.bf16.mxu0 %v11496
        %12416 = vmatpush1.bf16.msra.mxu0 %v11495
        %12417 = vmatprep.subr.bf16.mxu0 %v11500
        %12418 = vmatpush1.bf16.msra.mxu0 %v11499
        %12419 = vmatprep.subr.bf16.mxu0 %v11504
        %12420 = vmatpush1.bf16.msra.mxu0 %v11503
        %12421 = vmatprep.subr.bf16.mxu0 %v11508
        %12422 = vmatpush1.bf16.msra.mxu0 %v11507
        %12423 = vmatprep.subr.bf16.mxu0 %v11512
        %12424 = vmatpush1.bf16.msra.mxu0 %v11511
        %12425 = vmatprep.subr.bf16.mxu0 %v11516
        %12426 = vmatpush1.bf16.msra.mxu0 %v11515
        %12427 = vmatprep.mubr.bf16.mxu0 %v9123
        %12428 = vmatmul.mubr.bf16.gmra.mrb[0].mxu0 %v9122
        %v12429 = vpop.f32.mrb[0].mxu0
        %v12430 = vadd.f32 %v12387, %v12429
        %v12431 = vpop.f32.mrb[0].mxu0
        %v12432 = vadd.f32 %v12389, %v12431
        %v12433 = vpop.f32.mrb[0].mxu0
        %v12434 = vadd.f32 %v12391, %v12433
        %v12435 = vpop.f32.mrb[0].mxu0
        %v12436 = vadd.f32 %v12393, %v12435
        %12437 = vdwg.mxu0
        %12438 = vmatprep.subr.bf16.mxu0 %v11520
        %12439 = vmatpush1.bf16.msra.mxu0 %v11519
        %12440 = vmatprep.subr.bf16.mxu0 %v11524
        %12441 = vmatpush1.bf16.msra.mxu0 %v11523
        %12442 = vmatprep.subr.bf16.mxu0 %v11528
        %12443 = vmatpush1.bf16.msra.mxu0 %v11527
        %12444 = vmatprep.subr.bf16.mxu0 %v11532
        %12445 = vmatpush1.bf16.msra.mxu0 %v11531
        %12446 = vmatprep.subr.bf16.mxu0 %v11536
        %12447 = vmatpush1.bf16.msra.mxu0 %v11535
        %12448 = vmatprep.subr.bf16.mxu0 %v11540
        %12449 = vmatpush1.bf16.msra.mxu0 %v11539
        %12450 = vmatprep.subr.bf16.mxu0 %v11544
        %12451 = vmatpush1.bf16.msra.mxu0 %v11543
        %12452 = vmatprep.subr.bf16.mxu0 %v11548
        %12453 = vmatpush1.bf16.msra.mxu0 %v11547
        %12454 = vmatprep.subr.bf16.mxu0 %v11552
        %12455 = vmatpush1.bf16.msra.mxu0 %v11551
        %12456 = vmatprep.subr.bf16.mxu0 %v11556
        %12457 = vmatpush1.bf16.msra.mxu0 %v11555
        %12458 = vmatprep.subr.bf16.mxu0 %v11560
        %12459 = vmatpush1.bf16.msra.mxu0 %v11559
        %12460 = vmatprep.subr.bf16.mxu0 %v11564
        %12461 = vmatpush1.bf16.msra.mxu0 %v11563
        %12462 = vmatprep.subr.bf16.mxu0 %v11568
        %12463 = vmatpush1.bf16.msra.mxu0 %v11567
        %12464 = vmatprep.subr.bf16.mxu0 %v11572
        %12465 = vmatpush1.bf16.msra.mxu0 %v11571
        %12466 = vmatprep.subr.bf16.mxu0 %v11576
        %12467 = vmatpush1.bf16.msra.mxu0 %v11575
        %12468 = vmatprep.subr.bf16.mxu0 %v11580
        %12469 = vmatpush1.bf16.msra.mxu0 %v11579
        %12470 = vmatprep.mubr.bf16.mxu0 %v9125
        %12471 = vmatmul.mubr.bf16.gmra.mrb[0].mxu0 %v9124
        %v12472 = vpop.f32.mrb[0].mxu0
        %v12473 = vadd.f32 %v12430, %v12472
        %v12474 = vpop.f32.mrb[0].mxu0
        %v12475 = vadd.f32 %v12432, %v12474
        %v12476 = vpop.f32.mrb[0].mxu0
        %v12477 = vadd.f32 %v12434, %v12476
        %v12478 = vpop.f32.mrb[0].mxu0
        %v12479 = vadd.f32 %v12436, %v12478
        %12480 = vdwg.mxu0
        %12481 = vmatprep.subr.bf16.mxu0 %v11584
        %12482 = vmatpush1.bf16.msra.mxu0 %v11583
        %12483 = vmatprep.subr.bf16.mxu0 %v11588
        %12484 = vmatpush1.bf16.msra.mxu0 %v11587
        %12485 = vmatprep.subr.bf16.mxu0 %v11592
        %12486 = vmatpush1.bf16.msra.mxu0 %v11591
        %12487 = vmatprep.subr.bf16.mxu0 %v11596
        %12488 = vmatpush1.bf16.msra.mxu0 %v11595
        %12489 = vmatprep.subr.bf16.mxu0 %v11600
        %12490 = vmatpush1.bf16.msra.mxu0 %v11599
        %12491 = vmatprep.subr.bf16.mxu0 %v11604
        %12492 = vmatpush1.bf16.msra.mxu0 %v11603
        %12493 = vmatprep.subr.bf16.mxu0 %v11608
        %12494 = vmatpush1.bf16.msra.mxu0 %v11607
        %12495 = vmatprep.subr.bf16.mxu0 %v11612
        %12496 = vmatpush1.bf16.msra.mxu0 %v11611
        %12497 = vmatprep.subr.bf16.mxu0 %v11616
        %12498 = vmatpush1.bf16.msra.mxu0 %v11615
        %12499 = vmatprep.subr.bf16.mxu0 %v11620
        %12500 = vmatpush1.bf16.msra.mxu0 %v11619
        %12501 = vmatprep.subr.bf16.mxu0 %v11624
        %12502 = vmatpush1.bf16.msra.mxu0 %v11623
        %12503 = vmatprep.subr.bf16.mxu0 %v11628
        %12504 = vmatpush1.bf16.msra.mxu0 %v11627
        %12505 = vmatprep.subr.bf16.mxu0 %v11632
        %12506 = vmatpush1.bf16.msra.mxu0 %v11631
        %12507 = vmatprep.subr.bf16.mxu0 %v11636
        %12508 = vmatpush1.bf16.msra.mxu0 %v11635
        %12509 = vmatprep.subr.bf16.mxu0 %v11640
        %12510 = vmatpush1.bf16.msra.mxu0 %v11639
        %12511 = vmatprep.subr.bf16.mxu0 %v11644
        %12512 = vmatpush1.bf16.msra.mxu0 %v11643
        %12513 = vmatprep.mubr.bf16.mxu0 %v9127
        %12514 = vmatmul.mubr.bf16.gmra.mrb[0].mxu0 %v9126
        %v12515 = vpop.f32.mrb[0].mxu0
        %v12516 = vadd.f32 %v12473, %v12515
        %v12517 = vpop.f32.mrb[0].mxu0
        %v12518 = vadd.f32 %v12475, %v12517
        %v12519 = vpop.f32.mrb[0].mxu0
        %v12520 = vadd.f32 %v12477, %v12519
        %v12521 = vpop.f32.mrb[0].mxu0
        %v12522 = vadd.f32 %v12479, %v12521
        %12523 = vdwg.mxu0
        %12524 = vmatprep.subr.bf16.mxu0 %v11648
        %12525 = vmatpush1.bf16.msra.mxu0 %v11647
        %12526 = vmatprep.subr.bf16.mxu0 %v11652
        %12527 = vmatpush1.bf16.msra.mxu0 %v11651
        %12528 = vmatprep.subr.bf16.mxu0 %v11656
        %12529 = vmatpush1.bf16.msra.mxu0 %v11655
        %12530 = vmatprep.subr.bf16.mxu0 %v11660
        %12531 = vmatpush1.bf16.msra.mxu0 %v11659
        %12532 = vmatprep.subr.bf16.mxu0 %v11664
        %12533 = vmatpush1.bf16.msra.mxu0 %v11663
        %12534 = vmatprep.subr.bf16.mxu0 %v11668
        %12535 = vmatpush1.bf16.msra.mxu0 %v11667
        %12536 = vmatprep.subr.bf16.mxu0 %v11672
        %12537 = vmatpush1.bf16.msra.mxu0 %v11671
        %12538 = vmatprep.subr.bf16.mxu0 %v11676
        %12539 = vmatpush1.bf16.msra.mxu0 %v11675
        %12540 = vmatprep.subr.bf16.mxu0 %v11680
        %12541 = vmatpush1.bf16.msra.mxu0 %v11679
        %12542 = vmatprep.subr.bf16.mxu0 %v11684
        %12543 = vmatpush1.bf16.msra.mxu0 %v11683
        %12544 = vmatprep.subr.bf16.mxu0 %v11688
        %12545 = vmatpush1.bf16.msra.mxu0 %v11687
        %12546 = vmatprep.subr.bf16.mxu0 %v11692
        %12547 = vmatpush1.bf16.msra.mxu0 %v11691
        %12548 = vmatprep.subr.bf16.mxu0 %v11696
        %12549 = vmatpush1.bf16.msra.mxu0 %v11695
        %12550 = vmatprep.subr.bf16.mxu0 %v11700
        %12551 = vmatpush1.bf16.msra.mxu0 %v11699
        %12552 = vmatprep.subr.bf16.mxu0 %v11704
        %12553 = vmatpush1.bf16.msra.mxu0 %v11703
        %12554 = vmatprep.subr.bf16.mxu0 %v11708
        %12555 = vmatpush1.bf16.msra.mxu0 %v11707
        %12556 = vmatprep.mubr.bf16.mxu0 %v9129
        %12557 = vmatmul.mubr.bf16.gmra.mrb[0].mxu0 %v9128
        %v12558 = vpop.f32.mrb[0].mxu0
        %v12559 = vadd.f32 %v12516, %v12558
        %v12560 = vpop.f32.mrb[0].mxu0
        %v12561 = vadd.f32 %v12518, %v12560
        %v12562 = vpop.f32.mrb[0].mxu0
        %v12563 = vadd.f32 %v12520, %v12562
        %v12564 = vpop.f32.mrb[0].mxu0
        %v12565 = vadd.f32 %v12522, %v12564
        %12566 = vdwg.mxu0
        %12567 = vmatprep.subr.bf16.mxu0 %v11202
        %12568 = vmatpush1.bf16.msra.mxu0 %v11201
        %12569 = vmatprep.subr.bf16.mxu0 %v11206
        %12570 = vmatpush1.bf16.msra.mxu0 %v11205
        %12571 = vmatprep.subr.bf16.mxu0 %v11210
        %12572 = vmatpush1.bf16.msra.mxu0 %v11209
        %12573 = vmatprep.subr.bf16.mxu0 %v11214
        %12574 = vmatpush1.bf16.msra.mxu0 %v11213
        %12575 = vmatprep.subr.bf16.mxu0 %v11218
        %12576 = vmatpush1.bf16.msra.mxu0 %v11217
        %12577 = vmatprep.subr.bf16.mxu0 %v11222
        %12578 = vmatpush1.bf16.msra.mxu0 %v11221
        %12579 = vmatprep.subr.bf16.mxu0 %v11226
        %12580 = vmatpush1.bf16.msra.mxu0 %v11225
        %12581 = vmatprep.subr.bf16.mxu0 %v11230
        %12582 = vmatpush1.bf16.msra.mxu0 %v11229
        %12583 = vmatprep.subr.bf16.mxu0 %v11234
        %12584 = vmatpush1.bf16.msra.mxu0 %v11233
        %12585 = vmatprep.subr.bf16.mxu0 %v11238
        %12586 = vmatpush1.bf16.msra.mxu0 %v11237
        %12587 = vmatprep.subr.bf16.mxu0 %v11242
        %12588 = vmatpush1.bf16.msra.mxu0 %v11241
        %12589 = vmatprep.subr.bf16.mxu0 %v11246
        %12590 = vmatpush1.bf16.msra.mxu0 %v11245
        %12591 = vmatprep.subr.bf16.mxu0 %v11250
        %12592 = vmatpush1.bf16.msra.mxu0 %v11249
        %12593 = vmatprep.subr.bf16.mxu0 %v11254
        %12594 = vmatpush1.bf16.msra.mxu0 %v11253
        %12595 = vmatprep.subr.bf16.mxu0 %v11258
        %12596 = vmatpush1.bf16.msra.mxu0 %v11257
        %12597 = vmatprep.subr.bf16.mxu0 %v11262
        %12598 = vmatpush1.bf16.msra.mxu0 %v11261
        %12599 = vmatprep.mubr.bf16.mxu0 %v9115
        %12600 = vmatmul.mubr.bf16.gmra.mrb[0].mxu0 %v9114
        %v12601 = vpop.f32.mrb[0].mxu0
        %v12602 = vadd.f32 %v9654, %v12601
        %v12603 = vpop.f32.mrb[0].mxu0
        %v12604 = vadd.f32 %v9658, %v12603
        %v12605 = vpop.f32.mrb[0].mxu0
        %v12606 = vadd.f32 %v9654, %v12605
        %v12607 = vpop.f32.mrb[0].mxu0
        %v12608 = vadd.f32 %v9658, %v12607
        %12609 = vdwg.mxu0
        %12610 = vmatprep.subr.bf16.mxu0 %v11266
        %12611 = vmatpush1.bf16.msra.mxu0 %v11265
        %12612 = vmatprep.subr.bf16.mxu0 %v11270
        %12613 = vmatpush1.bf16.msra.mxu0 %v11269
        %12614 = vmatprep.subr.bf16.mxu0 %v11274
        %12615 = vmatpush1.bf16.msra.mxu0 %v11273
        %12616 = vmatprep.subr.bf16.mxu0 %v11278
        %12617 = vmatpush1.bf16.msra.mxu0 %v11277
        %12618 = vmatprep.subr.bf16.mxu0 %v11282
        %12619 = vmatpush1.bf16.msra.mxu0 %v11281
        %12620 = vmatprep.subr.bf16.mxu0 %v11286
        %12621 = vmatpush1.bf16.msra.mxu0 %v11285
        %12622 = vmatprep.subr.bf16.mxu0 %v11290
        %12623 = vmatpush1.bf16.msra.mxu0 %v11289
        %12624 = vmatprep.subr.bf16.mxu0 %v11294
        %12625 = vmatpush1.bf16.msra.mxu0 %v11293
        %12626 = vmatprep.subr.bf16.mxu0 %v11298
        %12627 = vmatpush1.bf16.msra.mxu0 %v11297
        %12628 = vmatprep.subr.bf16.mxu0 %v11302
        %12629 = vmatpush1.bf16.msra.mxu0 %v11301
        %12630 = vmatprep.subr.bf16.mxu0 %v11306
        %12631 = vmatpush1.bf16.msra.mxu0 %v11305
        %12632 = vmatprep.subr.bf16.mxu0 %v11310
        %12633 = vmatpush1.bf16.msra.mxu0 %v11309
        %12634 = vmatprep.subr.bf16.mxu0 %v11314
        %12635 = vmatpush1.bf16.msra.mxu0 %v11313
        %12636 = vmatprep.subr.bf16.mxu0 %v11318
        %12637 = vmatpush1.bf16.msra.mxu0 %v11317
        %12638 = vmatprep.subr.bf16.mxu0 %v11322
        %12639 = vmatpush1.bf16.msra.mxu0 %v11321
        %12640 = vmatprep.subr.bf16.mxu0 %v11326
        %12641 = vmatpush1.bf16.msra.mxu0 %v11325
        %12642 = vmatprep.mubr.bf16.mxu0 %v9117
        %12643 = vmatmul.mubr.bf16.gmra.mrb[0].mxu0 %v9116
        %v12644 = vpop.f32.mrb[0].mxu0
        %v12645 = vadd.f32 %v12602, %v12644
        %v12646 = vpop.f32.mrb[0].mxu0
        %v12647 = vadd.f32 %v12604, %v12646
        %v12648 = vpop.f32.mrb[0].mxu0
        %v12649 = vadd.f32 %v12606, %v12648
        %v12650 = vpop.f32.mrb[0].mxu0
        %v12651 = vadd.f32 %v12608, %v12650
        %12652 = vdwg.mxu0
        %12653 = vmatprep.subr.bf16.mxu0 %v11330
        %12654 = vmatpush1.bf16.msra.mxu0 %v11329
        %12655 = vmatprep.subr.bf16.mxu0 %v11334
        %12656 = vmatpush1.bf16.msra.mxu0 %v11333
        %12657 = vmatprep.subr.bf16.mxu0 %v11338
        %12658 = vmatpush1.bf16.msra.mxu0 %v11337
        %12659 = vmatprep.subr.bf16.mxu0 %v11342
        %12660 = vmatpush1.bf16.msra.mxu0 %v11341
        %12661 = vmatprep.subr.bf16.mxu0 %v11346
        %12662 = vmatpush1.bf16.msra.mxu0 %v11345
        %12663 = vmatprep.subr.bf16.mxu0 %v11350
        %12664 = vmatpush1.bf16.msra.mxu0 %v11349
        %12665 = vmatprep.subr.bf16.mxu0 %v11354
        %12666 = vmatpush1.bf16.msra.mxu0 %v11353
        %12667 = vmatprep.subr.bf16.mxu0 %v11358
        %12668 = vmatpush1.bf16.msra.mxu0 %v11357
        %12669 = vmatprep.subr.bf16.mxu0 %v11362
        %12670 = vmatpush1.bf16.msra.mxu0 %v11361
        %12671 = vmatprep.subr.bf16.mxu0 %v11366
        %12672 = vmatpush1.bf16.msra.mxu0 %v11365
        %12673 = vmatprep.subr.bf16.mxu0 %v11370
        %12674 = vmatpush1.bf16.msra.mxu0 %v11369
        %12675 = vmatprep.subr.bf16.mxu0 %v11374
        %12676 = vmatpush1.bf16.msra.mxu0 %v11373
        %12677 = vmatprep.subr.bf16.mxu0 %v11378
        %12678 = vmatpush1.bf16.msra.mxu0 %v11377
        %12679 = vmatprep.subr.bf16.mxu0 %v11382
        %12680 = vmatpush1.bf16.msra.mxu0 %v11381
        %12681 = vmatprep.subr.bf16.mxu0 %v11386
        %12682 = vmatpush1.bf16.msra.mxu0 %v11385
        %12683 = vmatprep.subr.bf16.mxu0 %v11390
        %12684 = vmatpush1.bf16.msra.mxu0 %v11389
        %12685 = vmatprep.mubr.bf16.mxu0 %v9119
        %12686 = vmatmul.mubr.bf16.gmra.mrb[0].mxu0 %v9118
        %v12687 = vpop.f32.mrb[0].mxu0
        %v12688 = vadd.f32 %v12645, %v12687
        %v12689 = vpop.f32.mrb[0].mxu0
        %v12690 = vadd.f32 %v12647, %v12689
        %v12691 = vpop.f32.mrb[0].mxu0
        %v12692 = vadd.f32 %v12649, %v12691
        %v12693 = vpop.f32.mrb[0].mxu0
        %v12694 = vadd.f32 %v12651, %v12693
        %12695 = vdwg.mxu0
        %12696 = vmatprep.subr.bf16.mxu0 %v11394
        %12697 = vmatpush1.bf16.msra.mxu0 %v11393
        %12698 = vmatprep.subr.bf16.mxu0 %v11398
        %12699 = vmatpush1.bf16.msra.mxu0 %v11397
        %12700 = vmatprep.subr.bf16.mxu0 %v11402
        %12701 = vmatpush1.bf16.msra.mxu0 %v11401
        %12702 = vmatprep.subr.bf16.mxu0 %v11406
        %12703 = vmatpush1.bf16.msra.mxu0 %v11405
        %12704 = vmatprep.subr.bf16.mxu0 %v11410
        %12705 = vmatpush1.bf16.msra.mxu0 %v11409
        %12706 = vmatprep.subr.bf16.mxu0 %v11414
        %12707 = vmatpush1.bf16.msra.mxu0 %v11413
        %12708 = vmatprep.subr.bf16.mxu0 %v11418
        %12709 = vmatpush1.bf16.msra.mxu0 %v11417
        %12710 = vmatprep.subr.bf16.mxu0 %v11422
        %12711 = vmatpush1.bf16.msra.mxu0 %v11421
        %12712 = vmatprep.subr.bf16.mxu0 %v11426
        %12713 = vmatpush1.bf16.msra.mxu0 %v11425
        %12714 = vmatprep.subr.bf16.mxu0 %v11430
        %12715 = vmatpush1.bf16.msra.mxu0 %v11429
        %12716 = vmatprep.subr.bf16.mxu0 %v11434
        %12717 = vmatpush1.bf16.msra.mxu0 %v11433
        %12718 = vmatprep.subr.bf16.mxu0 %v11438
        %12719 = vmatpush1.bf16.msra.mxu0 %v11437
        %12720 = vmatprep.subr.bf16.mxu0 %v11442
        %12721 = vmatpush1.bf16.msra.mxu0 %v11441
        %12722 = vmatprep.subr.bf16.mxu0 %v11446
        %12723 = vmatpush1.bf16.msra.mxu0 %v11445
        %12724 = vmatprep.subr.bf16.mxu0 %v11450
        %12725 = vmatpush1.bf16.msra.mxu0 %v11449
        %12726 = vmatprep.subr.bf16.mxu0 %v11454
        %12727 = vmatpush1.bf16.msra.mxu0 %v11453
        %12728 = vmatprep.mubr.bf16.mxu0 %v9121
        %12729 = vmatmul.mubr.bf16.gmra.mrb[0].mxu0 %v9120
        %v12730 = vpop.f32.mrb[0].mxu0
        %v12731 = vadd.f32 %v12688, %v12730
        %v12732 = vpop.f32.mrb[0].mxu0
        %v12733 = vadd.f32 %v12690, %v12732
        %v12734 = vpop.f32.mrb[0].mxu0
        %v12735 = vadd.f32 %v12692, %v12734
        %v12736 = vpop.f32.mrb[0].mxu0
        %v12737 = vadd.f32 %v12694, %v12736
        %12738 = vdwg.mxu0
        %12739 = vmatprep.subr.bf16.mxu0 %v11458
        %12740 = vmatpush1.bf16.msra.mxu0 %v11457
        %12741 = vmatprep.subr.bf16.mxu0 %v11462
        %12742 = vmatpush1.bf16.msra.mxu0 %v11461
        %12743 = vmatprep.subr.bf16.mxu0 %v11466
        %12744 = vmatpush1.bf16.msra.mxu0 %v11465
        %12745 = vmatprep.subr.bf16.mxu0 %v11470
        %12746 = vmatpush1.bf16.msra.mxu0 %v11469
        %12747 = vmatprep.subr.bf16.mxu0 %v11474
        %12748 = vmatpush1.bf16.msra.mxu0 %v11473
        %12749 = vmatprep.subr.bf16.mxu0 %v11478
        %12750 = vmatpush1.bf16.msra.mxu0 %v11477
        %12751 = vmatprep.subr.bf16.mxu0 %v11482
        %12752 = vmatpush1.bf16.msra.mxu0 %v11481
        %12753 = vmatprep.subr.bf16.mxu0 %v11486
        %12754 = vmatpush1.bf16.msra.mxu0 %v11485
        %12755 = vmatprep.subr.bf16.mxu0 %v11490
        %12756 = vmatpush1.bf16.msra.mxu0 %v11489
        %12757 = vmatprep.subr.bf16.mxu0 %v11494
        %12758 = vmatpush1.bf16.msra.mxu0 %v11493
        %12759 = vmatprep.subr.bf16.mxu0 %v11498
        %12760 = vmatpush1.bf16.msra.mxu0 %v11497
        %12761 = vmatprep.subr.bf16.mxu0 %v11502
        %12762 = vmatpush1.bf16.msra.mxu0 %v11501
        %12763 = vmatprep.subr.bf16.mxu0 %v11506
        %12764 = vmatpush1.bf16.msra.mxu0 %v11505
        %12765 = vmatprep.subr.bf16.mxu0 %v11510
        %12766 = vmatpush1.bf16.msra.mxu0 %v11509
        %12767 = vmatprep.subr.bf16.mxu0 %v11514
        %12768 = vmatpush1.bf16.msra.mxu0 %v11513
        %12769 = vmatprep.subr.bf16.mxu0 %v11518
        %12770 = vmatpush1.bf16.msra.mxu0 %v11517
        %12771 = vmatprep.mubr.bf16.mxu0 %v9123
        %12772 = vmatmul.mubr.bf16.gmra.mrb[0].mxu0 %v9122
        %v12773 = vpop.f32.mrb[0].mxu0
        %v12774 = vadd.f32 %v12731, %v12773
        %v12775 = vpop.f32.mrb[0].mxu0
        %v12776 = vadd.f32 %v12733, %v12775
        %v12777 = vpop.f32.mrb[0].mxu0
        %v12778 = vadd.f32 %v12735, %v12777
        %v12779 = vpop.f32.mrb[0].mxu0
        %v12780 = vadd.f32 %v12737, %v12779
        %12781 = vdwg.mxu0
        %12782 = vmatprep.subr.bf16.mxu0 %v11522
        %12783 = vmatpush1.bf16.msra.mxu0 %v11521
        %12784 = vmatprep.subr.bf16.mxu0 %v11526
        %12785 = vmatpush1.bf16.msra.mxu0 %v11525
        %12786 = vmatprep.subr.bf16.mxu0 %v11530
        %12787 = vmatpush1.bf16.msra.mxu0 %v11529
        %12788 = vmatprep.subr.bf16.mxu0 %v11534
        %12789 = vmatpush1.bf16.msra.mxu0 %v11533
        %12790 = vmatprep.subr.bf16.mxu0 %v11538
        %12791 = vmatpush1.bf16.msra.mxu0 %v11537
        %12792 = vmatprep.subr.bf16.mxu0 %v11542
        %12793 = vmatpush1.bf16.msra.mxu0 %v11541
        %12794 = vmatprep.subr.bf16.mxu0 %v11546
        %12795 = vmatpush1.bf16.msra.mxu0 %v11545
        %12796 = vmatprep.subr.bf16.mxu0 %v11550
        %12797 = vmatpush1.bf16.msra.mxu0 %v11549
        %12798 = vmatprep.subr.bf16.mxu0 %v11554
        %12799 = vmatpush1.bf16.msra.mxu0 %v11553
        %12800 = vmatprep.subr.bf16.mxu0 %v11558
        %12801 = vmatpush1.bf16.msra.mxu0 %v11557
        %12802 = vmatprep.subr.bf16.mxu0 %v11562
        %12803 = vmatpush1.bf16.msra.mxu0 %v11561
        %12804 = vmatprep.subr.bf16.mxu0 %v11566
        %12805 = vmatpush1.bf16.msra.mxu0 %v11565
        %12806 = vmatprep.subr.bf16.mxu0 %v11570
        %12807 = vmatpush1.bf16.msra.mxu0 %v11569
        %12808 = vmatprep.subr.bf16.mxu0 %v11574
        %12809 = vmatpush1.bf16.msra.mxu0 %v11573
        %12810 = vmatprep.subr.bf16.mxu0 %v11578
        %12811 = vmatpush1.bf16.msra.mxu0 %v11577
        %12812 = vmatprep.subr.bf16.mxu0 %v11582
        %12813 = vmatpush1.bf16.msra.mxu0 %v11581
        %12814 = vmatprep.mubr.bf16.mxu0 %v9125
        %12815 = vmatmul.mubr.bf16.gmra.mrb[0].mxu0 %v9124
        %v12816 = vpop.f32.mrb[0].mxu0
        %v12817 = vadd.f32 %v12774, %v12816
        %v12818 = vpop.f32.mrb[0].mxu0
        %v12819 = vadd.f32 %v12776, %v12818
        %v12820 = vpop.f32.mrb[0].mxu0
        %v12821 = vadd.f32 %v12778, %v12820
        %v12822 = vpop.f32.mrb[0].mxu0
        %v12823 = vadd.f32 %v12780, %v12822
        %12824 = vdwg.mxu0
        %12825 = vmatprep.subr.bf16.mxu0 %v11586
        %12826 = vmatpush1.bf16.msra.mxu0 %v11585
        %12827 = vmatprep.subr.bf16.mxu0 %v11590
        %12828 = vmatpush1.bf16.msra.mxu0 %v11589
        %12829 = vmatprep.subr.bf16.mxu0 %v11594
        %12830 = vmatpush1.bf16.msra.mxu0 %v11593
        %12831 = vmatprep.subr.bf16.mxu0 %v11598
        %12832 = vmatpush1.bf16.msra.mxu0 %v11597
        %12833 = vmatprep.subr.bf16.mxu0 %v11602
        %12834 = vmatpush1.bf16.msra.mxu0 %v11601
        %12835 = vmatprep.subr.bf16.mxu0 %v11606
        %12836 = vmatpush1.bf16.msra.mxu0 %v11605
        %12837 = vmatprep.subr.bf16.mxu0 %v11610
        %12838 = vmatpush1.bf16.msra.mxu0 %v11609
        %12839 = vmatprep.subr.bf16.mxu0 %v11614
        %12840 = vmatpush1.bf16.msra.mxu0 %v11613
        %12841 = vmatprep.subr.bf16.mxu0 %v11618
        %12842 = vmatpush1.bf16.msra.mxu0 %v11617
        %12843 = vmatprep.subr.bf16.mxu0 %v11622
        %12844 = vmatpush1.bf16.msra.mxu0 %v11621
        %12845 = vmatprep.subr.bf16.mxu0 %v11626
        %12846 = vmatpush1.bf16.msra.mxu0 %v11625
        %12847 = vmatprep.subr.bf16.mxu0 %v11630
        %12848 = vmatpush1.bf16.msra.mxu0 %v11629
        %12849 = vmatprep.subr.bf16.mxu0 %v11634
        %12850 = vmatpush1.bf16.msra.mxu0 %v11633
        %12851 = vmatprep.subr.bf16.mxu0 %v11638
        %12852 = vmatpush1.bf16.msra.mxu0 %v11637
        %12853 = vmatprep.subr.bf16.mxu0 %v11642
        %12854 = vmatpush1.bf16.msra.mxu0 %v11641
        %12855 = vmatprep.subr.bf16.mxu0 %v11646
        %12856 = vmatpush1.bf16.msra.mxu0 %v11645
        %12857 = vmatprep.mubr.bf16.mxu0 %v9127
        %12858 = vmatmul.mubr.bf16.gmra.mrb[0].mxu0 %v9126
        %v12859 = vpop.f32.mrb[0].mxu0
        %v12860 = vadd.f32 %v12817, %v12859
        %v12861 = vpop.f32.mrb[0].mxu0
        %v12862 = vadd.f32 %v12819, %v12861
        %v12863 = vpop.f32.mrb[0].mxu0
        %v12864 = vadd.f32 %v12821, %v12863
        %v12865 = vpop.f32.mrb[0].mxu0
        %v12866 = vadd.f32 %v12823, %v12865
        %12867 = vdwg.mxu0
        %12868 = vmatprep.subr.bf16.mxu0 %v11650
        %12869 = vmatpush1.bf16.msra.mxu0 %v11649
        %12870 = vmatprep.subr.bf16.mxu0 %v11654
        %12871 = vmatpush1.bf16.msra.mxu0 %v11653
        %12872 = vmatprep.subr.bf16.mxu0 %v11658
        %12873 = vmatpush1.bf16.msra.mxu0 %v11657
        %12874 = vmatprep.subr.bf16.mxu0 %v11662
        %12875 = vmatpush1.bf16.msra.mxu0 %v11661
        %12876 = vmatprep.subr.bf16.mxu0 %v11666
        %12877 = vmatpush1.bf16.msra.mxu0 %v11665
        %12878 = vmatprep.subr.bf16.mxu0 %v11670
        %12879 = vmatpush1.bf16.msra.mxu0 %v11669
        %12880 = vmatprep.subr.bf16.mxu0 %v11674
        %12881 = vmatpush1.bf16.msra.mxu0 %v11673
        %12882 = vmatprep.subr.bf16.mxu0 %v11678
        %12883 = vmatpush1.bf16.msra.mxu0 %v11677
        %12884 = vmatprep.subr.bf16.mxu0 %v11682
        %12885 = vmatpush1.bf16.msra.mxu0 %v11681
        %12886 = vmatprep.subr.bf16.mxu0 %v11686
        %12887 = vmatpush1.bf16.msra.mxu0 %v11685
        %12888 = vmatprep.subr.bf16.mxu0 %v11690
        %12889 = vmatpush1.bf16.msra.mxu0 %v11689
        %12890 = vmatprep.subr.bf16.mxu0 %v11694
        %12891 = vmatpush1.bf16.msra.mxu0 %v11693
        %12892 = vmatprep.subr.bf16.mxu0 %v11698
        %12893 = vmatpush1.bf16.msra.mxu0 %v11697
        %12894 = vmatprep.subr.bf16.mxu0 %v11702
        %12895 = vmatpush1.bf16.msra.mxu0 %v11701
        %12896 = vmatprep.subr.bf16.mxu0 %v11706
        %12897 = vmatpush1.bf16.msra.mxu0 %v11705
        %12898 = vmatprep.subr.bf16.mxu0 %v11710
        %12899 = vmatpush1.bf16.msra.mxu0 %v11709
        %12900 = vmatprep.mubr.bf16.mxu0 %v9129
        %12901 = vmatmul.mubr.bf16.gmra.mrb[0].mxu0 %v9128
        %v12902 = vpop.f32.mrb[0].mxu0
        %v12903 = vadd.f32 %v12860, %v12902
        %v12904 = vpop.f32.mrb[0].mxu0
        %v12905 = vadd.f32 %v12862, %v12904
        %v12906 = vpop.f32.mrb[0].mxu0
        %v12907 = vadd.f32 %v12864, %v12906
        %v12908 = vpop.f32.mrb[0].mxu0
        %v12909 = vadd.f32 %v12866, %v12908
        %12910 = vdwg.mxu0
        %v12911 = vadd.f32 %v5228, %v12559
        %v12912 = vadd.f32 %v5229, %v12561
        %v12913 = vadd.f32 %v5230, %v12903
        %v12914 = vadd.f32 %v5231, %v12905
        %v12915 = vadd.f32 %v5232, %v12563
        %v12916 = vadd.f32 %v5233, %v12565
        %v12917 = vadd.f32 %v5234, %v12907
        %v12918 = vadd.f32 %v5235, %v12909
        %v12919 = vadd.f32 %v12911, %v12912
        %v12920 = vadd.f32 %v12919, %v12913
        %v12921 = vadd.f32 %v12920, %v12914
        %12922 = vadd.xlane.f32.xlu0 %v12921
        %v12923 = vpop.xlane.xlu0 %12922
        %v12924 = vadd.f32 %v12915, %v12916
        %v12925 = vadd.f32 %v12924, %v12917
        %v12926 = vadd.f32 %v12925, %v12918
        %12927 = vadd.xlane.f32.xlu0 %v12926
        %v12928 = vpop.xlane.xlu0 %12927
        %v12929 = vmul.f32 %v12923, %v5135
        %v12930 = vmul.f32 %v12928, %v5135
        %v12931 = vsub.f32 %v12911, %v12929
        %v12932 = vsub.f32 %v12912, %v12929
        %v12933 = vsub.f32 %v12913, %v12929
        %v12934 = vsub.f32 %v12914, %v12929
        %v12935 = vsub.f32 %v12915, %v12930
        %v12936 = vsub.f32 %v12916, %v12930
        %v12937 = vsub.f32 %v12917, %v12930
        %v12938 = vsub.f32 %v12918, %v12930
        %v12939 = vmul.f32 %v12931, %v12931
        %v12940 = vmul.f32 %v12932, %v12932
        %v12941 = vmul.f32 %v12933, %v12933
        %v12942 = vmul.f32 %v12934, %v12934
        %v12943 = vmul.f32 %v12935, %v12935
        %v12944 = vmul.f32 %v12936, %v12936
        %v12945 = vmul.f32 %v12937, %v12937
        %v12946 = vmul.f32 %v12938, %v12938
        %v12947 = vadd.f32 %v12939, %v12940
        %v12948 = vadd.f32 %v12947, %v12941
        %v12949 = vadd.f32 %v12948, %v12942
        %12950 = vadd.xlane.f32.xlu0 %v12949
        %v12951 = vpop.xlane.xlu0 %12950
        %v12952 = vadd.f32 %v12943, %v12944
        %v12953 = vadd.f32 %v12952, %v12945
        %v12954 = vadd.f32 %v12953, %v12946
        %12955 = vadd.xlane.f32.xlu0 %v12954
        %v12956 = vpop.xlane.xlu0 %12955
        %v12957 = vmul.f32 %v12951, %v5135
        %v12958 = vmul.f32 %v12956, %v5135
        %v12959 = vadd.f32 %v12957, 1e-05
        %v12960 = vadd.f32 %v12958, 1e-05
        %v12961 = vrsqrt.pop %v12959
        %v12962 = vrsqrt.pop %v12960
        %v12963 = vmul.f32 %v12931, %v12961
        %v12964 = vmul.f32 %v12932, %v12961
        %v12965 = vmul.f32 %v12933, %v12961
        %v12966 = vmul.f32 %v12934, %v12961
        %v12967 = vmul.f32 %v12935, %v12962
        %v12968 = vmul.f32 %v12936, %v12962
        %v12969 = vmul.f32 %v12937, %v12962
        %v12970 = vmul.f32 %v12938, %v12962
        %v12972 = vlaneseq
        %v12973 = vshrl.u32 %v12972, 7
        %v12974 = vsub.s32 0, %v12973
        %v12975 = vrot.slane %v435, %v12974
        %v12976 = vlaneseq
        %v12977 = vshrl.u32 %v12976, 7
        %v12978 = vsub.s32 1, %v12977
        %v12979 = vrot.slane %v435, %v12978
        %v12980 = vlaneseq
        %v12981 = vshrl.u32 %v12980, 7
        %v12982 = vsub.s32 2, %v12981
        %v12983 = vrot.slane %v435, %v12982
        %v12984 = vlaneseq
        %v12985 = vshrl.u32 %v12984, 7
        %v12986 = vsub.s32 3, %v12985
        %v12987 = vrot.slane %v435, %v12986
        %v12992 = vmul.f32 %v12963, %v12975
        %v12993 = vmul.f32 %v12964, %v12979
        %v12994 = vmul.f32 %v12965, %v12983
        %v12995 = vmul.f32 %v12966, %v12987
        %v12996 = vmul.f32 %v12967, %v12975
        %v12997 = vmul.f32 %v12968, %v12979
        %v12998 = vmul.f32 %v12969, %v12983
        %v12999 = vmul.f32 %v12970, %v12987
        %v13001 = vlaneseq
        %v13002 = vshrl.u32 %v13001, 7
        %v13003 = vsub.s32 0, %v13002
        %v13004 = vrot.slane %v436, %v13003
        %v13005 = vlaneseq
        %v13006 = vshrl.u32 %v13005, 7
        %v13007 = vsub.s32 1, %v13006
        %v13008 = vrot.slane %v436, %v13007
        %v13009 = vlaneseq
        %v13010 = vshrl.u32 %v13009, 7
        %v13011 = vsub.s32 2, %v13010
        %v13012 = vrot.slane %v436, %v13011
        %v13013 = vlaneseq
        %v13014 = vshrl.u32 %v13013, 7
        %v13015 = vsub.s32 3, %v13014
        %v13016 = vrot.slane %v436, %v13015
        %v13021 = vadd.f32 %v12992, %v13004
        %v13022 = vadd.f32 %v12993, %v13008
        %v13023 = vadd.f32 %v12994, %v13012
        %v13024 = vadd.f32 %v12995, %v13016
        %v13025 = vadd.f32 %v12996, %v13004
        %v13026 = vadd.f32 %v12997, %v13008
        %v13027 = vadd.f32 %v12998, %v13012
        %v13028 = vadd.f32 %v12999, %v13016
        %13029 = vst [vmem:[%s6] sm:$0xff] %v13021
        %13030 = vst [vmem:[%s6 + $0x8] sm:$0xff] %v13022
        %13031 = vst [vmem:[%s6 + $0x10] sm:$0xff] %v13023
        %13032 = vst [vmem:[%s6 + $0x18] sm:$0xff] %v13024
        %13033 = vst [vmem:[%s6 + $0x20] sm:$0xff] %v13025
        %13034 = vst [vmem:[%s6 + $0x28] sm:$0xff] %v13026
        %13035 = vst [vmem:[%s6 + $0x30] sm:$0xff] %v13027
        %13036 = vst [vmem:[%s6 + $0x38] sm:$0xff] %v13028
        // Predicated region
        $region69: #{transformer_classifier.1} parent=43 // pred_check
          %p13037 = pneg %p190
        $region70: #{transformer_classifier.1} parent=43 // pred_check_branch
          %13039 = sbr.rel (%p13037) target = $region72
        $region71: #{transformer_classifier.1} parent=43 // pred_region
          _
        $region72: #{transformer_classifier.1} parent=43 // pred_fallthru
          _
        // Predicated region
        $region73: #{transformer_classifier.1} parent=43 // pred_check
          %p13040 = pneg %p190
        $region74: #{transformer_classifier.1} parent=43 // pred_check_branch
          %13042 = sbr.rel (%p13040) target = $region76
        $region75: #{transformer_classifier.1} parent=43 // pred_region
          _
        $region76: #{transformer_classifier.1} parent=43 // pred_fallthru
          _
      $region44: #{transformer_classifier.1} parent=5 // pred_fallthru
        _
      %p13043 = scmp.le.s32.totalorder 2, %s21
      // Predicated region
      $region77: #{transformer_classifier.1} parent=5 // pred_check
        %p13044 = pneg %p13043
      $region78: #{transformer_classifier.1} parent=5 // pred_check_branch
        %13046 = sbr.rel (%p13044) target = $region80
      $region79: #{transformer_classifier.1} parent=5 // pred_region
        %s13047 = ssub.s32 %s21, 2
      $region80: #{transformer_classifier.1} parent=5 // pred_fallthru
        _
    $region6: #{transformer_classifier.1} parent=1 // loop_footer
      %s25 = sadd.s32 1, %s21
    $region7: #{transformer_classifier.1} parent=1 // loop_footer_branch
      %20 = sbr.rel target = $region3
    $region8: #{transformer_classifier.1} parent=1 // loop_exit
      _
    %13048 = vsyncpa [#allocation3], 1
    %s13049 = scalar_lea.sflag [#allocation3], 1
    %13050 = vsyncpa %s13049, 1
    %13051 = vsyncpa [#allocation5], 1
    %s13052 = scalar_lea.sflag [#allocation5], 1
    %13053 = vsyncpa %s13052, 1
    %13054 = vsyncpa [#allocation8], 1
    %s13055 = scalar_lea.sflag [#allocation8], 1
    %13056 = vsyncpa %s13055, 1

</llo_original>
